<compile_context>
chip_gen: v7x
topology: tpu7x:2x2x1
jax: 0.10.0
libtpu: 0.0.40
codegen_flags: <defaults>
</compile_context>

<pallas_src>
import functools
import math

import jax
import jax.numpy as jnp
from jax.experimental import pallas as pl
from jax.experimental.pallas import tpu as pltpu


# ----------------------------- Pallas kernels ------------------------------

def _memory_kernel(r2d_ref, i3d_ref, rel_ref, obj_ref,
                   wres_ref, wi3d_ref, wrel_ref, wobj_ref, bg_ref, bd_ref,
                   o_ref, *, lg, ld):
    """Fused (encoder linears ∘ vis_proj) -> padded memory [Lpad, D] for one batch.

    Memory layout (rows): [detail (ld), global (lg), zero pad] so every sublane
    store starts at an 8-aligned offset (ld = 200).
    """
    g = (jnp.dot(r2d_ref[0], wres_ref[...], preferred_element_type=jnp.float32)
         + jnp.dot(i3d_ref[0], wi3d_ref[...], preferred_element_type=jnp.float32)
         + bg_ref[...])                                                    # [lg, D]
    d = (jnp.dot(rel_ref[0], wrel_ref[...], preferred_element_type=jnp.float32)
         + jnp.dot(obj_ref[0], wobj_ref[...], preferred_element_type=jnp.float32)
         + bd_ref[...])                                                    # [ld, D]
    o_ref[0] = jnp.zeros(o_ref.shape[1:], o_ref.dtype)                     # zero the pad
    o_ref[0, :ld, :] = d.astype(o_ref.dtype)                               # offset 0
    o_ref[0, ld:ld + lg, :] = g.astype(o_ref.dtype)                        # offset 200 (8-aligned)


def memory_projection_fused(res2d, i3d, rel, obj, mp, *, lpad):
    B, Lg, Kg = res2d.shape
    Ki = i3d.shape[2]
    Ld, Kr = rel.shape[1], rel.shape[2]
    Ko = obj.shape[2]
    D = mp["w_res"].shape[1]
    return pl.pallas_call(
        functools.partial(_memory_kernel, lg=Lg, ld=Ld),
        out_shape=jax.ShapeDtypeStruct((B, lpad, D), res2d.dtype),
        grid_spec=pltpu.PrefetchScalarGridSpec(
            num_scalar_prefetch=0,
            grid=(B,),
            in_specs=[
                pl.BlockSpec((1, Lg, Kg), lambda i: (i, 0, 0)),
                pl.BlockSpec((1, Lg, Ki), lambda i: (i, 0, 0)),
                pl.BlockSpec((1, Ld, Kr), lambda i: (i, 0, 0)),
                pl.BlockSpec((1, Ld, Ko), lambda i: (i, 0, 0)),
                pl.BlockSpec((Kg, D), lambda i: (0, 0)),
                pl.BlockSpec((Ki, D), lambda i: (0, 0)),
                pl.BlockSpec((Kr, D), lambda i: (0, 0)),
                pl.BlockSpec((Ko, D), lambda i: (0, 0)),
                pl.BlockSpec((1, D), lambda i: (0, 0)),
                pl.BlockSpec((1, D), lambda i: (0, 0)),
            ],
            out_specs=pl.BlockSpec((1, lpad, D), lambda i: (i, 0, 0)),
        ),
        compiler_params=pltpu.CompilerParams(dimension_semantics=("parallel",)),
    )(res2d, i3d, rel, obj,
      mp["w_res"], mp["w_i3d"], mp["w_rel"], mp["w_obj"], mp["bias_g"], mp["bias_d"])


def _decoder_kernel(word_ref,                                   # SMEM prefetch [B, T]
                    mem_ref, embed_ref, pos_ref,
                    wqkv_ref, bqkv_ref, wos_ref, bos_ref, g1_ref, b1_ref,
                    wqc_ref, bqc_ref, wkvc_ref, bkvc_ref, woc_ref, boc_ref,
                    g2_ref, b2_ref,
                    w1_ref, b1f_ref, w2_ref, b2f_ref, g3_ref, b3_ref,
                    wout_ref, bout_ref,
                    o_ref, *, num_heads, mem_len, eps):
    """Fused decoder: embed + self-attn + cross-attn + FFN + 3xLN + vocab head (one batch)."""
    b = pl.program_id(0)
    T, D = pos_ref.shape
    V = embed_ref.shape[0]
    Dh = D // num_heads
    scale = 1.0 / math.sqrt(Dh)
    dn_nt = (((1,), (1,)), ((), ()))   # contract last dims: q @ k^T without XLU transpose

    # ---- token embedding via in-kernel one-hot matmul (no dynamic VMEM indexing) ----
    row = jax.lax.broadcasted_iota(jnp.int32, (T, V), 0)
    col = jax.lax.broadcasted_iota(jnp.int32, (T, V), 1)
    onehot = jnp.zeros((T, V), jnp.float32)
    for t in range(T):                                   # static, tiny (T=8) -> 8 vselects
        tok = word_ref[b, t]
        onehot = jnp.where((row == t) & (col == tok), 1.0, onehot)
    x = (jnp.dot(onehot, embed_ref[...].astype(jnp.float32),
                 preferred_element_type=jnp.float32)
         + pos_ref[...].astype(jnp.float32))                                    # [T, D]

    def layer_norm(y, g, bb):
        mu = jnp.mean(y, axis=-1, keepdims=True)
        var = jnp.mean((y - mu) ** 2, axis=-1, keepdims=True)
        return (y - mu) * jax.lax.rsqrt(var + eps) * g + bb

    # ---- masked self-attention + residual + LN1 ----
    qkv = jnp.dot(x, wqkv_ref[...], preferred_element_type=jnp.float32) + bqkv_ref[...]
    q, k, v = qkv[:, :D], qkv[:, D:2 * D], qkv[:, 2 * D:]
    ri = jax.lax.broadcasted_iota(jnp.int32, (T, T), 0)
    ci = jax.lax.broadcasted_iota(jnp.int32, (T, T), 1)
    causal = jnp.where(ri >= ci, 0.0, -1e9)
    acc = jnp.zeros((T, D), jnp.float32)
    for h in range(num_heads):                           # static loop over heads
        lo, hi = h * Dh, (h + 1) * Dh
        s = jax.lax.dot_general(q[:, lo:hi], k[:, lo:hi], dimension_numbers=dn_nt,
                                preferred_element_type=jnp.float32) * scale + causal
        s = s - jnp.max(s, axis=-1, keepdims=True)
        p = jnp.exp(s)
        p = p / jnp.sum(p, axis=-1, keepdims=True)
        oh = jnp.dot(p, v[:, lo:hi], preferred_element_type=jnp.float32)
        # (concat_h oh) @ wo == sum_h oh @ wo[h*Dh:(h+1)*Dh, :]  (avoids lane concat)
        acc = acc + jnp.dot(oh, wos_ref[lo:hi, :], preferred_element_type=jnp.float32)
    x = layer_norm(x + acc + bos_ref[...], g1_ref[...], b1_ref[...])

    # ---- cross-attention over padded memory (keys >= mem_len masked out) + LN2 ----
    mem = mem_ref[0].astype(jnp.float32)                                        # [Lp, D]
    Lp = mem.shape[0]
    kcol = jax.lax.broadcasted_iota(jnp.int32, (T, Lp), 1)
    kmask = jnp.where(kcol < mem_len, 0.0, -1e9)
    qc = jnp.dot(x, wqc_ref[...], preferred_element_type=jnp.float32) + bqc_ref[...]
    kvc = jnp.dot(mem, wkvc_ref[...], preferred_element_type=jnp.float32) + bkvc_ref[...]
    kc, vc = kvc[:, :D], kvc[:, D:]
    acc = jnp.zeros((T, D), jnp.float32)
    for h in range(num_heads):
        lo, hi = h * Dh, (h + 1) * Dh
        s = jax.lax.dot_general(qc[:, lo:hi], kc[:, lo:hi], dimension_numbers=dn_nt,
                                preferred_element_type=jnp.float32) * scale + kmask
        s = s - jnp.max(s, axis=-1, keepdims=True)
        p = jnp.exp(s)
        p = p / jnp.sum(p, axis=-1, keepdims=True)
        oh = jnp.dot(p, vc[:, lo:hi], preferred_element_type=jnp.float32)
        acc = acc + jnp.dot(oh, woc_ref[lo:hi, :], preferred_element_type=jnp.float32)
    x = layer_norm(x + acc + boc_ref[...], g2_ref[...], b2_ref[...])

    # ---- FFN + residual + LN3 + vocab head (vocab padded to lane width) ----
    hdn = jnp.maximum(
        jnp.dot(x, w1_ref[...], preferred_element_type=jnp.float32) + b1f_ref[...], 0.0)
    hdn = jnp.dot(hdn, w2_ref[...], preferred_element_type=jnp.float32) + b2f_ref[...]
    y = layer_norm(x + hdn, g3_ref[...], b3_ref[...])
    o_ref[0] = (jnp.dot(y, wout_ref[...], preferred_element_type=jnp.float32)
                + bout_ref[...]).astype(o_ref.dtype)


def decoder_forward(word_seq, memory, dp, *, num_heads, mem_len, eps=1e-5):
    B, T = word_seq.shape
    Lp, D = memory.shape[1], memory.shape[2]
    V = dp["embed"].shape[0]
    F = dp["ffn_w1"].shape[1]
    vpad = dp["wout"].shape[1]

    def full(shape):
        return pl.BlockSpec(shape, lambda i, ws: (0,) * len(shape))

    grid_spec = pltpu.PrefetchScalarGridSpec(
        num_scalar_prefetch=1,                          # word_seq -> SMEM
        grid=(B,),
        in_specs=[
            pl.BlockSpec((1, Lp, D), lambda i, ws: (i, 0, 0)),   # memory
            full((V, D)), full((T, D)),                          # embed, pos
            full((D, 3 * D)), full((1, 3 * D)), full((D, D)), full((1, D)),
            full((1, D)), full((1, D)),                          # self-attn + ln1
            full((D, D)), full((1, D)), full((D, 2 * D)), full((1, 2 * D)),
            full((D, D)), full((1, D)), full((1, D)), full((1, D)),  # cross-attn + ln2
            full((D, F)), full((1, F)), full((F, D)), full((1, D)),
            full((1, D)), full((1, D)),                          # ffn + ln3
            full((D, vpad)), full((1, vpad)),                    # vocab head
        ],
        out_specs=pl.BlockSpec((1, T, vpad), lambda i, ws: (i, 0, 0)),
    )
    return pl.pallas_call(
        functools.partial(_decoder_kernel, num_heads=num_heads, mem_len=mem_len, eps=eps),
        out_shape=jax.ShapeDtypeStruct((B, T, vpad), memory.dtype),
        grid_spec=grid_spec,
        compiler_params=pltpu.CompilerParams(dimension_semantics=("parallel",)),
    )(word_seq, memory, dp["embed"], dp["pos"],
      dp["wqkv"], dp["bqkv"], dp["wo_s"], dp["bo_s"], dp["ln1_g"], dp["ln1_b"],
      dp["wq_c"], dp["bq_c"], dp["wkv_c"], dp["bkv_c"], dp["wo_c"], dp["bo_c"],
      dp["ln2_g"], dp["ln2_b"],
      dp["ffn_w1"], dp["ffn_b1"], dp["ffn_w2"], dp["ffn_b2"], dp["ln3_g"], dp["ln3_b"],
      dp["wout"], dp["bout"])


# ----------------------------- model definition ----------------------------

CFG = dict(
    batch=2, seq_len=8, vocab=100,
    len_global=20, len_detail=200,
    d_res2d=64, d_i3d=64, d_rel=32, d_obj=32,
    d_enc=512, d_model=128, n_heads=4, d_ffn=512,
)


def init_params(key, cfg):
    ks = iter(jax.random.split(key, 64))

    def w(shape, scale=0.02):
        return (scale * jax.random.normal(next(ks), shape)).astype(jnp.float32)

    def z(shape):
        return jnp.zeros(shape, jnp.float32)

    D, E, V, F = cfg["d_model"], cfg["d_enc"], cfg["vocab"], cfg["d_ffn"]

    def attn_block():
        return dict(wq=w((D, D)), bq=z((D,)), wk=w((D, D)), bk=z((D,)),
                    wv=w((D, D)), bv=z((D,)), wo=w((D, D)), bo=z((D,)))

    return dict(
        enc=dict(
            w_res=w((cfg["d_res2d"], E)), b_res=z((E,)),
            w_i3d=w((cfg["d_i3d"], E)), b_i3d=z((E,)),
            w_rel=w((cfg["d_rel"], E)), b_rel=z((E,)),
            w_obj=w((cfg["d_obj"], E)), b_obj=z((E,)),
        ),
        vis_proj_w=w((2 * E, D)), vis_proj_b=z((D,)),
        embed=w((V, D)), pos=w((cfg["seq_len"], D)),
        self_attn=attn_block(), cross_attn=attn_block(),
        ln1_g=jnp.ones((D,), jnp.float32), ln1_b=z((D,)),
        ln2_g=jnp.ones((D,), jnp.float32), ln2_b=z((D,)),
        ln3_g=jnp.ones((D,), jnp.float32), ln3_b=z((D,)),
        ffn_w1=w((D, F)), ffn_b1=z((F,)),
        ffn_w2=w((F, D)), ffn_b2=z((D,)),
        out_w=w((D, V)), out_b=z((V,)),
    )


def prepare_params(params, cfg):
    """One-time parameter packing:
    - compose (per-stream encoder linear) ∘ (vis_proj) into [K_stream, D] weights,
    - pack wq/wk/wv -> wqkv, wk/wv -> wkv,
    - pad the vocab head to a lane multiple (100 -> 128)."""
    D, E, V, F = cfg["d_model"], cfg["d_enc"], cfg["vocab"], cfg["d_ffn"]
    vpad = ((V + 127) // 128) * 128
    vp_g, vp_d = params["vis_proj_w"][:E], params["vis_proj_w"][E:]
    e = params["enc"]
    mem = dict(
        w_res=e["w_res"] @ vp_g, w_i3d=e["w_i3d"] @ vp_d,
        w_rel=e["w_rel"] @ vp_g, w_obj=e["w_obj"] @ vp_d,
        bias_g=(e["b_res"] @ vp_g + e["b_i3d"] @ vp_d + params["vis_proj_b"]).reshape(1, D),
        bias_d=(e["b_rel"] @ vp_g + e["b_obj"] @ vp_d + params["vis_proj_b"]).reshape(1, D),
    )
    sa, ca = params["self_attn"], params["cross_attn"]
    dec = dict(
        embed=params["embed"], pos=params["pos"],
        wqkv=jnp.concatenate([sa["wq"], sa["wk"], sa["wv"]], axis=1),
        bqkv=jnp.concatenate([sa["bq"], sa["bk"], sa["bv"]], axis=0).reshape(1, 3 * D),
        wo_s=sa["wo"], bo_s=sa["bo"].reshape(1, D),
        ln1_g=params["ln1_g"].reshape(1, D), ln1_b=params["ln1_b"].reshape(1, D),
        wq_c=ca["wq"], bq_c=ca["bq"].reshape(1, D),
        wkv_c=jnp.concatenate([ca["wk"], ca["wv"]], axis=1),
        bkv_c=jnp.concatenate([ca["bk"], ca["bv"]], axis=0).reshape(1, 2 * D),
        wo_c=ca["wo"], bo_c=ca["bo"].reshape(1, D),
        ln2_g=params["ln2_g"].reshape(1, D), ln2_b=params["ln2_b"].reshape(1, D),
        ffn_w1=params["ffn_w1"], ffn_b1=params["ffn_b1"].reshape(1, F),
        ffn_w2=params["ffn_w2"], ffn_b2=params["ffn_b2"].reshape(1, D),
        ln3_g=params["ln3_g"].reshape(1, D), ln3_b=params["ln3_b"].reshape(1, D),
        wout=jnp.pad(params["out_w"], ((0, 0), (0, vpad - V))),
        bout=jnp.pad(params["out_b"], (0, vpad - V)).reshape(1, vpad),
    )
    return dict(mem=mem, dec=dec, vpad=vpad)


def caption_model_forward(prepared, cfg, res2d, i3d, rel, obj, word_seq):
    # Encoder outputs (global [B,20,1024] / detail [B,200,1024]) are algebraically folded
    # into the memory projection (no nonlinearity between them); the original module's
    # shape contract is verified statically here instead of materializing them.
    B = res2d.shape[0]
    assert res2d.shape == (B, cfg["len_global"], cfg["d_res2d"])
    assert i3d.shape == (B, cfg["len_global"], cfg["d_i3d"])
    assert rel.shape == (B, cfg["len_detail"], cfg["d_rel"])
    assert obj.shape == (B, cfg["len_detail"], cfg["d_obj"])
    assert 2 * cfg["d_enc"] == 1024, "global/detail_feats.shape would be wrong!"

    mem_len = cfg["len_global"] + cfg["len_detail"]      # 220 valid memory slots
    lpad = ((mem_len + 127) // 128) * 128                # pad to 256 (lane-dense scores)

    memory = memory_projection_fused(res2d, i3d, rel, obj, prepared["mem"], lpad=lpad)
    logits_pad = decoder_forward(word_seq, memory, prepared["dec"],
                                 num_heads=cfg["n_heads"], mem_len=mem_len)  # [B,T,128]
    return logits_pad[..., :cfg["vocab"]]                                    # [B,T,100]


# ---------------------------------- main ------------------------------------

if __name__ == "__main__":
    cfg = CFG
    key = jax.random.PRNGKey(0)
    k_p, k_r, k_i, k_rel, k_obj, k_w = jax.random.split(key, 6)

    params = init_params(k_p, cfg)
    prepared = prepare_params(params, cfg)

    B, T = cfg["batch"], cfg["seq_len"]
    res2d = jax.random.normal(k_r, (B, cfg["len_global"], cfg["d_res2d"]), jnp.float32)
    i3d = jax.random.normal(k_i, (B, cfg["len_global"], cfg["d_i3d"]), jnp.float32)
    rel = jax.random.normal(k_rel, (B, cfg["len_detail"], cfg["d_rel"]), jnp.float32)
    obj = jax.random.normal(k_obj, (B, cfg["len_detail"], cfg["d_obj"]), jnp.float32)
    word_seq = jax.random.randint(k_w, (B, T), 0, cfg["vocab"], jnp.int32)

    fwd = jax.jit(functools.partial(caption_model_forward, prepared, cfg))
    logits = fwd(res2d, i3d, rel, obj, word_seq)
    jax.block_until_ready(logits)

    assert logits.shape == (B, T, cfg["vocab"]), logits.shape
    assert bool(jnp.all(jnp.isfinite(logits)))
    print("KERNEL_OK")
</pallas_src>

<mosaic_0001>
module attributes {stable_mosaic.version = 11 : i64} {
  func.func @_memory_kernel(%arg0: i32, %arg1: memref<1x20x64xf32, #tpu.memory_space<vmem>>, %arg2: memref<1x20x64xf32, #tpu.memory_space<vmem>>, %arg3: memref<1x200x32xf32, #tpu.memory_space<vmem>>, %arg4: memref<1x200x32xf32, #tpu.memory_space<vmem>>, %arg5: memref<64x128xf32, #tpu.memory_space<vmem>>, %arg6: memref<64x128xf32, #tpu.memory_space<vmem>>, %arg7: memref<32x128xf32, #tpu.memory_space<vmem>>, %arg8: memref<32x128xf32, #tpu.memory_space<vmem>>, %arg9: memref<1x128xf32, #tpu.memory_space<vmem>>, %arg10: memref<1x128xf32, #tpu.memory_space<vmem>>, %arg11: memref<1x256x128xf32, #tpu.memory_space<vmem>>) attributes {dimension_semantics = [#tpu.dimension_semantics<parallel>], iteration_bounds = array<i64: 2>, scalar_prefetch = 0 : i64, scratch_operands = 0 : i64, tpu.core_type = #tpu.core_type<tc>, window_params = [{transform_indices = @transform_0, window_bounds = array<i64: 1, 20, 64>}, {transform_indices = @transform_1, window_bounds = array<i64: 1, 20, 64>}, {transform_indices = @transform_2, window_bounds = array<i64: 1, 200, 32>}, {transform_indices = @transform_3, window_bounds = array<i64: 1, 200, 32>}, {pipeline_mode = #tpu.pipeline_mode<synchronous>, transform_indices = @transform_4, window_bounds = array<i64: 64, 128>}, {pipeline_mode = #tpu.pipeline_mode<synchronous>, transform_indices = @transform_5, window_bounds = array<i64: 64, 128>}, {pipeline_mode = #tpu.pipeline_mode<synchronous>, transform_indices = @transform_6, window_bounds = array<i64: 32, 128>}, {pipeline_mode = #tpu.pipeline_mode<synchronous>, transform_indices = @transform_7, window_bounds = array<i64: 32, 128>}, {pipeline_mode = #tpu.pipeline_mode<synchronous>, transform_indices = @transform_8, window_bounds = array<i64: 1, 128>}, {pipeline_mode = #tpu.pipeline_mode<synchronous>, transform_indices = @transform_9, window_bounds = array<i64: 1, 128>}, {transform_indices = @transform_10, window_bounds = array<i64: 1, 256, 128>}]} {
    %c0 = arith.constant 0 : index
    %c0_0 = arith.constant 0 : index
    %c0_1 = arith.constant 0 : index
    %0 = vector.load %arg1[%c0, %c0_0, %c0_1] : memref<1x20x64xf32, #tpu.memory_space<vmem>>, vector<1x20x64xf32>
    %1 = vector.shape_cast %0 : vector<1x20x64xf32> to vector<20x64xf32>
    %c0_2 = arith.constant 0 : index
    %c0_3 = arith.constant 0 : index
    %2 = vector.load %arg5[%c0_2, %c0_3] : memref<64x128xf32, #tpu.memory_space<vmem>>, vector<64x128xf32>
    %cst = arith.constant dense<0.000000e+00> : vector<20x128xf32>
    %3 = tpu.matmul %1, %2, %cst {dimension_numbers = #tpu.dot_dimension_numbers<[1], [0], [0], [1], [0, 0, 1, 1], [], []>} : vector<20x64xf32>, vector<64x128xf32>, vector<20x128xf32> -> vector<20x128xf32>
    %c0_4 = arith.constant 0 : index
    %c0_5 = arith.constant 0 : index
    %c0_6 = arith.constant 0 : index
    %4 = vector.load %arg2[%c0_4, %c0_5, %c0_6] : memref<1x20x64xf32, #tpu.memory_space<vmem>>, vector<1x20x64xf32>
    %5 = vector.shape_cast %4 : vector<1x20x64xf32> to vector<20x64xf32>
    %c0_7 = arith.constant 0 : index
    %c0_8 = arith.constant 0 : index
    %6 = vector.load %arg6[%c0_7, %c0_8] : memref<64x128xf32, #tpu.memory_space<vmem>>, vector<64x128xf32>
    %cst_9 = arith.constant dense<0.000000e+00> : vector<20x128xf32>
    %7 = tpu.matmul %5, %6, %cst_9 {dimension_numbers = #tpu.dot_dimension_numbers<[1], [0], [0], [1], [0, 0, 1, 1], [], []>} : vector<20x64xf32>, vector<64x128xf32>, vector<20x128xf32> -> vector<20x128xf32>
    %8 = arith.addf %3, %7 : vector<20x128xf32>
    %c0_10 = arith.constant 0 : index
    %c0_11 = arith.constant 0 : index
    %9 = vector.load %arg9[%c0_10, %c0_11] : memref<1x128xf32, #tpu.memory_space<vmem>>, vector<1x128xf32>
    %10 = vector.broadcast %9 : vector<1x128xf32> to vector<20x128xf32>
    %11 = arith.addf %8, %10 : vector<20x128xf32>
    %c0_12 = arith.constant 0 : index
    %c0_13 = arith.constant 0 : index
    %c0_14 = arith.constant 0 : index
    %12 = vector.load %arg3[%c0_12, %c0_13, %c0_14] : memref<1x200x32xf32, #tpu.memory_space<vmem>>, vector<1x200x32xf32>
    %13 = vector.shape_cast %12 : vector<1x200x32xf32> to vector<200x32xf32>
    %c0_15 = arith.constant 0 : index
    %c0_16 = arith.constant 0 : index
    %14 = vector.load %arg7[%c0_15, %c0_16] : memref<32x128xf32, #tpu.memory_space<vmem>>, vector<32x128xf32>
    %cst_17 = arith.constant dense<0.000000e+00> : vector<200x128xf32>
    %15 = tpu.matmul %13, %14, %cst_17 {dimension_numbers = #tpu.dot_dimension_numbers<[1], [0], [0], [1], [0, 0, 1, 1], [], []>} : vector<200x32xf32>, vector<32x128xf32>, vector<200x128xf32> -> vector<200x128xf32>
    %c0_18 = arith.constant 0 : index
    %c0_19 = arith.constant 0 : index
    %c0_20 = arith.constant 0 : index
    %16 = vector.load %arg4[%c0_18, %c0_19, %c0_20] : memref<1x200x32xf32, #tpu.memory_space<vmem>>, vector<1x200x32xf32>
    %17 = vector.shape_cast %16 : vector<1x200x32xf32> to vector<200x32xf32>
    %c0_21 = arith.constant 0 : index
    %c0_22 = arith.constant 0 : index
    %18 = vector.load %arg8[%c0_21, %c0_22] : memref<32x128xf32, #tpu.memory_space<vmem>>, vector<32x128xf32>
    %cst_23 = arith.constant dense<0.000000e+00> : vector<200x128xf32>
    %19 = tpu.matmul %17, %18, %cst_23 {dimension_numbers = #tpu.dot_dimension_numbers<[1], [0], [0], [1], [0, 0, 1, 1], [], []>} : vector<200x32xf32>, vector<32x128xf32>, vector<200x128xf32> -> vector<200x128xf32>
    %20 = arith.addf %15, %19 : vector<200x128xf32>
    %c0_24 = arith.constant 0 : index
    %c0_25 = arith.constant 0 : index
    %21 = vector.load %arg10[%c0_24, %c0_25] : memref<1x128xf32, #tpu.memory_space<vmem>>, vector<1x128xf32>
    %22 = vector.broadcast %21 : vector<1x128xf32> to vector<200x128xf32>
    %23 = arith.addf %20, %22 : vector<200x128xf32>
    %cst_26 = arith.constant 0.000000e+00 : f32
    %24 = vector.broadcast %cst_26 : f32 to vector<256x128xf32>
    %c0_27 = arith.constant 0 : index
    %c0_28 = arith.constant 0 : index
    %c0_29 = arith.constant 0 : index
    %25 = vector.load %arg11[%c0_27, %c0_28, %c0_29] : memref<1x256x128xf32, #tpu.memory_space<vmem>>, vector<1x256x128xf32>
    %26 = vector.shape_cast %25 : vector<1x256x128xf32> to vector<256x128xf32>
    %27 = vector.shape_cast %24 : vector<256x128xf32> to vector<1x256x128xf32>
    tpu.vector_store %arg11[%c0_27, %c0_28, %c0_29], %27 {strides = array<i32>} : memref<1x256x128xf32, #tpu.memory_space<vmem>>, vector<1x256x128xf32>,
    %c0_30 = arith.constant 0 : index
    %c0_31 = arith.constant 0 : index
    %c0_32 = arith.constant 0 : index
    %28 = vector.load %arg11[%c0_30, %c0_31, %c0_32] : memref<1x256x128xf32, #tpu.memory_space<vmem>>, vector<1x200x128xf32>
    %29 = vector.shape_cast %28 : vector<1x200x128xf32> to vector<200x128xf32>
    %30 = vector.shape_cast %23 : vector<200x128xf32> to vector<1x200x128xf32>
    tpu.vector_store %arg11[%c0_30, %c0_31, %c0_32], %30 {strides = array<i32>} : memref<1x256x128xf32, #tpu.memory_space<vmem>>, vector<1x200x128xf32>,
    %c0_33 = arith.constant 0 : index
    %c200 = arith.constant 200 : index
    %c0_34 = arith.constant 0 : index
    %31 = vector.load %arg11[%c0_33, %c200, %c0_34] : memref<1x256x128xf32, #tpu.memory_space<vmem>>, vector<1x20x128xf32>
    %32 = vector.shape_cast %31 : vector<1x20x128xf32> to vector<20x128xf32>
    %33 = vector.shape_cast %11 : vector<20x128xf32> to vector<1x20x128xf32>
    tpu.vector_store %arg11[%c0_33, %c200, %c0_34], %33 {strides = array<i32>} : memref<1x256x128xf32, #tpu.memory_space<vmem>>, vector<1x20x128xf32>,
    return
  }
  func.func @transform_0(%arg0: i32) -> (i32, i32, i32) {
    %c0_i32 = arith.constant 0 : i32
    %c0_i32_0 = arith.constant 0 : i32
    %c0_i32_1 = arith.constant 0 : i32
    return %arg0, %c0_i32, %c0_i32_0 : i32, i32, i32
  }
  func.func @transform_1(%arg0: i32) -> (i32, i32, i32) {
    %c0_i32 = arith.constant 0 : i32
    %c0_i32_0 = arith.constant 0 : i32
    %c0_i32_1 = arith.constant 0 : i32
    return %arg0, %c0_i32, %c0_i32_0 : i32, i32, i32
  }
  func.func @transform_2(%arg0: i32) -> (i32, i32, i32) {
    %c0_i32 = arith.constant 0 : i32
    %c0_i32_0 = arith.constant 0 : i32
    %c0_i32_1 = arith.constant 0 : i32
    return %arg0, %c0_i32, %c0_i32_0 : i32, i32, i32
  }
  func.func @transform_3(%arg0: i32) -> (i32, i32, i32) {
    %c0_i32 = arith.constant 0 : i32
    %c0_i32_0 = arith.constant 0 : i32
    %c0_i32_1 = arith.constant 0 : i32
    return %arg0, %c0_i32, %c0_i32_0 : i32, i32, i32
  }
  func.func @transform_4(%arg0: i32) -> (i32, i32) {
    %c0_i32 = arith.constant 0 : i32
    %c0_i32_0 = arith.constant 0 : i32
    %c0_i32_1 = arith.constant 0 : i32
    return %c0_i32, %c0_i32_0 : i32, i32
  }
  func.func @transform_5(%arg0: i32) -> (i32, i32) {
    %c0_i32 = arith.constant 0 : i32
    %c0_i32_0 = arith.constant 0 : i32
    %c0_i32_1 = arith.constant 0 : i32
    return %c0_i32, %c0_i32_0 : i32, i32
  }
  func.func @transform_6(%arg0: i32) -> (i32, i32) {
    %c0_i32 = arith.constant 0 : i32
    %c0_i32_0 = arith.constant 0 : i32
    %c0_i32_1 = arith.constant 0 : i32
    return %c0_i32, %c0_i32_0 : i32, i32
  }
  func.func @transform_7(%arg0: i32) -> (i32, i32) {
    %c0_i32 = arith.constant 0 : i32
    %c0_i32_0 = arith.constant 0 : i32
    %c0_i32_1 = arith.constant 0 : i32
    return %c0_i32, %c0_i32_0 : i32, i32
  }
  func.func @transform_8(%arg0: i32) -> (i32, i32) {
    %c0_i32 = arith.constant 0 : i32
    %c0_i32_0 = arith.constant 0 : i32
    %c0_i32_1 = arith.constant 0 : i32
    return %c0_i32, %c0_i32_0 : i32, i32
  }
  func.func @transform_9(%arg0: i32) -> (i32, i32) {
    %c0_i32 = arith.constant 0 : i32
    %c0_i32_0 = arith.constant 0 : i32
    %c0_i32_1 = arith.constant 0 : i32
    return %c0_i32, %c0_i32_0 : i32, i32
  }
  func.func @transform_10(%arg0: i32) -> (i32, i32, i32) {
    %c0_i32 = arith.constant 0 : i32
    %c0_i32_0 = arith.constant 0 : i32
    %c0_i32_1 = arith.constant 0 : i32
    return %arg0, %c0_i32, %c0_i32_0 : i32, i32, i32
  }
}

module attributes {stable_mosaic.version = 11 : i64} {
  func.func @_decoder_kernel(%arg0: i32, %arg1: memref<2x8xi32, #tpu.memory_space<smem>>, %arg2: memref<1x256x128xf32, #tpu.memory_space<vmem>>, %arg3: memref<100x128xf32, #tpu.memory_space<vmem>>, %arg4: memref<8x128xf32, #tpu.memory_space<vmem>>, %arg5: memref<128x384xf32, #tpu.memory_space<vmem>>, %arg6: memref<1x384xf32, #tpu.memory_space<vmem>>, %arg7: memref<128x128xf32, #tpu.memory_space<vmem>>, %arg8: memref<1x128xf32, #tpu.memory_space<vmem>>, %arg9: memref<1x128xf32, #tpu.memory_space<vmem>>, %arg10: memref<1x128xf32, #tpu.memory_space<vmem>>, %arg11: memref<128x128xf32, #tpu.memory_space<vmem>>, %arg12: memref<1x128xf32, #tpu.memory_space<vmem>>, %arg13: memref<128x256xf32, #tpu.memory_space<vmem>>, %arg14: memref<1x256xf32, #tpu.memory_space<vmem>>, %arg15: memref<128x128xf32, #tpu.memory_space<vmem>>, %arg16: memref<1x128xf32, #tpu.memory_space<vmem>>, %arg17: memref<1x128xf32, #tpu.memory_space<vmem>>, %arg18: memref<1x128xf32, #tpu.memory_space<vmem>>, %arg19: memref<128x512xf32, #tpu.memory_space<vmem>>, %arg20: memref<1x512xf32, #tpu.memory_space<vmem>>, %arg21: memref<512x128xf32, #tpu.memory_space<vmem>>, %arg22: memref<1x128xf32, #tpu.memory_space<vmem>>, %arg23: memref<1x128xf32, #tpu.memory_space<vmem>>, %arg24: memref<1x128xf32, #tpu.memory_space<vmem>>, %arg25: memref<128x128xf32, #tpu.memory_space<vmem>>, %arg26: memref<1x128xf32, #tpu.memory_space<vmem>>, %arg27: memref<1x8x128xf32, #tpu.memory_space<vmem>>) attributes {dimension_semantics = [#tpu.dimension_semantics<parallel>], iteration_bounds = array<i64: 2>, scalar_prefetch = 1 : i64, scratch_operands = 0 : i64, tpu.core_type = #tpu.core_type<tc>, window_params = [{transform_indices = @transform_0, window_bounds = array<i64: 1, 256, 128>}, {pipeline_mode = #tpu.pipeline_mode<synchronous>, transform_indices = @transform_1, window_bounds = array<i64: 100, 128>}, {pipeline_mode = #tpu.pipeline_mode<synchronous>, transform_indices = @transform_2, window_bounds = array<i64: 8, 128>}, {pipeline_mode = #tpu.pipeline_mode<synchronous>, transform_indices = @transform_3, window_bounds = array<i64: 128, 384>}, {pipeline_mode = #tpu.pipeline_mode<synchronous>, transform_indices = @transform_4, window_bounds = array<i64: 1, 384>}, {pipeline_mode = #tpu.pipeline_mode<synchronous>, transform_indices = @transform_5, window_bounds = array<i64: 128, 128>}, {pipeline_mode = #tpu.pipeline_mode<synchronous>, transform_indices = @transform_6, window_bounds = array<i64: 1, 128>}, {pipeline_mode = #tpu.pipeline_mode<synchronous>, transform_indices = @transform_7, window_bounds = array<i64: 1, 128>}, {pipeline_mode = #tpu.pipeline_mode<synchronous>, transform_indices = @transform_8, window_bounds = array<i64: 1, 128>}, {pipeline_mode = #tpu.pipeline_mode<synchronous>, transform_indices = @transform_9, window_bounds = array<i64: 128, 128>}, {pipeline_mode = #tpu.pipeline_mode<synchronous>, transform_indices = @transform_10, window_bounds = array<i64: 1, 128>}, {pipeline_mode = #tpu.pipeline_mode<synchronous>, transform_indices = @transform_11, window_bounds = array<i64: 128, 256>}, {pipeline_mode = #tpu.pipeline_mode<synchronous>, transform_indices = @transform_12, window_bounds = array<i64: 1, 256>}, {pipeline_mode = #tpu.pipeline_mode<synchronous>, transform_indices = @transform_13, window_bounds = array<i64: 128, 128>}, {pipeline_mode = #tpu.pipeline_mode<synchronous>, transform_indices = @transform_14, window_bounds = array<i64: 1, 128>}, {pipeline_mode = #tpu.pipeline_mode<synchronous>, transform_indices = @transform_15, window_bounds = array<i64: 1, 128>}, {pipeline_mode = #tpu.pipeline_mode<synchronous>, transform_indices = @transform_16, window_bounds = array<i64: 1, 128>}, {pipeline_mode = #tpu.pipeline_mode<synchronous>, transform_indices = @transform_17, window_bounds = array<i64: 128, 512>}, {pipeline_mode = #tpu.pipeline_mode<synchronous>, transform_indices = @transform_18, window_bounds = array<i64: 1, 512>}, {pipeline_mode = #tpu.pipeline_mode<synchronous>, transform_indices = @transform_19, window_bounds = array<i64: 512, 128>}, {pipeline_mode = #tpu.pipeline_mode<synchronous>, transform_indices = @transform_20, window_bounds = array<i64: 1, 128>}, {pipeline_mode = #tpu.pipeline_mode<synchronous>, transform_indices = @transform_21, window_bounds = array<i64: 1, 128>}, {pipeline_mode = #tpu.pipeline_mode<synchronous>, transform_indices = @transform_22, window_bounds = array<i64: 1, 128>}, {pipeline_mode = #tpu.pipeline_mode<synchronous>, transform_indices = @transform_23, window_bounds = array<i64: 128, 128>}, {pipeline_mode = #tpu.pipeline_mode<synchronous>, transform_indices = @transform_24, window_bounds = array<i64: 1, 128>}, {transform_indices = @transform_25, window_bounds = array<i64: 1, 8, 128>}]} {
    %0 = tpu.iota {dimensions = array<i32: 0>} : vector<8x100xi32>
    %1 = tpu.iota {dimensions = array<i32: 1>} : vector<8x100xi32>
    %cst = arith.constant 0.000000e+00 : f32
    %2 = vector.broadcast %cst : f32 to vector<8x100xf32>
    %3 = arith.index_cast %arg0 : i32 to index
    %c0 = arith.constant 0 : index
    %4 = memref.load %arg1[%3, %c0] : memref<2x8xi32, #tpu.memory_space<smem>>
    %c0_i32 = arith.constant 0 : i32
    %5 = vector.broadcast %c0_i32 : i32 to vector<8x100xi32>
    %6 = arith.cmpi eq, %0, %5 : vector<8x100xi32>
    %7 = vector.broadcast %4 : i32 to vector<8x100xi32>
    %8 = arith.cmpi eq, %1, %7 : vector<8x100xi32>
    %9 = arith.andi %6, %8 : vector<8x100xi1>
    %cst_0 = arith.constant 1.000000e+00 : f32
    %10 = vector.broadcast %cst_0 : f32 to vector<8x100xf32>
    %11 = arith.select %9, %10, %2 : vector<8x100xi1>, vector<8x100xf32>
    %12 = arith.index_cast %arg0 : i32 to index
    %c1 = arith.constant 1 : index
    %13 = memref.load %arg1[%12, %c1] : memref<2x8xi32, #tpu.memory_space<smem>>
    %c1_i32 = arith.constant 1 : i32
    %14 = vector.broadcast %c1_i32 : i32 to vector<8x100xi32>
    %15 = arith.cmpi eq, %0, %14 : vector<8x100xi32>
    %16 = vector.broadcast %13 : i32 to vector<8x100xi32>
    %17 = arith.cmpi eq, %1, %16 : vector<8x100xi32>
    %18 = arith.andi %15, %17 : vector<8x100xi1>
    %cst_1 = arith.constant 1.000000e+00 : f32
    %19 = vector.broadcast %cst_1 : f32 to vector<8x100xf32>
    %20 = arith.select %18, %19, %11 : vector<8x100xi1>, vector<8x100xf32>
    %21 = arith.index_cast %arg0 : i32 to index
    %c2 = arith.constant 2 : index
    %22 = memref.load %arg1[%21, %c2] : memref<2x8xi32, #tpu.memory_space<smem>>
    %c2_i32 = arith.constant 2 : i32
    %23 = vector.broadcast %c2_i32 : i32 to vector<8x100xi32>
    %24 = arith.cmpi eq, %0, %23 : vector<8x100xi32>
    %25 = vector.broadcast %22 : i32 to vector<8x100xi32>
    %26 = arith.cmpi eq, %1, %25 : vector<8x100xi32>
    %27 = arith.andi %24, %26 : vector<8x100xi1>
    %cst_2 = arith.constant 1.000000e+00 : f32
    %28 = vector.broadcast %cst_2 : f32 to vector<8x100xf32>
    %29 = arith.select %27, %28, %20 : vector<8x100xi1>, vector<8x100xf32>
    %30 = arith.index_cast %arg0 : i32 to index
    %c3 = arith.constant 3 : index
    %31 = memref.load %arg1[%30, %c3] : memref<2x8xi32, #tpu.memory_space<smem>>
    %c3_i32 = arith.constant 3 : i32
    %32 = vector.broadcast %c3_i32 : i32 to vector<8x100xi32>
    %33 = arith.cmpi eq, %0, %32 : vector<8x100xi32>
    %34 = vector.broadcast %31 : i32 to vector<8x100xi32>
    %35 = arith.cmpi eq, %1, %34 : vector<8x100xi32>
    %36 = arith.andi %33, %35 : vector<8x100xi1>
    %cst_3 = arith.constant 1.000000e+00 : f32
    %37 = vector.broadcast %cst_3 : f32 to vector<8x100xf32>
    %38 = arith.select %36, %37, %29 : vector<8x100xi1>, vector<8x100xf32>
    %39 = arith.index_cast %arg0 : i32 to index
    %c4 = arith.constant 4 : index
    %40 = memref.load %arg1[%39, %c4] : memref<2x8xi32, #tpu.memory_space<smem>>
    %c4_i32 = arith.constant 4 : i32
    %41 = vector.broadcast %c4_i32 : i32 to vector<8x100xi32>
    %42 = arith.cmpi eq, %0, %41 : vector<8x100xi32>
    %43 = vector.broadcast %40 : i32 to vector<8x100xi32>
    %44 = arith.cmpi eq, %1, %43 : vector<8x100xi32>
    %45 = arith.andi %42, %44 : vector<8x100xi1>
    %cst_4 = arith.constant 1.000000e+00 : f32
    %46 = vector.broadcast %cst_4 : f32 to vector<8x100xf32>
    %47 = arith.select %45, %46, %38 : vector<8x100xi1>, vector<8x100xf32>
    %48 = arith.index_cast %arg0 : i32 to index
    %c5 = arith.constant 5 : index
    %49 = memref.load %arg1[%48, %c5] : memref<2x8xi32, #tpu.memory_space<smem>>
    %c5_i32 = arith.constant 5 : i32
    %50 = vector.broadcast %c5_i32 : i32 to vector<8x100xi32>
    %51 = arith.cmpi eq, %0, %50 : vector<8x100xi32>
    %52 = vector.broadcast %49 : i32 to vector<8x100xi32>
    %53 = arith.cmpi eq, %1, %52 : vector<8x100xi32>
    %54 = arith.andi %51, %53 : vector<8x100xi1>
    %cst_5 = arith.constant 1.000000e+00 : f32
    %55 = vector.broadcast %cst_5 : f32 to vector<8x100xf32>
    %56 = arith.select %54, %55, %47 : vector<8x100xi1>, vector<8x100xf32>
    %57 = arith.index_cast %arg0 : i32 to index
    %c6 = arith.constant 6 : index
    %58 = memref.load %arg1[%57, %c6] : memref<2x8xi32, #tpu.memory_space<smem>>
    %c6_i32 = arith.constant 6 : i32
    %59 = vector.broadcast %c6_i32 : i32 to vector<8x100xi32>
    %60 = arith.cmpi eq, %0, %59 : vector<8x100xi32>
    %61 = vector.broadcast %58 : i32 to vector<8x100xi32>
    %62 = arith.cmpi eq, %1, %61 : vector<8x100xi32>
    %63 = arith.andi %60, %62 : vector<8x100xi1>
    %cst_6 = arith.constant 1.000000e+00 : f32
    %64 = vector.broadcast %cst_6 : f32 to vector<8x100xf32>
    %65 = arith.select %63, %64, %56 : vector<8x100xi1>, vector<8x100xf32>
    %66 = arith.index_cast %arg0 : i32 to index
    %c7 = arith.constant 7 : index
    %67 = memref.load %arg1[%66, %c7] : memref<2x8xi32, #tpu.memory_space<smem>>
    %c7_i32 = arith.constant 7 : i32
    %68 = vector.broadcast %c7_i32 : i32 to vector<8x100xi32>
    %69 = arith.cmpi eq, %0, %68 : vector<8x100xi32>
    %70 = vector.broadcast %67 : i32 to vector<8x100xi32>
    %71 = arith.cmpi eq, %1, %70 : vector<8x100xi32>
    %72 = arith.andi %69, %71 : vector<8x100xi1>
    %cst_7 = arith.constant 1.000000e+00 : f32
    %73 = vector.broadcast %cst_7 : f32 to vector<8x100xf32>
    %74 = arith.select %72, %73, %65 : vector<8x100xi1>, vector<8x100xf32>
    %c0_8 = arith.constant 0 : index
    %c0_9 = arith.constant 0 : index
    %75 = vector.load %arg3[%c0_8, %c0_9] : memref<100x128xf32, #tpu.memory_space<vmem>>, vector<100x128xf32>
    %cst_10 = arith.constant dense<0.000000e+00> : vector<8x128xf32>
    %76 = tpu.matmul %74, %75, %cst_10 {dimension_numbers = #tpu.dot_dimension_numbers<[1], [0], [0], [1], [0, 0, 1, 1], [], []>} : vector<8x100xf32>, vector<100x128xf32>, vector<8x128xf32> -> vector<8x128xf32>
    %c0_11 = arith.constant 0 : index
    %c0_12 = arith.constant 0 : index
    %77 = vector.load %arg4[%c0_11, %c0_12] : memref<8x128xf32, #tpu.memory_space<vmem>>, vector<8x128xf32>
    %78 = arith.addf %76, %77 : vector<8x128xf32>
    %c0_13 = arith.constant 0 : index
    %c0_14 = arith.constant 0 : index
    %79 = vector.load %arg5[%c0_13, %c0_14] : memref<128x384xf32, #tpu.memory_space<vmem>>, vector<128x384xf32>
    %cst_15 = arith.constant dense<0.000000e+00> : vector<8x384xf32>
    %80 = tpu.matmul %78, %79, %cst_15 {dimension_numbers = #tpu.dot_dimension_numbers<[1], [0], [0], [1], [0, 0, 1, 1], [], []>} : vector<8x128xf32>, vector<128x384xf32>, vector<8x384xf32> -> vector<8x384xf32>
    %c0_16 = arith.constant 0 : index
    %c0_17 = arith.constant 0 : index
    %81 = vector.load %arg6[%c0_16, %c0_17] : memref<1x384xf32, #tpu.memory_space<vmem>>, vector<1x384xf32>
    %82 = vector.broadcast %81 : vector<1x384xf32> to vector<8x384xf32>
    %83 = arith.addf %80, %82 : vector<8x384xf32>
    %84 = vector.extract_strided_slice %83 {offsets = [0, 0], sizes = [8, 128], strides = [1, 1]} : vector<8x384xf32> to vector<8x128xf32>
    %85 = vector.extract_strided_slice %83 {offsets = [0, 128], sizes = [8, 128], strides = [1, 1]} : vector<8x384xf32> to vector<8x128xf32>
    %86 = vector.extract_strided_slice %83 {offsets = [0, 256], sizes = [8, 128], strides = [1, 1]} : vector<8x384xf32> to vector<8x128xf32>
    %87 = tpu.iota {dimensions = array<i32: 0>} : vector<8x8xi32>
    %88 = tpu.iota {dimensions = array<i32: 1>} : vector<8x8xi32>
    %89 = arith.cmpi sge, %87, %88 : vector<8x8xi32>
    %cst_18 = arith.constant 0.000000e+00 : f32
    %cst_19 = arith.constant -1.000000e+09 : f32
    %90 = vector.broadcast %cst_18 : f32 to vector<8x8xf32>
    %91 = vector.broadcast %cst_19 : f32 to vector<8x8xf32>
    %92 = arith.select %89, %90, %91 : vector<8x8xi1>, vector<8x8xf32>
    %cst_20 = arith.constant 0.000000e+00 : f32
    %93 = vector.broadcast %cst_20 : f32 to vector<8x128xf32>
    %94 = vector.extract_strided_slice %84 {offsets = [0, 0], sizes = [8, 32], strides = [1, 1]} : vector<8x128xf32> to vector<8x32xf32>
    %95 = vector.extract_strided_slice %85 {offsets = [0, 0], sizes = [8, 32], strides = [1, 1]} : vector<8x128xf32> to vector<8x32xf32>
    %cst_21 = arith.constant dense<0.000000e+00> : vector<8x8xf32>
    %96 = tpu.matmul %94, %95, %cst_21 {dimension_numbers = #tpu.dot_dimension_numbers<[1], [1], [0], [0], [0, 0, 1, 0], [], []>} : vector<8x32xf32>, vector<8x32xf32>, vector<8x8xf32> -> vector<8x8xf32>
    %cst_22 = arith.constant 0.176776692 : f32
    %97 = vector.broadcast %cst_22 : f32 to vector<8x8xf32>
    %98 = arith.mulf %96, %97 : vector<8x8xf32>
    %99 = arith.addf %98, %92 : vector<8x8xf32>
    %cst_23 = arith.constant dense<0xFF800000> : vector<8xf32>
    %100 = vector.multi_reduction <maximumf>, %99, %cst_23 [1] : vector<8x8xf32> to vector<8xf32>
    %101 = vector.shape_cast %100 : vector<8xf32> to vector<8x1xf32>
    %102 = vector.broadcast %101 : vector<8x1xf32> to vector<8x8xf32>
    %103 = arith.subf %99, %102 : vector<8x8xf32>
    %104 = math.exp %103 : vector<8x8xf32>
    %cst_24 = arith.constant dense<0.000000e+00> : vector<8xf32>
    %105 = vector.multi_reduction <add>, %104, %cst_24 [1] : vector<8x8xf32> to vector<8xf32>
    %106 = vector.shape_cast %105 : vector<8xf32> to vector<8x1xf32>
    %107 = vector.broadcast %106 : vector<8x1xf32> to vector<8x8xf32>
    %108 = arith.divf %104, %107 : vector<8x8xf32>
    %109 = vector.extract_strided_slice %86 {offsets = [0, 0], sizes = [8, 32], strides = [1, 1]} : vector<8x128xf32> to vector<8x32xf32>
    %cst_25 = arith.constant dense<0.000000e+00> : vector<8x32xf32>
    %110 = tpu.matmul %108, %109, %cst_25 {dimension_numbers = #tpu.dot_dimension_numbers<[1], [0], [0], [1], [0, 0, 1, 1], [], []>} : vector<8x8xf32>, vector<8x32xf32>, vector<8x32xf32> -> vector<8x32xf32>
    %c0_26 = arith.constant 0 : index
    %c0_27 = arith.constant 0 : index
    %111 = vector.load %arg7[%c0_26, %c0_27] : memref<128x128xf32, #tpu.memory_space<vmem>>, vector<32x128xf32>
    %cst_28 = arith.constant dense<0.000000e+00> : vector<8x128xf32>
    %112 = tpu.matmul %110, %111, %cst_28 {dimension_numbers = #tpu.dot_dimension_numbers<[1], [0], [0], [1], [0, 0, 1, 1], [], []>} : vector<8x32xf32>, vector<32x128xf32>, vector<8x128xf32> -> vector<8x128xf32>
    %113 = arith.addf %93, %112 : vector<8x128xf32>
    %114 = vector.extract_strided_slice %84 {offsets = [0, 32], sizes = [8, 32], strides = [1, 1]} : vector<8x128xf32> to vector<8x32xf32>
    %115 = vector.extract_strided_slice %85 {offsets = [0, 32], sizes = [8, 32], strides = [1, 1]} : vector<8x128xf32> to vector<8x32xf32>
    %cst_29 = arith.constant dense<0.000000e+00> : vector<8x8xf32>
    %116 = tpu.matmul %114, %115, %cst_29 {dimension_numbers = #tpu.dot_dimension_numbers<[1], [1], [0], [0], [0, 0, 1, 0], [], []>} : vector<8x32xf32>, vector<8x32xf32>, vector<8x8xf32> -> vector<8x8xf32>
    %cst_30 = arith.constant 0.176776692 : f32
    %117 = vector.broadcast %cst_30 : f32 to vector<8x8xf32>
    %118 = arith.mulf %116, %117 : vector<8x8xf32>
    %119 = arith.addf %118, %92 : vector<8x8xf32>
    %cst_31 = arith.constant dense<0xFF800000> : vector<8xf32>
    %120 = vector.multi_reduction <maximumf>, %119, %cst_31 [1] : vector<8x8xf32> to vector<8xf32>
    %121 = vector.shape_cast %120 : vector<8xf32> to vector<8x1xf32>
    %122 = vector.broadcast %121 : vector<8x1xf32> to vector<8x8xf32>
    %123 = arith.subf %119, %122 : vector<8x8xf32>
    %124 = math.exp %123 : vector<8x8xf32>
    %cst_32 = arith.constant dense<0.000000e+00> : vector<8xf32>
    %125 = vector.multi_reduction <add>, %124, %cst_32 [1] : vector<8x8xf32> to vector<8xf32>
    %126 = vector.shape_cast %125 : vector<8xf32> to vector<8x1xf32>
    %127 = vector.broadcast %126 : vector<8x1xf32> to vector<8x8xf32>
    %128 = arith.divf %124, %127 : vector<8x8xf32>
    %129 = vector.extract_strided_slice %86 {offsets = [0, 32], sizes = [8, 32], strides = [1, 1]} : vector<8x128xf32> to vector<8x32xf32>
    %cst_33 = arith.constant dense<0.000000e+00> : vector<8x32xf32>
    %130 = tpu.matmul %128, %129, %cst_33 {dimension_numbers = #tpu.dot_dimension_numbers<[1], [0], [0], [1], [0, 0, 1, 1], [], []>} : vector<8x8xf32>, vector<8x32xf32>, vector<8x32xf32> -> vector<8x32xf32>
    %c32 = arith.constant 32 : index
    %c0_34 = arith.constant 0 : index
    %131 = vector.load %arg7[%c32, %c0_34] : memref<128x128xf32, #tpu.memory_space<vmem>>, vector<32x128xf32>
    %cst_35 = arith.constant dense<0.000000e+00> : vector<8x128xf32>
    %132 = tpu.matmul %130, %131, %cst_35 {dimension_numbers = #tpu.dot_dimension_numbers<[1], [0], [0], [1], [0, 0, 1, 1], [], []>} : vector<8x32xf32>, vector<32x128xf32>, vector<8x128xf32> -> vector<8x128xf32>
    %133 = arith.addf %113, %132 : vector<8x128xf32>
    %134 = vector.extract_strided_slice %84 {offsets = [0, 64], sizes = [8, 32], strides = [1, 1]} : vector<8x128xf32> to vector<8x32xf32>
    %135 = vector.extract_strided_slice %85 {offsets = [0, 64], sizes = [8, 32], strides = [1, 1]} : vector<8x128xf32> to vector<8x32xf32>
    %cst_36 = arith.constant dense<0.000000e+00> : vector<8x8xf32>
    %136 = tpu.matmul %134, %135, %cst_36 {dimension_numbers = #tpu.dot_dimension_numbers<[1], [1], [0], [0], [0, 0, 1, 0], [], []>} : vector<8x32xf32>, vector<8x32xf32>, vector<8x8xf32> -> vector<8x8xf32>
    %cst_37 = arith.constant 0.176776692 : f32
    %137 = vector.broadcast %cst_37 : f32 to vector<8x8xf32>
    %138 = arith.mulf %136, %137 : vector<8x8xf32>
    %139 = arith.addf %138, %92 : vector<8x8xf32>
    %cst_38 = arith.constant dense<0xFF800000> : vector<8xf32>
    %140 = vector.multi_reduction <maximumf>, %139, %cst_38 [1] : vector<8x8xf32> to vector<8xf32>
    %141 = vector.shape_cast %140 : vector<8xf32> to vector<8x1xf32>
    %142 = vector.broadcast %141 : vector<8x1xf32> to vector<8x8xf32>
    %143 = arith.subf %139, %142 : vector<8x8xf32>
    %144 = math.exp %143 : vector<8x8xf32>
    %cst_39 = arith.constant dense<0.000000e+00> : vector<8xf32>
    %145 = vector.multi_reduction <add>, %144, %cst_39 [1] : vector<8x8xf32> to vector<8xf32>
    %146 = vector.shape_cast %145 : vector<8xf32> to vector<8x1xf32>
    %147 = vector.broadcast %146 : vector<8x1xf32> to vector<8x8xf32>
    %148 = arith.divf %144, %147 : vector<8x8xf32>
    %149 = vector.extract_strided_slice %86 {offsets = [0, 64], sizes = [8, 32], strides = [1, 1]} : vector<8x128xf32> to vector<8x32xf32>
    %cst_40 = arith.constant dense<0.000000e+00> : vector<8x32xf32>
    %150 = tpu.matmul %148, %149, %cst_40 {dimension_numbers = #tpu.dot_dimension_numbers<[1], [0], [0], [1], [0, 0, 1, 1], [], []>} : vector<8x8xf32>, vector<8x32xf32>, vector<8x32xf32> -> vector<8x32xf32>
    %c64 = arith.constant 64 : index
    %c0_41 = arith.constant 0 : index
    %151 = vector.load %arg7[%c64, %c0_41] : memref<128x128xf32, #tpu.memory_space<vmem>>, vector<32x128xf32>
    %cst_42 = arith.constant dense<0.000000e+00> : vector<8x128xf32>
    %152 = tpu.matmul %150, %151, %cst_42 {dimension_numbers = #tpu.dot_dimension_numbers<[1], [0], [0], [1], [0, 0, 1, 1], [], []>} : vector<8x32xf32>, vector<32x128xf32>, vector<8x128xf32> -> vector<8x128xf32>
    %153 = arith.addf %133, %152 : vector<8x128xf32>
    %154 = vector.extract_strided_slice %84 {offsets = [0, 96], sizes = [8, 32], strides = [1, 1]} : vector<8x128xf32> to vector<8x32xf32>
    %155 = vector.extract_strided_slice %85 {offsets = [0, 96], sizes = [8, 32], strides = [1, 1]} : vector<8x128xf32> to vector<8x32xf32>
    %cst_43 = arith.constant dense<0.000000e+00> : vector<8x8xf32>
    %156 = tpu.matmul %154, %155, %cst_43 {dimension_numbers = #tpu.dot_dimension_numbers<[1], [1], [0], [0], [0, 0, 1, 0], [], []>} : vector<8x32xf32>, vector<8x32xf32>, vector<8x8xf32> -> vector<8x8xf32>
    %cst_44 = arith.constant 0.176776692 : f32
    %157 = vector.broadcast %cst_44 : f32 to vector<8x8xf32>
    %158 = arith.mulf %156, %157 : vector<8x8xf32>
    %159 = arith.addf %158, %92 : vector<8x8xf32>
    %cst_45 = arith.constant dense<0xFF800000> : vector<8xf32>
    %160 = vector.multi_reduction <maximumf>, %159, %cst_45 [1] : vector<8x8xf32> to vector<8xf32>
    %161 = vector.shape_cast %160 : vector<8xf32> to vector<8x1xf32>
    %162 = vector.broadcast %161 : vector<8x1xf32> to vector<8x8xf32>
    %163 = arith.subf %159, %162 : vector<8x8xf32>
    %164 = math.exp %163 : vector<8x8xf32>
    %cst_46 = arith.constant dense<0.000000e+00> : vector<8xf32>
    %165 = vector.multi_reduction <add>, %164, %cst_46 [1] : vector<8x8xf32> to vector<8xf32>
    %166 = vector.shape_cast %165 : vector<8xf32> to vector<8x1xf32>
    %167 = vector.broadcast %166 : vector<8x1xf32> to vector<8x8xf32>
    %168 = arith.divf %164, %167 : vector<8x8xf32>
    %169 = vector.extract_strided_slice %86 {offsets = [0, 96], sizes = [8, 32], strides = [1, 1]} : vector<8x128xf32> to vector<8x32xf32>
    %cst_47 = arith.constant dense<0.000000e+00> : vector<8x32xf32>
    %170 = tpu.matmul %168, %169, %cst_47 {dimension_numbers = #tpu.dot_dimension_numbers<[1], [0], [0], [1], [0, 0, 1, 1], [], []>} : vector<8x8xf32>, vector<8x32xf32>, vector<8x32xf32> -> vector<8x32xf32>
    %c96 = arith.constant 96 : index
    %c0_48 = arith.constant 0 : index
    %171 = vector.load %arg7[%c96, %c0_48] : memref<128x128xf32, #tpu.memory_space<vmem>>, vector<32x128xf32>
    %cst_49 = arith.constant dense<0.000000e+00> : vector<8x128xf32>
    %172 = tpu.matmul %170, %171, %cst_49 {dimension_numbers = #tpu.dot_dimension_numbers<[1], [0], [0], [1], [0, 0, 1, 1], [], []>} : vector<8x32xf32>, vector<32x128xf32>, vector<8x128xf32> -> vector<8x128xf32>
    %173 = arith.addf %153, %172 : vector<8x128xf32>
    %174 = arith.addf %78, %173 : vector<8x128xf32>
    %c0_50 = arith.constant 0 : index
    %c0_51 = arith.constant 0 : index
    %175 = vector.load %arg8[%c0_50, %c0_51] : memref<1x128xf32, #tpu.memory_space<vmem>>, vector<1x128xf32>
    %176 = vector.broadcast %175 : vector<1x128xf32> to vector<8x128xf32>
    %177 = arith.addf %174, %176 : vector<8x128xf32>
    %c0_52 = arith.constant 0 : index
    %c0_53 = arith.constant 0 : index
    %178 = vector.load %arg9[%c0_52, %c0_53] : memref<1x128xf32, #tpu.memory_space<vmem>>, vector<1x128xf32>
    %c0_54 = arith.constant 0 : index
    %c0_55 = arith.constant 0 : index
    %179 = vector.load %arg10[%c0_54, %c0_55] : memref<1x128xf32, #tpu.memory_space<vmem>>, vector<1x128xf32>
    %cst_56 = arith.constant dense<0.000000e+00> : vector<8xf32>
    %180 = vector.multi_reduction <add>, %177, %cst_56 [1] : vector<8x128xf32> to vector<8xf32>
    %181 = vector.shape_cast %180 : vector<8xf32> to vector<8x1xf32>
    %cst_57 = arith.constant 1.280000e+02 : f32
    %182 = vector.broadcast %cst_57 : f32 to vector<8x1xf32>
    %183 = arith.divf %181, %182 : vector<8x1xf32>
    %184 = vector.broadcast %183 : vector<8x1xf32> to vector<8x128xf32>
    %185 = arith.subf %177, %184 : vector<8x128xf32>
    %186 = arith.mulf %185, %185 : vector<8x128xf32>
    %cst_58 = arith.constant dense<0.000000e+00> : vector<8xf32>
    %187 = vector.multi_reduction <add>, %186, %cst_58 [1] : vector<8x128xf32> to vector<8xf32>
    %188 = vector.shape_cast %187 : vector<8xf32> to vector<8x1xf32>
    %cst_59 = arith.constant 1.280000e+02 : f32
    %189 = vector.broadcast %cst_59 : f32 to vector<8x1xf32>
    %190 = arith.divf %188, %189 : vector<8x1xf32>
    %191 = vector.broadcast %183 : vector<8x1xf32> to vector<8x128xf32>
    %192 = arith.subf %177, %191 : vector<8x128xf32>
    %cst_60 = arith.constant 9.99999974E-6 : f32
    %193 = vector.broadcast %cst_60 : f32 to vector<8x1xf32>
    %194 = arith.addf %190, %193 : vector<8x1xf32>
    %195 = math.rsqrt %194 : vector<8x1xf32>
    %196 = vector.broadcast %195 : vector<8x1xf32> to vector<8x128xf32>
    %197 = arith.mulf %192, %196 : vector<8x128xf32>
    %198 = vector.broadcast %178 : vector<1x128xf32> to vector<8x128xf32>
    %199 = arith.mulf %197, %198 : vector<8x128xf32>
    %200 = vector.broadcast %179 : vector<1x128xf32> to vector<8x128xf32>
    %201 = arith.addf %199, %200 : vector<8x128xf32>
    %c0_61 = arith.constant 0 : index
    %c0_62 = arith.constant 0 : index
    %c0_63 = arith.constant 0 : index
    %202 = vector.load %arg2[%c0_61, %c0_62, %c0_63] : memref<1x256x128xf32, #tpu.memory_space<vmem>>, vector<1x256x128xf32>
    %203 = vector.shape_cast %202 : vector<1x256x128xf32> to vector<256x128xf32>
    %204 = tpu.iota {dimensions = array<i32: 1>} : vector<8x256xi32>
    %c220_i32 = arith.constant 220 : i32
    %205 = vector.broadcast %c220_i32 : i32 to vector<8x256xi32>
    %206 = arith.cmpi slt, %204, %205 : vector<8x256xi32>
    %cst_64 = arith.constant 0.000000e+00 : f32
    %cst_65 = arith.constant -1.000000e+09 : f32
    %207 = vector.broadcast %cst_64 : f32 to vector<8x256xf32>
    %208 = vector.broadcast %cst_65 : f32 to vector<8x256xf32>
    %209 = arith.select %206, %207, %208 : vector<8x256xi1>, vector<8x256xf32>
    %c0_66 = arith.constant 0 : index
    %c0_67 = arith.constant 0 : index
    %210 = vector.load %arg11[%c0_66, %c0_67] : memref<128x128xf32, #tpu.memory_space<vmem>>, vector<128x128xf32>
    %cst_68 = arith.constant dense<0.000000e+00> : vector<8x128xf32>
    %211 = tpu.matmul %201, %210, %cst_68 {dimension_numbers = #tpu.dot_dimension_numbers<[1], [0], [0], [1], [0, 0, 1, 1], [], []>} : vector<8x128xf32>, vector<128x128xf32>, vector<8x128xf32> -> vector<8x128xf32>
    %c0_69 = arith.constant 0 : index
    %c0_70 = arith.constant 0 : index
    %212 = vector.load %arg12[%c0_69, %c0_70] : memref<1x128xf32, #tpu.memory_space<vmem>>, vector<1x128xf32>
    %213 = vector.broadcast %212 : vector<1x128xf32> to vector<8x128xf32>
    %214 = arith.addf %211, %213 : vector<8x128xf32>
    %c0_71 = arith.constant 0 : index
    %c0_72 = arith.constant 0 : index
    %215 = vector.load %arg13[%c0_71, %c0_72] : memref<128x256xf32, #tpu.memory_space<vmem>>, vector<128x256xf32>
    %cst_73 = arith.constant dense<0.000000e+00> : vector<256x256xf32>
    %216 = tpu.matmul %203, %215, %cst_73 {dimension_numbers = #tpu.dot_dimension_numbers<[1], [0], [0], [1], [0, 0, 1, 1], [], []>} : vector<256x128xf32>, vector<128x256xf32>, vector<256x256xf32> -> vector<256x256xf32>
    %c0_74 = arith.constant 0 : index
    %c0_75 = arith.constant 0 : index
    %217 = vector.load %arg14[%c0_74, %c0_75] : memref<1x256xf32, #tpu.memory_space<vmem>>, vector<1x256xf32>
    %218 = vector.broadcast %217 : vector<1x256xf32> to vector<256x256xf32>
    %219 = arith.addf %216, %218 : vector<256x256xf32>
    %220 = vector.extract_strided_slice %219 {offsets = [0, 0], sizes = [256, 128], strides = [1, 1]} : vector<256x256xf32> to vector<256x128xf32>
    %221 = vector.extract_strided_slice %219 {offsets = [0, 128], sizes = [256, 128], strides = [1, 1]} : vector<256x256xf32> to vector<256x128xf32>
    %cst_76 = arith.constant 0.000000e+00 : f32
    %222 = vector.broadcast %cst_76 : f32 to vector<8x128xf32>
    %223 = vector.extract_strided_slice %214 {offsets = [0, 0], sizes = [8, 32], strides = [1, 1]} : vector<8x128xf32> to vector<8x32xf32>
    %224 = vector.extract_strided_slice %220 {offsets = [0, 0], sizes = [256, 32], strides = [1, 1]} : vector<256x128xf32> to vector<256x32xf32>
    %cst_77 = arith.constant dense<0.000000e+00> : vector<8x256xf32>
    %225 = tpu.matmul %223, %224, %cst_77 {dimension_numbers = #tpu.dot_dimension_numbers<[1], [1], [0], [0], [0, 0, 1, 0], [], []>} : vector<8x32xf32>, vector<256x32xf32>, vector<8x256xf32> -> vector<8x256xf32>
    %cst_78 = arith.constant 0.176776692 : f32
    %226 = vector.broadcast %cst_78 : f32 to vector<8x256xf32>
    %227 = arith.mulf %225, %226 : vector<8x256xf32>
    %228 = arith.addf %227, %209 : vector<8x256xf32>
    %cst_79 = arith.constant dense<0xFF800000> : vector<8xf32>
    %229 = vector.multi_reduction <maximumf>, %228, %cst_79 [1] : vector<8x256xf32> to vector<8xf32>
    %230 = vector.shape_cast %229 : vector<8xf32> to vector<8x1xf32>
    %231 = vector.broadcast %230 : vector<8x1xf32> to vector<8x256xf32>
    %232 = arith.subf %228, %231 : vector<8x256xf32>
    %233 = math.exp %232 : vector<8x256xf32>
    %cst_80 = arith.constant dense<0.000000e+00> : vector<8xf32>
    %234 = vector.multi_reduction <add>, %233, %cst_80 [1] : vector<8x256xf32> to vector<8xf32>
    %235 = vector.shape_cast %234 : vector<8xf32> to vector<8x1xf32>
    %236 = vector.broadcast %235 : vector<8x1xf32> to vector<8x256xf32>
    %237 = arith.divf %233, %236 : vector<8x256xf32>
    %238 = vector.extract_strided_slice %221 {offsets = [0, 0], sizes = [256, 32], strides = [1, 1]} : vector<256x128xf32> to vector<256x32xf32>
    %cst_81 = arith.constant dense<0.000000e+00> : vector<8x32xf32>
    %239 = tpu.matmul %237, %238, %cst_81 {dimension_numbers = #tpu.dot_dimension_numbers<[1], [0], [0], [1], [0, 0, 1, 1], [], []>} : vector<8x256xf32>, vector<256x32xf32>, vector<8x32xf32> -> vector<8x32xf32>
    %c0_82 = arith.constant 0 : index
    %c0_83 = arith.constant 0 : index
    %240 = vector.load %arg15[%c0_82, %c0_83] : memref<128x128xf32, #tpu.memory_space<vmem>>, vector<32x128xf32>
    %cst_84 = arith.constant dense<0.000000e+00> : vector<8x128xf32>
    %241 = tpu.matmul %239, %240, %cst_84 {dimension_numbers = #tpu.dot_dimension_numbers<[1], [0], [0], [1], [0, 0, 1, 1], [], []>} : vector<8x32xf32>, vector<32x128xf32>, vector<8x128xf32> -> vector<8x128xf32>
    %242 = arith.addf %222, %241 : vector<8x128xf32>
    %243 = vector.extract_strided_slice %214 {offsets = [0, 32], sizes = [8, 32], strides = [1, 1]} : vector<8x128xf32> to vector<8x32xf32>
    %244 = vector.extract_strided_slice %220 {offsets = [0, 32], sizes = [256, 32], strides = [1, 1]} : vector<256x128xf32> to vector<256x32xf32>
    %cst_85 = arith.constant dense<0.000000e+00> : vector<8x256xf32>
    %245 = tpu.matmul %243, %244, %cst_85 {dimension_numbers = #tpu.dot_dimension_numbers<[1], [1], [0], [0], [0, 0, 1, 0], [], []>} : vector<8x32xf32>, vector<256x32xf32>, vector<8x256xf32> -> vector<8x256xf32>
    %cst_86 = arith.constant 0.176776692 : f32
    %246 = vector.broadcast %cst_86 : f32 to vector<8x256xf32>
    %247 = arith.mulf %245, %246 : vector<8x256xf32>
    %248 = arith.addf %247, %209 : vector<8x256xf32>
    %cst_87 = arith.constant dense<0xFF800000> : vector<8xf32>
    %249 = vector.multi_reduction <maximumf>, %248, %cst_87 [1] : vector<8x256xf32> to vector<8xf32>
    %250 = vector.shape_cast %249 : vector<8xf32> to vector<8x1xf32>
    %251 = vector.broadcast %250 : vector<8x1xf32> to vector<8x256xf32>
    %252 = arith.subf %248, %251 : vector<8x256xf32>
    %253 = math.exp %252 : vector<8x256xf32>
    %cst_88 = arith.constant dense<0.000000e+00> : vector<8xf32>
    %254 = vector.multi_reduction <add>, %253, %cst_88 [1] : vector<8x256xf32> to vector<8xf32>
    %255 = vector.shape_cast %254 : vector<8xf32> to vector<8x1xf32>
    %256 = vector.broadcast %255 : vector<8x1xf32> to vector<8x256xf32>
    %257 = arith.divf %253, %256 : vector<8x256xf32>
    %258 = vector.extract_strided_slice %221 {offsets = [0, 32], sizes = [256, 32], strides = [1, 1]} : vector<256x128xf32> to vector<256x32xf32>
    %cst_89 = arith.constant dense<0.000000e+00> : vector<8x32xf32>
    %259 = tpu.matmul %257, %258, %cst_89 {dimension_numbers = #tpu.dot_dimension_numbers<[1], [0], [0], [1], [0, 0, 1, 1], [], []>} : vector<8x256xf32>, vector<256x32xf32>, vector<8x32xf32> -> vector<8x32xf32>
    %c32_90 = arith.constant 32 : index
    %c0_91 = arith.constant 0 : index
    %260 = vector.load %arg15[%c32_90, %c0_91] : memref<128x128xf32, #tpu.memory_space<vmem>>, vector<32x128xf32>
    %cst_92 = arith.constant dense<0.000000e+00> : vector<8x128xf32>
    %261 = tpu.matmul %259, %260, %cst_92 {dimension_numbers = #tpu.dot_dimension_numbers<[1], [0], [0], [1], [0, 0, 1, 1], [], []>} : vector<8x32xf32>, vector<32x128xf32>, vector<8x128xf32> -> vector<8x128xf32>
    %262 = arith.addf %242, %261 : vector<8x128xf32>
    %263 = vector.extract_strided_slice %214 {offsets = [0, 64], sizes = [8, 32], strides = [1, 1]} : vector<8x128xf32> to vector<8x32xf32>
    %264 = vector.extract_strided_slice %220 {offsets = [0, 64], sizes = [256, 32], strides = [1, 1]} : vector<256x128xf32> to vector<256x32xf32>
    %cst_93 = arith.constant dense<0.000000e+00> : vector<8x256xf32>
    %265 = tpu.matmul %263, %264, %cst_93 {dimension_numbers = #tpu.dot_dimension_numbers<[1], [1], [0], [0], [0, 0, 1, 0], [], []>} : vector<8x32xf32>, vector<256x32xf32>, vector<8x256xf32> -> vector<8x256xf32>
    %cst_94 = arith.constant 0.176776692 : f32
    %266 = vector.broadcast %cst_94 : f32 to vector<8x256xf32>
    %267 = arith.mulf %265, %266 : vector<8x256xf32>
    %268 = arith.addf %267, %209 : vector<8x256xf32>
    %cst_95 = arith.constant dense<0xFF800000> : vector<8xf32>
    %269 = vector.multi_reduction <maximumf>, %268, %cst_95 [1] : vector<8x256xf32> to vector<8xf32>
    %270 = vector.shape_cast %269 : vector<8xf32> to vector<8x1xf32>
    %271 = vector.broadcast %270 : vector<8x1xf32> to vector<8x256xf32>
    %272 = arith.subf %268, %271 : vector<8x256xf32>
    %273 = math.exp %272 : vector<8x256xf32>
    %cst_96 = arith.constant dense<0.000000e+00> : vector<8xf32>
    %274 = vector.multi_reduction <add>, %273, %cst_96 [1] : vector<8x256xf32> to vector<8xf32>
    %275 = vector.shape_cast %274 : vector<8xf32> to vector<8x1xf32>
    %276 = vector.broadcast %275 : vector<8x1xf32> to vector<8x256xf32>
    %277 = arith.divf %273, %276 : vector<8x256xf32>
    %278 = vector.extract_strided_slice %221 {offsets = [0, 64], sizes = [256, 32], strides = [1, 1]} : vector<256x128xf32> to vector<256x32xf32>
    %cst_97 = arith.constant dense<0.000000e+00> : vector<8x32xf32>
    %279 = tpu.matmul %277, %278, %cst_97 {dimension_numbers = #tpu.dot_dimension_numbers<[1], [0], [0], [1], [0, 0, 1, 1], [], []>} : vector<8x256xf32>, vector<256x32xf32>, vector<8x32xf32> -> vector<8x32xf32>
    %c64_98 = arith.constant 64 : index
    %c0_99 = arith.constant 0 : index
    %280 = vector.load %arg15[%c64_98, %c0_99] : memref<128x128xf32, #tpu.memory_space<vmem>>, vector<32x128xf32>
    %cst_100 = arith.constant dense<0.000000e+00> : vector<8x128xf32>
    %281 = tpu.matmul %279, %280, %cst_100 {dimension_numbers = #tpu.dot_dimension_numbers<[1], [0], [0], [1], [0, 0, 1, 1], [], []>} : vector<8x32xf32>, vector<32x128xf32>, vector<8x128xf32> -> vector<8x128xf32>
    %282 = arith.addf %262, %281 : vector<8x128xf32>
    %283 = vector.extract_strided_slice %214 {offsets = [0, 96], sizes = [8, 32], strides = [1, 1]} : vector<8x128xf32> to vector<8x32xf32>
    %284 = vector.extract_strided_slice %220 {offsets = [0, 96], sizes = [256, 32], strides = [1, 1]} : vector<256x128xf32> to vector<256x32xf32>
    %cst_101 = arith.constant dense<0.000000e+00> : vector<8x256xf32>
    %285 = tpu.matmul %283, %284, %cst_101 {dimension_numbers = #tpu.dot_dimension_numbers<[1], [1], [0], [0], [0, 0, 1, 0], [], []>} : vector<8x32xf32>, vector<256x32xf32>, vector<8x256xf32> -> vector<8x256xf32>
    %cst_102 = arith.constant 0.176776692 : f32
    %286 = vector.broadcast %cst_102 : f32 to vector<8x256xf32>
    %287 = arith.mulf %285, %286 : vector<8x256xf32>
    %288 = arith.addf %287, %209 : vector<8x256xf32>
    %cst_103 = arith.constant dense<0xFF800000> : vector<8xf32>
    %289 = vector.multi_reduction <maximumf>, %288, %cst_103 [1] : vector<8x256xf32> to vector<8xf32>
    %290 = vector.shape_cast %289 : vector<8xf32> to vector<8x1xf32>
    %291 = vector.broadcast %290 : vector<8x1xf32> to vector<8x256xf32>
    %292 = arith.subf %288, %291 : vector<8x256xf32>
    %293 = math.exp %292 : vector<8x256xf32>
    %cst_104 = arith.constant dense<0.000000e+00> : vector<8xf32>
    %294 = vector.multi_reduction <add>, %293, %cst_104 [1] : vector<8x256xf32> to vector<8xf32>
    %295 = vector.shape_cast %294 : vector<8xf32> to vector<8x1xf32>
    %296 = vector.broadcast %295 : vector<8x1xf32> to vector<8x256xf32>
    %297 = arith.divf %293, %296 : vector<8x256xf32>
    %298 = vector.extract_strided_slice %221 {offsets = [0, 96], sizes = [256, 32], strides = [1, 1]} : vector<256x128xf32> to vector<256x32xf32>
    %cst_105 = arith.constant dense<0.000000e+00> : vector<8x32xf32>
    %299 = tpu.matmul %297, %298, %cst_105 {dimension_numbers = #tpu.dot_dimension_numbers<[1], [0], [0], [1], [0, 0, 1, 1], [], []>} : vector<8x256xf32>, vector<256x32xf32>, vector<8x32xf32> -> vector<8x32xf32>
    %c96_106 = arith.constant 96 : index
    %c0_107 = arith.constant 0 : index
    %300 = vector.load %arg15[%c96_106, %c0_107] : memref<128x128xf32, #tpu.memory_space<vmem>>, vector<32x128xf32>
    %cst_108 = arith.constant dense<0.000000e+00> : vector<8x128xf32>
    %301 = tpu.matmul %299, %300, %cst_108 {dimension_numbers = #tpu.dot_dimension_numbers<[1], [0], [0], [1], [0, 0, 1, 1], [], []>} : vector<8x32xf32>, vector<32x128xf32>, vector<8x128xf32> -> vector<8x128xf32>
    %302 = arith.addf %282, %301 : vector<8x128xf32>
    %303 = arith.addf %201, %302 : vector<8x128xf32>
    %c0_109 = arith.constant 0 : index
    %c0_110 = arith.constant 0 : index
    %304 = vector.load %arg16[%c0_109, %c0_110] : memref<1x128xf32, #tpu.memory_space<vmem>>, vector<1x128xf32>
    %305 = vector.broadcast %304 : vector<1x128xf32> to vector<8x128xf32>
    %306 = arith.addf %303, %305 : vector<8x128xf32>
    %c0_111 = arith.constant 0 : index
    %c0_112 = arith.constant 0 : index
    %307 = vector.load %arg17[%c0_111, %c0_112] : memref<1x128xf32, #tpu.memory_space<vmem>>, vector<1x128xf32>
    %c0_113 = arith.constant 0 : index
    %c0_114 = arith.constant 0 : index
    %308 = vector.load %arg18[%c0_113, %c0_114] : memref<1x128xf32, #tpu.memory_space<vmem>>, vector<1x128xf32>
    %cst_115 = arith.constant dense<0.000000e+00> : vector<8xf32>
    %309 = vector.multi_reduction <add>, %306, %cst_115 [1] : vector<8x128xf32> to vector<8xf32>
    %310 = vector.shape_cast %309 : vector<8xf32> to vector<8x1xf32>
    %cst_116 = arith.constant 1.280000e+02 : f32
    %311 = vector.broadcast %cst_116 : f32 to vector<8x1xf32>
    %312 = arith.divf %310, %311 : vector<8x1xf32>
    %313 = vector.broadcast %312 : vector<8x1xf32> to vector<8x128xf32>
    %314 = arith.subf %306, %313 : vector<8x128xf32>
    %315 = arith.mulf %314, %314 : vector<8x128xf32>
    %cst_117 = arith.constant dense<0.000000e+00> : vector<8xf32>
    %316 = vector.multi_reduction <add>, %315, %cst_117 [1] : vector<8x128xf32> to vector<8xf32>
    %317 = vector.shape_cast %316 : vector<8xf32> to vector<8x1xf32>
    %cst_118 = arith.constant 1.280000e+02 : f32
    %318 = vector.broadcast %cst_118 : f32 to vector<8x1xf32>
    %319 = arith.divf %317, %318 : vector<8x1xf32>
    %320 = vector.broadcast %312 : vector<8x1xf32> to vector<8x128xf32>
    %321 = arith.subf %306, %320 : vector<8x128xf32>
    %cst_119 = arith.constant 9.99999974E-6 : f32
    %322 = vector.broadcast %cst_119 : f32 to vector<8x1xf32>
    %323 = arith.addf %319, %322 : vector<8x1xf32>
    %324 = math.rsqrt %323 : vector<8x1xf32>
    %325 = vector.broadcast %324 : vector<8x1xf32> to vector<8x128xf32>
    %326 = arith.mulf %321, %325 : vector<8x128xf32>
    %327 = vector.broadcast %307 : vector<1x128xf32> to vector<8x128xf32>
    %328 = arith.mulf %326, %327 : vector<8x128xf32>
    %329 = vector.broadcast %308 : vector<1x128xf32> to vector<8x128xf32>
    %330 = arith.addf %328, %329 : vector<8x128xf32>
    %c0_120 = arith.constant 0 : index
    %c0_121 = arith.constant 0 : index
    %331 = vector.load %arg19[%c0_120, %c0_121] : memref<128x512xf32, #tpu.memory_space<vmem>>, vector<128x512xf32>
    %cst_122 = arith.constant dense<0.000000e+00> : vector<8x512xf32>
    %332 = tpu.matmul %330, %331, %cst_122 {dimension_numbers = #tpu.dot_dimension_numbers<[1], [0], [0], [1], [0, 0, 1, 1], [], []>} : vector<8x128xf32>, vector<128x512xf32>, vector<8x512xf32> -> vector<8x512xf32>
    %c0_123 = arith.constant 0 : index
    %c0_124 = arith.constant 0 : index
    %333 = vector.load %arg20[%c0_123, %c0_124] : memref<1x512xf32, #tpu.memory_space<vmem>>, vector<1x512xf32>
    %334 = vector.broadcast %333 : vector<1x512xf32> to vector<8x512xf32>
    %335 = arith.addf %332, %334 : vector<8x512xf32>
    %cst_125 = arith.constant 0.000000e+00 : f32
    %336 = vector.broadcast %cst_125 : f32 to vector<8x512xf32>
    %337 = arith.maximumf %335, %336 : vector<8x512xf32>
    %c0_126 = arith.constant 0 : index
    %c0_127 = arith.constant 0 : index
    %338 = vector.load %arg21[%c0_126, %c0_127] : memref<512x128xf32, #tpu.memory_space<vmem>>, vector<512x128xf32>
    %cst_128 = arith.constant dense<0.000000e+00> : vector<8x128xf32>
    %339 = tpu.matmul %337, %338, %cst_128 {dimension_numbers = #tpu.dot_dimension_numbers<[1], [0], [0], [1], [0, 0, 1, 1], [], []>} : vector<8x512xf32>, vector<512x128xf32>, vector<8x128xf32> -> vector<8x128xf32>
    %c0_129 = arith.constant 0 : index
    %c0_130 = arith.constant 0 : index
    %340 = vector.load %arg22[%c0_129, %c0_130] : memref<1x128xf32, #tpu.memory_space<vmem>>, vector<1x128xf32>
    %341 = vector.broadcast %340 : vector<1x128xf32> to vector<8x128xf32>
    %342 = arith.addf %339, %341 : vector<8x128xf32>
    %343 = arith.addf %330, %342 : vector<8x128xf32>
    %c0_131 = arith.constant 0 : index
    %c0_132 = arith.constant 0 : index
    %344 = vector.load %arg23[%c0_131, %c0_132] : memref<1x128xf32, #tpu.memory_space<vmem>>, vector<1x128xf32>
    %c0_133 = arith.constant 0 : index
    %c0_134 = arith.constant 0 : index
    %345 = vector.load %arg24[%c0_133, %c0_134] : memref<1x128xf32, #tpu.memory_space<vmem>>, vector<1x128xf32>
    %cst_135 = arith.constant dense<0.000000e+00> : vector<8xf32>
    %346 = vector.multi_reduction <add>, %343, %cst_135 [1] : vector<8x128xf32> to vector<8xf32>
    %347 = vector.shape_cast %346 : vector<8xf32> to vector<8x1xf32>
    %cst_136 = arith.constant 1.280000e+02 : f32
    %348 = vector.broadcast %cst_136 : f32 to vector<8x1xf32>
    %349 = arith.divf %347, %348 : vector<8x1xf32>
    %350 = vector.broadcast %349 : vector<8x1xf32> to vector<8x128xf32>
    %351 = arith.subf %343, %350 : vector<8x128xf32>
    %352 = arith.mulf %351, %351 : vector<8x128xf32>
    %cst_137 = arith.constant dense<0.000000e+00> : vector<8xf32>
    %353 = vector.multi_reduction <add>, %352, %cst_137 [1] : vector<8x128xf32> to vector<8xf32>
    %354 = vector.shape_cast %353 : vector<8xf32> to vector<8x1xf32>
    %cst_138 = arith.constant 1.280000e+02 : f32
    %355 = vector.broadcast %cst_138 : f32 to vector<8x1xf32>
    %356 = arith.divf %354, %355 : vector<8x1xf32>
    %357 = vector.broadcast %349 : vector<8x1xf32> to vector<8x128xf32>
    %358 = arith.subf %343, %357 : vector<8x128xf32>
    %cst_139 = arith.constant 9.99999974E-6 : f32
    %359 = vector.broadcast %cst_139 : f32 to vector<8x1xf32>
    %360 = arith.addf %356, %359 : vector<8x1xf32>
    %361 = math.rsqrt %360 : vector<8x1xf32>
    %362 = vector.broadcast %361 : vector<8x1xf32> to vector<8x128xf32>
    %363 = arith.mulf %358, %362 : vector<8x128xf32>
    %364 = vector.broadcast %344 : vector<1x128xf32> to vector<8x128xf32>
    %365 = arith.mulf %363, %364 : vector<8x128xf32>
    %366 = vector.broadcast %345 : vector<1x128xf32> to vector<8x128xf32>
    %367 = arith.addf %365, %366 : vector<8x128xf32>
    %c0_140 = arith.constant 0 : index
    %c0_141 = arith.constant 0 : index
    %368 = vector.load %arg25[%c0_140, %c0_141] : memref<128x128xf32, #tpu.memory_space<vmem>>, vector<128x128xf32>
    %cst_142 = arith.constant dense<0.000000e+00> : vector<8x128xf32>
    %369 = tpu.matmul %367, %368, %cst_142 {dimension_numbers = #tpu.dot_dimension_numbers<[1], [0], [0], [1], [0, 0, 1, 1], [], []>} : vector<8x128xf32>, vector<128x128xf32>, vector<8x128xf32> -> vector<8x128xf32>
    %c0_143 = arith.constant 0 : index
    %c0_144 = arith.constant 0 : index
    %370 = vector.load %arg26[%c0_143, %c0_144] : memref<1x128xf32, #tpu.memory_space<vmem>>, vector<1x128xf32>
    %371 = vector.broadcast %370 : vector<1x128xf32> to vector<8x128xf32>
    %372 = arith.addf %369, %371 : vector<8x128xf32>
    %c0_145 = arith.constant 0 : index
    %c0_146 = arith.constant 0 : index
    %c0_147 = arith.constant 0 : index
    %373 = vector.load %arg27[%c0_145, %c0_146, %c0_147] : memref<1x8x128xf32, #tpu.memory_space<vmem>>, vector<1x8x128xf32>
    %374 = vector.shape_cast %373 : vector<1x8x128xf32> to vector<8x128xf32>
    %375 = vector.shape_cast %372 : vector<8x128xf32> to vector<1x8x128xf32>
    tpu.vector_store %arg27[%c0_145, %c0_146, %c0_147], %375 {strides = array<i32>} : memref<1x8x128xf32, #tpu.memory_space<vmem>>, vector<1x8x128xf32>,
    return
  }
  func.func @transform_0(%arg0: i32, %arg1: memref<2x8xi32, #tpu.memory_space<smem>>) -> (i32, i32, i32) {
    %c0_i32 = arith.constant 0 : i32
    %c0_i32_0 = arith.constant 0 : i32
    %c0_i32_1 = arith.constant 0 : i32
    return %arg0, %c0_i32, %c0_i32_0 : i32, i32, i32
  }
  func.func @transform_1(%arg0: i32, %arg1: memref<2x8xi32, #tpu.memory_space<smem>>) -> (i32, i32) {
    %c0_i32 = arith.constant 0 : i32
    %c0_i32_0 = arith.constant 0 : i32
    %c0_i32_1 = arith.constant 0 : i32
    return %c0_i32, %c0_i32_0 : i32, i32
  }
  func.func @transform_2(%arg0: i32, %arg1: memref<2x8xi32, #tpu.memory_space<smem>>) -> (i32, i32) {
    %c0_i32 = arith.constant 0 : i32
    %c0_i32_0 = arith.constant 0 : i32
    %c0_i32_1 = arith.constant 0 : i32
    return %c0_i32, %c0_i32_0 : i32, i32
  }
  func.func @transform_3(%arg0: i32, %arg1: memref<2x8xi32, #tpu.memory_space<smem>>) -> (i32, i32) {
    %c0_i32 = arith.constant 0 : i32
    %c0_i32_0 = arith.constant 0 : i32
    %c0_i32_1 = arith.constant 0 : i32
    return %c0_i32, %c0_i32_0 : i32, i32
  }
  func.func @transform_4(%arg0: i32, %arg1: memref<2x8xi32, #tpu.memory_space<smem>>) -> (i32, i32) {
    %c0_i32 = arith.constant 0 : i32
    %c0_i32_0 = arith.constant 0 : i32
    %c0_i32_1 = arith.constant 0 : i32
    return %c0_i32, %c0_i32_0 : i32, i32
  }
  func.func @transform_5(%arg0: i32, %arg1: memref<2x8xi32, #tpu.memory_space<smem>>) -> (i32, i32) {
    %c0_i32 = arith.constant 0 : i32
    %c0_i32_0 = arith.constant 0 : i32
    %c0_i32_1 = arith.constant 0 : i32
    return %c0_i32, %c0_i32_0 : i32, i32
  }
  func.func @transform_6(%arg0: i32, %arg1: memref<2x8xi32, #tpu.memory_space<smem>>) -> (i32, i32) {
    %c0_i32 = arith.constant 0 : i32
    %c0_i32_0 = arith.constant 0 : i32
    %c0_i32_1 = arith.constant 0 : i32
    return %c0_i32, %c0_i32_0 : i32, i32
  }
  func.func @transform_7(%arg0: i32, %arg1: memref<2x8xi32, #tpu.memory_space<smem>>) -> (i32, i32) {
    %c0_i32 = arith.constant 0 : i32
    %c0_i32_0 = arith.constant 0 : i32
    %c0_i32_1 = arith.constant 0 : i32
    return %c0_i32, %c0_i32_0 : i32, i32
  }
  func.func @transform_8(%arg0: i32, %arg1: memref<2x8xi32, #tpu.memory_space<smem>>) -> (i32, i32) {
    %c0_i32 = arith.constant 0 : i32
    %c0_i32_0 = arith.constant 0 : i32
    %c0_i32_1 = arith.constant 0 : i32
    return %c0_i32, %c0_i32_0 : i32, i32
  }
  func.func @transform_9(%arg0: i32, %arg1: memref<2x8xi32, #tpu.memory_space<smem>>) -> (i32, i32) {
    %c0_i32 = arith.constant 0 : i32
    %c0_i32_0 = arith.constant 0 : i32
    %c0_i32_1 = arith.constant 0 : i32
    return %c0_i32, %c0_i32_0 : i32, i32
  }
  func.func @transform_10(%arg0: i32, %arg1: memref<2x8xi32, #tpu.memory_space<smem>>) -> (i32, i32) {
    %c0_i32 = arith.constant 0 : i32
    %c0_i32_0 = arith.constant 0 : i32
    %c0_i32_1 = arith.constant 0 : i32
    return %c0_i32, %c0_i32_0 : i32, i32
  }
  func.func @transform_11(%arg0: i32, %arg1: memref<2x8xi32, #tpu.memory_space<smem>>) -> (i32, i32) {
    %c0_i32 = arith.constant 0 : i32
    %c0_i32_0 = arith.constant 0 : i32
    %c0_i32_1 = arith.constant 0 : i32
    return %c0_i32, %c0_i32_0 : i32, i32
  }
  func.func @transform_12(%arg0: i32, %arg1: memref<2x8xi32, #tpu.memory_space<smem>>) -> (i32, i32) {
    %c0_i32 = arith.constant 0 : i32
    %c0_i32_0 = arith.constant 0 : i32
    %c0_i32_1 = arith.constant 0 : i32
    return %c0_i32, %c0_i32_0 : i32, i32
  }
  func.func @transform_13(%arg0: i32, %arg1: memref<2x8xi32, #tpu.memory_space<smem>>) -> (i32, i32) {
    %c0_i32 = arith.constant 0 : i32
    %c0_i32_0 = arith.constant 0 : i32
    %c0_i32_1 = arith.constant 0 : i32
    return %c0_i32, %c0_i32_0 : i32, i32
  }
  func.func @transform_14(%arg0: i32, %arg1: memref<2x8xi32, #tpu.memory_space<smem>>) -> (i32, i32) {
    %c0_i32 = arith.constant 0 : i32
    %c0_i32_0 = arith.constant 0 : i32
    %c0_i32_1 = arith.constant 0 : i32
    return %c0_i32, %c0_i32_0 : i32, i32
  }
  func.func @transform_15(%arg0: i32, %arg1: memref<2x8xi32, #tpu.memory_space<smem>>) -> (i32, i32) {
    %c0_i32 = arith.constant 0 : i32
    %c0_i32_0 = arith.constant 0 : i32
    %c0_i32_1 = arith.constant 0 : i32
    return %c0_i32, %c0_i32_0 : i32, i32
  }
  func.func @transform_16(%arg0: i32, %arg1: memref<2x8xi32, #tpu.memory_space<smem>>) -> (i32, i32) {
    %c0_i32 = arith.constant 0 : i32
    %c0_i32_0 = arith.constant 0 : i32
    %c0_i32_1 = arith.constant 0 : i32
    return %c0_i32, %c0_i32_0 : i32, i32
  }
  func.func @transform_17(%arg0: i32, %arg1: memref<2x8xi32, #tpu.memory_space<smem>>) -> (i32, i32) {
    %c0_i32 = arith.constant 0 : i32
    %c0_i32_0 = arith.constant 0 : i32
    %c0_i32_1 = arith.constant 0 : i32
    return %c0_i32, %c0_i32_0 : i32, i32
  }
  func.func @transform_18(%arg0: i32, %arg1: memref<2x8xi32, #tpu.memory_space<smem>>) -> (i32, i32) {
    %c0_i32 = arith.constant 0 : i32
    %c0_i32_0 = arith.constant 0 : i32
    %c0_i32_1 = arith.constant 0 : i32
    return %c0_i32, %c0_i32_0 : i32, i32
  }
  func.func @transform_19(%arg0: i32, %arg1: memref<2x8xi32, #tpu.memory_space<smem>>) -> (i32, i32) {
    %c0_i32 = arith.constant 0 : i32
    %c0_i32_0 = arith.constant 0 : i32
    %c0_i32_1 = arith.constant 0 : i32
    return %c0_i32, %c0_i32_0 : i32, i32
  }
  func.func @transform_20(%arg0: i32, %arg1: memref<2x8xi32, #tpu.memory_space<smem>>) -> (i32, i32) {
    %c0_i32 = arith.constant 0 : i32
    %c0_i32_0 = arith.constant 0 : i32
    %c0_i32_1 = arith.constant 0 : i32
    return %c0_i32, %c0_i32_0 : i32, i32
  }
  func.func @transform_21(%arg0: i32, %arg1: memref<2x8xi32, #tpu.memory_space<smem>>) -> (i32, i32) {
    %c0_i32 = arith.constant 0 : i32
    %c0_i32_0 = arith.constant 0 : i32
    %c0_i32_1 = arith.constant 0 : i32
    return %c0_i32, %c0_i32_0 : i32, i32
  }
  func.func @transform_22(%arg0: i32, %arg1: memref<2x8xi32, #tpu.memory_space<smem>>) -> (i32, i32) {
    %c0_i32 = arith.constant 0 : i32
    %c0_i32_0 = arith.constant 0 : i32
    %c0_i32_1 = arith.constant 0 : i32
    return %c0_i32, %c0_i32_0 : i32, i32
  }
  func.func @transform_23(%arg0: i32, %arg1: memref<2x8xi32, #tpu.memory_space<smem>>) -> (i32, i32) {
    %c0_i32 = arith.constant 0 : i32
    %c0_i32_0 = arith.constant 0 : i32
    %c0_i32_1 = arith.constant 0 : i32
    return %c0_i32, %c0_i32_0 : i32, i32
  }
  func.func @transform_24(%arg0: i32, %arg1: memref<2x8xi32, #tpu.memory_space<smem>>) -> (i32, i32) {
    %c0_i32 = arith.constant 0 : i32
    %c0_i32_0 = arith.constant 0 : i32
    %c0_i32_1 = arith.constant 0 : i32
    return %c0_i32, %c0_i32_0 : i32, i32
  }
  func.func @transform_25(%arg0: i32, %arg1: memref<2x8xi32, #tpu.memory_space<smem>>) -> (i32, i32, i32) {
    %c0_i32 = arith.constant 0 : i32
    %c0_i32_0 = arith.constant 0 : i32
    %c0_i32_1 = arith.constant 0 : i32
    return %arg0, %c0_i32, %c0_i32_0 : i32, i32, i32
  }
}

</mosaic_0001>

<llo_original>
// kernel: caption_model_forward.2
$region0: #{caption_model_forward.2}
  #allocation0 [shape = 'u32[]', space=smem, size = 0x4, offset = 0x4, fixed_abs, tag = 'smem constant byte address 0x4 - core index']
  #allocation1 [shape = 'u32[144,128]{1,0:T(1,128)}', space=vmem, size = 0x12000, scoped, tag = 'internal scratch']
  %s0 = inlined_call_operand.vmem [shape: f32[2,20,64], index: 0, kind: input, shape index: {}]
  %s1 = inlined_call_operand.vmem [shape: f32[2,20,64], index: 1, kind: input, shape index: {}]
  %s2 = inlined_call_operand.vmem [shape: f32[2,200,32], index: 2, kind: input, shape index: {}]
  %s3 = inlined_call_operand.vmem [shape: f32[2,200,32], index: 3, kind: input, shape index: {}]
  %s4 = inlined_call_operand.vmem [shape: f32[64,128], index: 4, kind: input, shape index: {}]
  %s5 = inlined_call_operand.vmem [shape: f32[64,128], index: 5, kind: input, shape index: {}]
  %s6 = inlined_call_operand.vmem [shape: f32[32,128], index: 6, kind: input, shape index: {}]
  %s7 = inlined_call_operand.vmem [shape: f32[32,128], index: 7, kind: input, shape index: {}]
  %s8 = inlined_call_operand.vmem [shape: f32[1,128], index: 8, kind: input, shape index: {}, may-alias: {8,9}]
  %s9 = inlined_call_operand.vmem [shape: f32[1,128], index: 9, kind: input, shape index: {}, may-alias: {8,9}]
  %s10 = inlined_call_operand.vmem [shape: f32[2,256,128], index: 10, kind: output, shape index: {}]
  %s11 = sld [smem:[#allocation0]]
  $region73: #{caption_model_forward.2} parent=0
    _
  %s13 = ssub.s32 1, %s11
  %s14 = scalar_select 0, %s13, %s11
  loop: start=0, step=1, limit=4
  $region2: #{caption_model_forward.2} parent=0 // loop_pre_header
    _
  $region3: #{caption_model_forward.2} parent=0 // loop_header
    %s16 = sphi 0, %s20
    %p17 = scmp.ge.s32.totalorder %s16, 4
    %s26 = sphi 0, %s28
    %s29 = sphi 0, %s26
    %s30 = sphi 0, %s29
    %s46 = sphi 0, %s30
    %s52 = sphi 0, %s54
    %s55 = sphi 0, %s52
    %s56 = sphi 0, %s55
    %s72 = sphi 0, %s56
    %s78 = sphi 0, %s80
    %s81 = sphi 0, %s78
    %s82 = sphi 0, %s81
    %s98 = sphi 0, %s82
    %s104 = sphi 0, %s106
    %s107 = sphi 0, %s104
    %s108 = sphi 0, %s107
    %s124 = sphi 0, %s108
    %s128 = sphi 0, %s128
    %s130 = sphi 0, %s128
    %s131 = sphi 0, %s130
    %s145 = sphi 0, %s131
    %s149 = sphi 0, %s149
    %s151 = sphi 0, %s149
    %s152 = sphi 0, %s151
    %s166 = sphi 0, %s152
    %s170 = sphi 0, %s170
    %s172 = sphi 0, %s170
    %s173 = sphi 0, %s172
    %s187 = sphi 0, %s173
    %s191 = sphi 0, %s191
    %s193 = sphi 0, %s191
    %s194 = sphi 0, %s193
    %s208 = sphi 0, %s194
    %s212 = sphi 0, %s212
    %s214 = sphi 0, %s212
    %s215 = sphi 0, %s214
    %s229 = sphi 0, %s215
    %s233 = sphi 0, %s233
    %s235 = sphi 0, %s233
    %s236 = sphi 0, %s235
    %s250 = sphi 0, %s236
    %s256 = sphi 0, %s258
    %s259 = sphi 0, %s256
    %s260 = sphi 0, %s259
    %s276 = sphi 0, %s260
  $region4: #{caption_model_forward.2} parent=0 // loop_header_branch
    %19 = sbr.rel (%p17) target = $region8
  $region5: #{caption_model_forward.2} parent=0 // loop_body
    %s21 = ssub.s32 %s16, 1
    %s22 = ssub.s32 %s16, 2
    %s23 = sadd.s32 %s16, 1
    %s24 = ssub.s32 %s16, %s23
    %p25 = scmp.eq.s32.totalorder %s24, 0
    %s27 = sadd.s32 %s26, 1
    %s28 = scalar_select %p25, %s26, %s27
    %p31 = pneg %p25
    %p32 = scmp.eq.s32.totalorder %s16, 1
    %p33 = por %p31, %p32
    %p34 = scmp.ne.s32.totalorder %s26, %s29
    %p35 = scmp.eq.s32.totalorder %s16, 0
    %p36 = por %p34, %p35
    %p37 = scmp.ne.s32.totalorder %s26, %s29
    %p38 = scmp.eq.s32.totalorder %s21, 1
    %p39 = por %p37, %p38
    %p40 = scmp.ne.s32.totalorder %s29, %s30
    %p41 = scmp.eq.s32.totalorder %s21, 0
    %p42 = por %p40, %p41
    %p43 = scmp.ne.s32.totalorder %s29, %s30
    %p44 = scmp.eq.s32.totalorder %s22, 1
    %p45 = por %p43, %p44
    %p47 = scmp.ne.s32.totalorder %s30, %s46
    %p48 = scmp.eq.s32.totalorder %s22, 0
    %p49 = por %p47, %p48
    %s50 = ssub.s32 %s16, %s23
    %p51 = scmp.eq.s32.totalorder %s50, 0
    %s53 = sadd.s32 %s52, 1
    %s54 = scalar_select %p51, %s52, %s53
    %p57 = pneg %p51
    %p58 = scmp.eq.s32.totalorder %s16, 1
    %p59 = por %p57, %p58
    %p60 = scmp.ne.s32.totalorder %s52, %s55
    %p61 = scmp.eq.s32.totalorder %s16, 0
    %p62 = por %p60, %p61
    %p63 = scmp.ne.s32.totalorder %s52, %s55
    %p64 = scmp.eq.s32.totalorder %s21, 1
    %p65 = por %p63, %p64
    %p66 = scmp.ne.s32.totalorder %s55, %s56
    %p67 = scmp.eq.s32.totalorder %s21, 0
    %p68 = por %p66, %p67
    %p69 = scmp.ne.s32.totalorder %s55, %s56
    %p70 = scmp.eq.s32.totalorder %s22, 1
    %p71 = por %p69, %p70
    %p73 = scmp.ne.s32.totalorder %s56, %s72
    %p74 = scmp.eq.s32.totalorder %s22, 0
    %p75 = por %p73, %p74
    %s76 = ssub.s32 %s16, %s23
    %p77 = scmp.eq.s32.totalorder %s76, 0
    %s79 = sadd.s32 %s78, 1
    %s80 = scalar_select %p77, %s78, %s79
    %p83 = pneg %p77
    %p84 = scmp.eq.s32.totalorder %s16, 1
    %p85 = por %p83, %p84
    %p86 = scmp.ne.s32.totalorder %s78, %s81
    %p87 = scmp.eq.s32.totalorder %s16, 0
    %p88 = por %p86, %p87
    %p89 = scmp.ne.s32.totalorder %s78, %s81
    %p90 = scmp.eq.s32.totalorder %s21, 1
    %p91 = por %p89, %p90
    %p92 = scmp.ne.s32.totalorder %s81, %s82
    %p93 = scmp.eq.s32.totalorder %s21, 0
    %p94 = por %p92, %p93
    %p95 = scmp.ne.s32.totalorder %s81, %s82
    %p96 = scmp.eq.s32.totalorder %s22, 1
    %p97 = por %p95, %p96
    %p99 = scmp.ne.s32.totalorder %s82, %s98
    %p100 = scmp.eq.s32.totalorder %s22, 0
    %p101 = por %p99, %p100
    %s102 = ssub.s32 %s16, %s23
    %p103 = scmp.eq.s32.totalorder %s102, 0
    %s105 = sadd.s32 %s104, 1
    %s106 = scalar_select %p103, %s104, %s105
    %p109 = pneg %p103
    %p110 = scmp.eq.s32.totalorder %s16, 1
    %p111 = por %p109, %p110
    %p112 = scmp.ne.s32.totalorder %s104, %s107
    %p113 = scmp.eq.s32.totalorder %s16, 0
    %p114 = por %p112, %p113
    %p115 = scmp.ne.s32.totalorder %s104, %s107
    %p116 = scmp.eq.s32.totalorder %s21, 1
    %p117 = por %p115, %p116
    %p118 = scmp.ne.s32.totalorder %s107, %s108
    %p119 = scmp.eq.s32.totalorder %s21, 0
    %p120 = por %p118, %p119
    %p121 = scmp.ne.s32.totalorder %s107, %s108
    %p122 = scmp.eq.s32.totalorder %s22, 1
    %p123 = por %p121, %p122
    %p125 = scmp.ne.s32.totalorder %s108, %s124
    %p126 = scmp.eq.s32.totalorder %s22, 0
    %p127 = por %p125, %p126
    %s129 = sadd.s32 %s128, 1
    %p132 = scmp.eq.s32.totalorder %s16, 1
    %p133 = scmp.ne.s32.totalorder %s128, %s130
    %p134 = scmp.eq.s32.totalorder %s16, 0
    %p135 = por %p133, %p134
    %p136 = scmp.ne.s32.totalorder %s128, %s130
    %p137 = scmp.eq.s32.totalorder %s21, 1
    %p138 = por %p136, %p137
    %p139 = scmp.ne.s32.totalorder %s130, %s131
    %p140 = scmp.eq.s32.totalorder %s21, 0
    %p141 = por %p139, %p140
    %p142 = scmp.ne.s32.totalorder %s130, %s131
    %p143 = scmp.eq.s32.totalorder %s22, 1
    %p144 = por %p142, %p143
    %p146 = scmp.ne.s32.totalorder %s131, %s145
    %p147 = scmp.eq.s32.totalorder %s22, 0
    %p148 = por %p146, %p147
    %s150 = sadd.s32 %s149, 1
    %p153 = scmp.eq.s32.totalorder %s16, 1
    %p154 = scmp.ne.s32.totalorder %s149, %s151
    %p155 = scmp.eq.s32.totalorder %s16, 0
    %p156 = por %p154, %p155
    %p157 = scmp.ne.s32.totalorder %s149, %s151
    %p158 = scmp.eq.s32.totalorder %s21, 1
    %p159 = por %p157, %p158
    %p160 = scmp.ne.s32.totalorder %s151, %s152
    %p161 = scmp.eq.s32.totalorder %s21, 0
    %p162 = por %p160, %p161
    %p163 = scmp.ne.s32.totalorder %s151, %s152
    %p164 = scmp.eq.s32.totalorder %s22, 1
    %p165 = por %p163, %p164
    %p167 = scmp.ne.s32.totalorder %s152, %s166
    %p168 = scmp.eq.s32.totalorder %s22, 0
    %p169 = por %p167, %p168
    %s171 = sadd.s32 %s170, 1
    %p174 = scmp.eq.s32.totalorder %s16, 1
    %p175 = scmp.ne.s32.totalorder %s170, %s172
    %p176 = scmp.eq.s32.totalorder %s16, 0
    %p177 = por %p175, %p176
    %p178 = scmp.ne.s32.totalorder %s170, %s172
    %p179 = scmp.eq.s32.totalorder %s21, 1
    %p180 = por %p178, %p179
    %p181 = scmp.ne.s32.totalorder %s172, %s173
    %p182 = scmp.eq.s32.totalorder %s21, 0
    %p183 = por %p181, %p182
    %p184 = scmp.ne.s32.totalorder %s172, %s173
    %p185 = scmp.eq.s32.totalorder %s22, 1
    %p186 = por %p184, %p185
    %p188 = scmp.ne.s32.totalorder %s173, %s187
    %p189 = scmp.eq.s32.totalorder %s22, 0
    %p190 = por %p188, %p189
    %s192 = sadd.s32 %s191, 1
    %p195 = scmp.eq.s32.totalorder %s16, 1
    %p196 = scmp.ne.s32.totalorder %s191, %s193
    %p197 = scmp.eq.s32.totalorder %s16, 0
    %p198 = por %p196, %p197
    %p199 = scmp.ne.s32.totalorder %s191, %s193
    %p200 = scmp.eq.s32.totalorder %s21, 1
    %p201 = por %p199, %p200
    %p202 = scmp.ne.s32.totalorder %s193, %s194
    %p203 = scmp.eq.s32.totalorder %s21, 0
    %p204 = por %p202, %p203
    %p205 = scmp.ne.s32.totalorder %s193, %s194
    %p206 = scmp.eq.s32.totalorder %s22, 1
    %p207 = por %p205, %p206
    %p209 = scmp.ne.s32.totalorder %s194, %s208
    %p210 = scmp.eq.s32.totalorder %s22, 0
    %p211 = por %p209, %p210
    %s213 = sadd.s32 %s212, 1
    %p216 = scmp.eq.s32.totalorder %s16, 1
    %p217 = scmp.ne.s32.totalorder %s212, %s214
    %p218 = scmp.eq.s32.totalorder %s16, 0
    %p219 = por %p217, %p218
    %p220 = scmp.ne.s32.totalorder %s212, %s214
    %p221 = scmp.eq.s32.totalorder %s21, 1
    %p222 = por %p220, %p221
    %p223 = scmp.ne.s32.totalorder %s214, %s215
    %p224 = scmp.eq.s32.totalorder %s21, 0
    %p225 = por %p223, %p224
    %p226 = scmp.ne.s32.totalorder %s214, %s215
    %p227 = scmp.eq.s32.totalorder %s22, 1
    %p228 = por %p226, %p227
    %p230 = scmp.ne.s32.totalorder %s215, %s229
    %p231 = scmp.eq.s32.totalorder %s22, 0
    %p232 = por %p230, %p231
    %s234 = sadd.s32 %s233, 1
    %p237 = scmp.eq.s32.totalorder %s16, 1
    %p238 = scmp.ne.s32.totalorder %s233, %s235
    %p239 = scmp.eq.s32.totalorder %s16, 0
    %p240 = por %p238, %p239
    %p241 = scmp.ne.s32.totalorder %s233, %s235
    %p242 = scmp.eq.s32.totalorder %s21, 1
    %p243 = por %p241, %p242
    %p244 = scmp.ne.s32.totalorder %s235, %s236
    %p245 = scmp.eq.s32.totalorder %s21, 0
    %p246 = por %p244, %p245
    %p247 = scmp.ne.s32.totalorder %s235, %s236
    %p248 = scmp.eq.s32.totalorder %s22, 1
    %p249 = por %p247, %p248
    %p251 = scmp.ne.s32.totalorder %s236, %s250
    %p252 = scmp.eq.s32.totalorder %s22, 0
    %p253 = por %p251, %p252
    %s254 = ssub.s32 %s16, %s23
    %p255 = scmp.eq.s32.totalorder %s254, 0
    %s257 = sadd.s32 %s256, 1
    %s258 = scalar_select %p255, %s256, %s257
    %p261 = pneg %p255
    %p262 = scmp.eq.s32.totalorder %s16, 1
    %p263 = por %p261, %p262
    %p264 = scmp.ne.s32.totalorder %s256, %s259
    %p265 = scmp.eq.s32.totalorder %s16, 0
    %p266 = por %p264, %p265
    %p267 = scmp.ne.s32.totalorder %s256, %s259
    %p268 = scmp.eq.s32.totalorder %s21, 1
    %p269 = por %p267, %p268
    %p270 = scmp.ne.s32.totalorder %s259, %s260
    %p271 = scmp.eq.s32.totalorder %s21, 0
    %p272 = por %p270, %p271
    %p273 = scmp.ne.s32.totalorder %s259, %s260
    %p274 = scmp.eq.s32.totalorder %s22, 1
    %p275 = por %p273, %p274
    %p277 = scmp.ne.s32.totalorder %s260, %s276
    %p278 = scmp.eq.s32.totalorder %s22, 0
    %p279 = por %p277, %p278
    %p280 = scmp.le.s32.totalorder 1, %s16
    %p281 = scmp.lt.s32.totalorder %s16, 3
    %p282 = pnand %p280, %p281
    %p283 = pneg %p282
    // Predicated region
    $region9: #{caption_model_forward.2} parent=5 // pred_check
      _
    $region10: #{caption_model_forward.2} parent=5 // pred_check_branch
      %285 = sbr.rel (%p282) target = $region12
    $region11: #{caption_model_forward.2} parent=5 // pred_region
      %s286 = ssub.s32 %s16, 1
      // Predicated region
      $region13: #{caption_model_forward.2} parent=11 // pred_check
        %p287 = pneg %p141
      $region14: #{caption_model_forward.2} parent=11 // pred_check_branch
        %289 = sbr.rel (%p287) target = $region16
      $region15: #{caption_model_forward.2} parent=11 // pred_region
        _
      $region16: #{caption_model_forward.2} parent=11 // pred_fallthru
        _
      // Predicated region
      $region17: #{caption_model_forward.2} parent=11 // pred_check
        %p290 = pneg %p162
      $region18: #{caption_model_forward.2} parent=11 // pred_check_branch
        %292 = sbr.rel (%p290) target = $region20
      $region19: #{caption_model_forward.2} parent=11 // pred_region
        _
      $region20: #{caption_model_forward.2} parent=11 // pred_fallthru
        _
      // Predicated region
      $region21: #{caption_model_forward.2} parent=11 // pred_check
        %p293 = pneg %p183
      $region22: #{caption_model_forward.2} parent=11 // pred_check_branch
        %295 = sbr.rel (%p293) target = $region24
      $region23: #{caption_model_forward.2} parent=11 // pred_region
        _
      $region24: #{caption_model_forward.2} parent=11 // pred_fallthru
        _
      // Predicated region
      $region25: #{caption_model_forward.2} parent=11 // pred_check
        %p296 = pneg %p204
      $region26: #{caption_model_forward.2} parent=11 // pred_check_branch
        %298 = sbr.rel (%p296) target = $region28
      $region27: #{caption_model_forward.2} parent=11 // pred_region
        _
      $region28: #{caption_model_forward.2} parent=11 // pred_fallthru
        _
      // Predicated region
      $region29: #{caption_model_forward.2} parent=11 // pred_check
        %p299 = pneg %p225
      $region30: #{caption_model_forward.2} parent=11 // pred_check_branch
        %301 = sbr.rel (%p299) target = $region32
      $region31: #{caption_model_forward.2} parent=11 // pred_region
        _
      $region32: #{caption_model_forward.2} parent=11 // pred_fallthru
        _
      // Predicated region
      $region33: #{caption_model_forward.2} parent=11 // pred_check
        %p302 = pneg %p246
      $region34: #{caption_model_forward.2} parent=11 // pred_check_branch
        %304 = sbr.rel (%p302) target = $region36
      $region35: #{caption_model_forward.2} parent=11 // pred_region
        _
      $region36: #{caption_model_forward.2} parent=11 // pred_fallthru
        _
    $region12: #{caption_model_forward.2} parent=5 // pred_fallthru
      _
    %p305 = scmp.lt.s32.totalorder %s16, 2
    // Predicated region
    $region37: #{caption_model_forward.2} parent=5 // pred_check
      %p306 = pneg %p305
    $region38: #{caption_model_forward.2} parent=5 // pred_check_branch
      %308 = sbr.rel (%p306) target = $region40
    $region39: #{caption_model_forward.2} parent=5 // pred_region
      // Predicated region
      $region41: #{caption_model_forward.2} parent=39 // pred_check
        %p309 = pneg %p36
      $region42: #{caption_model_forward.2} parent=39 // pred_check_branch
        %311 = sbr.rel (%p309) target = $region44
      $region43: #{caption_model_forward.2} parent=39 // pred_region
        %p312 = scmp.lt.s32.totalorder %s16, 1
        %s313 = scalar_select %p312, %s16, 1
        %s314 = smul.addr %s313, 3
        %s315 = smul.addr %s314, 8
        %s316 = scalar_lea.vmem %s0, %s315
      $region44: #{caption_model_forward.2} parent=39 // pred_fallthru
        _
      // Predicated region
      $region45: #{caption_model_forward.2} parent=39 // pred_check
        %p317 = pneg %p62
      $region46: #{caption_model_forward.2} parent=39 // pred_check_branch
        %319 = sbr.rel (%p317) target = $region48
      $region47: #{caption_model_forward.2} parent=39 // pred_region
        %p320 = scmp.lt.s32.totalorder %s16, 1
        %s321 = scalar_select %p320, %s16, 1
        %s322 = smul.addr %s321, 3
        %s323 = smul.addr %s322, 8
        %s324 = scalar_lea.vmem %s1, %s323
      $region48: #{caption_model_forward.2} parent=39 // pred_fallthru
        _
      // Predicated region
      $region49: #{caption_model_forward.2} parent=39 // pred_check
        %p325 = pneg %p88
      $region50: #{caption_model_forward.2} parent=39 // pred_check_branch
        %327 = sbr.rel (%p325) target = $region52
      $region51: #{caption_model_forward.2} parent=39 // pred_region
        %p328 = scmp.lt.s32.totalorder %s16, 1
        %s329 = scalar_select %p328, %s16, 1
        %s330 = smul.addr %s329, 25
        %s331 = smul.addr %s330, 8
        %s332 = scalar_lea.vmem %s2, %s331
      $region52: #{caption_model_forward.2} parent=39 // pred_fallthru
        _
      // Predicated region
      $region53: #{caption_model_forward.2} parent=39 // pred_check
        %p333 = pneg %p114
      $region54: #{caption_model_forward.2} parent=39 // pred_check_branch
        %335 = sbr.rel (%p333) target = $region56
      $region55: #{caption_model_forward.2} parent=39 // pred_region
        %p336 = scmp.lt.s32.totalorder %s16, 1
        %s337 = scalar_select %p336, %s16, 1
        %s338 = smul.addr %s337, 25
        %s339 = smul.addr %s338, 8
        %s340 = scalar_lea.vmem %s3, %s339
      $region56: #{caption_model_forward.2} parent=39 // pred_fallthru
        _
    $region40: #{caption_model_forward.2} parent=5 // pred_fallthru
      _
    %p341 = scmp.le.s32.totalorder 1, %s16
    %p342 = scmp.lt.s32.totalorder %s16, 3
    %p343 = pnand %p341, %p342
    %p344 = pneg %p343
    // Predicated region
    $region57: #{caption_model_forward.2} parent=5 // pred_check
      _
    $region58: #{caption_model_forward.2} parent=5 // pred_check_branch
      %346 = sbr.rel (%p343) target = $region60
    $region59: #{caption_model_forward.2} parent=5 // pred_region
      %s347 = ssub.s32 %s16, 1
      %p348 = scmp.lt.s32.totalorder %s21, 1
      %s349 = scalar_select %p348, %s21, 1
      %s350 = smul.addr %s349, 3
      %s351 = smul.addr %s350, 8
      %s352 = scalar_lea.vmem %s0, %s351
      %p353 = pneg %p42
      %p354 = pneg %p39
      %p355 = scmp.lt.s32.totalorder %s21, 1
      %s356 = scalar_select %p355, %s21, 1
      %s357 = smul.addr %s356, 3
      %s358 = smul.addr %s357, 8
      %s359 = scalar_lea.vmem %s1, %s358
      %p360 = pneg %p68
      %p361 = pneg %p65
      %p362 = scmp.lt.s32.totalorder %s21, 1
      %s363 = scalar_select %p362, %s21, 1
      %s364 = smul.addr %s363, 25
      %s365 = smul.addr %s364, 8
      %s366 = scalar_lea.vmem %s2, %s365
      %p367 = pneg %p94
      %p368 = pneg %p91
      %p369 = scmp.lt.s32.totalorder %s21, 1
      %s370 = scalar_select %p369, %s21, 1
      %s371 = smul.addr %s370, 25
      %s372 = smul.addr %s371, 8
      %s373 = scalar_lea.vmem %s3, %s372
      %p374 = pneg %p120
      %p375 = pneg %p117
      %p376 = pneg %p141
      %p377 = pneg %p138
      %p378 = pneg %p162
      %p379 = pneg %p159
      %p380 = pneg %p183
      %p381 = pneg %p180
      %p382 = pneg %p204
      %p383 = pneg %p201
      %p384 = pneg %p225
      %p385 = pneg %p222
      %p386 = pneg %p246
      %p387 = pneg %p243
      %p388 = pneg %p272
      %p389 = pneg %p269
      %p390 = scmp.lt.s32.totalorder %s21, 1
      %s391 = scalar_select %p390, %s21, 1
      %s392 = smul.addr %s391, 32
      %s393 = smul.addr %s392, 8
      %s394 = scalar_lea.vmem %s10, %s393
      %p395 = scmp.lt.s32.totalorder %s21, 1
      %s396 = scalar_select %p395, %s21, 1
      %s397 = smul.addr %s396, 3
      %s398 = smul.addr %s397, 8
      %s399 = scalar_lea.vmem %s0, %s398
      %p400 = scmp.lt.s32.totalorder %s21, 1
      %s401 = scalar_select %p400, %s21, 1
      %s402 = smul.addr %s401, 3
      %s403 = smul.addr %s402, 8
      %s404 = scalar_lea.vmem %s1, %s403
      %p405 = scmp.lt.s32.totalorder %s21, 1
      %s406 = scalar_select %p405, %s21, 1
      %s407 = smul.addr %s406, 25
      %s408 = smul.addr %s407, 8
      %s409 = scalar_lea.vmem %s2, %s408
      %p410 = scmp.lt.s32.totalorder %s21, 1
      %s411 = scalar_select %p410, %s21, 1
      %s412 = smul.addr %s411, 25
      %s413 = smul.addr %s412, 8
      %s414 = scalar_lea.vmem %s3, %s413
      %p415 = scmp.lt.s32.totalorder %s21, 1
      %s416 = scalar_select %p415, %s21, 1
      %s417 = smul.addr %s416, 32
      %s418 = smul.addr %s417, 8
      %s419 = scalar_lea.vmem %s10, %s418
      %v420 = vld [vmem:[%s399] sm:$0xff]
      %v421 = vld [vmem:[%s399 + $0x8] sm:$0xff]
      %v422 = vld [vmem:[%s399 + $0x10] sm:$0xf]
      %v423 = vld [vmem:[%s4] sm:$0xff]
      %v424 = vld [vmem:[%s4 + $0x8] sm:$0xff]
      %v425 = vld [vmem:[%s4 + $0x10] sm:$0xff]
      %v426 = vld [vmem:[%s4 + $0x18] sm:$0xff]
      %v427 = vld [vmem:[%s4 + $0x20] sm:$0xff]
      %v428 = vld [vmem:[%s4 + $0x28] sm:$0xff]
      %v429 = vld [vmem:[%s4 + $0x30] sm:$0xff]
      %v430 = vld [vmem:[%s4 + $0x38] sm:$0xff]
      %v431 = vld [vmem:[%s404] sm:$0xff]
      %v432 = vld [vmem:[%s404 + $0x8] sm:$0xff]
      %v433 = vld [vmem:[%s404 + $0x10] sm:$0xf]
      %v434 = vld [vmem:[%s5] sm:$0xff]
      %v435 = vld [vmem:[%s5 + $0x8] sm:$0xff]
      %v436 = vld [vmem:[%s5 + $0x10] sm:$0xff]
      %v437 = vld [vmem:[%s5 + $0x18] sm:$0xff]
      %v438 = vld [vmem:[%s5 + $0x20] sm:$0xff]
      %v439 = vld [vmem:[%s5 + $0x28] sm:$0xff]
      %v440 = vld [vmem:[%s5 + $0x30] sm:$0xff]
      %v441 = vld [vmem:[%s5 + $0x38] sm:$0xff]
      %vm442 = vcmask 523264
      %v444 = vsel %vm442, %v431, 0
      %v447 = vsel %vm442, %v432, 0
      %v450 = vsel %vm442, %v433, 0
      %452 = vmatprep.subr.mxu0 0.0
      %453 = vmatpush1.msra.mxu0 %v434
      %454 = vmatprep.subr.mxu0 0.0
      %455 = vmatpush1.msra.mxu0 %v435
      %456 = vmatprep.subr.mxu0 0.0
      %457 = vmatpush1.msra.mxu0 %v436
      %458 = vmatprep.subr.mxu0 0.0
      %459 = vmatpush1.msra.mxu0 %v437
      %460 = vmatprep.subr.mxu0 0.0
      %461 = vmatpush1.msra.mxu0 %v438
      %462 = vmatprep.subr.mxu0 0.0
      %463 = vmatpush1.msra.mxu0 %v439
      %464 = vmatprep.subr.mxu0 0.0
      %465 = vmatpush1.msra.mxu0 %v440
      %466 = vmatprep.subr.mxu0 0.0
      %467 = vmatpush1.msra.mxu0 %v441
      %468 = vmatprep.subr.mxu0 0.0
      %469 = vmatpush1.msra.mxu0 0.0
      %470 = vmatprep.subr.mxu0 0.0
      %471 = vmatpush1.msra.mxu0 0.0
      %472 = vmatprep.subr.mxu0 0.0
      %473 = vmatpush1.msra.mxu0 0.0
      %474 = vmatprep.subr.mxu0 0.0
      %475 = vmatpush1.msra.mxu0 0.0
      %476 = vmatprep.subr.mxu0 0.0
      %477 = vmatpush1.msra.mxu0 0.0
      %478 = vmatprep.subr.mxu0 0.0
      %479 = vmatpush1.msra.mxu0 0.0
      %480 = vmatprep.subr.mxu0 0.0
      %481 = vmatpush1.msra.mxu0 0.0
      %482 = vmatprep.subr.mxu0 0.0
      %483 = vmatpush1.msra.mxu0 0.0
      %484 = vmatprep.subr.mxu0 0.0
      %485 = vmatpush1.msra.mxu0 0.0
      %486 = vmatprep.subr.mxu0 0.0
      %487 = vmatpush1.msra.mxu0 0.0
      %488 = vmatprep.subr.mxu0 0.0
      %489 = vmatpush1.msra.mxu0 0.0
      %490 = vmatprep.subr.mxu0 0.0
      %491 = vmatpush1.msra.mxu0 0.0
      %492 = vmatprep.subr.mxu0 0.0
      %493 = vmatpush1.msra.mxu0 0.0
      %494 = vmatprep.subr.mxu0 0.0
      %495 = vmatpush1.msra.mxu0 0.0
      %496 = vmatprep.subr.mxu0 0.0
      %497 = vmatpush1.msra.mxu0 0.0
      %498 = vmatprep.subr.mxu0 0.0
      %499 = vmatpush1.msra.mxu0 0.0
      %500 = vmatprep.subr.mxu0 0.0
      %501 = vmatpush1.msra.mxu0 0.0
      %502 = vmatprep.subr.mxu0 0.0
      %503 = vmatpush1.msra.mxu0 0.0
      %504 = vmatprep.subr.mxu0 0.0
      %505 = vmatpush1.msra.mxu0 0.0
      %506 = vmatprep.subr.mxu0 0.0
      %507 = vmatpush1.msra.mxu0 0.0
      %508 = vmatprep.subr.mxu0 0.0
      %509 = vmatpush1.msra.mxu0 0.0
      %510 = vmatprep.subr.mxu0 0.0
      %511 = vmatpush1.msra.mxu0 0.0
      %512 = vmatprep.subr.mxu0 0.0
      %513 = vmatpush1.msra.mxu0 0.0
      %514 = vmatprep.subr.mxu0 0.0
      %515 = vmatpush1.msra.mxu0 0.0
      %516 = vmatprep.mubr.f32.mxu0 0.0
      %517 = vmatmul.mubr.f32.gmra.mrb[0].mxu0 %v444
      %v518 = vpop.f32.mrb[0].mxu0
      %v519 = vadd.f32 0.0, %v518
      %v520 = vpop.f32.mrb[0].mxu0
      %521 = vmatprep.mubr.f32.mxu0 0.0
      %522 = vmatmul.mubr.f32.gmra.mrb[0].mxu0 %v447
      %v523 = vpop.f32.mrb[0].mxu0
      %v524 = vadd.f32 0.0, %v523
      %v525 = vpop.f32.mrb[0].mxu0
      %526 = vmatprep.mubr.f32.mxu0 0.0
      %527 = vmatmul.mubr.f32.gmra.mrb[0].mxu0 %v450
      %v528 = vpop.f32.mrb[0].mxu0
      %v529 = vadd.f32 0.0, %v528
      %v530 = vpop.f32.mrb[0].mxu0
      %531 = vdwg.mxu0
      %v533 = vsel %vm442, %v420, 0
      %v536 = vsel %vm442, %v421, 0
      %v539 = vsel %vm442, %v422, 0
      %541 = vmatprep.subr.mxu0 0.0
      %542 = vmatpush1.msra.mxu0 %v423
      %543 = vmatprep.subr.mxu0 0.0
      %544 = vmatpush1.msra.mxu0 %v424
      %545 = vmatprep.subr.mxu0 0.0
      %546 = vmatpush1.msra.mxu0 %v425
      %547 = vmatprep.subr.mxu0 0.0
      %548 = vmatpush1.msra.mxu0 %v426
      %549 = vmatprep.subr.mxu0 0.0
      %550 = vmatpush1.msra.mxu0 %v427
      %551 = vmatprep.subr.mxu0 0.0
      %552 = vmatpush1.msra.mxu0 %v428
      %553 = vmatprep.subr.mxu0 0.0
      %554 = vmatpush1.msra.mxu0 %v429
      %555 = vmatprep.subr.mxu0 0.0
      %556 = vmatpush1.msra.mxu0 %v430
      %557 = vmatprep.subr.mxu0 0.0
      %558 = vmatpush1.msra.mxu0 0.0
      %559 = vmatprep.subr.mxu0 0.0
      %560 = vmatpush1.msra.mxu0 0.0
      %561 = vmatprep.subr.mxu0 0.0
      %562 = vmatpush1.msra.mxu0 0.0
      %563 = vmatprep.subr.mxu0 0.0
      %564 = vmatpush1.msra.mxu0 0.0
      %565 = vmatprep.subr.mxu0 0.0
      %566 = vmatpush1.msra.mxu0 0.0
      %567 = vmatprep.subr.mxu0 0.0
      %568 = vmatpush1.msra.mxu0 0.0
      %569 = vmatprep.subr.mxu0 0.0
      %570 = vmatpush1.msra.mxu0 0.0
      %571 = vmatprep.subr.mxu0 0.0
      %572 = vmatpush1.msra.mxu0 0.0
      %573 = vmatprep.subr.mxu0 0.0
      %574 = vmatpush1.msra.mxu0 0.0
      %575 = vmatprep.subr.mxu0 0.0
      %576 = vmatpush1.msra.mxu0 0.0
      %577 = vmatprep.subr.mxu0 0.0
      %578 = vmatpush1.msra.mxu0 0.0
      %579 = vmatprep.subr.mxu0 0.0
      %580 = vmatpush1.msra.mxu0 0.0
      %581 = vmatprep.subr.mxu0 0.0
      %582 = vmatpush1.msra.mxu0 0.0
      %583 = vmatprep.subr.mxu0 0.0
      %584 = vmatpush1.msra.mxu0 0.0
      %585 = vmatprep.subr.mxu0 0.0
      %586 = vmatpush1.msra.mxu0 0.0
      %587 = vmatprep.subr.mxu0 0.0
      %588 = vmatpush1.msra.mxu0 0.0
      %589 = vmatprep.subr.mxu0 0.0
      %590 = vmatpush1.msra.mxu0 0.0
      %591 = vmatprep.subr.mxu0 0.0
      %592 = vmatpush1.msra.mxu0 0.0
      %593 = vmatprep.subr.mxu0 0.0
      %594 = vmatpush1.msra.mxu0 0.0
      %595 = vmatprep.subr.mxu0 0.0
      %596 = vmatpush1.msra.mxu0 0.0
      %597 = vmatprep.subr.mxu0 0.0
      %598 = vmatpush1.msra.mxu0 0.0
      %599 = vmatprep.subr.mxu0 0.0
      %600 = vmatpush1.msra.mxu0 0.0
      %601 = vmatprep.subr.mxu0 0.0
      %602 = vmatpush1.msra.mxu0 0.0
      %603 = vmatprep.subr.mxu0 0.0
      %604 = vmatpush1.msra.mxu0 0.0
      %605 = vmatprep.mubr.f32.mxu0 0.0
      %606 = vmatmul.mubr.f32.gmra.mrb[0].mxu0 %v533
      %v607 = vpop.f32.mrb[0].mxu0
      %v608 = vadd.f32 %v519, %v607
      %v609 = vpop.f32.mrb[0].mxu0
      %610 = vmatprep.mubr.f32.mxu0 0.0
      %611 = vmatmul.mubr.f32.gmra.mrb[0].mxu0 %v536
      %v612 = vpop.f32.mrb[0].mxu0
      %v613 = vadd.f32 %v524, %v612
      %v614 = vpop.f32.mrb[0].mxu0
      %615 = vmatprep.mubr.f32.mxu0 0.0
      %616 = vmatmul.mubr.f32.gmra.mrb[0].mxu0 %v539
      %v617 = vpop.f32.mrb[0].mxu0
      %v618 = vadd.f32 %v529, %v617
      %v619 = vpop.f32.mrb[0].mxu0
      %620 = vdwg.mxu0
      %v621 = vld [vmem:[%s8] sm:$0x1]
      %v623 = vlaneseq
      %v624 = vshrl.u32 %v623, 7
      %v625 = vsub.s32 0, %v624
      %v626 = vrot.slane %v621, %v625
      %v628 = vadd.f32 %v608, %v626
      %v629 = vadd.f32 %v613, %v626
      %v630 = vadd.f32 %v618, %v626
      %v631 = vld [vmem:[%s409] sm:$0xff]
      %v632 = vld [vmem:[%s409 + $0x8] sm:$0xff]
      %v633 = vld [vmem:[%s409 + $0x10] sm:$0xff]
      %v634 = vld [vmem:[%s409 + $0x18] sm:$0xff]
      %v635 = vld [vmem:[%s409 + $0x20] sm:$0xff]
      %v636 = vld [vmem:[%s409 + $0x28] sm:$0xff]
      %v637 = vld [vmem:[%s409 + $0x30] sm:$0xff]
      %v638 = vld [vmem:[%s409 + $0x38] sm:$0xff]
      %v639 = vld [vmem:[%s409 + $0x40] sm:$0xff]
      %v640 = vld [vmem:[%s409 + $0x48] sm:$0xff]
      %v641 = vld [vmem:[%s409 + $0x50] sm:$0xff]
      %v642 = vld [vmem:[%s409 + $0x58] sm:$0xff]
      %v643 = vld [vmem:[%s409 + $0x60] sm:$0xff]
      %v644 = vld [vmem:[%s409 + $0x68] sm:$0xff]
      %v645 = vld [vmem:[%s409 + $0x70] sm:$0xff]
      %v646 = vld [vmem:[%s409 + $0x78] sm:$0xff]
      %v647 = vld [vmem:[%s409 + $0x80] sm:$0xff]
      %v648 = vld [vmem:[%s409 + $0x88] sm:$0xff]
      %v649 = vld [vmem:[%s409 + $0x90] sm:$0xff]
      %v650 = vld [vmem:[%s409 + $0x98] sm:$0xff]
      %v651 = vld [vmem:[%s409 + $0xa0] sm:$0xff]
      %v652 = vld [vmem:[%s409 + $0xa8] sm:$0xff]
      %v653 = vld [vmem:[%s409 + $0xb0] sm:$0xff]
      %v654 = vld [vmem:[%s409 + $0xb8] sm:$0xff]
      %v655 = vld [vmem:[%s409 + $0xc0] sm:$0xff]
      %v656 = vld [vmem:[%s6] sm:$0xff]
      %v657 = vld [vmem:[%s6 + $0x8] sm:$0xff]
      %v658 = vld [vmem:[%s6 + $0x10] sm:$0xff]
      %v659 = vld [vmem:[%s6 + $0x18] sm:$0xff]
      %v660 = vld [vmem:[%s414] sm:$0xff]
      %v661 = vld [vmem:[%s414 + $0x8] sm:$0xff]
      %v662 = vld [vmem:[%s414 + $0x10] sm:$0xff]
      %v663 = vld [vmem:[%s414 + $0x18] sm:$0xff]
      %v664 = vld [vmem:[%s414 + $0x20] sm:$0xff]
      %v665 = vld [vmem:[%s414 + $0x28] sm:$0xff]
      %v666 = vld [vmem:[%s414 + $0x30] sm:$0xff]
      %v667 = vld [vmem:[%s414 + $0x38] sm:$0xff]
      %v668 = vld [vmem:[%s414 + $0x40] sm:$0xff]
      %v669 = vld [vmem:[%s414 + $0x48] sm:$0xff]
      %v670 = vld [vmem:[%s414 + $0x50] sm:$0xff]
      %v671 = vld [vmem:[%s414 + $0x58] sm:$0xff]
      %v672 = vld [vmem:[%s414 + $0x60] sm:$0xff]
      %v673 = vld [vmem:[%s414 + $0x68] sm:$0xff]
      %v674 = vld [vmem:[%s414 + $0x70] sm:$0xff]
      %v675 = vld [vmem:[%s414 + $0x78] sm:$0xff]
      %v676 = vld [vmem:[%s414 + $0x80] sm:$0xff]
      %v677 = vld [vmem:[%s414 + $0x88] sm:$0xff]
      %v678 = vld [vmem:[%s414 + $0x90] sm:$0xff]
      %v679 = vld [vmem:[%s414 + $0x98] sm:$0xff]
      %v680 = vld [vmem:[%s414 + $0xa0] sm:$0xff]
      %v681 = vld [vmem:[%s414 + $0xa8] sm:$0xff]
      %v682 = vld [vmem:[%s414 + $0xb0] sm:$0xff]
      %v683 = vld [vmem:[%s414 + $0xb8] sm:$0xff]
      %v684 = vld [vmem:[%s414 + $0xc0] sm:$0xff]
      %v685 = vld [vmem:[%s7] sm:$0xff]
      %v686 = vld [vmem:[%s7 + $0x8] sm:$0xff]
      %v687 = vld [vmem:[%s7 + $0x10] sm:$0xff]
      %v688 = vld [vmem:[%s7 + $0x18] sm:$0xff]
      %vm689 = vcmask 261120
      %v691 = vsel %vm689, %v660, 0
      %v694 = vsel %vm689, %v661, 0
      %v697 = vsel %vm689, %v662, 0
      %v700 = vsel %vm689, %v663, 0
      %v703 = vsel %vm689, %v664, 0
      %v706 = vsel %vm689, %v665, 0
      %v709 = vsel %vm689, %v666, 0
      %v712 = vsel %vm689, %v667, 0
      %v715 = vsel %vm689, %v668, 0
      %v718 = vsel %vm689, %v669, 0
      %v721 = vsel %vm689, %v670, 0
      %v724 = vsel %vm689, %v671, 0
      %v727 = vsel %vm689, %v672, 0
      %v730 = vsel %vm689, %v673, 0
      %v733 = vsel %vm689, %v674, 0
      %v736 = vsel %vm689, %v675, 0
      %v739 = vsel %vm689, %v676, 0
      %v742 = vsel %vm689, %v677, 0
      %v745 = vsel %vm689, %v678, 0
      %v748 = vsel %vm689, %v679, 0
      %v751 = vsel %vm689, %v680, 0
      %v754 = vsel %vm689, %v681, 0
      %v757 = vsel %vm689, %v682, 0
      %v760 = vsel %vm689, %v683, 0
      %v763 = vsel %vm689, %v684, 0
      %765 = vmatprep.subr.mxu0 0.0
      %766 = vmatpush1.msra.mxu0 %v685
      %767 = vmatprep.subr.mxu0 0.0
      %768 = vmatpush1.msra.mxu0 %v686
      %769 = vmatprep.subr.mxu0 0.0
      %770 = vmatpush1.msra.mxu0 %v687
      %771 = vmatprep.subr.mxu0 0.0
      %772 = vmatpush1.msra.mxu0 %v688
      %773 = vmatprep.subr.mxu0 0.0
      %774 = vmatpush1.msra.mxu0 0.0
      %775 = vmatprep.subr.mxu0 0.0
      %776 = vmatpush1.msra.mxu0 0.0
      %777 = vmatprep.subr.mxu0 0.0
      %778 = vmatpush1.msra.mxu0 0.0
      %779 = vmatprep.subr.mxu0 0.0
      %780 = vmatpush1.msra.mxu0 0.0
      %781 = vmatprep.subr.mxu0 0.0
      %782 = vmatpush1.msra.mxu0 0.0
      %783 = vmatprep.subr.mxu0 0.0
      %784 = vmatpush1.msra.mxu0 0.0
      %785 = vmatprep.subr.mxu0 0.0
      %786 = vmatpush1.msra.mxu0 0.0
      %787 = vmatprep.subr.mxu0 0.0
      %788 = vmatpush1.msra.mxu0 0.0
      %789 = vmatprep.subr.mxu0 0.0
      %790 = vmatpush1.msra.mxu0 0.0
      %791 = vmatprep.subr.mxu0 0.0
      %792 = vmatpush1.msra.mxu0 0.0
      %793 = vmatprep.subr.mxu0 0.0
      %794 = vmatpush1.msra.mxu0 0.0
      %795 = vmatprep.subr.mxu0 0.0
      %796 = vmatpush1.msra.mxu0 0.0
      %797 = vmatprep.subr.mxu0 0.0
      %798 = vmatpush1.msra.mxu0 0.0
      %799 = vmatprep.subr.mxu0 0.0
      %800 = vmatpush1.msra.mxu0 0.0
      %801 = vmatprep.subr.mxu0 0.0
      %802 = vmatpush1.msra.mxu0 0.0
      %803 = vmatprep.subr.mxu0 0.0
      %804 = vmatpush1.msra.mxu0 0.0
      %805 = vmatprep.subr.mxu0 0.0
      %806 = vmatpush1.msra.mxu0 0.0
      %807 = vmatprep.subr.mxu0 0.0
      %808 = vmatpush1.msra.mxu0 0.0
      %809 = vmatprep.subr.mxu0 0.0
      %810 = vmatpush1.msra.mxu0 0.0
      %811 = vmatprep.subr.mxu0 0.0
      %812 = vmatpush1.msra.mxu0 0.0
      %813 = vmatprep.subr.mxu0 0.0
      %814 = vmatpush1.msra.mxu0 0.0
      %815 = vmatprep.subr.mxu0 0.0
      %816 = vmatpush1.msra.mxu0 0.0
      %817 = vmatprep.subr.mxu0 0.0
      %818 = vmatpush1.msra.mxu0 0.0
      %819 = vmatprep.subr.mxu0 0.0
      %820 = vmatpush1.msra.mxu0 0.0
      %821 = vmatprep.subr.mxu0 0.0
      %822 = vmatpush1.msra.mxu0 0.0
      %823 = vmatprep.subr.mxu0 0.0
      %824 = vmatpush1.msra.mxu0 0.0
      %825 = vmatprep.subr.mxu0 0.0
      %826 = vmatpush1.msra.mxu0 0.0
      %827 = vmatprep.subr.mxu0 0.0
      %828 = vmatpush1.msra.mxu0 0.0
      %829 = vmatprep.mubr.f32.mxu0 0.0
      %830 = vmatmul.mubr.f32.gmra.mrb[0].mxu0 %v691
      %v831 = vpop.f32.mrb[0].mxu0
      %v832 = vadd.f32 0.0, %v831
      %v833 = vpop.f32.mrb[0].mxu0
      %834 = vmatprep.mubr.f32.mxu0 0.0
      %835 = vmatmul.mubr.f32.gmra.mrb[0].mxu0 %v694
      %v836 = vpop.f32.mrb[0].mxu0
      %v837 = vadd.f32 0.0, %v836
      %v838 = vpop.f32.mrb[0].mxu0
      %839 = vmatprep.mubr.f32.mxu0 0.0
      %840 = vmatmul.mubr.f32.gmra.mrb[0].mxu0 %v697
      %v841 = vpop.f32.mrb[0].mxu0
      %v842 = vadd.f32 0.0, %v841
      %v843 = vpop.f32.mrb[0].mxu0
      %844 = vmatprep.mubr.f32.mxu0 0.0
      %845 = vmatmul.mubr.f32.gmra.mrb[0].mxu0 %v700
      %v846 = vpop.f32.mrb[0].mxu0
      %v847 = vadd.f32 0.0, %v846
      %v848 = vpop.f32.mrb[0].mxu0
      %849 = vmatprep.mubr.f32.mxu0 0.0
      %850 = vmatmul.mubr.f32.gmra.mrb[0].mxu0 %v703
      %v851 = vpop.f32.mrb[0].mxu0
      %v852 = vadd.f32 0.0, %v851
      %v853 = vpop.f32.mrb[0].mxu0
      %854 = vmatprep.mubr.f32.mxu0 0.0
      %855 = vmatmul.mubr.f32.gmra.mrb[0].mxu0 %v706
      %v856 = vpop.f32.mrb[0].mxu0
      %v857 = vadd.f32 0.0, %v856
      %v858 = vpop.f32.mrb[0].mxu0
      %859 = vmatprep.mubr.f32.mxu0 0.0
      %860 = vmatmul.mubr.f32.gmra.mrb[0].mxu0 %v709
      %v861 = vpop.f32.mrb[0].mxu0
      %v862 = vadd.f32 0.0, %v861
      %v863 = vpop.f32.mrb[0].mxu0
      %864 = vmatprep.mubr.f32.mxu0 0.0
      %865 = vmatmul.mubr.f32.gmra.mrb[0].mxu0 %v712
      %v866 = vpop.f32.mrb[0].mxu0
      %v867 = vadd.f32 0.0, %v866
      %v868 = vpop.f32.mrb[0].mxu0
      %869 = vmatprep.mubr.f32.mxu0 0.0
      %870 = vmatmul.mubr.f32.gmra.mrb[0].mxu0 %v715
      %v871 = vpop.f32.mrb[0].mxu0
      %v872 = vadd.f32 0.0, %v871
      %v873 = vpop.f32.mrb[0].mxu0
      %874 = vmatprep.mubr.f32.mxu0 0.0
      %875 = vmatmul.mubr.f32.gmra.mrb[0].mxu0 %v718
      %v876 = vpop.f32.mrb[0].mxu0
      %v877 = vadd.f32 0.0, %v876
      %v878 = vpop.f32.mrb[0].mxu0
      %879 = vmatprep.mubr.f32.mxu0 0.0
      %880 = vmatmul.mubr.f32.gmra.mrb[0].mxu0 %v721
      %v881 = vpop.f32.mrb[0].mxu0
      %v882 = vadd.f32 0.0, %v881
      %v883 = vpop.f32.mrb[0].mxu0
      %884 = vmatprep.mubr.f32.mxu0 0.0
      %885 = vmatmul.mubr.f32.gmra.mrb[0].mxu0 %v724
      %v886 = vpop.f32.mrb[0].mxu0
      %v887 = vadd.f32 0.0, %v886
      %v888 = vpop.f32.mrb[0].mxu0
      %889 = vmatprep.mubr.f32.mxu0 0.0
      %890 = vmatmul.mubr.f32.gmra.mrb[0].mxu0 %v727
      %v891 = vpop.f32.mrb[0].mxu0
      %v892 = vadd.f32 0.0, %v891
      %v893 = vpop.f32.mrb[0].mxu0
      %894 = vmatprep.mubr.f32.mxu0 0.0
      %895 = vmatmul.mubr.f32.gmra.mrb[0].mxu0 %v730
      %v896 = vpop.f32.mrb[0].mxu0
      %v897 = vadd.f32 0.0, %v896
      %v898 = vpop.f32.mrb[0].mxu0
      %899 = vmatprep.mubr.f32.mxu0 0.0
      %900 = vmatmul.mubr.f32.gmra.mrb[0].mxu0 %v733
      %v901 = vpop.f32.mrb[0].mxu0
      %v902 = vadd.f32 0.0, %v901
      %v903 = vpop.f32.mrb[0].mxu0
      %904 = vmatprep.mubr.f32.mxu0 0.0
      %905 = vmatmul.mubr.f32.gmra.mrb[0].mxu0 %v736
      %v906 = vpop.f32.mrb[0].mxu0
      %v907 = vadd.f32 0.0, %v906
      %v908 = vpop.f32.mrb[0].mxu0
      %909 = vmatprep.mubr.f32.mxu0 0.0
      %910 = vmatmul.mubr.f32.gmra.mrb[0].mxu0 %v739
      %v911 = vpop.f32.mrb[0].mxu0
      %v912 = vadd.f32 0.0, %v911
      %v913 = vpop.f32.mrb[0].mxu0
      %914 = vmatprep.mubr.f32.mxu0 0.0
      %915 = vmatmul.mubr.f32.gmra.mrb[0].mxu0 %v742
      %v916 = vpop.f32.mrb[0].mxu0
      %v917 = vadd.f32 0.0, %v916
      %v918 = vpop.f32.mrb[0].mxu0
      %919 = vmatprep.mubr.f32.mxu0 0.0
      %920 = vmatmul.mubr.f32.gmra.mrb[0].mxu0 %v745
      %v921 = vpop.f32.mrb[0].mxu0
      %v922 = vadd.f32 0.0, %v921
      %v923 = vpop.f32.mrb[0].mxu0
      %924 = vmatprep.mubr.f32.mxu0 0.0
      %925 = vmatmul.mubr.f32.gmra.mrb[0].mxu0 %v748
      %v926 = vpop.f32.mrb[0].mxu0
      %v927 = vadd.f32 0.0, %v926
      %v928 = vpop.f32.mrb[0].mxu0
      %929 = vmatprep.mubr.f32.mxu0 0.0
      %930 = vmatmul.mubr.f32.gmra.mrb[0].mxu0 %v751
      %v931 = vpop.f32.mrb[0].mxu0
      %v932 = vadd.f32 0.0, %v931
      %v933 = vpop.f32.mrb[0].mxu0
      %934 = vmatprep.mubr.f32.mxu0 0.0
      %935 = vmatmul.mubr.f32.gmra.mrb[0].mxu0 %v754
      %v936 = vpop.f32.mrb[0].mxu0
      %v937 = vadd.f32 0.0, %v936
      %v938 = vpop.f32.mrb[0].mxu0
      %939 = vmatprep.mubr.f32.mxu0 0.0
      %940 = vmatmul.mubr.f32.gmra.mrb[0].mxu0 %v757
      %v941 = vpop.f32.mrb[0].mxu0
      %v942 = vadd.f32 0.0, %v941
      %v943 = vpop.f32.mrb[0].mxu0
      %944 = vmatprep.mubr.f32.mxu0 0.0
      %945 = vmatmul.mubr.f32.gmra.mrb[0].mxu0 %v760
      %v946 = vpop.f32.mrb[0].mxu0
      %v947 = vadd.f32 0.0, %v946
      %v948 = vpop.f32.mrb[0].mxu0
      %949 = vmatprep.mubr.f32.mxu0 0.0
      %950 = vmatmul.mubr.f32.gmra.mrb[0].mxu0 %v763
      %v951 = vpop.f32.mrb[0].mxu0
      %v952 = vadd.f32 0.0, %v951
      %v953 = vpop.f32.mrb[0].mxu0
      %954 = vdwg.mxu0
      %v956 = vsel %vm689, %v631, 0
      %v959 = vsel %vm689, %v632, 0
      %v962 = vsel %vm689, %v633, 0
      %v965 = vsel %vm689, %v634, 0
      %v968 = vsel %vm689, %v635, 0
      %v971 = vsel %vm689, %v636, 0
      %v974 = vsel %vm689, %v637, 0
      %v977 = vsel %vm689, %v638, 0
      %v980 = vsel %vm689, %v639, 0
      %v983 = vsel %vm689, %v640, 0
      %v986 = vsel %vm689, %v641, 0
      %v989 = vsel %vm689, %v642, 0
      %v992 = vsel %vm689, %v643, 0
      %v995 = vsel %vm689, %v644, 0
      %v998 = vsel %vm689, %v645, 0
      %v1001 = vsel %vm689, %v646, 0
      %v1004 = vsel %vm689, %v647, 0
      %v1007 = vsel %vm689, %v648, 0
      %v1010 = vsel %vm689, %v649, 0
      %v1013 = vsel %vm689, %v650, 0
      %v1016 = vsel %vm689, %v651, 0
      %v1019 = vsel %vm689, %v652, 0
      %v1022 = vsel %vm689, %v653, 0
      %v1025 = vsel %vm689, %v654, 0
      %v1028 = vsel %vm689, %v655, 0
      %1030 = vmatprep.subr.mxu0 0.0
      %1031 = vmatpush1.msra.mxu0 %v656
      %1032 = vmatprep.subr.mxu0 0.0
      %1033 = vmatpush1.msra.mxu0 %v657
      %1034 = vmatprep.subr.mxu0 0.0
      %1035 = vmatpush1.msra.mxu0 %v658
      %1036 = vmatprep.subr.mxu0 0.0
      %1037 = vmatpush1.msra.mxu0 %v659
      %1038 = vmatprep.subr.mxu0 0.0
      %1039 = vmatpush1.msra.mxu0 0.0
      %1040 = vmatprep.subr.mxu0 0.0
      %1041 = vmatpush1.msra.mxu0 0.0
      %1042 = vmatprep.subr.mxu0 0.0
      %1043 = vmatpush1.msra.mxu0 0.0
      %1044 = vmatprep.subr.mxu0 0.0
      %1045 = vmatpush1.msra.mxu0 0.0
      %1046 = vmatprep.subr.mxu0 0.0
      %1047 = vmatpush1.msra.mxu0 0.0
      %1048 = vmatprep.subr.mxu0 0.0
      %1049 = vmatpush1.msra.mxu0 0.0
      %1050 = vmatprep.subr.mxu0 0.0
      %1051 = vmatpush1.msra.mxu0 0.0
      %1052 = vmatprep.subr.mxu0 0.0
      %1053 = vmatpush1.msra.mxu0 0.0
      %1054 = vmatprep.subr.mxu0 0.0
      %1055 = vmatpush1.msra.mxu0 0.0
      %1056 = vmatprep.subr.mxu0 0.0
      %1057 = vmatpush1.msra.mxu0 0.0
      %1058 = vmatprep.subr.mxu0 0.0
      %1059 = vmatpush1.msra.mxu0 0.0
      %1060 = vmatprep.subr.mxu0 0.0
      %1061 = vmatpush1.msra.mxu0 0.0
      %1062 = vmatprep.subr.mxu0 0.0
      %1063 = vmatpush1.msra.mxu0 0.0
      %1064 = vmatprep.subr.mxu0 0.0
      %1065 = vmatpush1.msra.mxu0 0.0
      %1066 = vmatprep.subr.mxu0 0.0
      %1067 = vmatpush1.msra.mxu0 0.0
      %1068 = vmatprep.subr.mxu0 0.0
      %1069 = vmatpush1.msra.mxu0 0.0
      %1070 = vmatprep.subr.mxu0 0.0
      %1071 = vmatpush1.msra.mxu0 0.0
      %1072 = vmatprep.subr.mxu0 0.0
      %1073 = vmatpush1.msra.mxu0 0.0
      %1074 = vmatprep.subr.mxu0 0.0
      %1075 = vmatpush1.msra.mxu0 0.0
      %1076 = vmatprep.subr.mxu0 0.0
      %1077 = vmatpush1.msra.mxu0 0.0
      %1078 = vmatprep.subr.mxu0 0.0
      %1079 = vmatpush1.msra.mxu0 0.0
      %1080 = vmatprep.subr.mxu0 0.0
      %1081 = vmatpush1.msra.mxu0 0.0
      %1082 = vmatprep.subr.mxu0 0.0
      %1083 = vmatpush1.msra.mxu0 0.0
      %1084 = vmatprep.subr.mxu0 0.0
      %1085 = vmatpush1.msra.mxu0 0.0
      %1086 = vmatprep.subr.mxu0 0.0
      %1087 = vmatpush1.msra.mxu0 0.0
      %1088 = vmatprep.subr.mxu0 0.0
      %1089 = vmatpush1.msra.mxu0 0.0
      %1090 = vmatprep.subr.mxu0 0.0
      %1091 = vmatpush1.msra.mxu0 0.0
      %1092 = vmatprep.subr.mxu0 0.0
      %1093 = vmatpush1.msra.mxu0 0.0
      %1094 = vmatprep.mubr.f32.mxu0 0.0
      %1095 = vmatmul.mubr.f32.gmra.mrb[0].mxu0 %v956
      %v1096 = vpop.f32.mrb[0].mxu0
      %v1097 = vadd.f32 %v832, %v1096
      %v1098 = vpop.f32.mrb[0].mxu0
      %1099 = vmatprep.mubr.f32.mxu0 0.0
      %1100 = vmatmul.mubr.f32.gmra.mrb[0].mxu0 %v959
      %v1101 = vpop.f32.mrb[0].mxu0
      %v1102 = vadd.f32 %v837, %v1101
      %v1103 = vpop.f32.mrb[0].mxu0
      %1104 = vmatprep.mubr.f32.mxu0 0.0
      %1105 = vmatmul.mubr.f32.gmra.mrb[0].mxu0 %v962
      %v1106 = vpop.f32.mrb[0].mxu0
      %v1107 = vadd.f32 %v842, %v1106
      %v1108 = vpop.f32.mrb[0].mxu0
      %1109 = vmatprep.mubr.f32.mxu0 0.0
      %1110 = vmatmul.mubr.f32.gmra.mrb[0].mxu0 %v965
      %v1111 = vpop.f32.mrb[0].mxu0
      %v1112 = vadd.f32 %v847, %v1111
      %v1113 = vpop.f32.mrb[0].mxu0
      %1114 = vmatprep.mubr.f32.mxu0 0.0
      %1115 = vmatmul.mubr.f32.gmra.mrb[0].mxu0 %v968
      %v1116 = vpop.f32.mrb[0].mxu0
      %v1117 = vadd.f32 %v852, %v1116
      %v1118 = vpop.f32.mrb[0].mxu0
      %1119 = vmatprep.mubr.f32.mxu0 0.0
      %1120 = vmatmul.mubr.f32.gmra.mrb[0].mxu0 %v971
      %v1121 = vpop.f32.mrb[0].mxu0
      %v1122 = vadd.f32 %v857, %v1121
      %v1123 = vpop.f32.mrb[0].mxu0
      %1124 = vmatprep.mubr.f32.mxu0 0.0
      %1125 = vmatmul.mubr.f32.gmra.mrb[0].mxu0 %v974
      %v1126 = vpop.f32.mrb[0].mxu0
      %v1127 = vadd.f32 %v862, %v1126
      %v1128 = vpop.f32.mrb[0].mxu0
      %1129 = vmatprep.mubr.f32.mxu0 0.0
      %1130 = vmatmul.mubr.f32.gmra.mrb[0].mxu0 %v977
      %v1131 = vpop.f32.mrb[0].mxu0
      %v1132 = vadd.f32 %v867, %v1131
      %v1133 = vpop.f32.mrb[0].mxu0
      %1134 = vmatprep.mubr.f32.mxu0 0.0
      %1135 = vmatmul.mubr.f32.gmra.mrb[0].mxu0 %v980
      %v1136 = vpop.f32.mrb[0].mxu0
      %v1137 = vadd.f32 %v872, %v1136
      %v1138 = vpop.f32.mrb[0].mxu0
      %1139 = vmatprep.mubr.f32.mxu0 0.0
      %1140 = vmatmul.mubr.f32.gmra.mrb[0].mxu0 %v983
      %v1141 = vpop.f32.mrb[0].mxu0
      %v1142 = vadd.f32 %v877, %v1141
      %v1143 = vpop.f32.mrb[0].mxu0
      %1144 = vmatprep.mubr.f32.mxu0 0.0
      %1145 = vmatmul.mubr.f32.gmra.mrb[0].mxu0 %v986
      %v1146 = vpop.f32.mrb[0].mxu0
      %v1147 = vadd.f32 %v882, %v1146
      %v1148 = vpop.f32.mrb[0].mxu0
      %1149 = vmatprep.mubr.f32.mxu0 0.0
      %1150 = vmatmul.mubr.f32.gmra.mrb[0].mxu0 %v989
      %v1151 = vpop.f32.mrb[0].mxu0
      %v1152 = vadd.f32 %v887, %v1151
      %v1153 = vpop.f32.mrb[0].mxu0
      %1154 = vmatprep.mubr.f32.mxu0 0.0
      %1155 = vmatmul.mubr.f32.gmra.mrb[0].mxu0 %v992
      %v1156 = vpop.f32.mrb[0].mxu0
      %v1157 = vadd.f32 %v892, %v1156
      %v1158 = vpop.f32.mrb[0].mxu0
      %1159 = vmatprep.mubr.f32.mxu0 0.0
      %1160 = vmatmul.mubr.f32.gmra.mrb[0].mxu0 %v995
      %v1161 = vpop.f32.mrb[0].mxu0
      %v1162 = vadd.f32 %v897, %v1161
      %v1163 = vpop.f32.mrb[0].mxu0
      %1164 = vmatprep.mubr.f32.mxu0 0.0
      %1165 = vmatmul.mubr.f32.gmra.mrb[0].mxu0 %v998
      %v1166 = vpop.f32.mrb[0].mxu0
      %v1167 = vadd.f32 %v902, %v1166
      %v1168 = vpop.f32.mrb[0].mxu0
      %1169 = vmatprep.mubr.f32.mxu0 0.0
      %1170 = vmatmul.mubr.f32.gmra.mrb[0].mxu0 %v1001
      %v1171 = vpop.f32.mrb[0].mxu0
      %v1172 = vadd.f32 %v907, %v1171
      %v1173 = vpop.f32.mrb[0].mxu0
      %1174 = vmatprep.mubr.f32.mxu0 0.0
      %1175 = vmatmul.mubr.f32.gmra.mrb[0].mxu0 %v1004
      %v1176 = vpop.f32.mrb[0].mxu0
      %v1177 = vadd.f32 %v912, %v1176
      %v1178 = vpop.f32.mrb[0].mxu0
      %1179 = vmatprep.mubr.f32.mxu0 0.0
      %1180 = vmatmul.mubr.f32.gmra.mrb[0].mxu0 %v1007
      %v1181 = vpop.f32.mrb[0].mxu0
      %v1182 = vadd.f32 %v917, %v1181
      %v1183 = vpop.f32.mrb[0].mxu0
      %1184 = vmatprep.mubr.f32.mxu0 0.0
      %1185 = vmatmul.mubr.f32.gmra.mrb[0].mxu0 %v1010
      %v1186 = vpop.f32.mrb[0].mxu0
      %v1187 = vadd.f32 %v922, %v1186
      %v1188 = vpop.f32.mrb[0].mxu0
      %1189 = vmatprep.mubr.f32.mxu0 0.0
      %1190 = vmatmul.mubr.f32.gmra.mrb[0].mxu0 %v1013
      %v1191 = vpop.f32.mrb[0].mxu0
      %v1192 = vadd.f32 %v927, %v1191
      %v1193 = vpop.f32.mrb[0].mxu0
      %1194 = vmatprep.mubr.f32.mxu0 0.0
      %1195 = vmatmul.mubr.f32.gmra.mrb[0].mxu0 %v1016
      %v1196 = vpop.f32.mrb[0].mxu0
      %v1197 = vadd.f32 %v932, %v1196
      %v1198 = vpop.f32.mrb[0].mxu0
      %1199 = vmatprep.mubr.f32.mxu0 0.0
      %1200 = vmatmul.mubr.f32.gmra.mrb[0].mxu0 %v1019
      %v1201 = vpop.f32.mrb[0].mxu0
      %v1202 = vadd.f32 %v937, %v1201
      %v1203 = vpop.f32.mrb[0].mxu0
      %1204 = vmatprep.mubr.f32.mxu0 0.0
      %1205 = vmatmul.mubr.f32.gmra.mrb[0].mxu0 %v1022
      %v1206 = vpop.f32.mrb[0].mxu0
      %v1207 = vadd.f32 %v942, %v1206
      %v1208 = vpop.f32.mrb[0].mxu0
      %1209 = vmatprep.mubr.f32.mxu0 0.0
      %1210 = vmatmul.mubr.f32.gmra.mrb[0].mxu0 %v1025
      %v1211 = vpop.f32.mrb[0].mxu0
      %v1212 = vadd.f32 %v947, %v1211
      %v1213 = vpop.f32.mrb[0].mxu0
      %1214 = vmatprep.mubr.f32.mxu0 0.0
      %1215 = vmatmul.mubr.f32.gmra.mrb[0].mxu0 %v1028
      %v1216 = vpop.f32.mrb[0].mxu0
      %v1217 = vadd.f32 %v952, %v1216
      %v1218 = vpop.f32.mrb[0].mxu0
      %1219 = vdwg.mxu0
      %v1220 = vld [vmem:[%s9] sm:$0x1]
      %v1222 = vlaneseq
      %v1223 = vshrl.u32 %v1222, 7
      %v1224 = vsub.s32 0, %v1223
      %v1225 = vrot.slane %v1220, %v1224
      %v1227 = vadd.f32 %v1097, %v1225
      %v1228 = vadd.f32 %v1102, %v1225
      %v1229 = vadd.f32 %v1107, %v1225
      %v1230 = vadd.f32 %v1112, %v1225
      %v1231 = vadd.f32 %v1117, %v1225
      %v1232 = vadd.f32 %v1122, %v1225
      %v1233 = vadd.f32 %v1127, %v1225
      %v1234 = vadd.f32 %v1132, %v1225
      %v1235 = vadd.f32 %v1137, %v1225
      %v1236 = vadd.f32 %v1142, %v1225
      %v1237 = vadd.f32 %v1147, %v1225
      %v1238 = vadd.f32 %v1152, %v1225
      %v1239 = vadd.f32 %v1157, %v1225
      %v1240 = vadd.f32 %v1162, %v1225
      %v1241 = vadd.f32 %v1167, %v1225
      %v1242 = vadd.f32 %v1172, %v1225
      %v1243 = vadd.f32 %v1177, %v1225
      %v1244 = vadd.f32 %v1182, %v1225
      %v1245 = vadd.f32 %v1187, %v1225
      %v1246 = vadd.f32 %v1192, %v1225
      %v1247 = vadd.f32 %v1197, %v1225
      %v1248 = vadd.f32 %v1202, %v1225
      %v1249 = vadd.f32 %v1207, %v1225
      %v1250 = vadd.f32 %v1212, %v1225
      %v1251 = vadd.f32 %v1217, %v1225
      %1252 = vst [vmem:[%s419] sm:$0xff] 0.0
      %1253 = vst [vmem:[%s419 + $0x8] sm:$0xff] 0.0
      %1254 = vst [vmem:[%s419 + $0x10] sm:$0xff] 0.0
      %1255 = vst [vmem:[%s419 + $0x18] sm:$0xff] 0.0
      %1256 = vst [vmem:[%s419 + $0x20] sm:$0xff] 0.0
      %1257 = vst [vmem:[%s419 + $0x28] sm:$0xff] 0.0
      %1258 = vst [vmem:[%s419 + $0x30] sm:$0xff] 0.0
      %1259 = vst [vmem:[%s419 + $0x38] sm:$0xff] 0.0
      %1260 = vst [vmem:[%s419 + $0x40] sm:$0xff] 0.0
      %1261 = vst [vmem:[%s419 + $0x48] sm:$0xff] 0.0
      %1262 = vst [vmem:[%s419 + $0x50] sm:$0xff] 0.0
      %1263 = vst [vmem:[%s419 + $0x58] sm:$0xff] 0.0
      %1264 = vst [vmem:[%s419 + $0x60] sm:$0xff] 0.0
      %1265 = vst [vmem:[%s419 + $0x68] sm:$0xff] 0.0
      %1266 = vst [vmem:[%s419 + $0x70] sm:$0xff] 0.0
      %1267 = vst [vmem:[%s419 + $0x78] sm:$0xff] 0.0
      %1268 = vst [vmem:[%s419 + $0x80] sm:$0xff] 0.0
      %1269 = vst [vmem:[%s419 + $0x88] sm:$0xff] 0.0
      %1270 = vst [vmem:[%s419 + $0x90] sm:$0xff] 0.0
      %1271 = vst [vmem:[%s419 + $0x98] sm:$0xff] 0.0
      %1272 = vst [vmem:[%s419 + $0xa0] sm:$0xff] 0.0
      %1273 = vst [vmem:[%s419 + $0xa8] sm:$0xff] 0.0
      %1274 = vst [vmem:[%s419 + $0xb0] sm:$0xff] 0.0
      %1275 = vst [vmem:[%s419 + $0xb8] sm:$0xff] 0.0
      %1276 = vst [vmem:[%s419 + $0xc0] sm:$0xff] 0.0
      %1277 = vst [vmem:[%s419 + $0xc8] sm:$0xff] 0.0
      %1278 = vst [vmem:[%s419 + $0xd0] sm:$0xff] 0.0
      %1279 = vst [vmem:[%s419 + $0xd8] sm:$0xff] 0.0
      %1280 = vst [vmem:[%s419 + $0xe0] sm:$0xff] 0.0
      %1281 = vst [vmem:[%s419 + $0xe8] sm:$0xff] 0.0
      %1282 = vst [vmem:[%s419 + $0xf0] sm:$0xff] 0.0
      %1283 = vst [vmem:[%s419 + $0xf8] sm:$0xff] 0.0
      %1284 = vst [vmem:[%s419] sm:$0xff] %v1227
      %1285 = vst [vmem:[%s419 + $0x8] sm:$0xff] %v1228
      %1286 = vst [vmem:[%s419 + $0x10] sm:$0xff] %v1229
      %1287 = vst [vmem:[%s419 + $0x18] sm:$0xff] %v1230
      %1288 = vst [vmem:[%s419 + $0x20] sm:$0xff] %v1231
      %1289 = vst [vmem:[%s419 + $0x28] sm:$0xff] %v1232
      %1290 = vst [vmem:[%s419 + $0x30] sm:$0xff] %v1233
      %1291 = vst [vmem:[%s419 + $0x38] sm:$0xff] %v1234
      %1292 = vst [vmem:[%s419 + $0x40] sm:$0xff] %v1235
      %1293 = vst [vmem:[%s419 + $0x48] sm:$0xff] %v1236
      %1294 = vst [vmem:[%s419 + $0x50] sm:$0xff] %v1237
      %1295 = vst [vmem:[%s419 + $0x58] sm:$0xff] %v1238
      %1296 = vst [vmem:[%s419 + $0x60] sm:$0xff] %v1239
      %1297 = vst [vmem:[%s419 + $0x68] sm:$0xff] %v1240
      %1298 = vst [vmem:[%s419 + $0x70] sm:$0xff] %v1241
      %1299 = vst [vmem:[%s419 + $0x78] sm:$0xff] %v1242
      %1300 = vst [vmem:[%s419 + $0x80] sm:$0xff] %v1243
      %1301 = vst [vmem:[%s419 + $0x88] sm:$0xff] %v1244
      %1302 = vst [vmem:[%s419 + $0x90] sm:$0xff] %v1245
      %1303 = vst [vmem:[%s419 + $0x98] sm:$0xff] %v1246
      %1304 = vst [vmem:[%s419 + $0xa0] sm:$0xff] %v1247
      %1305 = vst [vmem:[%s419 + $0xa8] sm:$0xff] %v1248
      %1306 = vst [vmem:[%s419 + $0xb0] sm:$0xff] %v1249
      %1307 = vst [vmem:[%s419 + $0xb8] sm:$0xff] %v1250
      %1308 = vst [vmem:[%s419 + $0xc0] sm:$0xff] %v1251
      %1309 = vst [vmem:[%s419 + $0xc8] sm:$0xff] %v628
      %1310 = vst [vmem:[%s419 + $0xd0] sm:$0xff] %v629
      %1311 = vst [vmem:[%s419 + $0xd8] sm:$0xf] %v630
      %p1312 = scmp.lt.s32.totalorder %s21, 1
      %s1313 = scalar_select %p1312, %s21, 1
      %s1314 = smul.addr %s1313, 32
      %s1315 = smul.addr %s1314, 8
      %s1316 = scalar_lea.vmem %s10, %s1315
      // Predicated region
      $region61: #{caption_model_forward.2} parent=59 // pred_check
        %p1317 = pneg %p269
      $region62: #{caption_model_forward.2} parent=59 // pred_check_branch
        %1319 = sbr.rel (%p1317) target = $region64
      $region63: #{caption_model_forward.2} parent=59 // pred_region
        _
      $region64: #{caption_model_forward.2} parent=59 // pred_fallthru
        _
    $region60: #{caption_model_forward.2} parent=5 // pred_fallthru
      _
    %p1320 = scmp.le.s32.totalorder 2, %s16
    // Predicated region
    $region65: #{caption_model_forward.2} parent=5 // pred_check
      %p1321 = pneg %p1320
    $region66: #{caption_model_forward.2} parent=5 // pred_check_branch
      %1323 = sbr.rel (%p1321) target = $region68
    $region67: #{caption_model_forward.2} parent=5 // pred_region
      %s1324 = ssub.s32 %s16, 2
      // Predicated region
      $region69: #{caption_model_forward.2} parent=67 // pred_check
        %p1325 = pneg %p275
      $region70: #{caption_model_forward.2} parent=67 // pred_check_branch
        %1327 = sbr.rel (%p1325) target = $region72
      $region71: #{caption_model_forward.2} parent=67 // pred_region
        %p1328 = scmp.lt.s32.totalorder %s22, 1
        %s1329 = scalar_select %p1328, %s22, 1
        %s1330 = smul.addr %s1329, 32
        %s1331 = smul.addr %s1330, 8
        %s1332 = scalar_lea.vmem %s10, %s1331
      $region72: #{caption_model_forward.2} parent=67 // pred_fallthru
        _
    $region68: #{caption_model_forward.2} parent=5 // pred_fallthru
      _
  $region6: #{caption_model_forward.2} parent=0 // loop_footer
    %s20 = sadd.s32 1, %s16
  $region7: #{caption_model_forward.2} parent=0 // loop_footer_branch
    %15 = sbr.rel target = $region3
  $region8: #{caption_model_forward.2} parent=0 // loop_exit
    _

// kernel: caption_model_forward.3
$region0: #{caption_model_forward.3}
  #allocation0 [shape = 'u32[]', space=smem, size = 0x4, offset = 0x4, fixed_abs, tag = 'smem constant byte address 0x4 - core index']
  #allocation1 [shape = 'u32[144,128]{1,0:T(1,128)}', space=vmem, size = 0x12000, scoped, tag = 'internal scratch']
  #allocation2 [shape = 's32[1]{0}', space=sflag, size = 0x4, scoped, tag = 'scoped memory for caption_model_forward.3']
  #allocation3 [shape = 'u8[1024]{0}', space=smem, size = 0x400, scoped, tag = 'prefetched SMEM operand 0']
  %s0 = inlined_call_operand.vmem [shape: s32[2,8], index: 0, kind: input, shape index: {}]
  %s1 = inlined_call_operand.vmem [shape: f32[2,256,128], index: 1, kind: input, shape index: {}]
  %s2 = inlined_call_operand.vmem [shape: f32[100,128], index: 2, kind: input, shape index: {}]
  %s3 = inlined_call_operand.vmem [shape: f32[8,128], index: 3, kind: input, shape index: {}]
  %s4 = inlined_call_operand.vmem [shape: f32[128,384], index: 4, kind: input, shape index: {}]
  %s5 = inlined_call_operand.vmem [shape: f32[1,384], index: 5, kind: input, shape index: {}]
  %s6 = inlined_call_operand.vmem [shape: f32[128,128], index: 6, kind: input, shape index: {}]
  %s7 = inlined_call_operand.vmem [shape: f32[1,128], index: 7, kind: input, shape index: {}, may-alias: {7,9,11,15,17,21,23,25}]
  %s8 = inlined_call_operand.vmem [shape: f32[1,128], index: 8, kind: input, shape index: {}, may-alias: {8,16,22}]
  %s9 = inlined_call_operand.vmem [shape: f32[1,128], index: 9, kind: input, shape index: {}, may-alias: {7,9,11,15,17,21,23,25}]
  %s10 = inlined_call_operand.vmem [shape: f32[128,128], index: 10, kind: input, shape index: {}]
  %s11 = inlined_call_operand.vmem [shape: f32[1,128], index: 11, kind: input, shape index: {}, may-alias: {7,9,11,15,17,21,23,25}]
  %s12 = inlined_call_operand.vmem [shape: f32[128,256], index: 12, kind: input, shape index: {}]
  %s13 = inlined_call_operand.vmem [shape: f32[1,256], index: 13, kind: input, shape index: {}]
  %s14 = inlined_call_operand.vmem [shape: f32[128,128], index: 14, kind: input, shape index: {}]
  %s15 = inlined_call_operand.vmem [shape: f32[1,128], index: 15, kind: input, shape index: {}, may-alias: {7,9,11,15,17,21,23,25}]
  %s16 = inlined_call_operand.vmem [shape: f32[1,128], index: 16, kind: input, shape index: {}, may-alias: {8,16,22}]
  %s17 = inlined_call_operand.vmem [shape: f32[1,128], index: 17, kind: input, shape index: {}, may-alias: {7,9,11,15,17,21,23,25}]
  %s18 = inlined_call_operand.vmem [shape: f32[128,512], index: 18, kind: input, shape index: {}]
  %s19 = inlined_call_operand.vmem [shape: f32[1,512], index: 19, kind: input, shape index: {}]
  %s20 = inlined_call_operand.vmem [shape: f32[512,128], index: 20, kind: input, shape index: {}]
  %s21 = inlined_call_operand.vmem [shape: f32[1,128], index: 21, kind: input, shape index: {}, may-alias: {7,9,11,15,17,21,23,25}]
  %s22 = inlined_call_operand.vmem [shape: f32[1,128], index: 22, kind: input, shape index: {}, may-alias: {8,16,22}]
  %s23 = inlined_call_operand.vmem [shape: f32[1,128], index: 23, kind: input, shape index: {}, may-alias: {7,9,11,15,17,21,23,25}]
  %s24 = inlined_call_operand.vmem [shape: f32[128,128], index: 24, kind: input, shape index: {}]
  %s25 = inlined_call_operand.vmem [shape: f32[1,128], index: 25, kind: input, shape index: {}, may-alias: {7,9,11,15,17,21,23,25}]
  %s26 = inlined_call_operand.hbm [shape: f32[2,8,128], index: 26, kind: output, shape index: {}]
  %s27 = sld [smem:[#allocation0]]
  $region133: #{caption_model_forward.3} parent=0
    _
  %s29 = ssub.s32 1, %s27
  %s30 = scalar_select 0, %s29, %s27
  %s31 = sshll.u32 %s0, 4
  %s32 = int_to_ptr.vmem [resolvable:$true] %s31
  %34 = dma.vmem_to_smem %s32, 32, [#allocation3], [#allocation2]
  %35 = dma.done [#allocation2], 32
  %36 = sfence
  $region1: #{caption_model_forward.3} parent=0
    #allocation4 [shape = 'u8[8192]{0}', space=vmem, size = 0x2000, scoped, tag = 'output window, operand 0']
    #allocation5 [shape = 's32[2]{0}', space=sflag, size = 0x8, scoped, tag = 'scoped memory for caption_model_forward.3']
    %37 = vsyncpa [#allocation5], 0
    %s38 = scalar_lea.sflag [#allocation5], 1
    %39 = vsyncpa %s38, 0
    loop: start=0, step=1, limit=4
    $region2: #{caption_model_forward.3} parent=1 // loop_pre_header
      _
    $region3: #{caption_model_forward.3} parent=1 // loop_header
      %s41 = sphi 0, %s45
      %p42 = scmp.ge.s32.totalorder %s41, 4
      %s51 = sphi 0, %s53
      %s54 = sphi 0, %s51
      %s55 = sphi 0, %s54
      %s71 = sphi 0, %s55
      %s75 = sphi 0, %s75
      %s77 = sphi 0, %s75
      %s78 = sphi 0, %s77
      %s92 = sphi 0, %s78
      %s96 = sphi 0, %s96
      %s98 = sphi 0, %s96
      %s99 = sphi 0, %s98
      %s113 = sphi 0, %s99
      %s117 = sphi 0, %s117
      %s119 = sphi 0, %s117
      %s120 = sphi 0, %s119
      %s134 = sphi 0, %s120
      %s138 = sphi 0, %s138
      %s140 = sphi 0, %s138
      %s141 = sphi 0, %s140
      %s155 = sphi 0, %s141
      %s159 = sphi 0, %s159
      %s161 = sphi 0, %s159
      %s162 = sphi 0, %s161
      %s176 = sphi 0, %s162
      %s180 = sphi 0, %s180
      %s182 = sphi 0, %s180
      %s183 = sphi 0, %s182
      %s197 = sphi 0, %s183
      %s201 = sphi 0, %s201
      %s203 = sphi 0, %s201
      %s204 = sphi 0, %s203
      %s218 = sphi 0, %s204
      %s222 = sphi 0, %s222
      %s224 = sphi 0, %s222
      %s225 = sphi 0, %s224
      %s239 = sphi 0, %s225
      %s243 = sphi 0, %s243
      %s245 = sphi 0, %s243
      %s246 = sphi 0, %s245
      %s260 = sphi 0, %s246
      %s264 = sphi 0, %s264
      %s266 = sphi 0, %s264
      %s267 = sphi 0, %s266
      %s281 = sphi 0, %s267
      %s285 = sphi 0, %s285
      %s287 = sphi 0, %s285
      %s288 = sphi 0, %s287
      %s302 = sphi 0, %s288
      %s306 = sphi 0, %s306
      %s308 = sphi 0, %s306
      %s309 = sphi 0, %s308
      %s323 = sphi 0, %s309
      %s327 = sphi 0, %s327
      %s329 = sphi 0, %s327
      %s330 = sphi 0, %s329
      %s344 = sphi 0, %s330
      %s348 = sphi 0, %s348
      %s350 = sphi 0, %s348
      %s351 = sphi 0, %s350
      %s365 = sphi 0, %s351
      %s369 = sphi 0, %s369
      %s371 = sphi 0, %s369
      %s372 = sphi 0, %s371
      %s386 = sphi 0, %s372
      %s390 = sphi 0, %s390
      %s392 = sphi 0, %s390
      %s393 = sphi 0, %s392
      %s407 = sphi 0, %s393
      %s411 = sphi 0, %s411
      %s413 = sphi 0, %s411
      %s414 = sphi 0, %s413
      %s428 = sphi 0, %s414
      %s432 = sphi 0, %s432
      %s434 = sphi 0, %s432
      %s435 = sphi 0, %s434
      %s449 = sphi 0, %s435
      %s453 = sphi 0, %s453
      %s455 = sphi 0, %s453
      %s456 = sphi 0, %s455
      %s470 = sphi 0, %s456
      %s474 = sphi 0, %s474
      %s476 = sphi 0, %s474
      %s477 = sphi 0, %s476
      %s491 = sphi 0, %s477
      %s495 = sphi 0, %s495
      %s497 = sphi 0, %s495
      %s498 = sphi 0, %s497
      %s512 = sphi 0, %s498
      %s516 = sphi 0, %s516
      %s518 = sphi 0, %s516
      %s519 = sphi 0, %s518
      %s533 = sphi 0, %s519
      %s537 = sphi 0, %s537
      %s539 = sphi 0, %s537
      %s540 = sphi 0, %s539
      %s554 = sphi 0, %s540
      %s558 = sphi 0, %s558
      %s560 = sphi 0, %s558
      %s561 = sphi 0, %s560
      %s575 = sphi 0, %s561
      %s581 = sphi 0, %s583
      %s584 = sphi 0, %s581
      %s585 = sphi 0, %s584
      %s601 = sphi 0, %s585
    $region4: #{caption_model_forward.3} parent=1 // loop_header_branch
      %44 = sbr.rel (%p42) target = $region8
    $region5: #{caption_model_forward.3} parent=1 // loop_body
      %s46 = ssub.s32 %s41, 1
      %s47 = ssub.s32 %s41, 2
      %s48 = sadd.s32 %s41, 1
      %s49 = ssub.s32 %s41, %s48
      %p50 = scmp.eq.s32.totalorder %s49, 0
      %s52 = sadd.s32 %s51, 1
      %s53 = scalar_select %p50, %s51, %s52
      %p56 = pneg %p50
      %p57 = scmp.eq.s32.totalorder %s41, 1
      %p58 = por %p56, %p57
      %p59 = scmp.ne.s32.totalorder %s51, %s54
      %p60 = scmp.eq.s32.totalorder %s41, 0
      %p61 = por %p59, %p60
      %p62 = scmp.ne.s32.totalorder %s51, %s54
      %p63 = scmp.eq.s32.totalorder %s46, 1
      %p64 = por %p62, %p63
      %p65 = scmp.ne.s32.totalorder %s54, %s55
      %p66 = scmp.eq.s32.totalorder %s46, 0
      %p67 = por %p65, %p66
      %p68 = scmp.ne.s32.totalorder %s54, %s55
      %p69 = scmp.eq.s32.totalorder %s47, 1
      %p70 = por %p68, %p69
      %p72 = scmp.ne.s32.totalorder %s55, %s71
      %p73 = scmp.eq.s32.totalorder %s47, 0
      %p74 = por %p72, %p73
      %s76 = sadd.s32 %s75, 1
      %p79 = scmp.eq.s32.totalorder %s41, 1
      %p80 = scmp.ne.s32.totalorder %s75, %s77
      %p81 = scmp.eq.s32.totalorder %s41, 0
      %p82 = por %p80, %p81
      %p83 = scmp.ne.s32.totalorder %s75, %s77
      %p84 = scmp.eq.s32.totalorder %s46, 1
      %p85 = por %p83, %p84
      %p86 = scmp.ne.s32.totalorder %s77, %s78
      %p87 = scmp.eq.s32.totalorder %s46, 0
      %p88 = por %p86, %p87
      %p89 = scmp.ne.s32.totalorder %s77, %s78
      %p90 = scmp.eq.s32.totalorder %s47, 1
      %p91 = por %p89, %p90
      %p93 = scmp.ne.s32.totalorder %s78, %s92
      %p94 = scmp.eq.s32.totalorder %s47, 0
      %p95 = por %p93, %p94
      %s97 = sadd.s32 %s96, 1
      %p100 = scmp.eq.s32.totalorder %s41, 1
      %p101 = scmp.ne.s32.totalorder %s96, %s98
      %p102 = scmp.eq.s32.totalorder %s41, 0
      %p103 = por %p101, %p102
      %p104 = scmp.ne.s32.totalorder %s96, %s98
      %p105 = scmp.eq.s32.totalorder %s46, 1
      %p106 = por %p104, %p105
      %p107 = scmp.ne.s32.totalorder %s98, %s99
      %p108 = scmp.eq.s32.totalorder %s46, 0
      %p109 = por %p107, %p108
      %p110 = scmp.ne.s32.totalorder %s98, %s99
      %p111 = scmp.eq.s32.totalorder %s47, 1
      %p112 = por %p110, %p111
      %p114 = scmp.ne.s32.totalorder %s99, %s113
      %p115 = scmp.eq.s32.totalorder %s47, 0
      %p116 = por %p114, %p115
      %s118 = sadd.s32 %s117, 1
      %p121 = scmp.eq.s32.totalorder %s41, 1
      %p122 = scmp.ne.s32.totalorder %s117, %s119
      %p123 = scmp.eq.s32.totalorder %s41, 0
      %p124 = por %p122, %p123
      %p125 = scmp.ne.s32.totalorder %s117, %s119
      %p126 = scmp.eq.s32.totalorder %s46, 1
      %p127 = por %p125, %p126
      %p128 = scmp.ne.s32.totalorder %s119, %s120
      %p129 = scmp.eq.s32.totalorder %s46, 0
      %p130 = por %p128, %p129
      %p131 = scmp.ne.s32.totalorder %s119, %s120
      %p132 = scmp.eq.s32.totalorder %s47, 1
      %p133 = por %p131, %p132
      %p135 = scmp.ne.s32.totalorder %s120, %s134
      %p136 = scmp.eq.s32.totalorder %s47, 0
      %p137 = por %p135, %p136
      %s139 = sadd.s32 %s138, 1
      %p142 = scmp.eq.s32.totalorder %s41, 1
      %p143 = scmp.ne.s32.totalorder %s138, %s140
      %p144 = scmp.eq.s32.totalorder %s41, 0
      %p145 = por %p143, %p144
      %p146 = scmp.ne.s32.totalorder %s138, %s140
      %p147 = scmp.eq.s32.totalorder %s46, 1
      %p148 = por %p146, %p147
      %p149 = scmp.ne.s32.totalorder %s140, %s141
      %p150 = scmp.eq.s32.totalorder %s46, 0
      %p151 = por %p149, %p150
      %p152 = scmp.ne.s32.totalorder %s140, %s141
      %p153 = scmp.eq.s32.totalorder %s47, 1
      %p154 = por %p152, %p153
      %p156 = scmp.ne.s32.totalorder %s141, %s155
      %p157 = scmp.eq.s32.totalorder %s47, 0
      %p158 = por %p156, %p157
      %s160 = sadd.s32 %s159, 1
      %p163 = scmp.eq.s32.totalorder %s41, 1
      %p164 = scmp.ne.s32.totalorder %s159, %s161
      %p165 = scmp.eq.s32.totalorder %s41, 0
      %p166 = por %p164, %p165
      %p167 = scmp.ne.s32.totalorder %s159, %s161
      %p168 = scmp.eq.s32.totalorder %s46, 1
      %p169 = por %p167, %p168
      %p170 = scmp.ne.s32.totalorder %s161, %s162
      %p171 = scmp.eq.s32.totalorder %s46, 0
      %p172 = por %p170, %p171
      %p173 = scmp.ne.s32.totalorder %s161, %s162
      %p174 = scmp.eq.s32.totalorder %s47, 1
      %p175 = por %p173, %p174
      %p177 = scmp.ne.s32.totalorder %s162, %s176
      %p178 = scmp.eq.s32.totalorder %s47, 0
      %p179 = por %p177, %p178
      %s181 = sadd.s32 %s180, 1
      %p184 = scmp.eq.s32.totalorder %s41, 1
      %p185 = scmp.ne.s32.totalorder %s180, %s182
      %p186 = scmp.eq.s32.totalorder %s41, 0
      %p187 = por %p185, %p186
      %p188 = scmp.ne.s32.totalorder %s180, %s182
      %p189 = scmp.eq.s32.totalorder %s46, 1
      %p190 = por %p188, %p189
      %p191 = scmp.ne.s32.totalorder %s182, %s183
      %p192 = scmp.eq.s32.totalorder %s46, 0
      %p193 = por %p191, %p192
      %p194 = scmp.ne.s32.totalorder %s182, %s183
      %p195 = scmp.eq.s32.totalorder %s47, 1
      %p196 = por %p194, %p195
      %p198 = scmp.ne.s32.totalorder %s183, %s197
      %p199 = scmp.eq.s32.totalorder %s47, 0
      %p200 = por %p198, %p199
      %s202 = sadd.s32 %s201, 1
      %p205 = scmp.eq.s32.totalorder %s41, 1
      %p206 = scmp.ne.s32.totalorder %s201, %s203
      %p207 = scmp.eq.s32.totalorder %s41, 0
      %p208 = por %p206, %p207
      %p209 = scmp.ne.s32.totalorder %s201, %s203
      %p210 = scmp.eq.s32.totalorder %s46, 1
      %p211 = por %p209, %p210
      %p212 = scmp.ne.s32.totalorder %s203, %s204
      %p213 = scmp.eq.s32.totalorder %s46, 0
      %p214 = por %p212, %p213
      %p215 = scmp.ne.s32.totalorder %s203, %s204
      %p216 = scmp.eq.s32.totalorder %s47, 1
      %p217 = por %p215, %p216
      %p219 = scmp.ne.s32.totalorder %s204, %s218
      %p220 = scmp.eq.s32.totalorder %s47, 0
      %p221 = por %p219, %p220
      %s223 = sadd.s32 %s222, 1
      %p226 = scmp.eq.s32.totalorder %s41, 1
      %p227 = scmp.ne.s32.totalorder %s222, %s224
      %p228 = scmp.eq.s32.totalorder %s41, 0
      %p229 = por %p227, %p228
      %p230 = scmp.ne.s32.totalorder %s222, %s224
      %p231 = scmp.eq.s32.totalorder %s46, 1
      %p232 = por %p230, %p231
      %p233 = scmp.ne.s32.totalorder %s224, %s225
      %p234 = scmp.eq.s32.totalorder %s46, 0
      %p235 = por %p233, %p234
      %p236 = scmp.ne.s32.totalorder %s224, %s225
      %p237 = scmp.eq.s32.totalorder %s47, 1
      %p238 = por %p236, %p237
      %p240 = scmp.ne.s32.totalorder %s225, %s239
      %p241 = scmp.eq.s32.totalorder %s47, 0
      %p242 = por %p240, %p241
      %s244 = sadd.s32 %s243, 1
      %p247 = scmp.eq.s32.totalorder %s41, 1
      %p248 = scmp.ne.s32.totalorder %s243, %s245
      %p249 = scmp.eq.s32.totalorder %s41, 0
      %p250 = por %p248, %p249
      %p251 = scmp.ne.s32.totalorder %s243, %s245
      %p252 = scmp.eq.s32.totalorder %s46, 1
      %p253 = por %p251, %p252
      %p254 = scmp.ne.s32.totalorder %s245, %s246
      %p255 = scmp.eq.s32.totalorder %s46, 0
      %p256 = por %p254, %p255
      %p257 = scmp.ne.s32.totalorder %s245, %s246
      %p258 = scmp.eq.s32.totalorder %s47, 1
      %p259 = por %p257, %p258
      %p261 = scmp.ne.s32.totalorder %s246, %s260
      %p262 = scmp.eq.s32.totalorder %s47, 0
      %p263 = por %p261, %p262
      %s265 = sadd.s32 %s264, 1
      %p268 = scmp.eq.s32.totalorder %s41, 1
      %p269 = scmp.ne.s32.totalorder %s264, %s266
      %p270 = scmp.eq.s32.totalorder %s41, 0
      %p271 = por %p269, %p270
      %p272 = scmp.ne.s32.totalorder %s264, %s266
      %p273 = scmp.eq.s32.totalorder %s46, 1
      %p274 = por %p272, %p273
      %p275 = scmp.ne.s32.totalorder %s266, %s267
      %p276 = scmp.eq.s32.totalorder %s46, 0
      %p277 = por %p275, %p276
      %p278 = scmp.ne.s32.totalorder %s266, %s267
      %p279 = scmp.eq.s32.totalorder %s47, 1
      %p280 = por %p278, %p279
      %p282 = scmp.ne.s32.totalorder %s267, %s281
      %p283 = scmp.eq.s32.totalorder %s47, 0
      %p284 = por %p282, %p283
      %s286 = sadd.s32 %s285, 1
      %p289 = scmp.eq.s32.totalorder %s41, 1
      %p290 = scmp.ne.s32.totalorder %s285, %s287
      %p291 = scmp.eq.s32.totalorder %s41, 0
      %p292 = por %p290, %p291
      %p293 = scmp.ne.s32.totalorder %s285, %s287
      %p294 = scmp.eq.s32.totalorder %s46, 1
      %p295 = por %p293, %p294
      %p296 = scmp.ne.s32.totalorder %s287, %s288
      %p297 = scmp.eq.s32.totalorder %s46, 0
      %p298 = por %p296, %p297
      %p299 = scmp.ne.s32.totalorder %s287, %s288
      %p300 = scmp.eq.s32.totalorder %s47, 1
      %p301 = por %p299, %p300
      %p303 = scmp.ne.s32.totalorder %s288, %s302
      %p304 = scmp.eq.s32.totalorder %s47, 0
      %p305 = por %p303, %p304
      %s307 = sadd.s32 %s306, 1
      %p310 = scmp.eq.s32.totalorder %s41, 1
      %p311 = scmp.ne.s32.totalorder %s306, %s308
      %p312 = scmp.eq.s32.totalorder %s41, 0
      %p313 = por %p311, %p312
      %p314 = scmp.ne.s32.totalorder %s306, %s308
      %p315 = scmp.eq.s32.totalorder %s46, 1
      %p316 = por %p314, %p315
      %p317 = scmp.ne.s32.totalorder %s308, %s309
      %p318 = scmp.eq.s32.totalorder %s46, 0
      %p319 = por %p317, %p318
      %p320 = scmp.ne.s32.totalorder %s308, %s309
      %p321 = scmp.eq.s32.totalorder %s47, 1
      %p322 = por %p320, %p321
      %p324 = scmp.ne.s32.totalorder %s309, %s323
      %p325 = scmp.eq.s32.totalorder %s47, 0
      %p326 = por %p324, %p325
      %s328 = sadd.s32 %s327, 1
      %p331 = scmp.eq.s32.totalorder %s41, 1
      %p332 = scmp.ne.s32.totalorder %s327, %s329
      %p333 = scmp.eq.s32.totalorder %s41, 0
      %p334 = por %p332, %p333
      %p335 = scmp.ne.s32.totalorder %s327, %s329
      %p336 = scmp.eq.s32.totalorder %s46, 1
      %p337 = por %p335, %p336
      %p338 = scmp.ne.s32.totalorder %s329, %s330
      %p339 = scmp.eq.s32.totalorder %s46, 0
      %p340 = por %p338, %p339
      %p341 = scmp.ne.s32.totalorder %s329, %s330
      %p342 = scmp.eq.s32.totalorder %s47, 1
      %p343 = por %p341, %p342
      %p345 = scmp.ne.s32.totalorder %s330, %s344
      %p346 = scmp.eq.s32.totalorder %s47, 0
      %p347 = por %p345, %p346
      %s349 = sadd.s32 %s348, 1
      %p352 = scmp.eq.s32.totalorder %s41, 1
      %p353 = scmp.ne.s32.totalorder %s348, %s350
      %p354 = scmp.eq.s32.totalorder %s41, 0
      %p355 = por %p353, %p354
      %p356 = scmp.ne.s32.totalorder %s348, %s350
      %p357 = scmp.eq.s32.totalorder %s46, 1
      %p358 = por %p356, %p357
      %p359 = scmp.ne.s32.totalorder %s350, %s351
      %p360 = scmp.eq.s32.totalorder %s46, 0
      %p361 = por %p359, %p360
      %p362 = scmp.ne.s32.totalorder %s350, %s351
      %p363 = scmp.eq.s32.totalorder %s47, 1
      %p364 = por %p362, %p363
      %p366 = scmp.ne.s32.totalorder %s351, %s365
      %p367 = scmp.eq.s32.totalorder %s47, 0
      %p368 = por %p366, %p367
      %s370 = sadd.s32 %s369, 1
      %p373 = scmp.eq.s32.totalorder %s41, 1
      %p374 = scmp.ne.s32.totalorder %s369, %s371
      %p375 = scmp.eq.s32.totalorder %s41, 0
      %p376 = por %p374, %p375
      %p377 = scmp.ne.s32.totalorder %s369, %s371
      %p378 = scmp.eq.s32.totalorder %s46, 1
      %p379 = por %p377, %p378
      %p380 = scmp.ne.s32.totalorder %s371, %s372
      %p381 = scmp.eq.s32.totalorder %s46, 0
      %p382 = por %p380, %p381
      %p383 = scmp.ne.s32.totalorder %s371, %s372
      %p384 = scmp.eq.s32.totalorder %s47, 1
      %p385 = por %p383, %p384
      %p387 = scmp.ne.s32.totalorder %s372, %s386
      %p388 = scmp.eq.s32.totalorder %s47, 0
      %p389 = por %p387, %p388
      %s391 = sadd.s32 %s390, 1
      %p394 = scmp.eq.s32.totalorder %s41, 1
      %p395 = scmp.ne.s32.totalorder %s390, %s392
      %p396 = scmp.eq.s32.totalorder %s41, 0
      %p397 = por %p395, %p396
      %p398 = scmp.ne.s32.totalorder %s390, %s392
      %p399 = scmp.eq.s32.totalorder %s46, 1
      %p400 = por %p398, %p399
      %p401 = scmp.ne.s32.totalorder %s392, %s393
      %p402 = scmp.eq.s32.totalorder %s46, 0
      %p403 = por %p401, %p402
      %p404 = scmp.ne.s32.totalorder %s392, %s393
      %p405 = scmp.eq.s32.totalorder %s47, 1
      %p406 = por %p404, %p405
      %p408 = scmp.ne.s32.totalorder %s393, %s407
      %p409 = scmp.eq.s32.totalorder %s47, 0
      %p410 = por %p408, %p409
      %s412 = sadd.s32 %s411, 1
      %p415 = scmp.eq.s32.totalorder %s41, 1
      %p416 = scmp.ne.s32.totalorder %s411, %s413
      %p417 = scmp.eq.s32.totalorder %s41, 0
      %p418 = por %p416, %p417
      %p419 = scmp.ne.s32.totalorder %s411, %s413
      %p420 = scmp.eq.s32.totalorder %s46, 1
      %p421 = por %p419, %p420
      %p422 = scmp.ne.s32.totalorder %s413, %s414
      %p423 = scmp.eq.s32.totalorder %s46, 0
      %p424 = por %p422, %p423
      %p425 = scmp.ne.s32.totalorder %s413, %s414
      %p426 = scmp.eq.s32.totalorder %s47, 1
      %p427 = por %p425, %p426
      %p429 = scmp.ne.s32.totalorder %s414, %s428
      %p430 = scmp.eq.s32.totalorder %s47, 0
      %p431 = por %p429, %p430
      %s433 = sadd.s32 %s432, 1
      %p436 = scmp.eq.s32.totalorder %s41, 1
      %p437 = scmp.ne.s32.totalorder %s432, %s434
      %p438 = scmp.eq.s32.totalorder %s41, 0
      %p439 = por %p437, %p438
      %p440 = scmp.ne.s32.totalorder %s432, %s434
      %p441 = scmp.eq.s32.totalorder %s46, 1
      %p442 = por %p440, %p441
      %p443 = scmp.ne.s32.totalorder %s434, %s435
      %p444 = scmp.eq.s32.totalorder %s46, 0
      %p445 = por %p443, %p444
      %p446 = scmp.ne.s32.totalorder %s434, %s435
      %p447 = scmp.eq.s32.totalorder %s47, 1
      %p448 = por %p446, %p447
      %p450 = scmp.ne.s32.totalorder %s435, %s449
      %p451 = scmp.eq.s32.totalorder %s47, 0
      %p452 = por %p450, %p451
      %s454 = sadd.s32 %s453, 1
      %p457 = scmp.eq.s32.totalorder %s41, 1
      %p458 = scmp.ne.s32.totalorder %s453, %s455
      %p459 = scmp.eq.s32.totalorder %s41, 0
      %p460 = por %p458, %p459
      %p461 = scmp.ne.s32.totalorder %s453, %s455
      %p462 = scmp.eq.s32.totalorder %s46, 1
      %p463 = por %p461, %p462
      %p464 = scmp.ne.s32.totalorder %s455, %s456
      %p465 = scmp.eq.s32.totalorder %s46, 0
      %p466 = por %p464, %p465
      %p467 = scmp.ne.s32.totalorder %s455, %s456
      %p468 = scmp.eq.s32.totalorder %s47, 1
      %p469 = por %p467, %p468
      %p471 = scmp.ne.s32.totalorder %s456, %s470
      %p472 = scmp.eq.s32.totalorder %s47, 0
      %p473 = por %p471, %p472
      %s475 = sadd.s32 %s474, 1
      %p478 = scmp.eq.s32.totalorder %s41, 1
      %p479 = scmp.ne.s32.totalorder %s474, %s476
      %p480 = scmp.eq.s32.totalorder %s41, 0
      %p481 = por %p479, %p480
      %p482 = scmp.ne.s32.totalorder %s474, %s476
      %p483 = scmp.eq.s32.totalorder %s46, 1
      %p484 = por %p482, %p483
      %p485 = scmp.ne.s32.totalorder %s476, %s477
      %p486 = scmp.eq.s32.totalorder %s46, 0
      %p487 = por %p485, %p486
      %p488 = scmp.ne.s32.totalorder %s476, %s477
      %p489 = scmp.eq.s32.totalorder %s47, 1
      %p490 = por %p488, %p489
      %p492 = scmp.ne.s32.totalorder %s477, %s491
      %p493 = scmp.eq.s32.totalorder %s47, 0
      %p494 = por %p492, %p493
      %s496 = sadd.s32 %s495, 1
      %p499 = scmp.eq.s32.totalorder %s41, 1
      %p500 = scmp.ne.s32.totalorder %s495, %s497
      %p501 = scmp.eq.s32.totalorder %s41, 0
      %p502 = por %p500, %p501
      %p503 = scmp.ne.s32.totalorder %s495, %s497
      %p504 = scmp.eq.s32.totalorder %s46, 1
      %p505 = por %p503, %p504
      %p506 = scmp.ne.s32.totalorder %s497, %s498
      %p507 = scmp.eq.s32.totalorder %s46, 0
      %p508 = por %p506, %p507
      %p509 = scmp.ne.s32.totalorder %s497, %s498
      %p510 = scmp.eq.s32.totalorder %s47, 1
      %p511 = por %p509, %p510
      %p513 = scmp.ne.s32.totalorder %s498, %s512
      %p514 = scmp.eq.s32.totalorder %s47, 0
      %p515 = por %p513, %p514
      %s517 = sadd.s32 %s516, 1
      %p520 = scmp.eq.s32.totalorder %s41, 1
      %p521 = scmp.ne.s32.totalorder %s516, %s518
      %p522 = scmp.eq.s32.totalorder %s41, 0
      %p523 = por %p521, %p522
      %p524 = scmp.ne.s32.totalorder %s516, %s518
      %p525 = scmp.eq.s32.totalorder %s46, 1
      %p526 = por %p524, %p525
      %p527 = scmp.ne.s32.totalorder %s518, %s519
      %p528 = scmp.eq.s32.totalorder %s46, 0
      %p529 = por %p527, %p528
      %p530 = scmp.ne.s32.totalorder %s518, %s519
      %p531 = scmp.eq.s32.totalorder %s47, 1
      %p532 = por %p530, %p531
      %p534 = scmp.ne.s32.totalorder %s519, %s533
      %p535 = scmp.eq.s32.totalorder %s47, 0
      %p536 = por %p534, %p535
      %s538 = sadd.s32 %s537, 1
      %p541 = scmp.eq.s32.totalorder %s41, 1
      %p542 = scmp.ne.s32.totalorder %s537, %s539
      %p543 = scmp.eq.s32.totalorder %s41, 0
      %p544 = por %p542, %p543
      %p545 = scmp.ne.s32.totalorder %s537, %s539
      %p546 = scmp.eq.s32.totalorder %s46, 1
      %p547 = por %p545, %p546
      %p548 = scmp.ne.s32.totalorder %s539, %s540
      %p549 = scmp.eq.s32.totalorder %s46, 0
      %p550 = por %p548, %p549
      %p551 = scmp.ne.s32.totalorder %s539, %s540
      %p552 = scmp.eq.s32.totalorder %s47, 1
      %p553 = por %p551, %p552
      %p555 = scmp.ne.s32.totalorder %s540, %s554
      %p556 = scmp.eq.s32.totalorder %s47, 0
      %p557 = por %p555, %p556
      %s559 = sadd.s32 %s558, 1
      %p562 = scmp.eq.s32.totalorder %s41, 1
      %p563 = scmp.ne.s32.totalorder %s558, %s560
      %p564 = scmp.eq.s32.totalorder %s41, 0
      %p565 = por %p563, %p564
      %p566 = scmp.ne.s32.totalorder %s558, %s560
      %p567 = scmp.eq.s32.totalorder %s46, 1
      %p568 = por %p566, %p567
      %p569 = scmp.ne.s32.totalorder %s560, %s561
      %p570 = scmp.eq.s32.totalorder %s46, 0
      %p571 = por %p569, %p570
      %p572 = scmp.ne.s32.totalorder %s560, %s561
      %p573 = scmp.eq.s32.totalorder %s47, 1
      %p574 = por %p572, %p573
      %p576 = scmp.ne.s32.totalorder %s561, %s575
      %p577 = scmp.eq.s32.totalorder %s47, 0
      %p578 = por %p576, %p577
      %s579 = ssub.s32 %s41, %s48
      %p580 = scmp.eq.s32.totalorder %s579, 0
      %s582 = sadd.s32 %s581, 1
      %s583 = scalar_select %p580, %s581, %s582
      %p586 = pneg %p580
      %p587 = scmp.eq.s32.totalorder %s41, 1
      %p588 = por %p586, %p587
      %p589 = scmp.ne.s32.totalorder %s581, %s584
      %p590 = scmp.eq.s32.totalorder %s41, 0
      %p591 = por %p589, %p590
      %p592 = scmp.ne.s32.totalorder %s581, %s584
      %p593 = scmp.eq.s32.totalorder %s46, 1
      %p594 = por %p592, %p593
      %p595 = scmp.ne.s32.totalorder %s584, %s585
      %p596 = scmp.eq.s32.totalorder %s46, 0
      %p597 = por %p595, %p596
      %p598 = scmp.ne.s32.totalorder %s584, %s585
      %p599 = scmp.eq.s32.totalorder %s47, 1
      %p600 = por %p598, %p599
      %p602 = scmp.ne.s32.totalorder %s585, %s601
      %p603 = scmp.eq.s32.totalorder %s47, 0
      %p604 = por %p602, %p603
      %p605 = scmp.le.s32.totalorder 1, %s41
      %p606 = scmp.lt.s32.totalorder %s41, 3
      %p607 = pnand %p605, %p606
      %p608 = pneg %p607
      // Predicated region
      $region9: #{caption_model_forward.3} parent=5 // pred_check
        _
      $region10: #{caption_model_forward.3} parent=5 // pred_check_branch
        %610 = sbr.rel (%p607) target = $region12
      $region11: #{caption_model_forward.3} parent=5 // pred_region
        %s611 = ssub.s32 %s41, 1
        // Predicated region
        $region13: #{caption_model_forward.3} parent=11 // pred_check
          %p612 = pneg %p88
        $region14: #{caption_model_forward.3} parent=11 // pred_check_branch
          %614 = sbr.rel (%p612) target = $region16
        $region15: #{caption_model_forward.3} parent=11 // pred_region
          _
        $region16: #{caption_model_forward.3} parent=11 // pred_fallthru
          _
        // Predicated region
        $region17: #{caption_model_forward.3} parent=11 // pred_check
          %p615 = pneg %p109
        $region18: #{caption_model_forward.3} parent=11 // pred_check_branch
          %617 = sbr.rel (%p615) target = $region20
        $region19: #{caption_model_forward.3} parent=11 // pred_region
          _
        $region20: #{caption_model_forward.3} parent=11 // pred_fallthru
          _
        // Predicated region
        $region21: #{caption_model_forward.3} parent=11 // pred_check
          %p618 = pneg %p130
        $region22: #{caption_model_forward.3} parent=11 // pred_check_branch
          %620 = sbr.rel (%p618) target = $region24
        $region23: #{caption_model_forward.3} parent=11 // pred_region
          _
        $region24: #{caption_model_forward.3} parent=11 // pred_fallthru
          _
        // Predicated region
        $region25: #{caption_model_forward.3} parent=11 // pred_check
          %p621 = pneg %p151
        $region26: #{caption_model_forward.3} parent=11 // pred_check_branch
          %623 = sbr.rel (%p621) target = $region28
        $region27: #{caption_model_forward.3} parent=11 // pred_region
          _
        $region28: #{caption_model_forward.3} parent=11 // pred_fallthru
          _
        // Predicated region
        $region29: #{caption_model_forward.3} parent=11 // pred_check
          %p624 = pneg %p172
        $region30: #{caption_model_forward.3} parent=11 // pred_check_branch
          %626 = sbr.rel (%p624) target = $region32
        $region31: #{caption_model_forward.3} parent=11 // pred_region
          _
        $region32: #{caption_model_forward.3} parent=11 // pred_fallthru
          _
        // Predicated region
        $region33: #{caption_model_forward.3} parent=11 // pred_check
          %p627 = pneg %p193
        $region34: #{caption_model_forward.3} parent=11 // pred_check_branch
          %629 = sbr.rel (%p627) target = $region36
        $region35: #{caption_model_forward.3} parent=11 // pred_region
          _
        $region36: #{caption_model_forward.3} parent=11 // pred_fallthru
          _
        // Predicated region
        $region37: #{caption_model_forward.3} parent=11 // pred_check
          %p630 = pneg %p214
        $region38: #{caption_model_forward.3} parent=11 // pred_check_branch
          %632 = sbr.rel (%p630) target = $region40
        $region39: #{caption_model_forward.3} parent=11 // pred_region
          _
        $region40: #{caption_model_forward.3} parent=11 // pred_fallthru
          _
        // Predicated region
        $region41: #{caption_model_forward.3} parent=11 // pred_check
          %p633 = pneg %p235
        $region42: #{caption_model_forward.3} parent=11 // pred_check_branch
          %635 = sbr.rel (%p633) target = $region44
        $region43: #{caption_model_forward.3} parent=11 // pred_region
          _
        $region44: #{caption_model_forward.3} parent=11 // pred_fallthru
          _
        // Predicated region
        $region45: #{caption_model_forward.3} parent=11 // pred_check
          %p636 = pneg %p256
        $region46: #{caption_model_forward.3} parent=11 // pred_check_branch
          %638 = sbr.rel (%p636) target = $region48
        $region47: #{caption_model_forward.3} parent=11 // pred_region
          _
        $region48: #{caption_model_forward.3} parent=11 // pred_fallthru
          _
        // Predicated region
        $region49: #{caption_model_forward.3} parent=11 // pred_check
          %p639 = pneg %p277
        $region50: #{caption_model_forward.3} parent=11 // pred_check_branch
          %641 = sbr.rel (%p639) target = $region52
        $region51: #{caption_model_forward.3} parent=11 // pred_region
          _
        $region52: #{caption_model_forward.3} parent=11 // pred_fallthru
          _
        // Predicated region
        $region53: #{caption_model_forward.3} parent=11 // pred_check
          %p642 = pneg %p298
        $region54: #{caption_model_forward.3} parent=11 // pred_check_branch
          %644 = sbr.rel (%p642) target = $region56
        $region55: #{caption_model_forward.3} parent=11 // pred_region
          _
        $region56: #{caption_model_forward.3} parent=11 // pred_fallthru
          _
        // Predicated region
        $region57: #{caption_model_forward.3} parent=11 // pred_check
          %p645 = pneg %p319
        $region58: #{caption_model_forward.3} parent=11 // pred_check_branch
          %647 = sbr.rel (%p645) target = $region60
        $region59: #{caption_model_forward.3} parent=11 // pred_region
          _
        $region60: #{caption_model_forward.3} parent=11 // pred_fallthru
          _
        // Predicated region
        $region61: #{caption_model_forward.3} parent=11 // pred_check
          %p648 = pneg %p340
        $region62: #{caption_model_forward.3} parent=11 // pred_check_branch
          %650 = sbr.rel (%p648) target = $region64
        $region63: #{caption_model_forward.3} parent=11 // pred_region
          _
        $region64: #{caption_model_forward.3} parent=11 // pred_fallthru
          _
        // Predicated region
        $region65: #{caption_model_forward.3} parent=11 // pred_check
          %p651 = pneg %p361
        $region66: #{caption_model_forward.3} parent=11 // pred_check_branch
          %653 = sbr.rel (%p651) target = $region68
        $region67: #{caption_model_forward.3} parent=11 // pred_region
          _
        $region68: #{caption_model_forward.3} parent=11 // pred_fallthru
          _
        // Predicated region
        $region69: #{caption_model_forward.3} parent=11 // pred_check
          %p654 = pneg %p382
        $region70: #{caption_model_forward.3} parent=11 // pred_check_branch
          %656 = sbr.rel (%p654) target = $region72
        $region71: #{caption_model_forward.3} parent=11 // pred_region
          _
        $region72: #{caption_model_forward.3} parent=11 // pred_fallthru
          _
        // Predicated region
        $region73: #{caption_model_forward.3} parent=11 // pred_check
          %p657 = pneg %p403
        $region74: #{caption_model_forward.3} parent=11 // pred_check_branch
          %659 = sbr.rel (%p657) target = $region76
        $region75: #{caption_model_forward.3} parent=11 // pred_region
          _
        $region76: #{caption_model_forward.3} parent=11 // pred_fallthru
          _
        // Predicated region
        $region77: #{caption_model_forward.3} parent=11 // pred_check
          %p660 = pneg %p424
        $region78: #{caption_model_forward.3} parent=11 // pred_check_branch
          %662 = sbr.rel (%p660) target = $region80
        $region79: #{caption_model_forward.3} parent=11 // pred_region
          _
        $region80: #{caption_model_forward.3} parent=11 // pred_fallthru
          _
        // Predicated region
        $region81: #{caption_model_forward.3} parent=11 // pred_check
          %p663 = pneg %p445
        $region82: #{caption_model_forward.3} parent=11 // pred_check_branch
          %665 = sbr.rel (%p663) target = $region84
        $region83: #{caption_model_forward.3} parent=11 // pred_region
          _
        $region84: #{caption_model_forward.3} parent=11 // pred_fallthru
          _
        // Predicated region
        $region85: #{caption_model_forward.3} parent=11 // pred_check
          %p666 = pneg %p466
        $region86: #{caption_model_forward.3} parent=11 // pred_check_branch
          %668 = sbr.rel (%p666) target = $region88
        $region87: #{caption_model_forward.3} parent=11 // pred_region
          _
        $region88: #{caption_model_forward.3} parent=11 // pred_fallthru
          _
        // Predicated region
        $region89: #{caption_model_forward.3} parent=11 // pred_check
          %p669 = pneg %p487
        $region90: #{caption_model_forward.3} parent=11 // pred_check_branch
          %671 = sbr.rel (%p669) target = $region92
        $region91: #{caption_model_forward.3} parent=11 // pred_region
          _
        $region92: #{caption_model_forward.3} parent=11 // pred_fallthru
          _
        // Predicated region
        $region93: #{caption_model_forward.3} parent=11 // pred_check
          %p672 = pneg %p508
        $region94: #{caption_model_forward.3} parent=11 // pred_check_branch
          %674 = sbr.rel (%p672) target = $region96
        $region95: #{caption_model_forward.3} parent=11 // pred_region
          _
        $region96: #{caption_model_forward.3} parent=11 // pred_fallthru
          _
        // Predicated region
        $region97: #{caption_model_forward.3} parent=11 // pred_check
          %p675 = pneg %p529
        $region98: #{caption_model_forward.3} parent=11 // pred_check_branch
          %677 = sbr.rel (%p675) target = $region100
        $region99: #{caption_model_forward.3} parent=11 // pred_region
          _
        $region100: #{caption_model_forward.3} parent=11 // pred_fallthru
          _
        // Predicated region
        $region101: #{caption_model_forward.3} parent=11 // pred_check
          %p678 = pneg %p550
        $region102: #{caption_model_forward.3} parent=11 // pred_check_branch
          %680 = sbr.rel (%p678) target = $region104
        $region103: #{caption_model_forward.3} parent=11 // pred_region
          _
        $region104: #{caption_model_forward.3} parent=11 // pred_fallthru
          _
        // Predicated region
        $region105: #{caption_model_forward.3} parent=11 // pred_check
          %p681 = pneg %p571
        $region106: #{caption_model_forward.3} parent=11 // pred_check_branch
          %683 = sbr.rel (%p681) target = $region108
        $region107: #{caption_model_forward.3} parent=11 // pred_region
          _
        $region108: #{caption_model_forward.3} parent=11 // pred_fallthru
          _
      $region12: #{caption_model_forward.3} parent=5 // pred_fallthru
        _
      %p684 = scmp.lt.s32.totalorder %s41, 2
      // Predicated region
      $region109: #{caption_model_forward.3} parent=5 // pred_check
        %p685 = pneg %p684
      $region110: #{caption_model_forward.3} parent=5 // pred_check_branch
        %687 = sbr.rel (%p685) target = $region112
      $region111: #{caption_model_forward.3} parent=5 // pred_region
        // Predicated region
        $region113: #{caption_model_forward.3} parent=111 // pred_check
          %p688 = pneg %p61
        $region114: #{caption_model_forward.3} parent=111 // pred_check_branch
          %690 = sbr.rel (%p688) target = $region116
        $region115: #{caption_model_forward.3} parent=111 // pred_region
          %p691 = scmp.lt.s32.totalorder %s41, 1
          %s692 = scalar_select %p691, %s41, 1
          %s693 = smul.addr %s692, 32
          %s694 = smul.addr %s693, 8
          %s695 = scalar_lea.vmem %s1, %s694
        $region116: #{caption_model_forward.3} parent=111 // pred_fallthru
          _
      $region112: #{caption_model_forward.3} parent=5 // pred_fallthru
        _
      %p696 = scmp.le.s32.totalorder 1, %s41
      %p697 = scmp.lt.s32.totalorder %s41, 3
      %p698 = pnand %p696, %p697
      %p699 = pneg %p698
      // Predicated region
      $region117: #{caption_model_forward.3} parent=5 // pred_check
        _
      $region118: #{caption_model_forward.3} parent=5 // pred_check_branch
        %701 = sbr.rel (%p698) target = $region120
      $region119: #{caption_model_forward.3} parent=5 // pred_region
        %s702 = ssub.s32 %s41, 1
        %p703 = scmp.lt.s32.totalorder %s46, 1
        %s704 = scalar_select %p703, %s46, 1
        %s705 = smul.addr %s704, 32
        %s706 = smul.addr %s705, 8
        %s707 = scalar_lea.vmem %s1, %s706
        %p708 = pneg %p67
        %p709 = pneg %p64
        %p710 = pneg %p88
        %p711 = pneg %p85
        %p712 = pneg %p109
        %p713 = pneg %p106
        %p714 = pneg %p130
        %p715 = pneg %p127
        %p716 = pneg %p151
        %p717 = pneg %p148
        %p718 = pneg %p172
        %p719 = pneg %p169
        %p720 = pneg %p193
        %p721 = pneg %p190
        %p722 = pneg %p214
        %p723 = pneg %p211
        %p724 = pneg %p235
        %p725 = pneg %p232
        %p726 = pneg %p256
        %p727 = pneg %p253
        %p728 = pneg %p277
        %p729 = pneg %p274
        %p730 = pneg %p298
        %p731 = pneg %p295
        %p732 = pneg %p319
        %p733 = pneg %p316
        %p734 = pneg %p340
        %p735 = pneg %p337
        %p736 = pneg %p361
        %p737 = pneg %p358
        %p738 = pneg %p382
        %p739 = pneg %p379
        %p740 = pneg %p403
        %p741 = pneg %p400
        %p742 = pneg %p424
        %p743 = pneg %p421
        %p744 = pneg %p445
        %p745 = pneg %p442
        %p746 = pneg %p466
        %p747 = pneg %p463
        %p748 = pneg %p487
        %p749 = pneg %p484
        %p750 = pneg %p508
        %p751 = pneg %p505
        %p752 = pneg %p529
        %p753 = pneg %p526
        %p754 = pneg %p550
        %p755 = pneg %p547
        %p756 = pneg %p571
        %p757 = pneg %p568
        %p758 = pneg %p597
        %p759 = pneg %p594
        %s760 = sand.u32 %s584, 1
        %s761 = scalar_lea.sflag [#allocation5], %s760
        %s762 = sand.u32 %s584, 1
        %s763 = smul.addr %s762, 8
        %s764 = scalar_lea.vmem [#allocation4], %s763
        %p765 = scmp.lt.s32.totalorder %s46, 1
        %s766 = scalar_select %p765, %s46, 1
        %s767 = smul.addr %s766, 32
        %s768 = smul.addr %s767, 8
        %s769 = scalar_lea.vmem %s1, %s768
        %v770 = vlaneseq
        %v771 = vshrl.u32 %v770, 7
        %v772 = vlaneseq
        %v773 = vand.u32 %v772, 127
        %s774 = smul.u32 %s46, 128
        %s775 = sld [smem:[#allocation3 + %s774]]
        %vm776 = vcmp.eq.s32.totalorder %v771, 0
        %v777 = vstv %s775
        %vm778 = vcmp.eq.s32.totalorder %v773, %v777
        %vm779 = vmand %vm776, %vm778
        %v780 = vsel %vm779, 1.0, 0.0
        %s781 = sadd.s32 %s774, 1
        %s782 = sld [smem:[#allocation3 + %s781]]
        %vm783 = vcmp.eq.s32.totalorder %v771, 1
        %v784 = vstv %s782
        %vm785 = vcmp.eq.s32.totalorder %v773, %v784
        %vm786 = vmand %vm783, %vm785
        %v787 = vsel %vm786, 1.0, %v780
        %s788 = sadd.s32 %s774, 2
        %s789 = sld [smem:[#allocation3 + %s788]]
        %vm790 = vcmp.eq.s32.totalorder %v771, 2
        %v791 = vstv %s789
        %vm792 = vcmp.eq.s32.totalorder %v773, %v791
        %vm793 = vmand %vm790, %vm792
        %v794 = vsel %vm793, 1.0, %v787
        %s795 = sadd.s32 %s774, 3
        %s796 = sld [smem:[#allocation3 + %s795]]
        %vm797 = vcmp.eq.s32.totalorder %v771, 3
        %v798 = vstv %s796
        %vm799 = vcmp.eq.s32.totalorder %v773, %v798
        %vm800 = vmand %vm797, %vm799
        %v801 = vsel %vm800, 1.0, %v794
        %s802 = sadd.s32 %s774, 4
        %s803 = sld [smem:[#allocation3 + %s802]]
        %vm804 = vcmp.eq.s32.totalorder %v771, 4
        %v805 = vstv %s803
        %vm806 = vcmp.eq.s32.totalorder %v773, %v805
        %vm807 = vmand %vm804, %vm806
        %v808 = vsel %vm807, 1.0, %v801
        %s809 = sadd.s32 %s774, 5
        %s810 = sld [smem:[#allocation3 + %s809]]
        %vm811 = vcmp.eq.s32.totalorder %v771, 5
        %v812 = vstv %s810
        %vm813 = vcmp.eq.s32.totalorder %v773, %v812
        %vm814 = vmand %vm811, %vm813
        %v815 = vsel %vm814, 1.0, %v808
        %s816 = sadd.s32 %s774, 6
        %s817 = sld [smem:[#allocation3 + %s816]]
        %vm818 = vcmp.eq.s32.totalorder %v771, 6
        %v819 = vstv %s817
        %vm820 = vcmp.eq.s32.totalorder %v773, %v819
        %vm821 = vmand %vm818, %vm820
        %v822 = vsel %vm821, 1.0, %v815
        %s823 = sadd.s32 %s774, 7
        %s824 = sld [smem:[#allocation3 + %s823]]
        %vm825 = vcmp.eq.s32.totalorder %v771, 7
        %v826 = vstv %s824
        %vm827 = vcmp.eq.s32.totalorder %v773, %v826
        %vm828 = vmand %vm825, %vm827
        %v829 = vsel %vm828, 1.0, %v822
        %v830 = vld [vmem:[%s2] sm:$0xff]
        %v831 = vld [vmem:[%s2 + $0x8] sm:$0xff]
        %v832 = vld [vmem:[%s2 + $0x10] sm:$0xff]
        %v833 = vld [vmem:[%s2 + $0x18] sm:$0xff]
        %v834 = vld [vmem:[%s2 + $0x20] sm:$0xff]
        %v835 = vld [vmem:[%s2 + $0x28] sm:$0xff]
        %v836 = vld [vmem:[%s2 + $0x30] sm:$0xff]
        %v837 = vld [vmem:[%s2 + $0x38] sm:$0xff]
        %v838 = vld [vmem:[%s2 + $0x40] sm:$0xff]
        %v839 = vld [vmem:[%s2 + $0x48] sm:$0xff]
        %v840 = vld [vmem:[%s2 + $0x50] sm:$0xff]
        %v841 = vld [vmem:[%s2 + $0x58] sm:$0xff]
        %v842 = vld [vmem:[%s2 + $0x60] sm:$0xf]
        %v843 = vld [vmem:[%s3] sm:$0xff]
        %vm844 = vcmask 818176
        %v846 = vsel %vm844, %v829, 0
        %vm848 = vcmask 1043456
        %v850 = vsel %vm848, %v842, 0
        %852 = vmatprep.subr.mxu0 0.0
        %853 = vmatpush1.msra.mxu0 %v830
        %854 = vmatprep.subr.mxu0 0.0
        %855 = vmatpush1.msra.mxu0 %v831
        %856 = vmatprep.subr.mxu0 0.0
        %857 = vmatpush1.msra.mxu0 %v832
        %858 = vmatprep.subr.mxu0 0.0
        %859 = vmatpush1.msra.mxu0 %v833
        %860 = vmatprep.subr.mxu0 0.0
        %861 = vmatpush1.msra.mxu0 %v834
        %862 = vmatprep.subr.mxu0 0.0
        %863 = vmatpush1.msra.mxu0 %v835
        %864 = vmatprep.subr.mxu0 0.0
        %865 = vmatpush1.msra.mxu0 %v836
        %866 = vmatprep.subr.mxu0 0.0
        %867 = vmatpush1.msra.mxu0 %v837
        %868 = vmatprep.subr.mxu0 0.0
        %869 = vmatpush1.msra.mxu0 %v838
        %870 = vmatprep.subr.mxu0 0.0
        %871 = vmatpush1.msra.mxu0 %v839
        %872 = vmatprep.subr.mxu0 0.0
        %873 = vmatpush1.msra.mxu0 %v840
        %874 = vmatprep.subr.mxu0 0.0
        %875 = vmatpush1.msra.mxu0 %v841
        %876 = vmatprep.subr.mxu0 0.0
        %877 = vmatpush1.msra.mxu0 %v850
        %878 = vmatprep.subr.mxu0 0.0
        %879 = vmatpush1.msra.mxu0 0.0
        %880 = vmatprep.subr.mxu0 0.0
        %881 = vmatpush1.msra.mxu0 0.0
        %882 = vmatprep.subr.mxu0 0.0
        %883 = vmatpush1.msra.mxu0 0.0
        %884 = vmatprep.subr.mxu0 0.0
        %885 = vmatpush1.msra.mxu0 0.0
        %886 = vmatprep.subr.mxu0 0.0
        %887 = vmatpush1.msra.mxu0 0.0
        %888 = vmatprep.subr.mxu0 0.0
        %889 = vmatpush1.msra.mxu0 0.0
        %890 = vmatprep.subr.mxu0 0.0
        %891 = vmatpush1.msra.mxu0 0.0
        %892 = vmatprep.subr.mxu0 0.0
        %893 = vmatpush1.msra.mxu0 0.0
        %894 = vmatprep.subr.mxu0 0.0
        %895 = vmatpush1.msra.mxu0 0.0
        %896 = vmatprep.subr.mxu0 0.0
        %897 = vmatpush1.msra.mxu0 0.0
        %898 = vmatprep.subr.mxu0 0.0
        %899 = vmatpush1.msra.mxu0 0.0
        %900 = vmatprep.subr.mxu0 0.0
        %901 = vmatpush1.msra.mxu0 0.0
        %902 = vmatprep.subr.mxu0 0.0
        %903 = vmatpush1.msra.mxu0 0.0
        %904 = vmatprep.subr.mxu0 0.0
        %905 = vmatpush1.msra.mxu0 0.0
        %906 = vmatprep.subr.mxu0 0.0
        %907 = vmatpush1.msra.mxu0 0.0
        %908 = vmatprep.subr.mxu0 0.0
        %909 = vmatpush1.msra.mxu0 0.0
        %910 = vmatprep.subr.mxu0 0.0
        %911 = vmatpush1.msra.mxu0 0.0
        %912 = vmatprep.subr.mxu0 0.0
        %913 = vmatpush1.msra.mxu0 0.0
        %914 = vmatprep.subr.mxu0 0.0
        %915 = vmatpush1.msra.mxu0 0.0
        %916 = vmatprep.mubr.f32.mxu0 0.0
        %917 = vmatmul.mubr.f32.gmra.mrb[0].mxu0 %v846
        %v918 = vpop.f32.mrb[0].mxu0
        %v919 = vadd.f32 %v843, %v918
        %v920 = vpop.f32.mrb[0].mxu0
        %921 = vdwg.mxu0
        %v922 = vld [vmem:[%s4] sm:$0xff]
        %v923 = vld [vmem:[%s4 + $0x8] sm:$0xff]
        %v924 = vld [vmem:[%s4 + $0x10] sm:$0xff]
        %v925 = vld [vmem:[%s4 + $0x18] sm:$0xff]
        %v926 = vld [vmem:[%s4 + $0x20] sm:$0xff]
        %v927 = vld [vmem:[%s4 + $0x28] sm:$0xff]
        %v928 = vld [vmem:[%s4 + $0x30] sm:$0xff]
        %v929 = vld [vmem:[%s4 + $0x38] sm:$0xff]
        %v930 = vld [vmem:[%s4 + $0x40] sm:$0xff]
        %v931 = vld [vmem:[%s4 + $0x48] sm:$0xff]
        %v932 = vld [vmem:[%s4 + $0x50] sm:$0xff]
        %v933 = vld [vmem:[%s4 + $0x58] sm:$0xff]
        %v934 = vld [vmem:[%s4 + $0x60] sm:$0xff]
        %v935 = vld [vmem:[%s4 + $0x68] sm:$0xff]
        %v936 = vld [vmem:[%s4 + $0x70] sm:$0xff]
        %v937 = vld [vmem:[%s4 + $0x78] sm:$0xff]
        %v938 = vld [vmem:[%s4 + $0x80] sm:$0xff]
        %v939 = vld [vmem:[%s4 + $0x88] sm:$0xff]
        %v940 = vld [vmem:[%s4 + $0x90] sm:$0xff]
        %v941 = vld [vmem:[%s4 + $0x98] sm:$0xff]
        %v942 = vld [vmem:[%s4 + $0xa0] sm:$0xff]
        %v943 = vld [vmem:[%s4 + $0xa8] sm:$0xff]
        %v944 = vld [vmem:[%s4 + $0xb0] sm:$0xff]
        %v945 = vld [vmem:[%s4 + $0xb8] sm:$0xff]
        %v946 = vld [vmem:[%s4 + $0xc0] sm:$0xff]
        %v947 = vld [vmem:[%s4 + $0xc8] sm:$0xff]
        %v948 = vld [vmem:[%s4 + $0xd0] sm:$0xff]
        %v949 = vld [vmem:[%s4 + $0xd8] sm:$0xff]
        %v950 = vld [vmem:[%s4 + $0xe0] sm:$0xff]
        %v951 = vld [vmem:[%s4 + $0xe8] sm:$0xff]
        %v952 = vld [vmem:[%s4 + $0xf0] sm:$0xff]
        %v953 = vld [vmem:[%s4 + $0xf8] sm:$0xff]
        %v954 = vld [vmem:[%s4 + $0x100] sm:$0xff]
        %v955 = vld [vmem:[%s4 + $0x108] sm:$0xff]
        %v956 = vld [vmem:[%s4 + $0x110] sm:$0xff]
        %v957 = vld [vmem:[%s4 + $0x118] sm:$0xff]
        %v958 = vld [vmem:[%s4 + $0x120] sm:$0xff]
        %v959 = vld [vmem:[%s4 + $0x128] sm:$0xff]
        %v960 = vld [vmem:[%s4 + $0x130] sm:$0xff]
        %v961 = vld [vmem:[%s4 + $0x138] sm:$0xff]
        %v962 = vld [vmem:[%s4 + $0x140] sm:$0xff]
        %v963 = vld [vmem:[%s4 + $0x148] sm:$0xff]
        %v964 = vld [vmem:[%s4 + $0x150] sm:$0xff]
        %v965 = vld [vmem:[%s4 + $0x158] sm:$0xff]
        %v966 = vld [vmem:[%s4 + $0x160] sm:$0xff]
        %v967 = vld [vmem:[%s4 + $0x168] sm:$0xff]
        %v968 = vld [vmem:[%s4 + $0x170] sm:$0xff]
        %v969 = vld [vmem:[%s4 + $0x178] sm:$0xff]
        %v970 = vld [vmem:[%s5] sm:$0x7]
        %v972 = vlaneseq
        %v973 = vshrl.u32 %v972, 7
        %v974 = vsub.s32 0, %v973
        %v975 = vrot.slane %v970, %v974
        %v976 = vlaneseq
        %v977 = vshrl.u32 %v976, 7
        %v978 = vsub.s32 1, %v977
        %v979 = vrot.slane %v970, %v978
        %v980 = vlaneseq
        %v981 = vshrl.u32 %v980, 7
        %v982 = vsub.s32 2, %v981
        %v983 = vrot.slane %v970, %v982
        %987 = vmatprep.subr.mxu0 %v923
        %988 = vmatpush1.msra.mxu0 %v922
        %989 = vmatprep.subr.mxu0 %v926
        %990 = vmatpush1.msra.mxu0 %v925
        %991 = vmatprep.subr.mxu0 %v929
        %992 = vmatpush1.msra.mxu0 %v928
        %993 = vmatprep.subr.mxu0 %v932
        %994 = vmatpush1.msra.mxu0 %v931
        %995 = vmatprep.subr.mxu0 %v935
        %996 = vmatpush1.msra.mxu0 %v934
        %997 = vmatprep.subr.mxu0 %v938
        %998 = vmatpush1.msra.mxu0 %v937
        %999 = vmatprep.subr.mxu0 %v941
        %1000 = vmatpush1.msra.mxu0 %v940
        %1001 = vmatprep.subr.mxu0 %v944
        %1002 = vmatpush1.msra.mxu0 %v943
        %1003 = vmatprep.subr.mxu0 %v947
        %1004 = vmatpush1.msra.mxu0 %v946
        %1005 = vmatprep.subr.mxu0 %v950
        %1006 = vmatpush1.msra.mxu0 %v949
        %1007 = vmatprep.subr.mxu0 %v953
        %1008 = vmatpush1.msra.mxu0 %v952
        %1009 = vmatprep.subr.mxu0 %v956
        %1010 = vmatpush1.msra.mxu0 %v955
        %1011 = vmatprep.subr.mxu0 %v959
        %1012 = vmatpush1.msra.mxu0 %v958
        %1013 = vmatprep.subr.mxu0 %v962
        %1014 = vmatpush1.msra.mxu0 %v961
        %1015 = vmatprep.subr.mxu0 %v965
        %1016 = vmatpush1.msra.mxu0 %v964
        %1017 = vmatprep.subr.mxu0 %v968
        %1018 = vmatpush1.msra.mxu0 %v967
        %1019 = vmatprep.subr.mxu0 0.0
        %1020 = vmatpush1.msra.mxu0 0.0
        %1021 = vmatprep.subr.mxu0 0.0
        %1022 = vmatpush1.msra.mxu0 0.0
        %1023 = vmatprep.subr.mxu0 0.0
        %1024 = vmatpush1.msra.mxu0 0.0
        %1025 = vmatprep.subr.mxu0 0.0
        %1026 = vmatpush1.msra.mxu0 0.0
        %1027 = vmatprep.subr.mxu0 0.0
        %1028 = vmatpush1.msra.mxu0 0.0
        %1029 = vmatprep.subr.mxu0 0.0
        %1030 = vmatpush1.msra.mxu0 0.0
        %1031 = vmatprep.subr.mxu0 0.0
        %1032 = vmatpush1.msra.mxu0 0.0
        %1033 = vmatprep.subr.mxu0 0.0
        %1034 = vmatpush1.msra.mxu0 0.0
        %1035 = vmatprep.subr.mxu0 0.0
        %1036 = vmatpush1.msra.mxu0 0.0
        %1037 = vmatprep.subr.mxu0 0.0
        %1038 = vmatpush1.msra.mxu0 0.0
        %1039 = vmatprep.subr.mxu0 0.0
        %1040 = vmatpush1.msra.mxu0 0.0
        %1041 = vmatprep.subr.mxu0 0.0
        %1042 = vmatpush1.msra.mxu0 0.0
        %1043 = vmatprep.subr.mxu0 0.0
        %1044 = vmatpush1.msra.mxu0 0.0
        %1045 = vmatprep.subr.mxu0 0.0
        %1046 = vmatpush1.msra.mxu0 0.0
        %1047 = vmatprep.subr.mxu0 0.0
        %1048 = vmatpush1.msra.mxu0 0.0
        %1049 = vmatprep.subr.mxu0 0.0
        %1050 = vmatpush1.msra.mxu0 0.0
        %1051 = vmatprep.mubr.f32.mxu0 0.0
        %1052 = vmatmul.mubr.f32.gmra.mrb[0].mxu0 %v919
        %v1053 = vpop.f32.mrb[0].mxu0
        %v1054 = vadd.f32 %v975, %v1053
        %v1055 = vpop.f32.mrb[0].mxu0
        %v1056 = vadd.f32 %v979, %v1055
        %1057 = vdwg.mxu0
        %1058 = vmatprep.subr.mxu0 0.0
        %1059 = vmatpush1.msra.mxu0 %v924
        %1060 = vmatprep.subr.mxu0 0.0
        %1061 = vmatpush1.msra.mxu0 %v927
        %1062 = vmatprep.subr.mxu0 0.0
        %1063 = vmatpush1.msra.mxu0 %v930
        %1064 = vmatprep.subr.mxu0 0.0
        %1065 = vmatpush1.msra.mxu0 %v933
        %1066 = vmatprep.subr.mxu0 0.0
        %1067 = vmatpush1.msra.mxu0 %v936
        %1068 = vmatprep.subr.mxu0 0.0
        %1069 = vmatpush1.msra.mxu0 %v939
        %1070 = vmatprep.subr.mxu0 0.0
        %1071 = vmatpush1.msra.mxu0 %v942
        %1072 = vmatprep.subr.mxu0 0.0
        %1073 = vmatpush1.msra.mxu0 %v945
        %1074 = vmatprep.subr.mxu0 0.0
        %1075 = vmatpush1.msra.mxu0 %v948
        %1076 = vmatprep.subr.mxu0 0.0
        %1077 = vmatpush1.msra.mxu0 %v951
        %1078 = vmatprep.subr.mxu0 0.0
        %1079 = vmatpush1.msra.mxu0 %v954
        %1080 = vmatprep.subr.mxu0 0.0
        %1081 = vmatpush1.msra.mxu0 %v957
        %1082 = vmatprep.subr.mxu0 0.0
        %1083 = vmatpush1.msra.mxu0 %v960
        %1084 = vmatprep.subr.mxu0 0.0
        %1085 = vmatpush1.msra.mxu0 %v963
        %1086 = vmatprep.subr.mxu0 0.0
        %1087 = vmatpush1.msra.mxu0 %v966
        %1088 = vmatprep.subr.mxu0 0.0
        %1089 = vmatpush1.msra.mxu0 %v969
        %1090 = vmatprep.subr.mxu0 0.0
        %1091 = vmatpush1.msra.mxu0 0.0
        %1092 = vmatprep.subr.mxu0 0.0
        %1093 = vmatpush1.msra.mxu0 0.0
        %1094 = vmatprep.subr.mxu0 0.0
        %1095 = vmatpush1.msra.mxu0 0.0
        %1096 = vmatprep.subr.mxu0 0.0
        %1097 = vmatpush1.msra.mxu0 0.0
        %1098 = vmatprep.subr.mxu0 0.0
        %1099 = vmatpush1.msra.mxu0 0.0
        %1100 = vmatprep.subr.mxu0 0.0
        %1101 = vmatpush1.msra.mxu0 0.0
        %1102 = vmatprep.subr.mxu0 0.0
        %1103 = vmatpush1.msra.mxu0 0.0
        %1104 = vmatprep.subr.mxu0 0.0
        %1105 = vmatpush1.msra.mxu0 0.0
        %1106 = vmatprep.subr.mxu0 0.0
        %1107 = vmatpush1.msra.mxu0 0.0
        %1108 = vmatprep.subr.mxu0 0.0
        %1109 = vmatpush1.msra.mxu0 0.0
        %1110 = vmatprep.subr.mxu0 0.0
        %1111 = vmatpush1.msra.mxu0 0.0
        %1112 = vmatprep.subr.mxu0 0.0
        %1113 = vmatpush1.msra.mxu0 0.0
        %1114 = vmatprep.subr.mxu0 0.0
        %1115 = vmatpush1.msra.mxu0 0.0
        %1116 = vmatprep.subr.mxu0 0.0
        %1117 = vmatpush1.msra.mxu0 0.0
        %1118 = vmatprep.subr.mxu0 0.0
        %1119 = vmatpush1.msra.mxu0 0.0
        %1120 = vmatprep.subr.mxu0 0.0
        %1121 = vmatpush1.msra.mxu0 0.0
        %1122 = vmatprep.mubr.f32.mxu0 0.0
        %1123 = vmatmul.mubr.f32.gmra.mrb[0].mxu0 %v919
        %v1124 = vpop.f32.mrb[0].mxu0
        %v1125 = vadd.f32 %v983, %v1124
        %v1126 = vpop.f32.mrb[0].mxu0
        %1127 = vdwg.mxu0
        %vm1128 = vcmp.ge.s32.totalorder %v771, %v773
        %v1129 = vsel %vm1128, 0.0, -1e+09
        %vm1130 = vcmask 261120
        %v1132 = vsel %vm1130, %v1054, 0
        %v1135 = vsel %vm1130, %v1056, 0
        %1137 = vmatprep.subr.mxu0 0.0
        %1138 = vmatpush1.xpose.msra.mxu0 %v1135
        %1139 = vmatprep.subr.mxu0 0.0
        %1140 = vmatpush1.xpose.msra.mxu0 0.0
        %1141 = vmatprep.subr.mxu0 0.0
        %1142 = vmatpush1.xpose.msra.mxu0 0.0
        %1143 = vmatprep.subr.mxu0 0.0
        %1144 = vmatpush1.xpose.msra.mxu0 0.0
        %1145 = vmatprep.subr.mxu0 0.0
        %1146 = vmatpush1.xpose.msra.mxu0 0.0
        %1147 = vmatprep.subr.mxu0 0.0
        %1148 = vmatpush1.xpose.msra.mxu0 0.0
        %1149 = vmatprep.subr.mxu0 0.0
        %1150 = vmatpush1.xpose.msra.mxu0 0.0
        %1151 = vmatprep.subr.mxu0 0.0
        %1152 = vmatpush1.xpose.msra.mxu0 0.0
        %1153 = vmatprep.subr.mxu0 0.0
        %1154 = vmatpush1.xpose.msra.mxu0 0.0
        %1155 = vmatprep.subr.mxu0 0.0
        %1156 = vmatpush1.xpose.msra.mxu0 0.0
        %1157 = vmatprep.subr.mxu0 0.0
        %1158 = vmatpush1.xpose.msra.mxu0 0.0
        %1159 = vmatprep.subr.mxu0 0.0
        %1160 = vmatpush1.xpose.msra.mxu0 0.0
        %1161 = vmatprep.subr.mxu0 0.0
        %1162 = vmatpush1.xpose.msra.mxu0 0.0
        %1163 = vmatprep.subr.mxu0 0.0
        %1164 = vmatpush1.xpose.msra.mxu0 0.0
        %1165 = vmatprep.subr.mxu0 0.0
        %1166 = vmatpush1.xpose.msra.mxu0 0.0
        %1167 = vmatprep.subr.mxu0 0.0
        %1168 = vmatpush1.xpose.msra.mxu0 0.0
        %1169 = vmatprep.subr.mxu0 0.0
        %1170 = vmatpush1.xpose.msra.mxu0 0.0
        %1171 = vmatprep.subr.mxu0 0.0
        %1172 = vmatpush1.xpose.msra.mxu0 0.0
        %1173 = vmatprep.subr.mxu0 0.0
        %1174 = vmatpush1.xpose.msra.mxu0 0.0
        %1175 = vmatprep.subr.mxu0 0.0
        %1176 = vmatpush1.xpose.msra.mxu0 0.0
        %1177 = vmatprep.subr.mxu0 0.0
        %1178 = vmatpush1.xpose.msra.mxu0 0.0
        %1179 = vmatprep.subr.mxu0 0.0
        %1180 = vmatpush1.xpose.msra.mxu0 0.0
        %1181 = vmatprep.subr.mxu0 0.0
        %1182 = vmatpush1.xpose.msra.mxu0 0.0
        %1183 = vmatprep.subr.mxu0 0.0
        %1184 = vmatpush1.xpose.msra.mxu0 0.0
        %1185 = vmatprep.subr.mxu0 0.0
        %1186 = vmatpush1.xpose.msra.mxu0 0.0
        %1187 = vmatprep.subr.mxu0 0.0
        %1188 = vmatpush1.xpose.msra.mxu0 0.0
        %1189 = vmatprep.subr.mxu0 0.0
        %1190 = vmatpush1.xpose.msra.mxu0 0.0
        %1191 = vmatprep.subr.mxu0 0.0
        %1192 = vmatpush1.xpose.msra.mxu0 0.0
        %1193 = vmatprep.subr.mxu0 0.0
        %1194 = vmatpush1.xpose.msra.mxu0 0.0
        %1195 = vmatprep.subr.mxu0 0.0
        %1196 = vmatpush1.xpose.msra.mxu0 0.0
        %1197 = vmatprep.subr.mxu0 0.0
        %1198 = vmatpush1.xpose.msra.mxu0 0.0
        %1199 = vmatprep.subr.mxu0 0.0
        %1200 = vmatpush1.xpose.msra.mxu0 0.0
        %1201 = vmatprep.mubr.f32.mxu0 0.0
        %1202 = vmatmul.mubr.f32.gmra.mrb[0].mxu0 %v1132
        %v1203 = vpop.f32.mrb[0].mxu0
        %v1204 = vadd.f32 0.0, %v1203
        %v1205 = vpop.f32.mrb[0].mxu0
        %1206 = vdwg.mxu0
        %v1207 = vmul.f32 %v1204, 0.17677669
        %v1208 = vadd.f32 %v1207, %v1129
        %vm1209 = vcmask 64512
        %v1210 = vsel %vm1209, %v1208, -inf
        %1211 = vmax.xlane.f32.xlu0 %v1210
        %v1212 = vpop.xlane.xlu0 %1211
        %v1213 = vsub.f32 %v1208, %v1212
        %v1214 = vmul.f32 %v1213, 1.442695
        %v1215 = vpow.pop %v1214
        %v1216 = vsel %vm1209, %v1215, 0.0
        %1217 = vadd.xlane.f32.xlu0 %v1216
        %v1218 = vpop.xlane.xlu0 %1217
        %v1219 = vrcp.pop %v1218
        %v1220 = vmul.f32 %v1215, %v1219
        %v1222 = vsel %vm1209, %v1220, 0
        %1224 = vmatprep.subr.mxu0 0.0
        %1225 = vmatpush1.msra.mxu0 %v1125
        %1226 = vmatprep.subr.mxu0 0.0
        %1227 = vmatpush1.msra.mxu0 0.0
        %1228 = vmatprep.subr.mxu0 0.0
        %1229 = vmatpush1.msra.mxu0 0.0
        %1230 = vmatprep.subr.mxu0 0.0
        %1231 = vmatpush1.msra.mxu0 0.0
        %1232 = vmatprep.subr.mxu0 0.0
        %1233 = vmatpush1.msra.mxu0 0.0
        %1234 = vmatprep.subr.mxu0 0.0
        %1235 = vmatpush1.msra.mxu0 0.0
        %1236 = vmatprep.subr.mxu0 0.0
        %1237 = vmatpush1.msra.mxu0 0.0
        %1238 = vmatprep.subr.mxu0 0.0
        %1239 = vmatpush1.msra.mxu0 0.0
        %1240 = vmatprep.subr.mxu0 0.0
        %1241 = vmatpush1.msra.mxu0 0.0
        %1242 = vmatprep.subr.mxu0 0.0
        %1243 = vmatpush1.msra.mxu0 0.0
        %1244 = vmatprep.subr.mxu0 0.0
        %1245 = vmatpush1.msra.mxu0 0.0
        %1246 = vmatprep.subr.mxu0 0.0
        %1247 = vmatpush1.msra.mxu0 0.0
        %1248 = vmatprep.subr.mxu0 0.0
        %1249 = vmatpush1.msra.mxu0 0.0
        %1250 = vmatprep.subr.mxu0 0.0
        %1251 = vmatpush1.msra.mxu0 0.0
        %1252 = vmatprep.subr.mxu0 0.0
        %1253 = vmatpush1.msra.mxu0 0.0
        %1254 = vmatprep.subr.mxu0 0.0
        %1255 = vmatpush1.msra.mxu0 0.0
        %1256 = vmatprep.subr.mxu0 0.0
        %1257 = vmatpush1.msra.mxu0 0.0
        %1258 = vmatprep.subr.mxu0 0.0
        %1259 = vmatpush1.msra.mxu0 0.0
        %1260 = vmatprep.subr.mxu0 0.0
        %1261 = vmatpush1.msra.mxu0 0.0
        %1262 = vmatprep.subr.mxu0 0.0
        %1263 = vmatpush1.msra.mxu0 0.0
        %1264 = vmatprep.subr.mxu0 0.0
        %1265 = vmatpush1.msra.mxu0 0.0
        %1266 = vmatprep.subr.mxu0 0.0
        %1267 = vmatpush1.msra.mxu0 0.0
        %1268 = vmatprep.subr.mxu0 0.0
        %1269 = vmatpush1.msra.mxu0 0.0
        %1270 = vmatprep.subr.mxu0 0.0
        %1271 = vmatpush1.msra.mxu0 0.0
        %1272 = vmatprep.subr.mxu0 0.0
        %1273 = vmatpush1.msra.mxu0 0.0
        %1274 = vmatprep.subr.mxu0 0.0
        %1275 = vmatpush1.msra.mxu0 0.0
        %1276 = vmatprep.subr.mxu0 0.0
        %1277 = vmatpush1.msra.mxu0 0.0
        %1278 = vmatprep.subr.mxu0 0.0
        %1279 = vmatpush1.msra.mxu0 0.0
        %1280 = vmatprep.subr.mxu0 0.0
        %1281 = vmatpush1.msra.mxu0 0.0
        %1282 = vmatprep.subr.mxu0 0.0
        %1283 = vmatpush1.msra.mxu0 0.0
        %1284 = vmatprep.subr.mxu0 0.0
        %1285 = vmatpush1.msra.mxu0 0.0
        %1286 = vmatprep.subr.mxu0 0.0
        %1287 = vmatpush1.msra.mxu0 0.0
        %1288 = vmatprep.mubr.f32.mxu0 0.0
        %1289 = vmatmul.mubr.f32.gmra.mrb[0].mxu0 %v1222
        %v1290 = vpop.f32.mrb[0].mxu0
        %v1291 = vadd.f32 0.0, %v1290
        %v1292 = vpop.f32.mrb[0].mxu0
        %1293 = vdwg.mxu0
        %v1294 = vld [vmem:[%s6] sm:$0xff]
        %v1295 = vld [vmem:[%s6 + $0x8] sm:$0xff]
        %v1296 = vld [vmem:[%s6 + $0x10] sm:$0xff]
        %v1297 = vld [vmem:[%s6 + $0x18] sm:$0xff]
        %1298 = vrot.lane.b32.xlu0 %v1054, 96
        %v1299 = vpop.permute.xlu0 %1298
        %1300 = vrot.lane.b32.xlu0 %v1056, 96
        %v1301 = vpop.permute.xlu0 %1300
        %v1302 = vsel %vm1130, %v1299, 0
        %v1304 = vsel %vm1130, %v1301, 0
        %1306 = vmatprep.subr.mxu0 0.0
        %1307 = vmatpush1.xpose.msra.mxu0 %v1304
        %1308 = vmatprep.subr.mxu0 0.0
        %1309 = vmatpush1.xpose.msra.mxu0 0.0
        %1310 = vmatprep.subr.mxu0 0.0
        %1311 = vmatpush1.xpose.msra.mxu0 0.0
        %1312 = vmatprep.subr.mxu0 0.0
        %1313 = vmatpush1.xpose.msra.mxu0 0.0
        %1314 = vmatprep.subr.mxu0 0.0
        %1315 = vmatpush1.xpose.msra.mxu0 0.0
        %1316 = vmatprep.subr.mxu0 0.0
        %1317 = vmatpush1.xpose.msra.mxu0 0.0
        %1318 = vmatprep.subr.mxu0 0.0
        %1319 = vmatpush1.xpose.msra.mxu0 0.0
        %1320 = vmatprep.subr.mxu0 0.0
        %1321 = vmatpush1.xpose.msra.mxu0 0.0
        %1322 = vmatprep.subr.mxu0 0.0
        %1323 = vmatpush1.xpose.msra.mxu0 0.0
        %1324 = vmatprep.subr.mxu0 0.0
        %1325 = vmatpush1.xpose.msra.mxu0 0.0
        %1326 = vmatprep.subr.mxu0 0.0
        %1327 = vmatpush1.xpose.msra.mxu0 0.0
        %1328 = vmatprep.subr.mxu0 0.0
        %1329 = vmatpush1.xpose.msra.mxu0 0.0
        %1330 = vmatprep.subr.mxu0 0.0
        %1331 = vmatpush1.xpose.msra.mxu0 0.0
        %1332 = vmatprep.subr.mxu0 0.0
        %1333 = vmatpush1.xpose.msra.mxu0 0.0
        %1334 = vmatprep.subr.mxu0 0.0
        %1335 = vmatpush1.xpose.msra.mxu0 0.0
        %1336 = vmatprep.subr.mxu0 0.0
        %1337 = vmatpush1.xpose.msra.mxu0 0.0
        %1338 = vmatprep.subr.mxu0 0.0
        %1339 = vmatpush1.xpose.msra.mxu0 0.0
        %1340 = vmatprep.subr.mxu0 0.0
        %1341 = vmatpush1.xpose.msra.mxu0 0.0
        %1342 = vmatprep.subr.mxu0 0.0
        %1343 = vmatpush1.xpose.msra.mxu0 0.0
        %1344 = vmatprep.subr.mxu0 0.0
        %1345 = vmatpush1.xpose.msra.mxu0 0.0
        %1346 = vmatprep.subr.mxu0 0.0
        %1347 = vmatpush1.xpose.msra.mxu0 0.0
        %1348 = vmatprep.subr.mxu0 0.0
        %1349 = vmatpush1.xpose.msra.mxu0 0.0
        %1350 = vmatprep.subr.mxu0 0.0
        %1351 = vmatpush1.xpose.msra.mxu0 0.0
        %1352 = vmatprep.subr.mxu0 0.0
        %1353 = vmatpush1.xpose.msra.mxu0 0.0
        %1354 = vmatprep.subr.mxu0 0.0
        %1355 = vmatpush1.xpose.msra.mxu0 0.0
        %1356 = vmatprep.subr.mxu0 0.0
        %1357 = vmatpush1.xpose.msra.mxu0 0.0
        %1358 = vmatprep.subr.mxu0 0.0
        %1359 = vmatpush1.xpose.msra.mxu0 0.0
        %1360 = vmatprep.subr.mxu0 0.0
        %1361 = vmatpush1.xpose.msra.mxu0 0.0
        %1362 = vmatprep.subr.mxu0 0.0
        %1363 = vmatpush1.xpose.msra.mxu0 0.0
        %1364 = vmatprep.subr.mxu0 0.0
        %1365 = vmatpush1.xpose.msra.mxu0 0.0
        %1366 = vmatprep.subr.mxu0 0.0
        %1367 = vmatpush1.xpose.msra.mxu0 0.0
        %1368 = vmatprep.subr.mxu0 0.0
        %1369 = vmatpush1.xpose.msra.mxu0 0.0
        %1370 = vmatprep.mubr.f32.mxu0 0.0
        %1371 = vmatmul.mubr.f32.gmra.mrb[0].mxu0 %v1302
        %v1372 = vpop.f32.mrb[0].mxu0
        %v1373 = vadd.f32 0.0, %v1372
        %v1374 = vpop.f32.mrb[0].mxu0
        %1375 = vdwg.mxu0
        %v1376 = vmul.f32 %v1373, 0.17677669
        %v1377 = vadd.f32 %v1376, %v1129
        %v1378 = vsel %vm1209, %v1377, -inf
        %1379 = vmax.xlane.f32.xlu0 %v1378
        %v1380 = vpop.xlane.xlu0 %1379
        %v1381 = vsub.f32 %v1377, %v1380
        %v1382 = vmul.f32 %v1381, 1.442695
        %v1383 = vpow.pop %v1382
        %v1384 = vsel %vm1209, %v1383, 0.0
        %1385 = vadd.xlane.f32.xlu0 %v1384
        %v1386 = vpop.xlane.xlu0 %1385
        %v1387 = vrcp.pop %v1386
        %v1388 = vmul.f32 %v1383, %v1387
        %1390 = vrot.lane.b32.xlu0 %v1125, 96
        %v1391 = vpop.permute.xlu0 %1390
        %v1394 = vsel %vm1209, %v1388, 0
        %1396 = vmatprep.subr.mxu0 0.0
        %1397 = vmatpush1.msra.mxu0 %v1391
        %1398 = vmatprep.subr.mxu0 0.0
        %1399 = vmatpush1.msra.mxu0 0.0
        %1400 = vmatprep.subr.mxu0 0.0
        %1401 = vmatpush1.msra.mxu0 0.0
        %1402 = vmatprep.subr.mxu0 0.0
        %1403 = vmatpush1.msra.mxu0 0.0
        %1404 = vmatprep.subr.mxu0 0.0
        %1405 = vmatpush1.msra.mxu0 0.0
        %1406 = vmatprep.subr.mxu0 0.0
        %1407 = vmatpush1.msra.mxu0 0.0
        %1408 = vmatprep.subr.mxu0 0.0
        %1409 = vmatpush1.msra.mxu0 0.0
        %1410 = vmatprep.subr.mxu0 0.0
        %1411 = vmatpush1.msra.mxu0 0.0
        %1412 = vmatprep.subr.mxu0 0.0
        %1413 = vmatpush1.msra.mxu0 0.0
        %1414 = vmatprep.subr.mxu0 0.0
        %1415 = vmatpush1.msra.mxu0 0.0
        %1416 = vmatprep.subr.mxu0 0.0
        %1417 = vmatpush1.msra.mxu0 0.0
        %1418 = vmatprep.subr.mxu0 0.0
        %1419 = vmatpush1.msra.mxu0 0.0
        %1420 = vmatprep.subr.mxu0 0.0
        %1421 = vmatpush1.msra.mxu0 0.0
        %1422 = vmatprep.subr.mxu0 0.0
        %1423 = vmatpush1.msra.mxu0 0.0
        %1424 = vmatprep.subr.mxu0 0.0
        %1425 = vmatpush1.msra.mxu0 0.0
        %1426 = vmatprep.subr.mxu0 0.0
        %1427 = vmatpush1.msra.mxu0 0.0
        %1428 = vmatprep.subr.mxu0 0.0
        %1429 = vmatpush1.msra.mxu0 0.0
        %1430 = vmatprep.subr.mxu0 0.0
        %1431 = vmatpush1.msra.mxu0 0.0
        %1432 = vmatprep.subr.mxu0 0.0
        %1433 = vmatpush1.msra.mxu0 0.0
        %1434 = vmatprep.subr.mxu0 0.0
        %1435 = vmatpush1.msra.mxu0 0.0
        %1436 = vmatprep.subr.mxu0 0.0
        %1437 = vmatpush1.msra.mxu0 0.0
        %1438 = vmatprep.subr.mxu0 0.0
        %1439 = vmatpush1.msra.mxu0 0.0
        %1440 = vmatprep.subr.mxu0 0.0
        %1441 = vmatpush1.msra.mxu0 0.0
        %1442 = vmatprep.subr.mxu0 0.0
        %1443 = vmatpush1.msra.mxu0 0.0
        %1444 = vmatprep.subr.mxu0 0.0
        %1445 = vmatpush1.msra.mxu0 0.0
        %1446 = vmatprep.subr.mxu0 0.0
        %1447 = vmatpush1.msra.mxu0 0.0
        %1448 = vmatprep.subr.mxu0 0.0
        %1449 = vmatpush1.msra.mxu0 0.0
        %1450 = vmatprep.subr.mxu0 0.0
        %1451 = vmatpush1.msra.mxu0 0.0
        %1452 = vmatprep.subr.mxu0 0.0
        %1453 = vmatpush1.msra.mxu0 0.0
        %1454 = vmatprep.subr.mxu0 0.0
        %1455 = vmatpush1.msra.mxu0 0.0
        %1456 = vmatprep.subr.mxu0 0.0
        %1457 = vmatpush1.msra.mxu0 0.0
        %1458 = vmatprep.subr.mxu0 0.0
        %1459 = vmatpush1.msra.mxu0 0.0
        %1460 = vmatprep.mubr.f32.mxu0 0.0
        %1461 = vmatmul.mubr.f32.gmra.mrb[0].mxu0 %v1394
        %v1462 = vpop.f32.mrb[0].mxu0
        %v1463 = vadd.f32 0.0, %v1462
        %v1464 = vpop.f32.mrb[0].mxu0
        %1465 = vdwg.mxu0
        %v1466 = vld [vmem:[%s6 + $0x20] sm:$0xff]
        %v1467 = vld [vmem:[%s6 + $0x28] sm:$0xff]
        %v1468 = vld [vmem:[%s6 + $0x30] sm:$0xff]
        %v1469 = vld [vmem:[%s6 + $0x38] sm:$0xff]
        %v1471 = vsel %vm1130, %v1463, 0
        %1473 = vmatprep.subr.mxu0 0.0
        %1474 = vmatpush1.msra.mxu0 %v1466
        %1475 = vmatprep.subr.mxu0 0.0
        %1476 = vmatpush1.msra.mxu0 %v1467
        %1477 = vmatprep.subr.mxu0 0.0
        %1478 = vmatpush1.msra.mxu0 %v1468
        %1479 = vmatprep.subr.mxu0 0.0
        %1480 = vmatpush1.msra.mxu0 %v1469
        %1481 = vmatprep.subr.mxu0 0.0
        %1482 = vmatpush1.msra.mxu0 0.0
        %1483 = vmatprep.subr.mxu0 0.0
        %1484 = vmatpush1.msra.mxu0 0.0
        %1485 = vmatprep.subr.mxu0 0.0
        %1486 = vmatpush1.msra.mxu0 0.0
        %1487 = vmatprep.subr.mxu0 0.0
        %1488 = vmatpush1.msra.mxu0 0.0
        %1489 = vmatprep.subr.mxu0 0.0
        %1490 = vmatpush1.msra.mxu0 0.0
        %1491 = vmatprep.subr.mxu0 0.0
        %1492 = vmatpush1.msra.mxu0 0.0
        %1493 = vmatprep.subr.mxu0 0.0
        %1494 = vmatpush1.msra.mxu0 0.0
        %1495 = vmatprep.subr.mxu0 0.0
        %1496 = vmatpush1.msra.mxu0 0.0
        %1497 = vmatprep.subr.mxu0 0.0
        %1498 = vmatpush1.msra.mxu0 0.0
        %1499 = vmatprep.subr.mxu0 0.0
        %1500 = vmatpush1.msra.mxu0 0.0
        %1501 = vmatprep.subr.mxu0 0.0
        %1502 = vmatpush1.msra.mxu0 0.0
        %1503 = vmatprep.subr.mxu0 0.0
        %1504 = vmatpush1.msra.mxu0 0.0
        %1505 = vmatprep.subr.mxu0 0.0
        %1506 = vmatpush1.msra.mxu0 0.0
        %1507 = vmatprep.subr.mxu0 0.0
        %1508 = vmatpush1.msra.mxu0 0.0
        %1509 = vmatprep.subr.mxu0 0.0
        %1510 = vmatpush1.msra.mxu0 0.0
        %1511 = vmatprep.subr.mxu0 0.0
        %1512 = vmatpush1.msra.mxu0 0.0
        %1513 = vmatprep.subr.mxu0 0.0
        %1514 = vmatpush1.msra.mxu0 0.0
        %1515 = vmatprep.subr.mxu0 0.0
        %1516 = vmatpush1.msra.mxu0 0.0
        %1517 = vmatprep.subr.mxu0 0.0
        %1518 = vmatpush1.msra.mxu0 0.0
        %1519 = vmatprep.subr.mxu0 0.0
        %1520 = vmatpush1.msra.mxu0 0.0
        %1521 = vmatprep.subr.mxu0 0.0
        %1522 = vmatpush1.msra.mxu0 0.0
        %1523 = vmatprep.subr.mxu0 0.0
        %1524 = vmatpush1.msra.mxu0 0.0
        %1525 = vmatprep.subr.mxu0 0.0
        %1526 = vmatpush1.msra.mxu0 0.0
        %1527 = vmatprep.subr.mxu0 0.0
        %1528 = vmatpush1.msra.mxu0 0.0
        %1529 = vmatprep.subr.mxu0 0.0
        %1530 = vmatpush1.msra.mxu0 0.0
        %1531 = vmatprep.subr.mxu0 0.0
        %1532 = vmatpush1.msra.mxu0 0.0
        %1533 = vmatprep.subr.mxu0 0.0
        %1534 = vmatpush1.msra.mxu0 0.0
        %1535 = vmatprep.subr.mxu0 0.0
        %1536 = vmatpush1.msra.mxu0 0.0
        %1537 = vmatprep.mubr.f32.mxu0 0.0
        %1538 = vmatmul.mubr.f32.gmra.mrb[0].mxu0 %v1471
        %v1539 = vpop.f32.mrb[0].mxu0
        %v1540 = vadd.f32 0.0, %v1539
        %v1541 = vpop.f32.mrb[0].mxu0
        %1542 = vdwg.mxu0
        %v1544 = vsel %vm1130, %v1291, 0
        %1546 = vmatprep.subr.mxu0 0.0
        %1547 = vmatpush1.msra.mxu0 %v1294
        %1548 = vmatprep.subr.mxu0 0.0
        %1549 = vmatpush1.msra.mxu0 %v1295
        %1550 = vmatprep.subr.mxu0 0.0
        %1551 = vmatpush1.msra.mxu0 %v1296
        %1552 = vmatprep.subr.mxu0 0.0
        %1553 = vmatpush1.msra.mxu0 %v1297
        %1554 = vmatprep.subr.mxu0 0.0
        %1555 = vmatpush1.msra.mxu0 0.0
        %1556 = vmatprep.subr.mxu0 0.0
        %1557 = vmatpush1.msra.mxu0 0.0
        %1558 = vmatprep.subr.mxu0 0.0
        %1559 = vmatpush1.msra.mxu0 0.0
        %1560 = vmatprep.subr.mxu0 0.0
        %1561 = vmatpush1.msra.mxu0 0.0
        %1562 = vmatprep.subr.mxu0 0.0
        %1563 = vmatpush1.msra.mxu0 0.0
        %1564 = vmatprep.subr.mxu0 0.0
        %1565 = vmatpush1.msra.mxu0 0.0
        %1566 = vmatprep.subr.mxu0 0.0
        %1567 = vmatpush1.msra.mxu0 0.0
        %1568 = vmatprep.subr.mxu0 0.0
        %1569 = vmatpush1.msra.mxu0 0.0
        %1570 = vmatprep.subr.mxu0 0.0
        %1571 = vmatpush1.msra.mxu0 0.0
        %1572 = vmatprep.subr.mxu0 0.0
        %1573 = vmatpush1.msra.mxu0 0.0
        %1574 = vmatprep.subr.mxu0 0.0
        %1575 = vmatpush1.msra.mxu0 0.0
        %1576 = vmatprep.subr.mxu0 0.0
        %1577 = vmatpush1.msra.mxu0 0.0
        %1578 = vmatprep.subr.mxu0 0.0
        %1579 = vmatpush1.msra.mxu0 0.0
        %1580 = vmatprep.subr.mxu0 0.0
        %1581 = vmatpush1.msra.mxu0 0.0
        %1582 = vmatprep.subr.mxu0 0.0
        %1583 = vmatpush1.msra.mxu0 0.0
        %1584 = vmatprep.subr.mxu0 0.0
        %1585 = vmatpush1.msra.mxu0 0.0
        %1586 = vmatprep.subr.mxu0 0.0
        %1587 = vmatpush1.msra.mxu0 0.0
        %1588 = vmatprep.subr.mxu0 0.0
        %1589 = vmatpush1.msra.mxu0 0.0
        %1590 = vmatprep.subr.mxu0 0.0
        %1591 = vmatpush1.msra.mxu0 0.0
        %1592 = vmatprep.subr.mxu0 0.0
        %1593 = vmatpush1.msra.mxu0 0.0
        %1594 = vmatprep.subr.mxu0 0.0
        %1595 = vmatpush1.msra.mxu0 0.0
        %1596 = vmatprep.subr.mxu0 0.0
        %1597 = vmatpush1.msra.mxu0 0.0
        %1598 = vmatprep.subr.mxu0 0.0
        %1599 = vmatpush1.msra.mxu0 0.0
        %1600 = vmatprep.subr.mxu0 0.0
        %1601 = vmatpush1.msra.mxu0 0.0
        %1602 = vmatprep.subr.mxu0 0.0
        %1603 = vmatpush1.msra.mxu0 0.0
        %1604 = vmatprep.subr.mxu0 0.0
        %1605 = vmatpush1.msra.mxu0 0.0
        %1606 = vmatprep.subr.mxu0 0.0
        %1607 = vmatpush1.msra.mxu0 0.0
        %1608 = vmatprep.subr.mxu0 0.0
        %1609 = vmatpush1.msra.mxu0 0.0
        %1610 = vmatprep.mubr.f32.mxu0 0.0
        %1611 = vmatmul.mubr.f32.gmra.mrb[0].mxu0 %v1544
        %v1612 = vpop.f32.mrb[0].mxu0
        %v1613 = vadd.f32 %v1540, %v1612
        %v1614 = vpop.f32.mrb[0].mxu0
        %1615 = vdwg.mxu0
        %1616 = vrot.lane.b32.xlu0 %v1054, 64
        %v1617 = vpop.permute.xlu0 %1616
        %1618 = vrot.lane.b32.xlu0 %v1056, 64
        %v1619 = vpop.permute.xlu0 %1618
        %v1620 = vsel %vm1130, %v1617, 0
        %v1622 = vsel %vm1130, %v1619, 0
        %1624 = vmatprep.subr.mxu0 0.0
        %1625 = vmatpush1.xpose.msra.mxu0 %v1622
        %1626 = vmatprep.subr.mxu0 0.0
        %1627 = vmatpush1.xpose.msra.mxu0 0.0
        %1628 = vmatprep.subr.mxu0 0.0
        %1629 = vmatpush1.xpose.msra.mxu0 0.0
        %1630 = vmatprep.subr.mxu0 0.0
        %1631 = vmatpush1.xpose.msra.mxu0 0.0
        %1632 = vmatprep.subr.mxu0 0.0
        %1633 = vmatpush1.xpose.msra.mxu0 0.0
        %1634 = vmatprep.subr.mxu0 0.0
        %1635 = vmatpush1.xpose.msra.mxu0 0.0
        %1636 = vmatprep.subr.mxu0 0.0
        %1637 = vmatpush1.xpose.msra.mxu0 0.0
        %1638 = vmatprep.subr.mxu0 0.0
        %1639 = vmatpush1.xpose.msra.mxu0 0.0
        %1640 = vmatprep.subr.mxu0 0.0
        %1641 = vmatpush1.xpose.msra.mxu0 0.0
        %1642 = vmatprep.subr.mxu0 0.0
        %1643 = vmatpush1.xpose.msra.mxu0 0.0
        %1644 = vmatprep.subr.mxu0 0.0
        %1645 = vmatpush1.xpose.msra.mxu0 0.0
        %1646 = vmatprep.subr.mxu0 0.0
        %1647 = vmatpush1.xpose.msra.mxu0 0.0
        %1648 = vmatprep.subr.mxu0 0.0
        %1649 = vmatpush1.xpose.msra.mxu0 0.0
        %1650 = vmatprep.subr.mxu0 0.0
        %1651 = vmatpush1.xpose.msra.mxu0 0.0
        %1652 = vmatprep.subr.mxu0 0.0
        %1653 = vmatpush1.xpose.msra.mxu0 0.0
        %1654 = vmatprep.subr.mxu0 0.0
        %1655 = vmatpush1.xpose.msra.mxu0 0.0
        %1656 = vmatprep.subr.mxu0 0.0
        %1657 = vmatpush1.xpose.msra.mxu0 0.0
        %1658 = vmatprep.subr.mxu0 0.0
        %1659 = vmatpush1.xpose.msra.mxu0 0.0
        %1660 = vmatprep.subr.mxu0 0.0
        %1661 = vmatpush1.xpose.msra.mxu0 0.0
        %1662 = vmatprep.subr.mxu0 0.0
        %1663 = vmatpush1.xpose.msra.mxu0 0.0
        %1664 = vmatprep.subr.mxu0 0.0
        %1665 = vmatpush1.xpose.msra.mxu0 0.0
        %1666 = vmatprep.subr.mxu0 0.0
        %1667 = vmatpush1.xpose.msra.mxu0 0.0
        %1668 = vmatprep.subr.mxu0 0.0
        %1669 = vmatpush1.xpose.msra.mxu0 0.0
        %1670 = vmatprep.subr.mxu0 0.0
        %1671 = vmatpush1.xpose.msra.mxu0 0.0
        %1672 = vmatprep.subr.mxu0 0.0
        %1673 = vmatpush1.xpose.msra.mxu0 0.0
        %1674 = vmatprep.subr.mxu0 0.0
        %1675 = vmatpush1.xpose.msra.mxu0 0.0
        %1676 = vmatprep.subr.mxu0 0.0
        %1677 = vmatpush1.xpose.msra.mxu0 0.0
        %1678 = vmatprep.subr.mxu0 0.0
        %1679 = vmatpush1.xpose.msra.mxu0 0.0
        %1680 = vmatprep.subr.mxu0 0.0
        %1681 = vmatpush1.xpose.msra.mxu0 0.0
        %1682 = vmatprep.subr.mxu0 0.0
        %1683 = vmatpush1.xpose.msra.mxu0 0.0
        %1684 = vmatprep.subr.mxu0 0.0
        %1685 = vmatpush1.xpose.msra.mxu0 0.0
        %1686 = vmatprep.subr.mxu0 0.0
        %1687 = vmatpush1.xpose.msra.mxu0 0.0
        %1688 = vmatprep.mubr.f32.mxu0 0.0
        %1689 = vmatmul.mubr.f32.gmra.mrb[0].mxu0 %v1620
        %v1690 = vpop.f32.mrb[0].mxu0
        %v1691 = vadd.f32 0.0, %v1690
        %v1692 = vpop.f32.mrb[0].mxu0
        %1693 = vdwg.mxu0
        %v1694 = vmul.f32 %v1691, 0.17677669
        %v1695 = vadd.f32 %v1694, %v1129
        %v1696 = vsel %vm1209, %v1695, -inf
        %1697 = vmax.xlane.f32.xlu0 %v1696
        %v1698 = vpop.xlane.xlu0 %1697
        %v1699 = vsub.f32 %v1695, %v1698
        %v1700 = vmul.f32 %v1699, 1.442695
        %v1701 = vpow.pop %v1700
        %v1702 = vsel %vm1209, %v1701, 0.0
        %1703 = vadd.xlane.f32.xlu0 %v1702
        %v1704 = vpop.xlane.xlu0 %1703
        %v1705 = vrcp.pop %v1704
        %v1706 = vmul.f32 %v1701, %v1705
        %1707 = vrot.lane.b32.xlu0 %v1125, 64
        %v1708 = vpop.permute.xlu0 %1707
        %v1711 = vsel %vm1209, %v1706, 0
        %1713 = vmatprep.subr.mxu0 0.0
        %1714 = vmatpush1.msra.mxu0 %v1708
        %1715 = vmatprep.subr.mxu0 0.0
        %1716 = vmatpush1.msra.mxu0 0.0
        %1717 = vmatprep.subr.mxu0 0.0
        %1718 = vmatpush1.msra.mxu0 0.0
        %1719 = vmatprep.subr.mxu0 0.0
        %1720 = vmatpush1.msra.mxu0 0.0
        %1721 = vmatprep.subr.mxu0 0.0
        %1722 = vmatpush1.msra.mxu0 0.0
        %1723 = vmatprep.subr.mxu0 0.0
        %1724 = vmatpush1.msra.mxu0 0.0
        %1725 = vmatprep.subr.mxu0 0.0
        %1726 = vmatpush1.msra.mxu0 0.0
        %1727 = vmatprep.subr.mxu0 0.0
        %1728 = vmatpush1.msra.mxu0 0.0
        %1729 = vmatprep.subr.mxu0 0.0
        %1730 = vmatpush1.msra.mxu0 0.0
        %1731 = vmatprep.subr.mxu0 0.0
        %1732 = vmatpush1.msra.mxu0 0.0
        %1733 = vmatprep.subr.mxu0 0.0
        %1734 = vmatpush1.msra.mxu0 0.0
        %1735 = vmatprep.subr.mxu0 0.0
        %1736 = vmatpush1.msra.mxu0 0.0
        %1737 = vmatprep.subr.mxu0 0.0
        %1738 = vmatpush1.msra.mxu0 0.0
        %1739 = vmatprep.subr.mxu0 0.0
        %1740 = vmatpush1.msra.mxu0 0.0
        %1741 = vmatprep.subr.mxu0 0.0
        %1742 = vmatpush1.msra.mxu0 0.0
        %1743 = vmatprep.subr.mxu0 0.0
        %1744 = vmatpush1.msra.mxu0 0.0
        %1745 = vmatprep.subr.mxu0 0.0
        %1746 = vmatpush1.msra.mxu0 0.0
        %1747 = vmatprep.subr.mxu0 0.0
        %1748 = vmatpush1.msra.mxu0 0.0
        %1749 = vmatprep.subr.mxu0 0.0
        %1750 = vmatpush1.msra.mxu0 0.0
        %1751 = vmatprep.subr.mxu0 0.0
        %1752 = vmatpush1.msra.mxu0 0.0
        %1753 = vmatprep.subr.mxu0 0.0
        %1754 = vmatpush1.msra.mxu0 0.0
        %1755 = vmatprep.subr.mxu0 0.0
        %1756 = vmatpush1.msra.mxu0 0.0
        %1757 = vmatprep.subr.mxu0 0.0
        %1758 = vmatpush1.msra.mxu0 0.0
        %1759 = vmatprep.subr.mxu0 0.0
        %1760 = vmatpush1.msra.mxu0 0.0
        %1761 = vmatprep.subr.mxu0 0.0
        %1762 = vmatpush1.msra.mxu0 0.0
        %1763 = vmatprep.subr.mxu0 0.0
        %1764 = vmatpush1.msra.mxu0 0.0
        %1765 = vmatprep.subr.mxu0 0.0
        %1766 = vmatpush1.msra.mxu0 0.0
        %1767 = vmatprep.subr.mxu0 0.0
        %1768 = vmatpush1.msra.mxu0 0.0
        %1769 = vmatprep.subr.mxu0 0.0
        %1770 = vmatpush1.msra.mxu0 0.0
        %1771 = vmatprep.subr.mxu0 0.0
        %1772 = vmatpush1.msra.mxu0 0.0
        %1773 = vmatprep.subr.mxu0 0.0
        %1774 = vmatpush1.msra.mxu0 0.0
        %1775 = vmatprep.subr.mxu0 0.0
        %1776 = vmatpush1.msra.mxu0 0.0
        %1777 = vmatprep.mubr.f32.mxu0 0.0
        %1778 = vmatmul.mubr.f32.gmra.mrb[0].mxu0 %v1711
        %v1779 = vpop.f32.mrb[0].mxu0
        %v1780 = vadd.f32 0.0, %v1779
        %v1781 = vpop.f32.mrb[0].mxu0
        %1782 = vdwg.mxu0
        %v1783 = vld [vmem:[%s6 + $0x40] sm:$0xff]
        %v1784 = vld [vmem:[%s6 + $0x48] sm:$0xff]
        %v1785 = vld [vmem:[%s6 + $0x50] sm:$0xff]
        %v1786 = vld [vmem:[%s6 + $0x58] sm:$0xff]
        %v1788 = vsel %vm1130, %v1780, 0
        %1790 = vmatprep.subr.mxu0 0.0
        %1791 = vmatpush1.msra.mxu0 %v1783
        %1792 = vmatprep.subr.mxu0 0.0
        %1793 = vmatpush1.msra.mxu0 %v1784
        %1794 = vmatprep.subr.mxu0 0.0
        %1795 = vmatpush1.msra.mxu0 %v1785
        %1796 = vmatprep.subr.mxu0 0.0
        %1797 = vmatpush1.msra.mxu0 %v1786
        %1798 = vmatprep.subr.mxu0 0.0
        %1799 = vmatpush1.msra.mxu0 0.0
        %1800 = vmatprep.subr.mxu0 0.0
        %1801 = vmatpush1.msra.mxu0 0.0
        %1802 = vmatprep.subr.mxu0 0.0
        %1803 = vmatpush1.msra.mxu0 0.0
        %1804 = vmatprep.subr.mxu0 0.0
        %1805 = vmatpush1.msra.mxu0 0.0
        %1806 = vmatprep.subr.mxu0 0.0
        %1807 = vmatpush1.msra.mxu0 0.0
        %1808 = vmatprep.subr.mxu0 0.0
        %1809 = vmatpush1.msra.mxu0 0.0
        %1810 = vmatprep.subr.mxu0 0.0
        %1811 = vmatpush1.msra.mxu0 0.0
        %1812 = vmatprep.subr.mxu0 0.0
        %1813 = vmatpush1.msra.mxu0 0.0
        %1814 = vmatprep.subr.mxu0 0.0
        %1815 = vmatpush1.msra.mxu0 0.0
        %1816 = vmatprep.subr.mxu0 0.0
        %1817 = vmatpush1.msra.mxu0 0.0
        %1818 = vmatprep.subr.mxu0 0.0
        %1819 = vmatpush1.msra.mxu0 0.0
        %1820 = vmatprep.subr.mxu0 0.0
        %1821 = vmatpush1.msra.mxu0 0.0
        %1822 = vmatprep.subr.mxu0 0.0
        %1823 = vmatpush1.msra.mxu0 0.0
        %1824 = vmatprep.subr.mxu0 0.0
        %1825 = vmatpush1.msra.mxu0 0.0
        %1826 = vmatprep.subr.mxu0 0.0
        %1827 = vmatpush1.msra.mxu0 0.0
        %1828 = vmatprep.subr.mxu0 0.0
        %1829 = vmatpush1.msra.mxu0 0.0
        %1830 = vmatprep.subr.mxu0 0.0
        %1831 = vmatpush1.msra.mxu0 0.0
        %1832 = vmatprep.subr.mxu0 0.0
        %1833 = vmatpush1.msra.mxu0 0.0
        %1834 = vmatprep.subr.mxu0 0.0
        %1835 = vmatpush1.msra.mxu0 0.0
        %1836 = vmatprep.subr.mxu0 0.0
        %1837 = vmatpush1.msra.mxu0 0.0
        %1838 = vmatprep.subr.mxu0 0.0
        %1839 = vmatpush1.msra.mxu0 0.0
        %1840 = vmatprep.subr.mxu0 0.0
        %1841 = vmatpush1.msra.mxu0 0.0
        %1842 = vmatprep.subr.mxu0 0.0
        %1843 = vmatpush1.msra.mxu0 0.0
        %1844 = vmatprep.subr.mxu0 0.0
        %1845 = vmatpush1.msra.mxu0 0.0
        %1846 = vmatprep.subr.mxu0 0.0
        %1847 = vmatpush1.msra.mxu0 0.0
        %1848 = vmatprep.subr.mxu0 0.0
        %1849 = vmatpush1.msra.mxu0 0.0
        %1850 = vmatprep.subr.mxu0 0.0
        %1851 = vmatpush1.msra.mxu0 0.0
        %1852 = vmatprep.subr.mxu0 0.0
        %1853 = vmatpush1.msra.mxu0 0.0
        %1854 = vmatprep.mubr.f32.mxu0 0.0
        %1855 = vmatmul.mubr.f32.gmra.mrb[0].mxu0 %v1788
        %v1856 = vpop.f32.mrb[0].mxu0
        %v1857 = vadd.f32 0.0, %v1856
        %v1858 = vpop.f32.mrb[0].mxu0
        %1859 = vdwg.mxu0
        %v1860 = vadd.f32 %v1613, %v1857
        %1861 = vrot.lane.b32.xlu0 %v1054, 32
        %v1862 = vpop.permute.xlu0 %1861
        %1863 = vrot.lane.b32.xlu0 %v1056, 32
        %v1864 = vpop.permute.xlu0 %1863
        %v1865 = vsel %vm1130, %v1862, 0
        %v1867 = vsel %vm1130, %v1864, 0
        %1869 = vmatprep.subr.mxu0 0.0
        %1870 = vmatpush1.xpose.msra.mxu0 %v1867
        %1871 = vmatprep.subr.mxu0 0.0
        %1872 = vmatpush1.xpose.msra.mxu0 0.0
        %1873 = vmatprep.subr.mxu0 0.0
        %1874 = vmatpush1.xpose.msra.mxu0 0.0
        %1875 = vmatprep.subr.mxu0 0.0
        %1876 = vmatpush1.xpose.msra.mxu0 0.0
        %1877 = vmatprep.subr.mxu0 0.0
        %1878 = vmatpush1.xpose.msra.mxu0 0.0
        %1879 = vmatprep.subr.mxu0 0.0
        %1880 = vmatpush1.xpose.msra.mxu0 0.0
        %1881 = vmatprep.subr.mxu0 0.0
        %1882 = vmatpush1.xpose.msra.mxu0 0.0
        %1883 = vmatprep.subr.mxu0 0.0
        %1884 = vmatpush1.xpose.msra.mxu0 0.0
        %1885 = vmatprep.subr.mxu0 0.0
        %1886 = vmatpush1.xpose.msra.mxu0 0.0
        %1887 = vmatprep.subr.mxu0 0.0
        %1888 = vmatpush1.xpose.msra.mxu0 0.0
        %1889 = vmatprep.subr.mxu0 0.0
        %1890 = vmatpush1.xpose.msra.mxu0 0.0
        %1891 = vmatprep.subr.mxu0 0.0
        %1892 = vmatpush1.xpose.msra.mxu0 0.0
        %1893 = vmatprep.subr.mxu0 0.0
        %1894 = vmatpush1.xpose.msra.mxu0 0.0
        %1895 = vmatprep.subr.mxu0 0.0
        %1896 = vmatpush1.xpose.msra.mxu0 0.0
        %1897 = vmatprep.subr.mxu0 0.0
        %1898 = vmatpush1.xpose.msra.mxu0 0.0
        %1899 = vmatprep.subr.mxu0 0.0
        %1900 = vmatpush1.xpose.msra.mxu0 0.0
        %1901 = vmatprep.subr.mxu0 0.0
        %1902 = vmatpush1.xpose.msra.mxu0 0.0
        %1903 = vmatprep.subr.mxu0 0.0
        %1904 = vmatpush1.xpose.msra.mxu0 0.0
        %1905 = vmatprep.subr.mxu0 0.0
        %1906 = vmatpush1.xpose.msra.mxu0 0.0
        %1907 = vmatprep.subr.mxu0 0.0
        %1908 = vmatpush1.xpose.msra.mxu0 0.0
        %1909 = vmatprep.subr.mxu0 0.0
        %1910 = vmatpush1.xpose.msra.mxu0 0.0
        %1911 = vmatprep.subr.mxu0 0.0
        %1912 = vmatpush1.xpose.msra.mxu0 0.0
        %1913 = vmatprep.subr.mxu0 0.0
        %1914 = vmatpush1.xpose.msra.mxu0 0.0
        %1915 = vmatprep.subr.mxu0 0.0
        %1916 = vmatpush1.xpose.msra.mxu0 0.0
        %1917 = vmatprep.subr.mxu0 0.0
        %1918 = vmatpush1.xpose.msra.mxu0 0.0
        %1919 = vmatprep.subr.mxu0 0.0
        %1920 = vmatpush1.xpose.msra.mxu0 0.0
        %1921 = vmatprep.subr.mxu0 0.0
        %1922 = vmatpush1.xpose.msra.mxu0 0.0
        %1923 = vmatprep.subr.mxu0 0.0
        %1924 = vmatpush1.xpose.msra.mxu0 0.0
        %1925 = vmatprep.subr.mxu0 0.0
        %1926 = vmatpush1.xpose.msra.mxu0 0.0
        %1927 = vmatprep.subr.mxu0 0.0
        %1928 = vmatpush1.xpose.msra.mxu0 0.0
        %1929 = vmatprep.subr.mxu0 0.0
        %1930 = vmatpush1.xpose.msra.mxu0 0.0
        %1931 = vmatprep.subr.mxu0 0.0
        %1932 = vmatpush1.xpose.msra.mxu0 0.0
        %1933 = vmatprep.mubr.f32.mxu0 0.0
        %1934 = vmatmul.mubr.f32.gmra.mrb[0].mxu0 %v1865
        %v1935 = vpop.f32.mrb[0].mxu0
        %v1936 = vadd.f32 0.0, %v1935
        %v1937 = vpop.f32.mrb[0].mxu0
        %1938 = vdwg.mxu0
        %v1939 = vmul.f32 %v1936, 0.17677669
        %v1940 = vadd.f32 %v1939, %v1129
        %v1941 = vsel %vm1209, %v1940, -inf
        %1942 = vmax.xlane.f32.xlu0 %v1941
        %v1943 = vpop.xlane.xlu0 %1942
        %v1944 = vsub.f32 %v1940, %v1943
        %v1945 = vmul.f32 %v1944, 1.442695
        %v1946 = vpow.pop %v1945
        %v1947 = vsel %vm1209, %v1946, 0.0
        %1948 = vadd.xlane.f32.xlu0 %v1947
        %v1949 = vpop.xlane.xlu0 %1948
        %v1950 = vrcp.pop %v1949
        %v1951 = vmul.f32 %v1946, %v1950
        %1952 = vrot.lane.b32.xlu0 %v1125, 32
        %v1953 = vpop.permute.xlu0 %1952
        %v1956 = vsel %vm1209, %v1951, 0
        %1958 = vmatprep.subr.mxu0 0.0
        %1959 = vmatpush1.msra.mxu0 %v1953
        %1960 = vmatprep.subr.mxu0 0.0
        %1961 = vmatpush1.msra.mxu0 0.0
        %1962 = vmatprep.subr.mxu0 0.0
        %1963 = vmatpush1.msra.mxu0 0.0
        %1964 = vmatprep.subr.mxu0 0.0
        %1965 = vmatpush1.msra.mxu0 0.0
        %1966 = vmatprep.subr.mxu0 0.0
        %1967 = vmatpush1.msra.mxu0 0.0
        %1968 = vmatprep.subr.mxu0 0.0
        %1969 = vmatpush1.msra.mxu0 0.0
        %1970 = vmatprep.subr.mxu0 0.0
        %1971 = vmatpush1.msra.mxu0 0.0
        %1972 = vmatprep.subr.mxu0 0.0
        %1973 = vmatpush1.msra.mxu0 0.0
        %1974 = vmatprep.subr.mxu0 0.0
        %1975 = vmatpush1.msra.mxu0 0.0
        %1976 = vmatprep.subr.mxu0 0.0
        %1977 = vmatpush1.msra.mxu0 0.0
        %1978 = vmatprep.subr.mxu0 0.0
        %1979 = vmatpush1.msra.mxu0 0.0
        %1980 = vmatprep.subr.mxu0 0.0
        %1981 = vmatpush1.msra.mxu0 0.0
        %1982 = vmatprep.subr.mxu0 0.0
        %1983 = vmatpush1.msra.mxu0 0.0
        %1984 = vmatprep.subr.mxu0 0.0
        %1985 = vmatpush1.msra.mxu0 0.0
        %1986 = vmatprep.subr.mxu0 0.0
        %1987 = vmatpush1.msra.mxu0 0.0
        %1988 = vmatprep.subr.mxu0 0.0
        %1989 = vmatpush1.msra.mxu0 0.0
        %1990 = vmatprep.subr.mxu0 0.0
        %1991 = vmatpush1.msra.mxu0 0.0
        %1992 = vmatprep.subr.mxu0 0.0
        %1993 = vmatpush1.msra.mxu0 0.0
        %1994 = vmatprep.subr.mxu0 0.0
        %1995 = vmatpush1.msra.mxu0 0.0
        %1996 = vmatprep.subr.mxu0 0.0
        %1997 = vmatpush1.msra.mxu0 0.0
        %1998 = vmatprep.subr.mxu0 0.0
        %1999 = vmatpush1.msra.mxu0 0.0
        %2000 = vmatprep.subr.mxu0 0.0
        %2001 = vmatpush1.msra.mxu0 0.0
        %2002 = vmatprep.subr.mxu0 0.0
        %2003 = vmatpush1.msra.mxu0 0.0
        %2004 = vmatprep.subr.mxu0 0.0
        %2005 = vmatpush1.msra.mxu0 0.0
        %2006 = vmatprep.subr.mxu0 0.0
        %2007 = vmatpush1.msra.mxu0 0.0
        %2008 = vmatprep.subr.mxu0 0.0
        %2009 = vmatpush1.msra.mxu0 0.0
        %2010 = vmatprep.subr.mxu0 0.0
        %2011 = vmatpush1.msra.mxu0 0.0
        %2012 = vmatprep.subr.mxu0 0.0
        %2013 = vmatpush1.msra.mxu0 0.0
        %2014 = vmatprep.subr.mxu0 0.0
        %2015 = vmatpush1.msra.mxu0 0.0
        %2016 = vmatprep.subr.mxu0 0.0
        %2017 = vmatpush1.msra.mxu0 0.0
        %2018 = vmatprep.subr.mxu0 0.0
        %2019 = vmatpush1.msra.mxu0 0.0
        %2020 = vmatprep.subr.mxu0 0.0
        %2021 = vmatpush1.msra.mxu0 0.0
        %2022 = vmatprep.mubr.f32.mxu0 0.0
        %2023 = vmatmul.mubr.f32.gmra.mrb[0].mxu0 %v1956
        %v2024 = vpop.f32.mrb[0].mxu0
        %v2025 = vadd.f32 0.0, %v2024
        %v2026 = vpop.f32.mrb[0].mxu0
        %2027 = vdwg.mxu0
        %v2028 = vld [vmem:[%s6 + $0x60] sm:$0xff]
        %v2029 = vld [vmem:[%s6 + $0x68] sm:$0xff]
        %v2030 = vld [vmem:[%s6 + $0x70] sm:$0xff]
        %v2031 = vld [vmem:[%s6 + $0x78] sm:$0xff]
        %v2033 = vsel %vm1130, %v2025, 0
        %2035 = vmatprep.subr.mxu0 0.0
        %2036 = vmatpush1.msra.mxu0 %v2028
        %2037 = vmatprep.subr.mxu0 0.0
        %2038 = vmatpush1.msra.mxu0 %v2029
        %2039 = vmatprep.subr.mxu0 0.0
        %2040 = vmatpush1.msra.mxu0 %v2030
        %2041 = vmatprep.subr.mxu0 0.0
        %2042 = vmatpush1.msra.mxu0 %v2031
        %2043 = vmatprep.subr.mxu0 0.0
        %2044 = vmatpush1.msra.mxu0 0.0
        %2045 = vmatprep.subr.mxu0 0.0
        %2046 = vmatpush1.msra.mxu0 0.0
        %2047 = vmatprep.subr.mxu0 0.0
        %2048 = vmatpush1.msra.mxu0 0.0
        %2049 = vmatprep.subr.mxu0 0.0
        %2050 = vmatpush1.msra.mxu0 0.0
        %2051 = vmatprep.subr.mxu0 0.0
        %2052 = vmatpush1.msra.mxu0 0.0
        %2053 = vmatprep.subr.mxu0 0.0
        %2054 = vmatpush1.msra.mxu0 0.0
        %2055 = vmatprep.subr.mxu0 0.0
        %2056 = vmatpush1.msra.mxu0 0.0
        %2057 = vmatprep.subr.mxu0 0.0
        %2058 = vmatpush1.msra.mxu0 0.0
        %2059 = vmatprep.subr.mxu0 0.0
        %2060 = vmatpush1.msra.mxu0 0.0
        %2061 = vmatprep.subr.mxu0 0.0
        %2062 = vmatpush1.msra.mxu0 0.0
        %2063 = vmatprep.subr.mxu0 0.0
        %2064 = vmatpush1.msra.mxu0 0.0
        %2065 = vmatprep.subr.mxu0 0.0
        %2066 = vmatpush1.msra.mxu0 0.0
        %2067 = vmatprep.subr.mxu0 0.0
        %2068 = vmatpush1.msra.mxu0 0.0
        %2069 = vmatprep.subr.mxu0 0.0
        %2070 = vmatpush1.msra.mxu0 0.0
        %2071 = vmatprep.subr.mxu0 0.0
        %2072 = vmatpush1.msra.mxu0 0.0
        %2073 = vmatprep.subr.mxu0 0.0
        %2074 = vmatpush1.msra.mxu0 0.0
        %2075 = vmatprep.subr.mxu0 0.0
        %2076 = vmatpush1.msra.mxu0 0.0
        %2077 = vmatprep.subr.mxu0 0.0
        %2078 = vmatpush1.msra.mxu0 0.0
        %2079 = vmatprep.subr.mxu0 0.0
        %2080 = vmatpush1.msra.mxu0 0.0
        %2081 = vmatprep.subr.mxu0 0.0
        %2082 = vmatpush1.msra.mxu0 0.0
        %2083 = vmatprep.subr.mxu0 0.0
        %2084 = vmatpush1.msra.mxu0 0.0
        %2085 = vmatprep.subr.mxu0 0.0
        %2086 = vmatpush1.msra.mxu0 0.0
        %2087 = vmatprep.subr.mxu0 0.0
        %2088 = vmatpush1.msra.mxu0 0.0
        %2089 = vmatprep.subr.mxu0 0.0
        %2090 = vmatpush1.msra.mxu0 0.0
        %2091 = vmatprep.subr.mxu0 0.0
        %2092 = vmatpush1.msra.mxu0 0.0
        %2093 = vmatprep.subr.mxu0 0.0
        %2094 = vmatpush1.msra.mxu0 0.0
        %2095 = vmatprep.subr.mxu0 0.0
        %2096 = vmatpush1.msra.mxu0 0.0
        %2097 = vmatprep.subr.mxu0 0.0
        %2098 = vmatpush1.msra.mxu0 0.0
        %2099 = vmatprep.mubr.f32.mxu0 0.0
        %2100 = vmatmul.mubr.f32.gmra.mrb[0].mxu0 %v2033
        %v2101 = vpop.f32.mrb[0].mxu0
        %v2102 = vadd.f32 0.0, %v2101
        %v2103 = vpop.f32.mrb[0].mxu0
        %2104 = vdwg.mxu0
        %v2105 = vadd.f32 %v1860, %v2102
        %v2106 = vadd.f32 %v919, %v2105
        %v2107 = vld [vmem:[%s7] sm:$0x1]
        %v2109 = vlaneseq
        %v2110 = vshrl.u32 %v2109, 7
        %v2111 = vsub.s32 0, %v2110
        %v2112 = vrot.slane %v2107, %v2111
        %v2114 = vadd.f32 %v2106, %v2112
        %v2115 = vld [vmem:[%s8] sm:$0x1]
        %v2116 = vld [vmem:[%s9] sm:$0x1]
        %2117 = vadd.xlane.f32.xlu0 %v2114
        %v2118 = vpop.xlane.xlu0 %2117
        %v2119 = vrcp.pop 128.0
        %v2120 = vmul.f32 %v2118, %v2119
        %v2121 = vsub.f32 %v2114, %v2120
        %v2122 = vmul.f32 %v2121, %v2121
        %2123 = vadd.xlane.f32.xlu0 %v2122
        %v2124 = vpop.xlane.xlu0 %2123
        %v2125 = vmul.f32 %v2124, %v2119
        %v2126 = vadd.f32 %v2125, 1e-05
        %v2127 = vrsqrt.pop %v2126
        %v2128 = vmul.f32 %v2121, %v2127
        %v2130 = vlaneseq
        %v2131 = vshrl.u32 %v2130, 7
        %v2132 = vsub.s32 0, %v2131
        %v2133 = vrot.slane %v2115, %v2132
        %v2135 = vmul.f32 %v2128, %v2133
        %v2137 = vlaneseq
        %v2138 = vshrl.u32 %v2137, 7
        %v2139 = vsub.s32 0, %v2138
        %v2140 = vrot.slane %v2116, %v2139
        %v2142 = vadd.f32 %v2135, %v2140
        %v2143 = vld [vmem:[%s769] sm:$0xff]
        %v2144 = vld [vmem:[%s769 + $0x8] sm:$0xff]
        %v2145 = vld [vmem:[%s769 + $0x10] sm:$0xff]
        %v2146 = vld [vmem:[%s769 + $0x18] sm:$0xff]
        %v2147 = vld [vmem:[%s769 + $0x20] sm:$0xff]
        %v2148 = vld [vmem:[%s769 + $0x28] sm:$0xff]
        %v2149 = vld [vmem:[%s769 + $0x30] sm:$0xff]
        %v2150 = vld [vmem:[%s769 + $0x38] sm:$0xff]
        %v2151 = vld [vmem:[%s769 + $0x40] sm:$0xff]
        %v2152 = vld [vmem:[%s769 + $0x48] sm:$0xff]
        %v2153 = vld [vmem:[%s769 + $0x50] sm:$0xff]
        %v2154 = vld [vmem:[%s769 + $0x58] sm:$0xff]
        %v2155 = vld [vmem:[%s769 + $0x60] sm:$0xff]
        %v2156 = vld [vmem:[%s769 + $0x68] sm:$0xff]
        %v2157 = vld [vmem:[%s769 + $0x70] sm:$0xff]
        %v2158 = vld [vmem:[%s769 + $0x78] sm:$0xff]
        %v2159 = vld [vmem:[%s769 + $0x80] sm:$0xff]
        %v2160 = vld [vmem:[%s769 + $0x88] sm:$0xff]
        %v2161 = vld [vmem:[%s769 + $0x90] sm:$0xff]
        %v2162 = vld [vmem:[%s769 + $0x98] sm:$0xff]
        %v2163 = vld [vmem:[%s769 + $0xa0] sm:$0xff]
        %v2164 = vld [vmem:[%s769 + $0xa8] sm:$0xff]
        %v2165 = vld [vmem:[%s769 + $0xb0] sm:$0xff]
        %v2166 = vld [vmem:[%s769 + $0xb8] sm:$0xff]
        %v2167 = vld [vmem:[%s769 + $0xc0] sm:$0xff]
        %v2168 = vld [vmem:[%s769 + $0xc8] sm:$0xff]
        %v2169 = vld [vmem:[%s769 + $0xd0] sm:$0xff]
        %v2170 = vld [vmem:[%s769 + $0xd8] sm:$0xff]
        %v2171 = vld [vmem:[%s769 + $0xe0] sm:$0xff]
        %v2172 = vld [vmem:[%s769 + $0xe8] sm:$0xff]
        %v2173 = vld [vmem:[%s769 + $0xf0] sm:$0xff]
        %v2174 = vld [vmem:[%s769 + $0xf8] sm:$0xff]
        %v2175 = vadd.s32 %v773, 128
        %vm2176 = vcmp.lt.s32.totalorder %v773, 220
        %vm2177 = vcmp.lt.s32.totalorder %v2175, 220
        %v2178 = vsel %vm2176, 0.0, -1e+09
        %v2179 = vsel %vm2177, 0.0, -1e+09
        %v2180 = vld [vmem:[%s10] sm:$0xff]
        %v2181 = vld [vmem:[%s10 + $0x8] sm:$0xff]
        %v2182 = vld [vmem:[%s10 + $0x10] sm:$0xff]
        %v2183 = vld [vmem:[%s10 + $0x18] sm:$0xff]
        %v2184 = vld [vmem:[%s10 + $0x20] sm:$0xff]
        %v2185 = vld [vmem:[%s10 + $0x28] sm:$0xff]
        %v2186 = vld [vmem:[%s10 + $0x30] sm:$0xff]
        %v2187 = vld [vmem:[%s10 + $0x38] sm:$0xff]
        %v2188 = vld [vmem:[%s10 + $0x40] sm:$0xff]
        %v2189 = vld [vmem:[%s10 + $0x48] sm:$0xff]
        %v2190 = vld [vmem:[%s10 + $0x50] sm:$0xff]
        %v2191 = vld [vmem:[%s10 + $0x58] sm:$0xff]
        %v2192 = vld [vmem:[%s10 + $0x60] sm:$0xff]
        %v2193 = vld [vmem:[%s10 + $0x68] sm:$0xff]
        %v2194 = vld [vmem:[%s10 + $0x70] sm:$0xff]
        %v2195 = vld [vmem:[%s10 + $0x78] sm:$0xff]
        %v2196 = vld [vmem:[%s11] sm:$0x1]
        %v2198 = vlaneseq
        %v2199 = vshrl.u32 %v2198, 7
        %v2200 = vsub.s32 0, %v2199
        %v2201 = vrot.slane %v2196, %v2200
        %2203 = vmatprep.subr.mxu0 0.0
        %2204 = vmatpush1.msra.mxu0 %v2180
        %2205 = vmatprep.subr.mxu0 0.0
        %2206 = vmatpush1.msra.mxu0 %v2181
        %2207 = vmatprep.subr.mxu0 0.0
        %2208 = vmatpush1.msra.mxu0 %v2182
        %2209 = vmatprep.subr.mxu0 0.0
        %2210 = vmatpush1.msra.mxu0 %v2183
        %2211 = vmatprep.subr.mxu0 0.0
        %2212 = vmatpush1.msra.mxu0 %v2184
        %2213 = vmatprep.subr.mxu0 0.0
        %2214 = vmatpush1.msra.mxu0 %v2185
        %2215 = vmatprep.subr.mxu0 0.0
        %2216 = vmatpush1.msra.mxu0 %v2186
        %2217 = vmatprep.subr.mxu0 0.0
        %2218 = vmatpush1.msra.mxu0 %v2187
        %2219 = vmatprep.subr.mxu0 0.0
        %2220 = vmatpush1.msra.mxu0 %v2188
        %2221 = vmatprep.subr.mxu0 0.0
        %2222 = vmatpush1.msra.mxu0 %v2189
        %2223 = vmatprep.subr.mxu0 0.0
        %2224 = vmatpush1.msra.mxu0 %v2190
        %2225 = vmatprep.subr.mxu0 0.0
        %2226 = vmatpush1.msra.mxu0 %v2191
        %2227 = vmatprep.subr.mxu0 0.0
        %2228 = vmatpush1.msra.mxu0 %v2192
        %2229 = vmatprep.subr.mxu0 0.0
        %2230 = vmatpush1.msra.mxu0 %v2193
        %2231 = vmatprep.subr.mxu0 0.0
        %2232 = vmatpush1.msra.mxu0 %v2194
        %2233 = vmatprep.subr.mxu0 0.0
        %2234 = vmatpush1.msra.mxu0 %v2195
        %2235 = vmatprep.subr.mxu0 0.0
        %2236 = vmatpush1.msra.mxu0 0.0
        %2237 = vmatprep.subr.mxu0 0.0
        %2238 = vmatpush1.msra.mxu0 0.0
        %2239 = vmatprep.subr.mxu0 0.0
        %2240 = vmatpush1.msra.mxu0 0.0
        %2241 = vmatprep.subr.mxu0 0.0
        %2242 = vmatpush1.msra.mxu0 0.0
        %2243 = vmatprep.subr.mxu0 0.0
        %2244 = vmatpush1.msra.mxu0 0.0
        %2245 = vmatprep.subr.mxu0 0.0
        %2246 = vmatpush1.msra.mxu0 0.0
        %2247 = vmatprep.subr.mxu0 0.0
        %2248 = vmatpush1.msra.mxu0 0.0
        %2249 = vmatprep.subr.mxu0 0.0
        %2250 = vmatpush1.msra.mxu0 0.0
        %2251 = vmatprep.subr.mxu0 0.0
        %2252 = vmatpush1.msra.mxu0 0.0
        %2253 = vmatprep.subr.mxu0 0.0
        %2254 = vmatpush1.msra.mxu0 0.0
        %2255 = vmatprep.subr.mxu0 0.0
        %2256 = vmatpush1.msra.mxu0 0.0
        %2257 = vmatprep.subr.mxu0 0.0
        %2258 = vmatpush1.msra.mxu0 0.0
        %2259 = vmatprep.subr.mxu0 0.0
        %2260 = vmatpush1.msra.mxu0 0.0
        %2261 = vmatprep.subr.mxu0 0.0
        %2262 = vmatpush1.msra.mxu0 0.0
        %2263 = vmatprep.subr.mxu0 0.0
        %2264 = vmatpush1.msra.mxu0 0.0
        %2265 = vmatprep.subr.mxu0 0.0
        %2266 = vmatpush1.msra.mxu0 0.0
        %2267 = vmatprep.mubr.f32.mxu0 0.0
        %2268 = vmatmul.mubr.f32.gmra.mrb[0].mxu0 %v2142
        %v2269 = vpop.f32.mrb[0].mxu0
        %v2270 = vadd.f32 %v2201, %v2269
        %v2271 = vpop.f32.mrb[0].mxu0
        %2272 = vdwg.mxu0
        %v2273 = vld [vmem:[%s12] sm:$0xff]
        %v2274 = vld [vmem:[%s12 + $0x8] sm:$0xff]
        %v2275 = vld [vmem:[%s12 + $0x10] sm:$0xff]
        %v2276 = vld [vmem:[%s12 + $0x18] sm:$0xff]
        %v2277 = vld [vmem:[%s12 + $0x20] sm:$0xff]
        %v2278 = vld [vmem:[%s12 + $0x28] sm:$0xff]
        %v2279 = vld [vmem:[%s12 + $0x30] sm:$0xff]
        %v2280 = vld [vmem:[%s12 + $0x38] sm:$0xff]
        %v2281 = vld [vmem:[%s12 + $0x40] sm:$0xff]
        %v2282 = vld [vmem:[%s12 + $0x48] sm:$0xff]
        %v2283 = vld [vmem:[%s12 + $0x50] sm:$0xff]
        %v2284 = vld [vmem:[%s12 + $0x58] sm:$0xff]
        %v2285 = vld [vmem:[%s12 + $0x60] sm:$0xff]
        %v2286 = vld [vmem:[%s12 + $0x68] sm:$0xff]
        %v2287 = vld [vmem:[%s12 + $0x70] sm:$0xff]
        %v2288 = vld [vmem:[%s12 + $0x78] sm:$0xff]
        %v2289 = vld [vmem:[%s12 + $0x80] sm:$0xff]
        %v2290 = vld [vmem:[%s12 + $0x88] sm:$0xff]
        %v2291 = vld [vmem:[%s12 + $0x90] sm:$0xff]
        %v2292 = vld [vmem:[%s12 + $0x98] sm:$0xff]
        %v2293 = vld [vmem:[%s12 + $0xa0] sm:$0xff]
        %v2294 = vld [vmem:[%s12 + $0xa8] sm:$0xff]
        %v2295 = vld [vmem:[%s12 + $0xb0] sm:$0xff]
        %v2296 = vld [vmem:[%s12 + $0xb8] sm:$0xff]
        %v2297 = vld [vmem:[%s12 + $0xc0] sm:$0xff]
        %v2298 = vld [vmem:[%s12 + $0xc8] sm:$0xff]
        %v2299 = vld [vmem:[%s12 + $0xd0] sm:$0xff]
        %v2300 = vld [vmem:[%s12 + $0xd8] sm:$0xff]
        %v2301 = vld [vmem:[%s12 + $0xe0] sm:$0xff]
        %v2302 = vld [vmem:[%s12 + $0xe8] sm:$0xff]
        %v2303 = vld [vmem:[%s12 + $0xf0] sm:$0xff]
        %v2304 = vld [vmem:[%s12 + $0xf8] sm:$0xff]
        %v2305 = vld [vmem:[%s13] sm:$0x3]
        %v2307 = vlaneseq
        %v2308 = vshrl.u32 %v2307, 7
        %v2309 = vsub.s32 0, %v2308
        %v2310 = vrot.slane %v2305, %v2309
        %v2311 = vlaneseq
        %v2312 = vshrl.u32 %v2311, 7
        %v2313 = vsub.s32 1, %v2312
        %v2314 = vrot.slane %v2305, %v2313
        %2317 = vmatprep.subr.mxu0 %v2274
        %2318 = vmatpush1.msra.mxu0 %v2273
        %2319 = vmatprep.subr.mxu0 %v2276
        %2320 = vmatpush1.msra.mxu0 %v2275
        %2321 = vmatprep.subr.mxu0 %v2278
        %2322 = vmatpush1.msra.mxu0 %v2277
        %2323 = vmatprep.subr.mxu0 %v2280
        %2324 = vmatpush1.msra.mxu0 %v2279
        %2325 = vmatprep.subr.mxu0 %v2282
        %2326 = vmatpush1.msra.mxu0 %v2281
        %2327 = vmatprep.subr.mxu0 %v2284
        %2328 = vmatpush1.msra.mxu0 %v2283
        %2329 = vmatprep.subr.mxu0 %v2286
        %2330 = vmatpush1.msra.mxu0 %v2285
        %2331 = vmatprep.subr.mxu0 %v2288
        %2332 = vmatpush1.msra.mxu0 %v2287
        %2333 = vmatprep.subr.mxu0 %v2290
        %2334 = vmatpush1.msra.mxu0 %v2289
        %2335 = vmatprep.subr.mxu0 %v2292
        %2336 = vmatpush1.msra.mxu0 %v2291
        %2337 = vmatprep.subr.mxu0 %v2294
        %2338 = vmatpush1.msra.mxu0 %v2293
        %2339 = vmatprep.subr.mxu0 %v2296
        %2340 = vmatpush1.msra.mxu0 %v2295
        %2341 = vmatprep.subr.mxu0 %v2298
        %2342 = vmatpush1.msra.mxu0 %v2297
        %2343 = vmatprep.subr.mxu0 %v2300
        %2344 = vmatpush1.msra.mxu0 %v2299
        %2345 = vmatprep.subr.mxu0 %v2302
        %2346 = vmatpush1.msra.mxu0 %v2301
        %2347 = vmatprep.subr.mxu0 %v2304
        %2348 = vmatpush1.msra.mxu0 %v2303
        %2349 = vmatprep.subr.mxu0 0.0
        %2350 = vmatpush1.msra.mxu0 0.0
        %2351 = vmatprep.subr.mxu0 0.0
        %2352 = vmatpush1.msra.mxu0 0.0
        %2353 = vmatprep.subr.mxu0 0.0
        %2354 = vmatpush1.msra.mxu0 0.0
        %2355 = vmatprep.subr.mxu0 0.0
        %2356 = vmatpush1.msra.mxu0 0.0
        %2357 = vmatprep.subr.mxu0 0.0
        %2358 = vmatpush1.msra.mxu0 0.0
        %2359 = vmatprep.subr.mxu0 0.0
        %2360 = vmatpush1.msra.mxu0 0.0
        %2361 = vmatprep.subr.mxu0 0.0
        %2362 = vmatpush1.msra.mxu0 0.0
        %2363 = vmatprep.subr.mxu0 0.0
        %2364 = vmatpush1.msra.mxu0 0.0
        %2365 = vmatprep.subr.mxu0 0.0
        %2366 = vmatpush1.msra.mxu0 0.0
        %2367 = vmatprep.subr.mxu0 0.0
        %2368 = vmatpush1.msra.mxu0 0.0
        %2369 = vmatprep.subr.mxu0 0.0
        %2370 = vmatpush1.msra.mxu0 0.0
        %2371 = vmatprep.subr.mxu0 0.0
        %2372 = vmatpush1.msra.mxu0 0.0
        %2373 = vmatprep.subr.mxu0 0.0
        %2374 = vmatpush1.msra.mxu0 0.0
        %2375 = vmatprep.subr.mxu0 0.0
        %2376 = vmatpush1.msra.mxu0 0.0
        %2377 = vmatprep.subr.mxu0 0.0
        %2378 = vmatpush1.msra.mxu0 0.0
        %2379 = vmatprep.subr.mxu0 0.0
        %2380 = vmatpush1.msra.mxu0 0.0
        %2381 = vmatprep.mubr.f32.mxu0 0.0
        %2382 = vmatmul.mubr.f32.gmra.mrb[0].mxu0 %v2143
        %v2383 = vpop.f32.mrb[0].mxu0
        %v2384 = vadd.f32 %v2310, %v2383
        %v2385 = vpop.f32.mrb[0].mxu0
        %v2386 = vadd.f32 %v2314, %v2385
        %2387 = vmatprep.mubr.f32.mxu0 0.0
        %2388 = vmatmul.mubr.f32.gmra.mrb[0].mxu0 %v2144
        %v2389 = vpop.f32.mrb[0].mxu0
        %v2390 = vadd.f32 %v2310, %v2389
        %v2391 = vpop.f32.mrb[0].mxu0
        %v2392 = vadd.f32 %v2314, %v2391
        %2393 = vmatprep.mubr.f32.mxu0 0.0
        %2394 = vmatmul.mubr.f32.gmra.mrb[0].mxu0 %v2145
        %v2395 = vpop.f32.mrb[0].mxu0
        %v2396 = vadd.f32 %v2310, %v2395
        %v2397 = vpop.f32.mrb[0].mxu0
        %v2398 = vadd.f32 %v2314, %v2397
        %2399 = vmatprep.mubr.f32.mxu0 0.0
        %2400 = vmatmul.mubr.f32.gmra.mrb[0].mxu0 %v2146
        %v2401 = vpop.f32.mrb[0].mxu0
        %v2402 = vadd.f32 %v2310, %v2401
        %v2403 = vpop.f32.mrb[0].mxu0
        %v2404 = vadd.f32 %v2314, %v2403
        %2405 = vmatprep.mubr.f32.mxu0 0.0
        %2406 = vmatmul.mubr.f32.gmra.mrb[0].mxu0 %v2147
        %v2407 = vpop.f32.mrb[0].mxu0
        %v2408 = vadd.f32 %v2310, %v2407
        %v2409 = vpop.f32.mrb[0].mxu0
        %v2410 = vadd.f32 %v2314, %v2409
        %2411 = vmatprep.mubr.f32.mxu0 0.0
        %2412 = vmatmul.mubr.f32.gmra.mrb[0].mxu0 %v2148
        %v2413 = vpop.f32.mrb[0].mxu0
        %v2414 = vadd.f32 %v2310, %v2413
        %v2415 = vpop.f32.mrb[0].mxu0
        %v2416 = vadd.f32 %v2314, %v2415
        %2417 = vmatprep.mubr.f32.mxu0 0.0
        %2418 = vmatmul.mubr.f32.gmra.mrb[0].mxu0 %v2149
        %v2419 = vpop.f32.mrb[0].mxu0
        %v2420 = vadd.f32 %v2310, %v2419
        %v2421 = vpop.f32.mrb[0].mxu0
        %v2422 = vadd.f32 %v2314, %v2421
        %2423 = vmatprep.mubr.f32.mxu0 0.0
        %2424 = vmatmul.mubr.f32.gmra.mrb[0].mxu0 %v2150
        %v2425 = vpop.f32.mrb[0].mxu0
        %v2426 = vadd.f32 %v2310, %v2425
        %v2427 = vpop.f32.mrb[0].mxu0
        %v2428 = vadd.f32 %v2314, %v2427
        %2429 = vmatprep.mubr.f32.mxu0 0.0
        %2430 = vmatmul.mubr.f32.gmra.mrb[0].mxu0 %v2151
        %v2431 = vpop.f32.mrb[0].mxu0
        %v2432 = vadd.f32 %v2310, %v2431
        %v2433 = vpop.f32.mrb[0].mxu0
        %v2434 = vadd.f32 %v2314, %v2433
        %2435 = vmatprep.mubr.f32.mxu0 0.0
        %2436 = vmatmul.mubr.f32.gmra.mrb[0].mxu0 %v2152
        %v2437 = vpop.f32.mrb[0].mxu0
        %v2438 = vadd.f32 %v2310, %v2437
        %v2439 = vpop.f32.mrb[0].mxu0
        %v2440 = vadd.f32 %v2314, %v2439
        %2441 = vmatprep.mubr.f32.mxu0 0.0
        %2442 = vmatmul.mubr.f32.gmra.mrb[0].mxu0 %v2153
        %v2443 = vpop.f32.mrb[0].mxu0
        %v2444 = vadd.f32 %v2310, %v2443
        %v2445 = vpop.f32.mrb[0].mxu0
        %v2446 = vadd.f32 %v2314, %v2445
        %2447 = vmatprep.mubr.f32.mxu0 0.0
        %2448 = vmatmul.mubr.f32.gmra.mrb[0].mxu0 %v2154
        %v2449 = vpop.f32.mrb[0].mxu0
        %v2450 = vadd.f32 %v2310, %v2449
        %v2451 = vpop.f32.mrb[0].mxu0
        %v2452 = vadd.f32 %v2314, %v2451
        %2453 = vmatprep.mubr.f32.mxu0 0.0
        %2454 = vmatmul.mubr.f32.gmra.mrb[0].mxu0 %v2155
        %v2455 = vpop.f32.mrb[0].mxu0
        %v2456 = vadd.f32 %v2310, %v2455
        %v2457 = vpop.f32.mrb[0].mxu0
        %v2458 = vadd.f32 %v2314, %v2457
        %2459 = vmatprep.mubr.f32.mxu0 0.0
        %2460 = vmatmul.mubr.f32.gmra.mrb[0].mxu0 %v2156
        %v2461 = vpop.f32.mrb[0].mxu0
        %v2462 = vadd.f32 %v2310, %v2461
        %v2463 = vpop.f32.mrb[0].mxu0
        %v2464 = vadd.f32 %v2314, %v2463
        %2465 = vmatprep.mubr.f32.mxu0 0.0
        %2466 = vmatmul.mubr.f32.gmra.mrb[0].mxu0 %v2157
        %v2467 = vpop.f32.mrb[0].mxu0
        %v2468 = vadd.f32 %v2310, %v2467
        %v2469 = vpop.f32.mrb[0].mxu0
        %v2470 = vadd.f32 %v2314, %v2469
        %2471 = vmatprep.mubr.f32.mxu0 0.0
        %2472 = vmatmul.mubr.f32.gmra.mrb[0].mxu0 %v2158
        %v2473 = vpop.f32.mrb[0].mxu0
        %v2474 = vadd.f32 %v2310, %v2473
        %v2475 = vpop.f32.mrb[0].mxu0
        %v2476 = vadd.f32 %v2314, %v2475
        %2477 = vmatprep.mubr.f32.mxu0 0.0
        %2478 = vmatmul.mubr.f32.gmra.mrb[0].mxu0 %v2159
        %v2479 = vpop.f32.mrb[0].mxu0
        %v2480 = vadd.f32 %v2310, %v2479
        %v2481 = vpop.f32.mrb[0].mxu0
        %v2482 = vadd.f32 %v2314, %v2481
        %2483 = vmatprep.mubr.f32.mxu0 0.0
        %2484 = vmatmul.mubr.f32.gmra.mrb[0].mxu0 %v2160
        %v2485 = vpop.f32.mrb[0].mxu0
        %v2486 = vadd.f32 %v2310, %v2485
        %v2487 = vpop.f32.mrb[0].mxu0
        %v2488 = vadd.f32 %v2314, %v2487
        %2489 = vmatprep.mubr.f32.mxu0 0.0
        %2490 = vmatmul.mubr.f32.gmra.mrb[0].mxu0 %v2161
        %v2491 = vpop.f32.mrb[0].mxu0
        %v2492 = vadd.f32 %v2310, %v2491
        %v2493 = vpop.f32.mrb[0].mxu0
        %v2494 = vadd.f32 %v2314, %v2493
        %2495 = vmatprep.mubr.f32.mxu0 0.0
        %2496 = vmatmul.mubr.f32.gmra.mrb[0].mxu0 %v2162
        %v2497 = vpop.f32.mrb[0].mxu0
        %v2498 = vadd.f32 %v2310, %v2497
        %v2499 = vpop.f32.mrb[0].mxu0
        %v2500 = vadd.f32 %v2314, %v2499
        %2501 = vmatprep.mubr.f32.mxu0 0.0
        %2502 = vmatmul.mubr.f32.gmra.mrb[0].mxu0 %v2163
        %v2503 = vpop.f32.mrb[0].mxu0
        %v2504 = vadd.f32 %v2310, %v2503
        %v2505 = vpop.f32.mrb[0].mxu0
        %v2506 = vadd.f32 %v2314, %v2505
        %2507 = vmatprep.mubr.f32.mxu0 0.0
        %2508 = vmatmul.mubr.f32.gmra.mrb[0].mxu0 %v2164
        %v2509 = vpop.f32.mrb[0].mxu0
        %v2510 = vadd.f32 %v2310, %v2509
        %v2511 = vpop.f32.mrb[0].mxu0
        %v2512 = vadd.f32 %v2314, %v2511
        %2513 = vmatprep.mubr.f32.mxu0 0.0
        %2514 = vmatmul.mubr.f32.gmra.mrb[0].mxu0 %v2165
        %v2515 = vpop.f32.mrb[0].mxu0
        %v2516 = vadd.f32 %v2310, %v2515
        %v2517 = vpop.f32.mrb[0].mxu0
        %v2518 = vadd.f32 %v2314, %v2517
        %2519 = vmatprep.mubr.f32.mxu0 0.0
        %2520 = vmatmul.mubr.f32.gmra.mrb[0].mxu0 %v2166
        %v2521 = vpop.f32.mrb[0].mxu0
        %v2522 = vadd.f32 %v2310, %v2521
        %v2523 = vpop.f32.mrb[0].mxu0
        %v2524 = vadd.f32 %v2314, %v2523
        %2525 = vmatprep.mubr.f32.mxu0 0.0
        %2526 = vmatmul.mubr.f32.gmra.mrb[0].mxu0 %v2167
        %v2527 = vpop.f32.mrb[0].mxu0
        %v2528 = vadd.f32 %v2310, %v2527
        %v2529 = vpop.f32.mrb[0].mxu0
        %v2530 = vadd.f32 %v2314, %v2529
        %2531 = vmatprep.mubr.f32.mxu0 0.0
        %2532 = vmatmul.mubr.f32.gmra.mrb[0].mxu0 %v2168
        %v2533 = vpop.f32.mrb[0].mxu0
        %v2534 = vadd.f32 %v2310, %v2533
        %v2535 = vpop.f32.mrb[0].mxu0
        %v2536 = vadd.f32 %v2314, %v2535
        %2537 = vmatprep.mubr.f32.mxu0 0.0
        %2538 = vmatmul.mubr.f32.gmra.mrb[0].mxu0 %v2169
        %v2539 = vpop.f32.mrb[0].mxu0
        %v2540 = vadd.f32 %v2310, %v2539
        %v2541 = vpop.f32.mrb[0].mxu0
        %v2542 = vadd.f32 %v2314, %v2541
        %2543 = vmatprep.mubr.f32.mxu0 0.0
        %2544 = vmatmul.mubr.f32.gmra.mrb[0].mxu0 %v2170
        %v2545 = vpop.f32.mrb[0].mxu0
        %v2546 = vadd.f32 %v2310, %v2545
        %v2547 = vpop.f32.mrb[0].mxu0
        %v2548 = vadd.f32 %v2314, %v2547
        %2549 = vmatprep.mubr.f32.mxu0 0.0
        %2550 = vmatmul.mubr.f32.gmra.mrb[0].mxu0 %v2171
        %v2551 = vpop.f32.mrb[0].mxu0
        %v2552 = vadd.f32 %v2310, %v2551
        %v2553 = vpop.f32.mrb[0].mxu0
        %v2554 = vadd.f32 %v2314, %v2553
        %2555 = vmatprep.mubr.f32.mxu0 0.0
        %2556 = vmatmul.mubr.f32.gmra.mrb[0].mxu0 %v2172
        %v2557 = vpop.f32.mrb[0].mxu0
        %v2558 = vadd.f32 %v2310, %v2557
        %v2559 = vpop.f32.mrb[0].mxu0
        %v2560 = vadd.f32 %v2314, %v2559
        %2561 = vmatprep.mubr.f32.mxu0 0.0
        %2562 = vmatmul.mubr.f32.gmra.mrb[0].mxu0 %v2173
        %v2563 = vpop.f32.mrb[0].mxu0
        %v2564 = vadd.f32 %v2310, %v2563
        %v2565 = vpop.f32.mrb[0].mxu0
        %v2566 = vadd.f32 %v2314, %v2565
        %2567 = vmatprep.mubr.f32.mxu0 0.0
        %2568 = vmatmul.mubr.f32.gmra.mrb[0].mxu0 %v2174
        %v2569 = vpop.f32.mrb[0].mxu0
        %v2570 = vadd.f32 %v2310, %v2569
        %v2571 = vpop.f32.mrb[0].mxu0
        %v2572 = vadd.f32 %v2314, %v2571
        %2573 = vdwg.mxu0
        %v2575 = vsel %vm1130, %v2270, 0
        %v2578 = vsel %vm1130, %v2384, 0
        %v2581 = vsel %vm1130, %v2390, 0
        %v2584 = vsel %vm1130, %v2396, 0
        %v2587 = vsel %vm1130, %v2402, 0
        %v2590 = vsel %vm1130, %v2408, 0
        %v2593 = vsel %vm1130, %v2414, 0
        %v2596 = vsel %vm1130, %v2420, 0
        %v2599 = vsel %vm1130, %v2426, 0
        %v2602 = vsel %vm1130, %v2432, 0
        %v2605 = vsel %vm1130, %v2438, 0
        %v2608 = vsel %vm1130, %v2444, 0
        %v2611 = vsel %vm1130, %v2450, 0
        %v2614 = vsel %vm1130, %v2456, 0
        %v2617 = vsel %vm1130, %v2462, 0
        %v2620 = vsel %vm1130, %v2468, 0
        %v2623 = vsel %vm1130, %v2474, 0
        %v2626 = vsel %vm1130, %v2480, 0
        %v2629 = vsel %vm1130, %v2486, 0
        %v2632 = vsel %vm1130, %v2492, 0
        %v2635 = vsel %vm1130, %v2498, 0
        %v2638 = vsel %vm1130, %v2504, 0
        %v2641 = vsel %vm1130, %v2510, 0
        %v2644 = vsel %vm1130, %v2516, 0
        %v2647 = vsel %vm1130, %v2522, 0
        %v2650 = vsel %vm1130, %v2528, 0
        %v2653 = vsel %vm1130, %v2534, 0
        %v2656 = vsel %vm1130, %v2540, 0
        %v2659 = vsel %vm1130, %v2546, 0
        %v2662 = vsel %vm1130, %v2552, 0
        %v2665 = vsel %vm1130, %v2558, 0
        %v2668 = vsel %vm1130, %v2564, 0
        %v2671 = vsel %vm1130, %v2570, 0
        %2673 = vmatprep.subr.mxu0 0.0
        %2674 = vmatpush1.xpose.msra.mxu0 %v2578
        %2675 = vmatprep.subr.mxu0 0.0
        %2676 = vmatpush1.xpose.msra.mxu0 %v2581
        %2677 = vmatprep.subr.mxu0 0.0
        %2678 = vmatpush1.xpose.msra.mxu0 %v2584
        %2679 = vmatprep.subr.mxu0 0.0
        %2680 = vmatpush1.xpose.msra.mxu0 %v2587
        %2681 = vmatprep.subr.mxu0 0.0
        %2682 = vmatpush1.xpose.msra.mxu0 %v2590
        %2683 = vmatprep.subr.mxu0 0.0
        %2684 = vmatpush1.xpose.msra.mxu0 %v2593
        %2685 = vmatprep.subr.mxu0 0.0
        %2686 = vmatpush1.xpose.msra.mxu0 %v2596
        %2687 = vmatprep.subr.mxu0 0.0
        %2688 = vmatpush1.xpose.msra.mxu0 %v2599
        %2689 = vmatprep.subr.mxu0 0.0
        %2690 = vmatpush1.xpose.msra.mxu0 %v2602
        %2691 = vmatprep.subr.mxu0 0.0
        %2692 = vmatpush1.xpose.msra.mxu0 %v2605
        %2693 = vmatprep.subr.mxu0 0.0
        %2694 = vmatpush1.xpose.msra.mxu0 %v2608
        %2695 = vmatprep.subr.mxu0 0.0
        %2696 = vmatpush1.xpose.msra.mxu0 %v2611
        %2697 = vmatprep.subr.mxu0 0.0
        %2698 = vmatpush1.xpose.msra.mxu0 %v2614
        %2699 = vmatprep.subr.mxu0 0.0
        %2700 = vmatpush1.xpose.msra.mxu0 %v2617
        %2701 = vmatprep.subr.mxu0 0.0
        %2702 = vmatpush1.xpose.msra.mxu0 %v2620
        %2703 = vmatprep.subr.mxu0 0.0
        %2704 = vmatpush1.xpose.msra.mxu0 %v2623
        %2705 = vmatprep.subr.mxu0 0.0
        %2706 = vmatpush1.xpose.msra.mxu0 %v2626
        %2707 = vmatprep.subr.mxu0 0.0
        %2708 = vmatpush1.xpose.msra.mxu0 %v2629
        %2709 = vmatprep.subr.mxu0 0.0
        %2710 = vmatpush1.xpose.msra.mxu0 %v2632
        %2711 = vmatprep.subr.mxu0 0.0
        %2712 = vmatpush1.xpose.msra.mxu0 %v2635
        %2713 = vmatprep.subr.mxu0 0.0
        %2714 = vmatpush1.xpose.msra.mxu0 %v2638
        %2715 = vmatprep.subr.mxu0 0.0
        %2716 = vmatpush1.xpose.msra.mxu0 %v2641
        %2717 = vmatprep.subr.mxu0 0.0
        %2718 = vmatpush1.xpose.msra.mxu0 %v2644
        %2719 = vmatprep.subr.mxu0 0.0
        %2720 = vmatpush1.xpose.msra.mxu0 %v2647
        %2721 = vmatprep.subr.mxu0 0.0
        %2722 = vmatpush1.xpose.msra.mxu0 %v2650
        %2723 = vmatprep.subr.mxu0 0.0
        %2724 = vmatpush1.xpose.msra.mxu0 %v2653
        %2725 = vmatprep.subr.mxu0 0.0
        %2726 = vmatpush1.xpose.msra.mxu0 %v2656
        %2727 = vmatprep.subr.mxu0 0.0
        %2728 = vmatpush1.xpose.msra.mxu0 %v2659
        %2729 = vmatprep.subr.mxu0 0.0
        %2730 = vmatpush1.xpose.msra.mxu0 %v2662
        %2731 = vmatprep.subr.mxu0 0.0
        %2732 = vmatpush1.xpose.msra.mxu0 %v2665
        %2733 = vmatprep.subr.mxu0 0.0
        %2734 = vmatpush1.xpose.msra.mxu0 %v2668
        %2735 = vmatprep.subr.mxu0 0.0
        %2736 = vmatpush1.xpose.msra.mxu0 %v2671
        %2737 = vmatprep.mubr.f32.mxu0 0.0
        %2738 = vmatmul.mubr.f32.gmra.mrb[0].mxu0 %v2575
        %v2739 = vpop.f32.mrb[0].mxu0
        %v2740 = vadd.f32 0.0, %v2739
        %v2741 = vpop.f32.mrb[0].mxu0
        %v2742 = vadd.f32 0.0, %v2741
        %2743 = vdwg.mxu0
        %v2744 = vmul.f32 %v2740, 0.17677669
        %v2745 = vmul.f32 %v2742, 0.17677669
        %v2746 = vadd.f32 %v2744, %v2178
        %v2747 = vadd.f32 %v2745, %v2179
        %v2748 = vmax.f32 %v2746, %v2747
        %2749 = vmax.xlane.f32.xlu0 %v2748
        %v2750 = vpop.xlane.xlu0 %2749
        %v2751 = vsub.f32 %v2746, %v2750
        %v2752 = vsub.f32 %v2747, %v2750
        %v2753 = vmul.f32 %v2751, 1.442695
        %v2754 = vpow.pop %v2753
        %v2755 = vmul.f32 %v2752, 1.442695
        %v2756 = vpow.pop %v2755
        %v2757 = vadd.f32 %v2754, %v2756
        %2758 = vadd.xlane.f32.xlu0 %v2757
        %v2759 = vpop.xlane.xlu0 %2758
        %v2760 = vrcp.pop %v2759
        %v2761 = vmul.f32 %v2754, %v2760
        %v2762 = vmul.f32 %v2756, %v2760
        %2763 = vmatprep.subr.mxu0 0.0
        %2764 = vmatpush1.msra.mxu0 %v2386
        %2765 = vmatprep.subr.mxu0 0.0
        %2766 = vmatpush1.msra.mxu0 %v2392
        %2767 = vmatprep.subr.mxu0 0.0
        %2768 = vmatpush1.msra.mxu0 %v2398
        %2769 = vmatprep.subr.mxu0 0.0
        %2770 = vmatpush1.msra.mxu0 %v2404
        %2771 = vmatprep.subr.mxu0 0.0
        %2772 = vmatpush1.msra.mxu0 %v2410
        %2773 = vmatprep.subr.mxu0 0.0
        %2774 = vmatpush1.msra.mxu0 %v2416
        %2775 = vmatprep.subr.mxu0 0.0
        %2776 = vmatpush1.msra.mxu0 %v2422
        %2777 = vmatprep.subr.mxu0 0.0
        %2778 = vmatpush1.msra.mxu0 %v2428
        %2779 = vmatprep.subr.mxu0 0.0
        %2780 = vmatpush1.msra.mxu0 %v2434
        %2781 = vmatprep.subr.mxu0 0.0
        %2782 = vmatpush1.msra.mxu0 %v2440
        %2783 = vmatprep.subr.mxu0 0.0
        %2784 = vmatpush1.msra.mxu0 %v2446
        %2785 = vmatprep.subr.mxu0 0.0
        %2786 = vmatpush1.msra.mxu0 %v2452
        %2787 = vmatprep.subr.mxu0 0.0
        %2788 = vmatpush1.msra.mxu0 %v2458
        %2789 = vmatprep.subr.mxu0 0.0
        %2790 = vmatpush1.msra.mxu0 %v2464
        %2791 = vmatprep.subr.mxu0 0.0
        %2792 = vmatpush1.msra.mxu0 %v2470
        %2793 = vmatprep.subr.mxu0 0.0
        %2794 = vmatpush1.msra.mxu0 %v2476
        %2795 = vmatprep.subr.mxu0 0.0
        %2796 = vmatpush1.msra.mxu0 %v2482
        %2797 = vmatprep.subr.mxu0 0.0
        %2798 = vmatpush1.msra.mxu0 %v2488
        %2799 = vmatprep.subr.mxu0 0.0
        %2800 = vmatpush1.msra.mxu0 %v2494
        %2801 = vmatprep.subr.mxu0 0.0
        %2802 = vmatpush1.msra.mxu0 %v2500
        %2803 = vmatprep.subr.mxu0 0.0
        %2804 = vmatpush1.msra.mxu0 %v2506
        %2805 = vmatprep.subr.mxu0 0.0
        %2806 = vmatpush1.msra.mxu0 %v2512
        %2807 = vmatprep.subr.mxu0 0.0
        %2808 = vmatpush1.msra.mxu0 %v2518
        %2809 = vmatprep.subr.mxu0 0.0
        %2810 = vmatpush1.msra.mxu0 %v2524
        %2811 = vmatprep.subr.mxu0 0.0
        %2812 = vmatpush1.msra.mxu0 %v2530
        %2813 = vmatprep.subr.mxu0 0.0
        %2814 = vmatpush1.msra.mxu0 %v2536
        %2815 = vmatprep.subr.mxu0 0.0
        %2816 = vmatpush1.msra.mxu0 %v2542
        %2817 = vmatprep.subr.mxu0 0.0
        %2818 = vmatpush1.msra.mxu0 %v2548
        %2819 = vmatprep.subr.mxu0 0.0
        %2820 = vmatpush1.msra.mxu0 %v2554
        %2821 = vmatprep.subr.mxu0 0.0
        %2822 = vmatpush1.msra.mxu0 %v2560
        %2823 = vmatprep.subr.mxu0 0.0
        %2824 = vmatpush1.msra.mxu0 %v2566
        %2825 = vmatprep.subr.mxu0 0.0
        %2826 = vmatpush1.msra.mxu0 %v2572
        %2827 = vmatprep.mubr.f32.mxu0 %v2762
        %2828 = vmatmul.mubr.f32.gmra.mrb[0].mxu0 %v2761
        %v2829 = vpop.f32.mrb[0].mxu0
        %v2830 = vadd.f32 0.0, %v2829
        %v2831 = vpop.f32.mrb[0].mxu0
        %2832 = vdwg.mxu0
        %v2833 = vld [vmem:[%s14] sm:$0xff]
        %v2834 = vld [vmem:[%s14 + $0x8] sm:$0xff]
        %v2835 = vld [vmem:[%s14 + $0x10] sm:$0xff]
        %v2836 = vld [vmem:[%s14 + $0x18] sm:$0xff]
        %2837 = vrot.lane.b32.xlu0 %v2270, 96
        %v2838 = vpop.permute.xlu0 %2837
        %2839 = vrot.lane.b32.xlu0 %v2384, 96
        %v2840 = vpop.permute.xlu0 %2839
        %2841 = vrot.lane.b32.xlu0 %v2390, 96
        %v2842 = vpop.permute.xlu0 %2841
        %2843 = vrot.lane.b32.xlu0 %v2396, 96
        %v2844 = vpop.permute.xlu0 %2843
        %2845 = vrot.lane.b32.xlu0 %v2402, 96
        %v2846 = vpop.permute.xlu0 %2845
        %2847 = vrot.lane.b32.xlu0 %v2408, 96
        %v2848 = vpop.permute.xlu0 %2847
        %2849 = vrot.lane.b32.xlu0 %v2414, 96
        %v2850 = vpop.permute.xlu0 %2849
        %2851 = vrot.lane.b32.xlu0 %v2420, 96
        %v2852 = vpop.permute.xlu0 %2851
        %2853 = vrot.lane.b32.xlu0 %v2426, 96
        %v2854 = vpop.permute.xlu0 %2853
        %2855 = vrot.lane.b32.xlu0 %v2432, 96
        %v2856 = vpop.permute.xlu0 %2855
        %2857 = vrot.lane.b32.xlu0 %v2438, 96
        %v2858 = vpop.permute.xlu0 %2857
        %2859 = vrot.lane.b32.xlu0 %v2444, 96
        %v2860 = vpop.permute.xlu0 %2859
        %2861 = vrot.lane.b32.xlu0 %v2450, 96
        %v2862 = vpop.permute.xlu0 %2861
        %2863 = vrot.lane.b32.xlu0 %v2456, 96
        %v2864 = vpop.permute.xlu0 %2863
        %2865 = vrot.lane.b32.xlu0 %v2462, 96
        %v2866 = vpop.permute.xlu0 %2865
        %2867 = vrot.lane.b32.xlu0 %v2468, 96
        %v2868 = vpop.permute.xlu0 %2867
        %2869 = vrot.lane.b32.xlu0 %v2474, 96
        %v2870 = vpop.permute.xlu0 %2869
        %2871 = vrot.lane.b32.xlu0 %v2480, 96
        %v2872 = vpop.permute.xlu0 %2871
        %2873 = vrot.lane.b32.xlu0 %v2486, 96
        %v2874 = vpop.permute.xlu0 %2873
        %2875 = vrot.lane.b32.xlu0 %v2492, 96
        %v2876 = vpop.permute.xlu0 %2875
        %2877 = vrot.lane.b32.xlu0 %v2498, 96
        %v2878 = vpop.permute.xlu0 %2877
        %2879 = vrot.lane.b32.xlu0 %v2504, 96
        %v2880 = vpop.permute.xlu0 %2879
        %2881 = vrot.lane.b32.xlu0 %v2510, 96
        %v2882 = vpop.permute.xlu0 %2881
        %2883 = vrot.lane.b32.xlu0 %v2516, 96
        %v2884 = vpop.permute.xlu0 %2883
        %2885 = vrot.lane.b32.xlu0 %v2522, 96
        %v2886 = vpop.permute.xlu0 %2885
        %2887 = vrot.lane.b32.xlu0 %v2528, 96
        %v2888 = vpop.permute.xlu0 %2887
        %2889 = vrot.lane.b32.xlu0 %v2534, 96
        %v2890 = vpop.permute.xlu0 %2889
        %2891 = vrot.lane.b32.xlu0 %v2540, 96
        %v2892 = vpop.permute.xlu0 %2891
        %2893 = vrot.lane.b32.xlu0 %v2546, 96
        %v2894 = vpop.permute.xlu0 %2893
        %2895 = vrot.lane.b32.xlu0 %v2552, 96
        %v2896 = vpop.permute.xlu0 %2895
        %2897 = vrot.lane.b32.xlu0 %v2558, 96
        %v2898 = vpop.permute.xlu0 %2897
        %2899 = vrot.lane.b32.xlu0 %v2564, 96
        %v2900 = vpop.permute.xlu0 %2899
        %2901 = vrot.lane.b32.xlu0 %v2570, 96
        %v2902 = vpop.permute.xlu0 %2901
        %v2903 = vsel %vm1130, %v2838, 0
        %v2905 = vsel %vm1130, %v2840, 0
        %v2907 = vsel %vm1130, %v2842, 0
        %v2909 = vsel %vm1130, %v2844, 0
        %v2911 = vsel %vm1130, %v2846, 0
        %v2913 = vsel %vm1130, %v2848, 0
        %v2915 = vsel %vm1130, %v2850, 0
        %v2917 = vsel %vm1130, %v2852, 0
        %v2919 = vsel %vm1130, %v2854, 0
        %v2921 = vsel %vm1130, %v2856, 0
        %v2923 = vsel %vm1130, %v2858, 0
        %v2925 = vsel %vm1130, %v2860, 0
        %v2927 = vsel %vm1130, %v2862, 0
        %v2929 = vsel %vm1130, %v2864, 0
        %v2931 = vsel %vm1130, %v2866, 0
        %v2933 = vsel %vm1130, %v2868, 0
        %v2935 = vsel %vm1130, %v2870, 0
        %v2937 = vsel %vm1130, %v2872, 0
        %v2939 = vsel %vm1130, %v2874, 0
        %v2941 = vsel %vm1130, %v2876, 0
        %v2943 = vsel %vm1130, %v2878, 0
        %v2945 = vsel %vm1130, %v2880, 0
        %v2947 = vsel %vm1130, %v2882, 0
        %v2949 = vsel %vm1130, %v2884, 0
        %v2951 = vsel %vm1130, %v2886, 0
        %v2953 = vsel %vm1130, %v2888, 0
        %v2955 = vsel %vm1130, %v2890, 0
        %v2957 = vsel %vm1130, %v2892, 0
        %v2959 = vsel %vm1130, %v2894, 0
        %v2961 = vsel %vm1130, %v2896, 0
        %v2963 = vsel %vm1130, %v2898, 0
        %v2965 = vsel %vm1130, %v2900, 0
        %v2967 = vsel %vm1130, %v2902, 0
        %2969 = vmatprep.subr.mxu0 0.0
        %2970 = vmatpush1.xpose.msra.mxu0 %v2905
        %2971 = vmatprep.subr.mxu0 0.0
        %2972 = vmatpush1.xpose.msra.mxu0 %v2907
        %2973 = vmatprep.subr.mxu0 0.0
        %2974 = vmatpush1.xpose.msra.mxu0 %v2909
        %2975 = vmatprep.subr.mxu0 0.0
        %2976 = vmatpush1.xpose.msra.mxu0 %v2911
        %2977 = vmatprep.subr.mxu0 0.0
        %2978 = vmatpush1.xpose.msra.mxu0 %v2913
        %2979 = vmatprep.subr.mxu0 0.0
        %2980 = vmatpush1.xpose.msra.mxu0 %v2915
        %2981 = vmatprep.subr.mxu0 0.0
        %2982 = vmatpush1.xpose.msra.mxu0 %v2917
        %2983 = vmatprep.subr.mxu0 0.0
        %2984 = vmatpush1.xpose.msra.mxu0 %v2919
        %2985 = vmatprep.subr.mxu0 0.0
        %2986 = vmatpush1.xpose.msra.mxu0 %v2921
        %2987 = vmatprep.subr.mxu0 0.0
        %2988 = vmatpush1.xpose.msra.mxu0 %v2923
        %2989 = vmatprep.subr.mxu0 0.0
        %2990 = vmatpush1.xpose.msra.mxu0 %v2925
        %2991 = vmatprep.subr.mxu0 0.0
        %2992 = vmatpush1.xpose.msra.mxu0 %v2927
        %2993 = vmatprep.subr.mxu0 0.0
        %2994 = vmatpush1.xpose.msra.mxu0 %v2929
        %2995 = vmatprep.subr.mxu0 0.0
        %2996 = vmatpush1.xpose.msra.mxu0 %v2931
        %2997 = vmatprep.subr.mxu0 0.0
        %2998 = vmatpush1.xpose.msra.mxu0 %v2933
        %2999 = vmatprep.subr.mxu0 0.0
        %3000 = vmatpush1.xpose.msra.mxu0 %v2935
        %3001 = vmatprep.subr.mxu0 0.0
        %3002 = vmatpush1.xpose.msra.mxu0 %v2937
        %3003 = vmatprep.subr.mxu0 0.0
        %3004 = vmatpush1.xpose.msra.mxu0 %v2939
        %3005 = vmatprep.subr.mxu0 0.0
        %3006 = vmatpush1.xpose.msra.mxu0 %v2941
        %3007 = vmatprep.subr.mxu0 0.0
        %3008 = vmatpush1.xpose.msra.mxu0 %v2943
        %3009 = vmatprep.subr.mxu0 0.0
        %3010 = vmatpush1.xpose.msra.mxu0 %v2945
        %3011 = vmatprep.subr.mxu0 0.0
        %3012 = vmatpush1.xpose.msra.mxu0 %v2947
        %3013 = vmatprep.subr.mxu0 0.0
        %3014 = vmatpush1.xpose.msra.mxu0 %v2949
        %3015 = vmatprep.subr.mxu0 0.0
        %3016 = vmatpush1.xpose.msra.mxu0 %v2951
        %3017 = vmatprep.subr.mxu0 0.0
        %3018 = vmatpush1.xpose.msra.mxu0 %v2953
        %3019 = vmatprep.subr.mxu0 0.0
        %3020 = vmatpush1.xpose.msra.mxu0 %v2955
        %3021 = vmatprep.subr.mxu0 0.0
        %3022 = vmatpush1.xpose.msra.mxu0 %v2957
        %3023 = vmatprep.subr.mxu0 0.0
        %3024 = vmatpush1.xpose.msra.mxu0 %v2959
        %3025 = vmatprep.subr.mxu0 0.0
        %3026 = vmatpush1.xpose.msra.mxu0 %v2961
        %3027 = vmatprep.subr.mxu0 0.0
        %3028 = vmatpush1.xpose.msra.mxu0 %v2963
        %3029 = vmatprep.subr.mxu0 0.0
        %3030 = vmatpush1.xpose.msra.mxu0 %v2965
        %3031 = vmatprep.subr.mxu0 0.0
        %3032 = vmatpush1.xpose.msra.mxu0 %v2967
        %3033 = vmatprep.mubr.f32.mxu0 0.0
        %3034 = vmatmul.mubr.f32.gmra.mrb[0].mxu0 %v2903
        %v3035 = vpop.f32.mrb[0].mxu0
        %v3036 = vadd.f32 0.0, %v3035
        %v3037 = vpop.f32.mrb[0].mxu0
        %v3038 = vadd.f32 0.0, %v3037
        %3039 = vdwg.mxu0
        %v3040 = vmul.f32 %v3036, 0.17677669
        %v3041 = vmul.f32 %v3038, 0.17677669
        %v3042 = vadd.f32 %v3040, %v2178
        %v3043 = vadd.f32 %v3041, %v2179
        %v3044 = vmax.f32 %v3042, %v3043
        %3045 = vmax.xlane.f32.xlu0 %v3044
        %v3046 = vpop.xlane.xlu0 %3045
        %v3047 = vsub.f32 %v3042, %v3046
        %v3048 = vsub.f32 %v3043, %v3046
        %v3049 = vmul.f32 %v3047, 1.442695
        %v3050 = vpow.pop %v3049
        %v3051 = vmul.f32 %v3048, 1.442695
        %v3052 = vpow.pop %v3051
        %v3053 = vadd.f32 %v3050, %v3052
        %3054 = vadd.xlane.f32.xlu0 %v3053
        %v3055 = vpop.xlane.xlu0 %3054
        %v3056 = vrcp.pop %v3055
        %v3057 = vmul.f32 %v3050, %v3056
        %v3058 = vmul.f32 %v3052, %v3056
        %3091 = vrot.lane.b32.xlu0 %v2386, 96
        %v3092 = vpop.permute.xlu0 %3091
        %3093 = vrot.lane.b32.xlu0 %v2392, 96
        %v3094 = vpop.permute.xlu0 %3093
        %3095 = vrot.lane.b32.xlu0 %v2398, 96
        %v3096 = vpop.permute.xlu0 %3095
        %3097 = vrot.lane.b32.xlu0 %v2404, 96
        %v3098 = vpop.permute.xlu0 %3097
        %3099 = vrot.lane.b32.xlu0 %v2410, 96
        %v3100 = vpop.permute.xlu0 %3099
        %3101 = vrot.lane.b32.xlu0 %v2416, 96
        %v3102 = vpop.permute.xlu0 %3101
        %3103 = vrot.lane.b32.xlu0 %v2422, 96
        %v3104 = vpop.permute.xlu0 %3103
        %3105 = vrot.lane.b32.xlu0 %v2428, 96
        %v3106 = vpop.permute.xlu0 %3105
        %3107 = vrot.lane.b32.xlu0 %v2434, 96
        %v3108 = vpop.permute.xlu0 %3107
        %3109 = vrot.lane.b32.xlu0 %v2440, 96
        %v3110 = vpop.permute.xlu0 %3109
        %3111 = vrot.lane.b32.xlu0 %v2446, 96
        %v3112 = vpop.permute.xlu0 %3111
        %3113 = vrot.lane.b32.xlu0 %v2452, 96
        %v3114 = vpop.permute.xlu0 %3113
        %3115 = vrot.lane.b32.xlu0 %v2458, 96
        %v3116 = vpop.permute.xlu0 %3115
        %3117 = vrot.lane.b32.xlu0 %v2464, 96
        %v3118 = vpop.permute.xlu0 %3117
        %3119 = vrot.lane.b32.xlu0 %v2470, 96
        %v3120 = vpop.permute.xlu0 %3119
        %3121 = vrot.lane.b32.xlu0 %v2476, 96
        %v3122 = vpop.permute.xlu0 %3121
        %3123 = vrot.lane.b32.xlu0 %v2482, 96
        %v3124 = vpop.permute.xlu0 %3123
        %3125 = vrot.lane.b32.xlu0 %v2488, 96
        %v3126 = vpop.permute.xlu0 %3125
        %3127 = vrot.lane.b32.xlu0 %v2494, 96
        %v3128 = vpop.permute.xlu0 %3127
        %3129 = vrot.lane.b32.xlu0 %v2500, 96
        %v3130 = vpop.permute.xlu0 %3129
        %3131 = vrot.lane.b32.xlu0 %v2506, 96
        %v3132 = vpop.permute.xlu0 %3131
        %3133 = vrot.lane.b32.xlu0 %v2512, 96
        %v3134 = vpop.permute.xlu0 %3133
        %3135 = vrot.lane.b32.xlu0 %v2518, 96
        %v3136 = vpop.permute.xlu0 %3135
        %3137 = vrot.lane.b32.xlu0 %v2524, 96
        %v3138 = vpop.permute.xlu0 %3137
        %3139 = vrot.lane.b32.xlu0 %v2530, 96
        %v3140 = vpop.permute.xlu0 %3139
        %3141 = vrot.lane.b32.xlu0 %v2536, 96
        %v3142 = vpop.permute.xlu0 %3141
        %3143 = vrot.lane.b32.xlu0 %v2542, 96
        %v3144 = vpop.permute.xlu0 %3143
        %3145 = vrot.lane.b32.xlu0 %v2548, 96
        %v3146 = vpop.permute.xlu0 %3145
        %3147 = vrot.lane.b32.xlu0 %v2554, 96
        %v3148 = vpop.permute.xlu0 %3147
        %3149 = vrot.lane.b32.xlu0 %v2560, 96
        %v3150 = vpop.permute.xlu0 %3149
        %3151 = vrot.lane.b32.xlu0 %v2566, 96
        %v3152 = vpop.permute.xlu0 %3151
        %3153 = vrot.lane.b32.xlu0 %v2572, 96
        %v3154 = vpop.permute.xlu0 %3153
        %3187 = vmatprep.subr.mxu0 0.0
        %3188 = vmatpush1.msra.mxu0 %v3092
        %3189 = vmatprep.subr.mxu0 0.0
        %3190 = vmatpush1.msra.mxu0 %v3094
        %3191 = vmatprep.subr.mxu0 0.0
        %3192 = vmatpush1.msra.mxu0 %v3096
        %3193 = vmatprep.subr.mxu0 0.0
        %3194 = vmatpush1.msra.mxu0 %v3098
        %3195 = vmatprep.subr.mxu0 0.0
        %3196 = vmatpush1.msra.mxu0 %v3100
        %3197 = vmatprep.subr.mxu0 0.0
        %3198 = vmatpush1.msra.mxu0 %v3102
        %3199 = vmatprep.subr.mxu0 0.0
        %3200 = vmatpush1.msra.mxu0 %v3104
        %3201 = vmatprep.subr.mxu0 0.0
        %3202 = vmatpush1.msra.mxu0 %v3106
        %3203 = vmatprep.subr.mxu0 0.0
        %3204 = vmatpush1.msra.mxu0 %v3108
        %3205 = vmatprep.subr.mxu0 0.0
        %3206 = vmatpush1.msra.mxu0 %v3110
        %3207 = vmatprep.subr.mxu0 0.0
        %3208 = vmatpush1.msra.mxu0 %v3112
        %3209 = vmatprep.subr.mxu0 0.0
        %3210 = vmatpush1.msra.mxu0 %v3114
        %3211 = vmatprep.subr.mxu0 0.0
        %3212 = vmatpush1.msra.mxu0 %v3116
        %3213 = vmatprep.subr.mxu0 0.0
        %3214 = vmatpush1.msra.mxu0 %v3118
        %3215 = vmatprep.subr.mxu0 0.0
        %3216 = vmatpush1.msra.mxu0 %v3120
        %3217 = vmatprep.subr.mxu0 0.0
        %3218 = vmatpush1.msra.mxu0 %v3122
        %3219 = vmatprep.subr.mxu0 0.0
        %3220 = vmatpush1.msra.mxu0 %v3124
        %3221 = vmatprep.subr.mxu0 0.0
        %3222 = vmatpush1.msra.mxu0 %v3126
        %3223 = vmatprep.subr.mxu0 0.0
        %3224 = vmatpush1.msra.mxu0 %v3128
        %3225 = vmatprep.subr.mxu0 0.0
        %3226 = vmatpush1.msra.mxu0 %v3130
        %3227 = vmatprep.subr.mxu0 0.0
        %3228 = vmatpush1.msra.mxu0 %v3132
        %3229 = vmatprep.subr.mxu0 0.0
        %3230 = vmatpush1.msra.mxu0 %v3134
        %3231 = vmatprep.subr.mxu0 0.0
        %3232 = vmatpush1.msra.mxu0 %v3136
        %3233 = vmatprep.subr.mxu0 0.0
        %3234 = vmatpush1.msra.mxu0 %v3138
        %3235 = vmatprep.subr.mxu0 0.0
        %3236 = vmatpush1.msra.mxu0 %v3140
        %3237 = vmatprep.subr.mxu0 0.0
        %3238 = vmatpush1.msra.mxu0 %v3142
        %3239 = vmatprep.subr.mxu0 0.0
        %3240 = vmatpush1.msra.mxu0 %v3144
        %3241 = vmatprep.subr.mxu0 0.0
        %3242 = vmatpush1.msra.mxu0 %v3146
        %3243 = vmatprep.subr.mxu0 0.0
        %3244 = vmatpush1.msra.mxu0 %v3148
        %3245 = vmatprep.subr.mxu0 0.0
        %3246 = vmatpush1.msra.mxu0 %v3150
        %3247 = vmatprep.subr.mxu0 0.0
        %3248 = vmatpush1.msra.mxu0 %v3152
        %3249 = vmatprep.subr.mxu0 0.0
        %3250 = vmatpush1.msra.mxu0 %v3154
        %3251 = vmatprep.mubr.f32.mxu0 %v3058
        %3252 = vmatmul.mubr.f32.gmra.mrb[0].mxu0 %v3057
        %v3253 = vpop.f32.mrb[0].mxu0
        %v3254 = vadd.f32 0.0, %v3253
        %v3255 = vpop.f32.mrb[0].mxu0
        %3256 = vdwg.mxu0
        %v3257 = vld [vmem:[%s14 + $0x20] sm:$0xff]
        %v3258 = vld [vmem:[%s14 + $0x28] sm:$0xff]
        %v3259 = vld [vmem:[%s14 + $0x30] sm:$0xff]
        %v3260 = vld [vmem:[%s14 + $0x38] sm:$0xff]
        %v3262 = vsel %vm1130, %v3254, 0
        %3264 = vmatprep.subr.mxu0 0.0
        %3265 = vmatpush1.msra.mxu0 %v3257
        %3266 = vmatprep.subr.mxu0 0.0
        %3267 = vmatpush1.msra.mxu0 %v3258
        %3268 = vmatprep.subr.mxu0 0.0
        %3269 = vmatpush1.msra.mxu0 %v3259
        %3270 = vmatprep.subr.mxu0 0.0
        %3271 = vmatpush1.msra.mxu0 %v3260
        %3272 = vmatprep.subr.mxu0 0.0
        %3273 = vmatpush1.msra.mxu0 0.0
        %3274 = vmatprep.subr.mxu0 0.0
        %3275 = vmatpush1.msra.mxu0 0.0
        %3276 = vmatprep.subr.mxu0 0.0
        %3277 = vmatpush1.msra.mxu0 0.0
        %3278 = vmatprep.subr.mxu0 0.0
        %3279 = vmatpush1.msra.mxu0 0.0
        %3280 = vmatprep.subr.mxu0 0.0
        %3281 = vmatpush1.msra.mxu0 0.0
        %3282 = vmatprep.subr.mxu0 0.0
        %3283 = vmatpush1.msra.mxu0 0.0
        %3284 = vmatprep.subr.mxu0 0.0
        %3285 = vmatpush1.msra.mxu0 0.0
        %3286 = vmatprep.subr.mxu0 0.0
        %3287 = vmatpush1.msra.mxu0 0.0
        %3288 = vmatprep.subr.mxu0 0.0
        %3289 = vmatpush1.msra.mxu0 0.0
        %3290 = vmatprep.subr.mxu0 0.0
        %3291 = vmatpush1.msra.mxu0 0.0
        %3292 = vmatprep.subr.mxu0 0.0
        %3293 = vmatpush1.msra.mxu0 0.0
        %3294 = vmatprep.subr.mxu0 0.0
        %3295 = vmatpush1.msra.mxu0 0.0
        %3296 = vmatprep.subr.mxu0 0.0
        %3297 = vmatpush1.msra.mxu0 0.0
        %3298 = vmatprep.subr.mxu0 0.0
        %3299 = vmatpush1.msra.mxu0 0.0
        %3300 = vmatprep.subr.mxu0 0.0
        %3301 = vmatpush1.msra.mxu0 0.0
        %3302 = vmatprep.subr.mxu0 0.0
        %3303 = vmatpush1.msra.mxu0 0.0
        %3304 = vmatprep.subr.mxu0 0.0
        %3305 = vmatpush1.msra.mxu0 0.0
        %3306 = vmatprep.subr.mxu0 0.0
        %3307 = vmatpush1.msra.mxu0 0.0
        %3308 = vmatprep.subr.mxu0 0.0
        %3309 = vmatpush1.msra.mxu0 0.0
        %3310 = vmatprep.subr.mxu0 0.0
        %3311 = vmatpush1.msra.mxu0 0.0
        %3312 = vmatprep.subr.mxu0 0.0
        %3313 = vmatpush1.msra.mxu0 0.0
        %3314 = vmatprep.subr.mxu0 0.0
        %3315 = vmatpush1.msra.mxu0 0.0
        %3316 = vmatprep.subr.mxu0 0.0
        %3317 = vmatpush1.msra.mxu0 0.0
        %3318 = vmatprep.subr.mxu0 0.0
        %3319 = vmatpush1.msra.mxu0 0.0
        %3320 = vmatprep.subr.mxu0 0.0
        %3321 = vmatpush1.msra.mxu0 0.0
        %3322 = vmatprep.subr.mxu0 0.0
        %3323 = vmatpush1.msra.mxu0 0.0
        %3324 = vmatprep.subr.mxu0 0.0
        %3325 = vmatpush1.msra.mxu0 0.0
        %3326 = vmatprep.subr.mxu0 0.0
        %3327 = vmatpush1.msra.mxu0 0.0
        %3328 = vmatprep.mubr.f32.mxu0 0.0
        %3329 = vmatmul.mubr.f32.gmra.mrb[0].mxu0 %v3262
        %v3330 = vpop.f32.mrb[0].mxu0
        %v3331 = vadd.f32 0.0, %v3330
        %v3332 = vpop.f32.mrb[0].mxu0
        %3333 = vdwg.mxu0
        %v3335 = vsel %vm1130, %v2830, 0
        %3337 = vmatprep.subr.mxu0 0.0
        %3338 = vmatpush1.msra.mxu0 %v2833
        %3339 = vmatprep.subr.mxu0 0.0
        %3340 = vmatpush1.msra.mxu0 %v2834
        %3341 = vmatprep.subr.mxu0 0.0
        %3342 = vmatpush1.msra.mxu0 %v2835
        %3343 = vmatprep.subr.mxu0 0.0
        %3344 = vmatpush1.msra.mxu0 %v2836
        %3345 = vmatprep.subr.mxu0 0.0
        %3346 = vmatpush1.msra.mxu0 0.0
        %3347 = vmatprep.subr.mxu0 0.0
        %3348 = vmatpush1.msra.mxu0 0.0
        %3349 = vmatprep.subr.mxu0 0.0
        %3350 = vmatpush1.msra.mxu0 0.0
        %3351 = vmatprep.subr.mxu0 0.0
        %3352 = vmatpush1.msra.mxu0 0.0
        %3353 = vmatprep.subr.mxu0 0.0
        %3354 = vmatpush1.msra.mxu0 0.0
        %3355 = vmatprep.subr.mxu0 0.0
        %3356 = vmatpush1.msra.mxu0 0.0
        %3357 = vmatprep.subr.mxu0 0.0
        %3358 = vmatpush1.msra.mxu0 0.0
        %3359 = vmatprep.subr.mxu0 0.0
        %3360 = vmatpush1.msra.mxu0 0.0
        %3361 = vmatprep.subr.mxu0 0.0
        %3362 = vmatpush1.msra.mxu0 0.0
        %3363 = vmatprep.subr.mxu0 0.0
        %3364 = vmatpush1.msra.mxu0 0.0
        %3365 = vmatprep.subr.mxu0 0.0
        %3366 = vmatpush1.msra.mxu0 0.0
        %3367 = vmatprep.subr.mxu0 0.0
        %3368 = vmatpush1.msra.mxu0 0.0
        %3369 = vmatprep.subr.mxu0 0.0
        %3370 = vmatpush1.msra.mxu0 0.0
        %3371 = vmatprep.subr.mxu0 0.0
        %3372 = vmatpush1.msra.mxu0 0.0
        %3373 = vmatprep.subr.mxu0 0.0
        %3374 = vmatpush1.msra.mxu0 0.0
        %3375 = vmatprep.subr.mxu0 0.0
        %3376 = vmatpush1.msra.mxu0 0.0
        %3377 = vmatprep.subr.mxu0 0.0
        %3378 = vmatpush1.msra.mxu0 0.0
        %3379 = vmatprep.subr.mxu0 0.0
        %3380 = vmatpush1.msra.mxu0 0.0
        %3381 = vmatprep.subr.mxu0 0.0
        %3382 = vmatpush1.msra.mxu0 0.0
        %3383 = vmatprep.subr.mxu0 0.0
        %3384 = vmatpush1.msra.mxu0 0.0
        %3385 = vmatprep.subr.mxu0 0.0
        %3386 = vmatpush1.msra.mxu0 0.0
        %3387 = vmatprep.subr.mxu0 0.0
        %3388 = vmatpush1.msra.mxu0 0.0
        %3389 = vmatprep.subr.mxu0 0.0
        %3390 = vmatpush1.msra.mxu0 0.0
        %3391 = vmatprep.subr.mxu0 0.0
        %3392 = vmatpush1.msra.mxu0 0.0
        %3393 = vmatprep.subr.mxu0 0.0
        %3394 = vmatpush1.msra.mxu0 0.0
        %3395 = vmatprep.subr.mxu0 0.0
        %3396 = vmatpush1.msra.mxu0 0.0
        %3397 = vmatprep.subr.mxu0 0.0
        %3398 = vmatpush1.msra.mxu0 0.0
        %3399 = vmatprep.subr.mxu0 0.0
        %3400 = vmatpush1.msra.mxu0 0.0
        %3401 = vmatprep.mubr.f32.mxu0 0.0
        %3402 = vmatmul.mubr.f32.gmra.mrb[0].mxu0 %v3335
        %v3403 = vpop.f32.mrb[0].mxu0
        %v3404 = vadd.f32 %v3331, %v3403
        %v3405 = vpop.f32.mrb[0].mxu0
        %3406 = vdwg.mxu0
        %3407 = vrot.lane.b32.xlu0 %v2270, 64
        %v3408 = vpop.permute.xlu0 %3407
        %3409 = vrot.lane.b32.xlu0 %v2384, 64
        %v3410 = vpop.permute.xlu0 %3409
        %3411 = vrot.lane.b32.xlu0 %v2390, 64
        %v3412 = vpop.permute.xlu0 %3411
        %3413 = vrot.lane.b32.xlu0 %v2396, 64
        %v3414 = vpop.permute.xlu0 %3413
        %3415 = vrot.lane.b32.xlu0 %v2402, 64
        %v3416 = vpop.permute.xlu0 %3415
        %3417 = vrot.lane.b32.xlu0 %v2408, 64
        %v3418 = vpop.permute.xlu0 %3417
        %3419 = vrot.lane.b32.xlu0 %v2414, 64
        %v3420 = vpop.permute.xlu0 %3419
        %3421 = vrot.lane.b32.xlu0 %v2420, 64
        %v3422 = vpop.permute.xlu0 %3421
        %3423 = vrot.lane.b32.xlu0 %v2426, 64
        %v3424 = vpop.permute.xlu0 %3423
        %3425 = vrot.lane.b32.xlu0 %v2432, 64
        %v3426 = vpop.permute.xlu0 %3425
        %3427 = vrot.lane.b32.xlu0 %v2438, 64
        %v3428 = vpop.permute.xlu0 %3427
        %3429 = vrot.lane.b32.xlu0 %v2444, 64
        %v3430 = vpop.permute.xlu0 %3429
        %3431 = vrot.lane.b32.xlu0 %v2450, 64
        %v3432 = vpop.permute.xlu0 %3431
        %3433 = vrot.lane.b32.xlu0 %v2456, 64
        %v3434 = vpop.permute.xlu0 %3433
        %3435 = vrot.lane.b32.xlu0 %v2462, 64
        %v3436 = vpop.permute.xlu0 %3435
        %3437 = vrot.lane.b32.xlu0 %v2468, 64
        %v3438 = vpop.permute.xlu0 %3437
        %3439 = vrot.lane.b32.xlu0 %v2474, 64
        %v3440 = vpop.permute.xlu0 %3439
        %3441 = vrot.lane.b32.xlu0 %v2480, 64
        %v3442 = vpop.permute.xlu0 %3441
        %3443 = vrot.lane.b32.xlu0 %v2486, 64
        %v3444 = vpop.permute.xlu0 %3443
        %3445 = vrot.lane.b32.xlu0 %v2492, 64
        %v3446 = vpop.permute.xlu0 %3445
        %3447 = vrot.lane.b32.xlu0 %v2498, 64
        %v3448 = vpop.permute.xlu0 %3447
        %3449 = vrot.lane.b32.xlu0 %v2504, 64
        %v3450 = vpop.permute.xlu0 %3449
        %3451 = vrot.lane.b32.xlu0 %v2510, 64
        %v3452 = vpop.permute.xlu0 %3451
        %3453 = vrot.lane.b32.xlu0 %v2516, 64
        %v3454 = vpop.permute.xlu0 %3453
        %3455 = vrot.lane.b32.xlu0 %v2522, 64
        %v3456 = vpop.permute.xlu0 %3455
        %3457 = vrot.lane.b32.xlu0 %v2528, 64
        %v3458 = vpop.permute.xlu0 %3457
        %3459 = vrot.lane.b32.xlu0 %v2534, 64
        %v3460 = vpop.permute.xlu0 %3459
        %3461 = vrot.lane.b32.xlu0 %v2540, 64
        %v3462 = vpop.permute.xlu0 %3461
        %3463 = vrot.lane.b32.xlu0 %v2546, 64
        %v3464 = vpop.permute.xlu0 %3463
        %3465 = vrot.lane.b32.xlu0 %v2552, 64
        %v3466 = vpop.permute.xlu0 %3465
        %3467 = vrot.lane.b32.xlu0 %v2558, 64
        %v3468 = vpop.permute.xlu0 %3467
        %3469 = vrot.lane.b32.xlu0 %v2564, 64
        %v3470 = vpop.permute.xlu0 %3469
        %3471 = vrot.lane.b32.xlu0 %v2570, 64
        %v3472 = vpop.permute.xlu0 %3471
        %v3473 = vsel %vm1130, %v3408, 0
        %v3475 = vsel %vm1130, %v3410, 0
        %v3477 = vsel %vm1130, %v3412, 0
        %v3479 = vsel %vm1130, %v3414, 0
        %v3481 = vsel %vm1130, %v3416, 0
        %v3483 = vsel %vm1130, %v3418, 0
        %v3485 = vsel %vm1130, %v3420, 0
        %v3487 = vsel %vm1130, %v3422, 0
        %v3489 = vsel %vm1130, %v3424, 0
        %v3491 = vsel %vm1130, %v3426, 0
        %v3493 = vsel %vm1130, %v3428, 0
        %v3495 = vsel %vm1130, %v3430, 0
        %v3497 = vsel %vm1130, %v3432, 0
        %v3499 = vsel %vm1130, %v3434, 0
        %v3501 = vsel %vm1130, %v3436, 0
        %v3503 = vsel %vm1130, %v3438, 0
        %v3505 = vsel %vm1130, %v3440, 0
        %v3507 = vsel %vm1130, %v3442, 0
        %v3509 = vsel %vm1130, %v3444, 0
        %v3511 = vsel %vm1130, %v3446, 0
        %v3513 = vsel %vm1130, %v3448, 0
        %v3515 = vsel %vm1130, %v3450, 0
        %v3517 = vsel %vm1130, %v3452, 0
        %v3519 = vsel %vm1130, %v3454, 0
        %v3521 = vsel %vm1130, %v3456, 0
        %v3523 = vsel %vm1130, %v3458, 0
        %v3525 = vsel %vm1130, %v3460, 0
        %v3527 = vsel %vm1130, %v3462, 0
        %v3529 = vsel %vm1130, %v3464, 0
        %v3531 = vsel %vm1130, %v3466, 0
        %v3533 = vsel %vm1130, %v3468, 0
        %v3535 = vsel %vm1130, %v3470, 0
        %v3537 = vsel %vm1130, %v3472, 0
        %3539 = vmatprep.subr.mxu0 0.0
        %3540 = vmatpush1.xpose.msra.mxu0 %v3475
        %3541 = vmatprep.subr.mxu0 0.0
        %3542 = vmatpush1.xpose.msra.mxu0 %v3477
        %3543 = vmatprep.subr.mxu0 0.0
        %3544 = vmatpush1.xpose.msra.mxu0 %v3479
        %3545 = vmatprep.subr.mxu0 0.0
        %3546 = vmatpush1.xpose.msra.mxu0 %v3481
        %3547 = vmatprep.subr.mxu0 0.0
        %3548 = vmatpush1.xpose.msra.mxu0 %v3483
        %3549 = vmatprep.subr.mxu0 0.0
        %3550 = vmatpush1.xpose.msra.mxu0 %v3485
        %3551 = vmatprep.subr.mxu0 0.0
        %3552 = vmatpush1.xpose.msra.mxu0 %v3487
        %3553 = vmatprep.subr.mxu0 0.0
        %3554 = vmatpush1.xpose.msra.mxu0 %v3489
        %3555 = vmatprep.subr.mxu0 0.0
        %3556 = vmatpush1.xpose.msra.mxu0 %v3491
        %3557 = vmatprep.subr.mxu0 0.0
        %3558 = vmatpush1.xpose.msra.mxu0 %v3493
        %3559 = vmatprep.subr.mxu0 0.0
        %3560 = vmatpush1.xpose.msra.mxu0 %v3495
        %3561 = vmatprep.subr.mxu0 0.0
        %3562 = vmatpush1.xpose.msra.mxu0 %v3497
        %3563 = vmatprep.subr.mxu0 0.0
        %3564 = vmatpush1.xpose.msra.mxu0 %v3499
        %3565 = vmatprep.subr.mxu0 0.0
        %3566 = vmatpush1.xpose.msra.mxu0 %v3501
        %3567 = vmatprep.subr.mxu0 0.0
        %3568 = vmatpush1.xpose.msra.mxu0 %v3503
        %3569 = vmatprep.subr.mxu0 0.0
        %3570 = vmatpush1.xpose.msra.mxu0 %v3505
        %3571 = vmatprep.subr.mxu0 0.0
        %3572 = vmatpush1.xpose.msra.mxu0 %v3507
        %3573 = vmatprep.subr.mxu0 0.0
        %3574 = vmatpush1.xpose.msra.mxu0 %v3509
        %3575 = vmatprep.subr.mxu0 0.0
        %3576 = vmatpush1.xpose.msra.mxu0 %v3511
        %3577 = vmatprep.subr.mxu0 0.0
        %3578 = vmatpush1.xpose.msra.mxu0 %v3513
        %3579 = vmatprep.subr.mxu0 0.0
        %3580 = vmatpush1.xpose.msra.mxu0 %v3515
        %3581 = vmatprep.subr.mxu0 0.0
        %3582 = vmatpush1.xpose.msra.mxu0 %v3517
        %3583 = vmatprep.subr.mxu0 0.0
        %3584 = vmatpush1.xpose.msra.mxu0 %v3519
        %3585 = vmatprep.subr.mxu0 0.0
        %3586 = vmatpush1.xpose.msra.mxu0 %v3521
        %3587 = vmatprep.subr.mxu0 0.0
        %3588 = vmatpush1.xpose.msra.mxu0 %v3523
        %3589 = vmatprep.subr.mxu0 0.0
        %3590 = vmatpush1.xpose.msra.mxu0 %v3525
        %3591 = vmatprep.subr.mxu0 0.0
        %3592 = vmatpush1.xpose.msra.mxu0 %v3527
        %3593 = vmatprep.subr.mxu0 0.0
        %3594 = vmatpush1.xpose.msra.mxu0 %v3529
        %3595 = vmatprep.subr.mxu0 0.0
        %3596 = vmatpush1.xpose.msra.mxu0 %v3531
        %3597 = vmatprep.subr.mxu0 0.0
        %3598 = vmatpush1.xpose.msra.mxu0 %v3533
        %3599 = vmatprep.subr.mxu0 0.0
        %3600 = vmatpush1.xpose.msra.mxu0 %v3535
        %3601 = vmatprep.subr.mxu0 0.0
        %3602 = vmatpush1.xpose.msra.mxu0 %v3537
        %3603 = vmatprep.mubr.f32.mxu0 0.0
        %3604 = vmatmul.mubr.f32.gmra.mrb[0].mxu0 %v3473
        %v3605 = vpop.f32.mrb[0].mxu0
        %v3606 = vadd.f32 0.0, %v3605
        %v3607 = vpop.f32.mrb[0].mxu0
        %v3608 = vadd.f32 0.0, %v3607
        %3609 = vdwg.mxu0
        %v3610 = vmul.f32 %v3606, 0.17677669
        %v3611 = vmul.f32 %v3608, 0.17677669
        %v3612 = vadd.f32 %v3610, %v2178
        %v3613 = vadd.f32 %v3611, %v2179
        %v3614 = vmax.f32 %v3612, %v3613
        %3615 = vmax.xlane.f32.xlu0 %v3614
        %v3616 = vpop.xlane.xlu0 %3615
        %v3617 = vsub.f32 %v3612, %v3616
        %v3618 = vsub.f32 %v3613, %v3616
        %v3619 = vmul.f32 %v3617, 1.442695
        %v3620 = vpow.pop %v3619
        %v3621 = vmul.f32 %v3618, 1.442695
        %v3622 = vpow.pop %v3621
        %v3623 = vadd.f32 %v3620, %v3622
        %3624 = vadd.xlane.f32.xlu0 %v3623
        %v3625 = vpop.xlane.xlu0 %3624
        %v3626 = vrcp.pop %v3625
        %v3627 = vmul.f32 %v3620, %v3626
        %v3628 = vmul.f32 %v3622, %v3626
        %3629 = vrot.lane.b32.xlu0 %v2386, 64
        %v3630 = vpop.permute.xlu0 %3629
        %3631 = vrot.lane.b32.xlu0 %v2392, 64
        %v3632 = vpop.permute.xlu0 %3631
        %3633 = vrot.lane.b32.xlu0 %v2398, 64
        %v3634 = vpop.permute.xlu0 %3633
        %3635 = vrot.lane.b32.xlu0 %v2404, 64
        %v3636 = vpop.permute.xlu0 %3635
        %3637 = vrot.lane.b32.xlu0 %v2410, 64
        %v3638 = vpop.permute.xlu0 %3637
        %3639 = vrot.lane.b32.xlu0 %v2416, 64
        %v3640 = vpop.permute.xlu0 %3639
        %3641 = vrot.lane.b32.xlu0 %v2422, 64
        %v3642 = vpop.permute.xlu0 %3641
        %3643 = vrot.lane.b32.xlu0 %v2428, 64
        %v3644 = vpop.permute.xlu0 %3643
        %3645 = vrot.lane.b32.xlu0 %v2434, 64
        %v3646 = vpop.permute.xlu0 %3645
        %3647 = vrot.lane.b32.xlu0 %v2440, 64
        %v3648 = vpop.permute.xlu0 %3647
        %3649 = vrot.lane.b32.xlu0 %v2446, 64
        %v3650 = vpop.permute.xlu0 %3649
        %3651 = vrot.lane.b32.xlu0 %v2452, 64
        %v3652 = vpop.permute.xlu0 %3651
        %3653 = vrot.lane.b32.xlu0 %v2458, 64
        %v3654 = vpop.permute.xlu0 %3653
        %3655 = vrot.lane.b32.xlu0 %v2464, 64
        %v3656 = vpop.permute.xlu0 %3655
        %3657 = vrot.lane.b32.xlu0 %v2470, 64
        %v3658 = vpop.permute.xlu0 %3657
        %3659 = vrot.lane.b32.xlu0 %v2476, 64
        %v3660 = vpop.permute.xlu0 %3659
        %3661 = vrot.lane.b32.xlu0 %v2482, 64
        %v3662 = vpop.permute.xlu0 %3661
        %3663 = vrot.lane.b32.xlu0 %v2488, 64
        %v3664 = vpop.permute.xlu0 %3663
        %3665 = vrot.lane.b32.xlu0 %v2494, 64
        %v3666 = vpop.permute.xlu0 %3665
        %3667 = vrot.lane.b32.xlu0 %v2500, 64
        %v3668 = vpop.permute.xlu0 %3667
        %3669 = vrot.lane.b32.xlu0 %v2506, 64
        %v3670 = vpop.permute.xlu0 %3669
        %3671 = vrot.lane.b32.xlu0 %v2512, 64
        %v3672 = vpop.permute.xlu0 %3671
        %3673 = vrot.lane.b32.xlu0 %v2518, 64
        %v3674 = vpop.permute.xlu0 %3673
        %3675 = vrot.lane.b32.xlu0 %v2524, 64
        %v3676 = vpop.permute.xlu0 %3675
        %3677 = vrot.lane.b32.xlu0 %v2530, 64
        %v3678 = vpop.permute.xlu0 %3677
        %3679 = vrot.lane.b32.xlu0 %v2536, 64
        %v3680 = vpop.permute.xlu0 %3679
        %3681 = vrot.lane.b32.xlu0 %v2542, 64
        %v3682 = vpop.permute.xlu0 %3681
        %3683 = vrot.lane.b32.xlu0 %v2548, 64
        %v3684 = vpop.permute.xlu0 %3683
        %3685 = vrot.lane.b32.xlu0 %v2554, 64
        %v3686 = vpop.permute.xlu0 %3685
        %3687 = vrot.lane.b32.xlu0 %v2560, 64
        %v3688 = vpop.permute.xlu0 %3687
        %3689 = vrot.lane.b32.xlu0 %v2566, 64
        %v3690 = vpop.permute.xlu0 %3689
        %3691 = vrot.lane.b32.xlu0 %v2572, 64
        %v3692 = vpop.permute.xlu0 %3691
        %3725 = vmatprep.subr.mxu0 0.0
        %3726 = vmatpush1.msra.mxu0 %v3630
        %3727 = vmatprep.subr.mxu0 0.0
        %3728 = vmatpush1.msra.mxu0 %v3632
        %3729 = vmatprep.subr.mxu0 0.0
        %3730 = vmatpush1.msra.mxu0 %v3634
        %3731 = vmatprep.subr.mxu0 0.0
        %3732 = vmatpush1.msra.mxu0 %v3636
        %3733 = vmatprep.subr.mxu0 0.0
        %3734 = vmatpush1.msra.mxu0 %v3638
        %3735 = vmatprep.subr.mxu0 0.0
        %3736 = vmatpush1.msra.mxu0 %v3640
        %3737 = vmatprep.subr.mxu0 0.0
        %3738 = vmatpush1.msra.mxu0 %v3642
        %3739 = vmatprep.subr.mxu0 0.0
        %3740 = vmatpush1.msra.mxu0 %v3644
        %3741 = vmatprep.subr.mxu0 0.0
        %3742 = vmatpush1.msra.mxu0 %v3646
        %3743 = vmatprep.subr.mxu0 0.0
        %3744 = vmatpush1.msra.mxu0 %v3648
        %3745 = vmatprep.subr.mxu0 0.0
        %3746 = vmatpush1.msra.mxu0 %v3650
        %3747 = vmatprep.subr.mxu0 0.0
        %3748 = vmatpush1.msra.mxu0 %v3652
        %3749 = vmatprep.subr.mxu0 0.0
        %3750 = vmatpush1.msra.mxu0 %v3654
        %3751 = vmatprep.subr.mxu0 0.0
        %3752 = vmatpush1.msra.mxu0 %v3656
        %3753 = vmatprep.subr.mxu0 0.0
        %3754 = vmatpush1.msra.mxu0 %v3658
        %3755 = vmatprep.subr.mxu0 0.0
        %3756 = vmatpush1.msra.mxu0 %v3660
        %3757 = vmatprep.subr.mxu0 0.0
        %3758 = vmatpush1.msra.mxu0 %v3662
        %3759 = vmatprep.subr.mxu0 0.0
        %3760 = vmatpush1.msra.mxu0 %v3664
        %3761 = vmatprep.subr.mxu0 0.0
        %3762 = vmatpush1.msra.mxu0 %v3666
        %3763 = vmatprep.subr.mxu0 0.0
        %3764 = vmatpush1.msra.mxu0 %v3668
        %3765 = vmatprep.subr.mxu0 0.0
        %3766 = vmatpush1.msra.mxu0 %v3670
        %3767 = vmatprep.subr.mxu0 0.0
        %3768 = vmatpush1.msra.mxu0 %v3672
        %3769 = vmatprep.subr.mxu0 0.0
        %3770 = vmatpush1.msra.mxu0 %v3674
        %3771 = vmatprep.subr.mxu0 0.0
        %3772 = vmatpush1.msra.mxu0 %v3676
        %3773 = vmatprep.subr.mxu0 0.0
        %3774 = vmatpush1.msra.mxu0 %v3678
        %3775 = vmatprep.subr.mxu0 0.0
        %3776 = vmatpush1.msra.mxu0 %v3680
        %3777 = vmatprep.subr.mxu0 0.0
        %3778 = vmatpush1.msra.mxu0 %v3682
        %3779 = vmatprep.subr.mxu0 0.0
        %3780 = vmatpush1.msra.mxu0 %v3684
        %3781 = vmatprep.subr.mxu0 0.0
        %3782 = vmatpush1.msra.mxu0 %v3686
        %3783 = vmatprep.subr.mxu0 0.0
        %3784 = vmatpush1.msra.mxu0 %v3688
        %3785 = vmatprep.subr.mxu0 0.0
        %3786 = vmatpush1.msra.mxu0 %v3690
        %3787 = vmatprep.subr.mxu0 0.0
        %3788 = vmatpush1.msra.mxu0 %v3692
        %3789 = vmatprep.mubr.f32.mxu0 %v3628
        %3790 = vmatmul.mubr.f32.gmra.mrb[0].mxu0 %v3627
        %v3791 = vpop.f32.mrb[0].mxu0
        %v3792 = vadd.f32 0.0, %v3791
        %v3793 = vpop.f32.mrb[0].mxu0
        %3794 = vdwg.mxu0
        %v3795 = vld [vmem:[%s14 + $0x40] sm:$0xff]
        %v3796 = vld [vmem:[%s14 + $0x48] sm:$0xff]
        %v3797 = vld [vmem:[%s14 + $0x50] sm:$0xff]
        %v3798 = vld [vmem:[%s14 + $0x58] sm:$0xff]
        %v3800 = vsel %vm1130, %v3792, 0
        %3802 = vmatprep.subr.mxu0 0.0
        %3803 = vmatpush1.msra.mxu0 %v3795
        %3804 = vmatprep.subr.mxu0 0.0
        %3805 = vmatpush1.msra.mxu0 %v3796
        %3806 = vmatprep.subr.mxu0 0.0
        %3807 = vmatpush1.msra.mxu0 %v3797
        %3808 = vmatprep.subr.mxu0 0.0
        %3809 = vmatpush1.msra.mxu0 %v3798
        %3810 = vmatprep.subr.mxu0 0.0
        %3811 = vmatpush1.msra.mxu0 0.0
        %3812 = vmatprep.subr.mxu0 0.0
        %3813 = vmatpush1.msra.mxu0 0.0
        %3814 = vmatprep.subr.mxu0 0.0
        %3815 = vmatpush1.msra.mxu0 0.0
        %3816 = vmatprep.subr.mxu0 0.0
        %3817 = vmatpush1.msra.mxu0 0.0
        %3818 = vmatprep.subr.mxu0 0.0
        %3819 = vmatpush1.msra.mxu0 0.0
        %3820 = vmatprep.subr.mxu0 0.0
        %3821 = vmatpush1.msra.mxu0 0.0
        %3822 = vmatprep.subr.mxu0 0.0
        %3823 = vmatpush1.msra.mxu0 0.0
        %3824 = vmatprep.subr.mxu0 0.0
        %3825 = vmatpush1.msra.mxu0 0.0
        %3826 = vmatprep.subr.mxu0 0.0
        %3827 = vmatpush1.msra.mxu0 0.0
        %3828 = vmatprep.subr.mxu0 0.0
        %3829 = vmatpush1.msra.mxu0 0.0
        %3830 = vmatprep.subr.mxu0 0.0
        %3831 = vmatpush1.msra.mxu0 0.0
        %3832 = vmatprep.subr.mxu0 0.0
        %3833 = vmatpush1.msra.mxu0 0.0
        %3834 = vmatprep.subr.mxu0 0.0
        %3835 = vmatpush1.msra.mxu0 0.0
        %3836 = vmatprep.subr.mxu0 0.0
        %3837 = vmatpush1.msra.mxu0 0.0
        %3838 = vmatprep.subr.mxu0 0.0
        %3839 = vmatpush1.msra.mxu0 0.0
        %3840 = vmatprep.subr.mxu0 0.0
        %3841 = vmatpush1.msra.mxu0 0.0
        %3842 = vmatprep.subr.mxu0 0.0
        %3843 = vmatpush1.msra.mxu0 0.0
        %3844 = vmatprep.subr.mxu0 0.0
        %3845 = vmatpush1.msra.mxu0 0.0
        %3846 = vmatprep.subr.mxu0 0.0
        %3847 = vmatpush1.msra.mxu0 0.0
        %3848 = vmatprep.subr.mxu0 0.0
        %3849 = vmatpush1.msra.mxu0 0.0
        %3850 = vmatprep.subr.mxu0 0.0
        %3851 = vmatpush1.msra.mxu0 0.0
        %3852 = vmatprep.subr.mxu0 0.0
        %3853 = vmatpush1.msra.mxu0 0.0
        %3854 = vmatprep.subr.mxu0 0.0
        %3855 = vmatpush1.msra.mxu0 0.0
        %3856 = vmatprep.subr.mxu0 0.0
        %3857 = vmatpush1.msra.mxu0 0.0
        %3858 = vmatprep.subr.mxu0 0.0
        %3859 = vmatpush1.msra.mxu0 0.0
        %3860 = vmatprep.subr.mxu0 0.0
        %3861 = vmatpush1.msra.mxu0 0.0
        %3862 = vmatprep.subr.mxu0 0.0
        %3863 = vmatpush1.msra.mxu0 0.0
        %3864 = vmatprep.subr.mxu0 0.0
        %3865 = vmatpush1.msra.mxu0 0.0
        %3866 = vmatprep.mubr.f32.mxu0 0.0
        %3867 = vmatmul.mubr.f32.gmra.mrb[0].mxu0 %v3800
        %v3868 = vpop.f32.mrb[0].mxu0
        %v3869 = vadd.f32 0.0, %v3868
        %v3870 = vpop.f32.mrb[0].mxu0
        %3871 = vdwg.mxu0
        %v3872 = vadd.f32 %v3404, %v3869
        %3873 = vrot.lane.b32.xlu0 %v2270, 32
        %v3874 = vpop.permute.xlu0 %3873
        %3875 = vrot.lane.b32.xlu0 %v2384, 32
        %v3876 = vpop.permute.xlu0 %3875
        %3877 = vrot.lane.b32.xlu0 %v2390, 32
        %v3878 = vpop.permute.xlu0 %3877
        %3879 = vrot.lane.b32.xlu0 %v2396, 32
        %v3880 = vpop.permute.xlu0 %3879
        %3881 = vrot.lane.b32.xlu0 %v2402, 32
        %v3882 = vpop.permute.xlu0 %3881
        %3883 = vrot.lane.b32.xlu0 %v2408, 32
        %v3884 = vpop.permute.xlu0 %3883
        %3885 = vrot.lane.b32.xlu0 %v2414, 32
        %v3886 = vpop.permute.xlu0 %3885
        %3887 = vrot.lane.b32.xlu0 %v2420, 32
        %v3888 = vpop.permute.xlu0 %3887
        %3889 = vrot.lane.b32.xlu0 %v2426, 32
        %v3890 = vpop.permute.xlu0 %3889
        %3891 = vrot.lane.b32.xlu0 %v2432, 32
        %v3892 = vpop.permute.xlu0 %3891
        %3893 = vrot.lane.b32.xlu0 %v2438, 32
        %v3894 = vpop.permute.xlu0 %3893
        %3895 = vrot.lane.b32.xlu0 %v2444, 32
        %v3896 = vpop.permute.xlu0 %3895
        %3897 = vrot.lane.b32.xlu0 %v2450, 32
        %v3898 = vpop.permute.xlu0 %3897
        %3899 = vrot.lane.b32.xlu0 %v2456, 32
        %v3900 = vpop.permute.xlu0 %3899
        %3901 = vrot.lane.b32.xlu0 %v2462, 32
        %v3902 = vpop.permute.xlu0 %3901
        %3903 = vrot.lane.b32.xlu0 %v2468, 32
        %v3904 = vpop.permute.xlu0 %3903
        %3905 = vrot.lane.b32.xlu0 %v2474, 32
        %v3906 = vpop.permute.xlu0 %3905
        %3907 = vrot.lane.b32.xlu0 %v2480, 32
        %v3908 = vpop.permute.xlu0 %3907
        %3909 = vrot.lane.b32.xlu0 %v2486, 32
        %v3910 = vpop.permute.xlu0 %3909
        %3911 = vrot.lane.b32.xlu0 %v2492, 32
        %v3912 = vpop.permute.xlu0 %3911
        %3913 = vrot.lane.b32.xlu0 %v2498, 32
        %v3914 = vpop.permute.xlu0 %3913
        %3915 = vrot.lane.b32.xlu0 %v2504, 32
        %v3916 = vpop.permute.xlu0 %3915
        %3917 = vrot.lane.b32.xlu0 %v2510, 32
        %v3918 = vpop.permute.xlu0 %3917
        %3919 = vrot.lane.b32.xlu0 %v2516, 32
        %v3920 = vpop.permute.xlu0 %3919
        %3921 = vrot.lane.b32.xlu0 %v2522, 32
        %v3922 = vpop.permute.xlu0 %3921
        %3923 = vrot.lane.b32.xlu0 %v2528, 32
        %v3924 = vpop.permute.xlu0 %3923
        %3925 = vrot.lane.b32.xlu0 %v2534, 32
        %v3926 = vpop.permute.xlu0 %3925
        %3927 = vrot.lane.b32.xlu0 %v2540, 32
        %v3928 = vpop.permute.xlu0 %3927
        %3929 = vrot.lane.b32.xlu0 %v2546, 32
        %v3930 = vpop.permute.xlu0 %3929
        %3931 = vrot.lane.b32.xlu0 %v2552, 32
        %v3932 = vpop.permute.xlu0 %3931
        %3933 = vrot.lane.b32.xlu0 %v2558, 32
        %v3934 = vpop.permute.xlu0 %3933
        %3935 = vrot.lane.b32.xlu0 %v2564, 32
        %v3936 = vpop.permute.xlu0 %3935
        %3937 = vrot.lane.b32.xlu0 %v2570, 32
        %v3938 = vpop.permute.xlu0 %3937
        %v3939 = vsel %vm1130, %v3874, 0
        %v3941 = vsel %vm1130, %v3876, 0
        %v3943 = vsel %vm1130, %v3878, 0
        %v3945 = vsel %vm1130, %v3880, 0
        %v3947 = vsel %vm1130, %v3882, 0
        %v3949 = vsel %vm1130, %v3884, 0
        %v3951 = vsel %vm1130, %v3886, 0
        %v3953 = vsel %vm1130, %v3888, 0
        %v3955 = vsel %vm1130, %v3890, 0
        %v3957 = vsel %vm1130, %v3892, 0
        %v3959 = vsel %vm1130, %v3894, 0
        %v3961 = vsel %vm1130, %v3896, 0
        %v3963 = vsel %vm1130, %v3898, 0
        %v3965 = vsel %vm1130, %v3900, 0
        %v3967 = vsel %vm1130, %v3902, 0
        %v3969 = vsel %vm1130, %v3904, 0
        %v3971 = vsel %vm1130, %v3906, 0
        %v3973 = vsel %vm1130, %v3908, 0
        %v3975 = vsel %vm1130, %v3910, 0
        %v3977 = vsel %vm1130, %v3912, 0
        %v3979 = vsel %vm1130, %v3914, 0
        %v3981 = vsel %vm1130, %v3916, 0
        %v3983 = vsel %vm1130, %v3918, 0
        %v3985 = vsel %vm1130, %v3920, 0
        %v3987 = vsel %vm1130, %v3922, 0
        %v3989 = vsel %vm1130, %v3924, 0
        %v3991 = vsel %vm1130, %v3926, 0
        %v3993 = vsel %vm1130, %v3928, 0
        %v3995 = vsel %vm1130, %v3930, 0
        %v3997 = vsel %vm1130, %v3932, 0
        %v3999 = vsel %vm1130, %v3934, 0
        %v4001 = vsel %vm1130, %v3936, 0
        %v4003 = vsel %vm1130, %v3938, 0
        %4005 = vmatprep.subr.mxu0 0.0
        %4006 = vmatpush1.xpose.msra.mxu0 %v3941
        %4007 = vmatprep.subr.mxu0 0.0
        %4008 = vmatpush1.xpose.msra.mxu0 %v3943
        %4009 = vmatprep.subr.mxu0 0.0
        %4010 = vmatpush1.xpose.msra.mxu0 %v3945
        %4011 = vmatprep.subr.mxu0 0.0
        %4012 = vmatpush1.xpose.msra.mxu0 %v3947
        %4013 = vmatprep.subr.mxu0 0.0
        %4014 = vmatpush1.xpose.msra.mxu0 %v3949
        %4015 = vmatprep.subr.mxu0 0.0
        %4016 = vmatpush1.xpose.msra.mxu0 %v3951
        %4017 = vmatprep.subr.mxu0 0.0
        %4018 = vmatpush1.xpose.msra.mxu0 %v3953
        %4019 = vmatprep.subr.mxu0 0.0
        %4020 = vmatpush1.xpose.msra.mxu0 %v3955
        %4021 = vmatprep.subr.mxu0 0.0
        %4022 = vmatpush1.xpose.msra.mxu0 %v3957
        %4023 = vmatprep.subr.mxu0 0.0
        %4024 = vmatpush1.xpose.msra.mxu0 %v3959
        %4025 = vmatprep.subr.mxu0 0.0
        %4026 = vmatpush1.xpose.msra.mxu0 %v3961
        %4027 = vmatprep.subr.mxu0 0.0
        %4028 = vmatpush1.xpose.msra.mxu0 %v3963
        %4029 = vmatprep.subr.mxu0 0.0
        %4030 = vmatpush1.xpose.msra.mxu0 %v3965
        %4031 = vmatprep.subr.mxu0 0.0
        %4032 = vmatpush1.xpose.msra.mxu0 %v3967
        %4033 = vmatprep.subr.mxu0 0.0
        %4034 = vmatpush1.xpose.msra.mxu0 %v3969
        %4035 = vmatprep.subr.mxu0 0.0
        %4036 = vmatpush1.xpose.msra.mxu0 %v3971
        %4037 = vmatprep.subr.mxu0 0.0
        %4038 = vmatpush1.xpose.msra.mxu0 %v3973
        %4039 = vmatprep.subr.mxu0 0.0
        %4040 = vmatpush1.xpose.msra.mxu0 %v3975
        %4041 = vmatprep.subr.mxu0 0.0
        %4042 = vmatpush1.xpose.msra.mxu0 %v3977
        %4043 = vmatprep.subr.mxu0 0.0
        %4044 = vmatpush1.xpose.msra.mxu0 %v3979
        %4045 = vmatprep.subr.mxu0 0.0
        %4046 = vmatpush1.xpose.msra.mxu0 %v3981
        %4047 = vmatprep.subr.mxu0 0.0
        %4048 = vmatpush1.xpose.msra.mxu0 %v3983
        %4049 = vmatprep.subr.mxu0 0.0
        %4050 = vmatpush1.xpose.msra.mxu0 %v3985
        %4051 = vmatprep.subr.mxu0 0.0
        %4052 = vmatpush1.xpose.msra.mxu0 %v3987
        %4053 = vmatprep.subr.mxu0 0.0
        %4054 = vmatpush1.xpose.msra.mxu0 %v3989
        %4055 = vmatprep.subr.mxu0 0.0
        %4056 = vmatpush1.xpose.msra.mxu0 %v3991
        %4057 = vmatprep.subr.mxu0 0.0
        %4058 = vmatpush1.xpose.msra.mxu0 %v3993
        %4059 = vmatprep.subr.mxu0 0.0
        %4060 = vmatpush1.xpose.msra.mxu0 %v3995
        %4061 = vmatprep.subr.mxu0 0.0
        %4062 = vmatpush1.xpose.msra.mxu0 %v3997
        %4063 = vmatprep.subr.mxu0 0.0
        %4064 = vmatpush1.xpose.msra.mxu0 %v3999
        %4065 = vmatprep.subr.mxu0 0.0
        %4066 = vmatpush1.xpose.msra.mxu0 %v4001
        %4067 = vmatprep.subr.mxu0 0.0
        %4068 = vmatpush1.xpose.msra.mxu0 %v4003
        %4069 = vmatprep.mubr.f32.mxu0 0.0
        %4070 = vmatmul.mubr.f32.gmra.mrb[0].mxu0 %v3939
        %v4071 = vpop.f32.mrb[0].mxu0
        %v4072 = vadd.f32 0.0, %v4071
        %v4073 = vpop.f32.mrb[0].mxu0
        %v4074 = vadd.f32 0.0, %v4073
        %4075 = vdwg.mxu0
        %v4076 = vmul.f32 %v4072, 0.17677669
        %v4077 = vmul.f32 %v4074, 0.17677669
        %v4078 = vadd.f32 %v4076, %v2178
        %v4079 = vadd.f32 %v4077, %v2179
        %v4080 = vmax.f32 %v4078, %v4079
        %4081 = vmax.xlane.f32.xlu0 %v4080
        %v4082 = vpop.xlane.xlu0 %4081
        %v4083 = vsub.f32 %v4078, %v4082
        %v4084 = vsub.f32 %v4079, %v4082
        %v4085 = vmul.f32 %v4083, 1.442695
        %v4086 = vpow.pop %v4085
        %v4087 = vmul.f32 %v4084, 1.442695
        %v4088 = vpow.pop %v4087
        %v4089 = vadd.f32 %v4086, %v4088
        %4090 = vadd.xlane.f32.xlu0 %v4089
        %v4091 = vpop.xlane.xlu0 %4090
        %v4092 = vrcp.pop %v4091
        %v4093 = vmul.f32 %v4086, %v4092
        %v4094 = vmul.f32 %v4088, %v4092
        %4095 = vrot.lane.b32.xlu0 %v2386, 32
        %v4096 = vpop.permute.xlu0 %4095
        %4097 = vrot.lane.b32.xlu0 %v2392, 32
        %v4098 = vpop.permute.xlu0 %4097
        %4099 = vrot.lane.b32.xlu0 %v2398, 32
        %v4100 = vpop.permute.xlu0 %4099
        %4101 = vrot.lane.b32.xlu0 %v2404, 32
        %v4102 = vpop.permute.xlu0 %4101
        %4103 = vrot.lane.b32.xlu0 %v2410, 32
        %v4104 = vpop.permute.xlu0 %4103
        %4105 = vrot.lane.b32.xlu0 %v2416, 32
        %v4106 = vpop.permute.xlu0 %4105
        %4107 = vrot.lane.b32.xlu0 %v2422, 32
        %v4108 = vpop.permute.xlu0 %4107
        %4109 = vrot.lane.b32.xlu0 %v2428, 32
        %v4110 = vpop.permute.xlu0 %4109
        %4111 = vrot.lane.b32.xlu0 %v2434, 32
        %v4112 = vpop.permute.xlu0 %4111
        %4113 = vrot.lane.b32.xlu0 %v2440, 32
        %v4114 = vpop.permute.xlu0 %4113
        %4115 = vrot.lane.b32.xlu0 %v2446, 32
        %v4116 = vpop.permute.xlu0 %4115
        %4117 = vrot.lane.b32.xlu0 %v2452, 32
        %v4118 = vpop.permute.xlu0 %4117
        %4119 = vrot.lane.b32.xlu0 %v2458, 32
        %v4120 = vpop.permute.xlu0 %4119
        %4121 = vrot.lane.b32.xlu0 %v2464, 32
        %v4122 = vpop.permute.xlu0 %4121
        %4123 = vrot.lane.b32.xlu0 %v2470, 32
        %v4124 = vpop.permute.xlu0 %4123
        %4125 = vrot.lane.b32.xlu0 %v2476, 32
        %v4126 = vpop.permute.xlu0 %4125
        %4127 = vrot.lane.b32.xlu0 %v2482, 32
        %v4128 = vpop.permute.xlu0 %4127
        %4129 = vrot.lane.b32.xlu0 %v2488, 32
        %v4130 = vpop.permute.xlu0 %4129
        %4131 = vrot.lane.b32.xlu0 %v2494, 32
        %v4132 = vpop.permute.xlu0 %4131
        %4133 = vrot.lane.b32.xlu0 %v2500, 32
        %v4134 = vpop.permute.xlu0 %4133
        %4135 = vrot.lane.b32.xlu0 %v2506, 32
        %v4136 = vpop.permute.xlu0 %4135
        %4137 = vrot.lane.b32.xlu0 %v2512, 32
        %v4138 = vpop.permute.xlu0 %4137
        %4139 = vrot.lane.b32.xlu0 %v2518, 32
        %v4140 = vpop.permute.xlu0 %4139
        %4141 = vrot.lane.b32.xlu0 %v2524, 32
        %v4142 = vpop.permute.xlu0 %4141
        %4143 = vrot.lane.b32.xlu0 %v2530, 32
        %v4144 = vpop.permute.xlu0 %4143
        %4145 = vrot.lane.b32.xlu0 %v2536, 32
        %v4146 = vpop.permute.xlu0 %4145
        %4147 = vrot.lane.b32.xlu0 %v2542, 32
        %v4148 = vpop.permute.xlu0 %4147
        %4149 = vrot.lane.b32.xlu0 %v2548, 32
        %v4150 = vpop.permute.xlu0 %4149
        %4151 = vrot.lane.b32.xlu0 %v2554, 32
        %v4152 = vpop.permute.xlu0 %4151
        %4153 = vrot.lane.b32.xlu0 %v2560, 32
        %v4154 = vpop.permute.xlu0 %4153
        %4155 = vrot.lane.b32.xlu0 %v2566, 32
        %v4156 = vpop.permute.xlu0 %4155
        %4157 = vrot.lane.b32.xlu0 %v2572, 32
        %v4158 = vpop.permute.xlu0 %4157
        %4191 = vmatprep.subr.mxu0 0.0
        %4192 = vmatpush1.msra.mxu0 %v4096
        %4193 = vmatprep.subr.mxu0 0.0
        %4194 = vmatpush1.msra.mxu0 %v4098
        %4195 = vmatprep.subr.mxu0 0.0
        %4196 = vmatpush1.msra.mxu0 %v4100
        %4197 = vmatprep.subr.mxu0 0.0
        %4198 = vmatpush1.msra.mxu0 %v4102
        %4199 = vmatprep.subr.mxu0 0.0
        %4200 = vmatpush1.msra.mxu0 %v4104
        %4201 = vmatprep.subr.mxu0 0.0
        %4202 = vmatpush1.msra.mxu0 %v4106
        %4203 = vmatprep.subr.mxu0 0.0
        %4204 = vmatpush1.msra.mxu0 %v4108
        %4205 = vmatprep.subr.mxu0 0.0
        %4206 = vmatpush1.msra.mxu0 %v4110
        %4207 = vmatprep.subr.mxu0 0.0
        %4208 = vmatpush1.msra.mxu0 %v4112
        %4209 = vmatprep.subr.mxu0 0.0
        %4210 = vmatpush1.msra.mxu0 %v4114
        %4211 = vmatprep.subr.mxu0 0.0
        %4212 = vmatpush1.msra.mxu0 %v4116
        %4213 = vmatprep.subr.mxu0 0.0
        %4214 = vmatpush1.msra.mxu0 %v4118
        %4215 = vmatprep.subr.mxu0 0.0
        %4216 = vmatpush1.msra.mxu0 %v4120
        %4217 = vmatprep.subr.mxu0 0.0
        %4218 = vmatpush1.msra.mxu0 %v4122
        %4219 = vmatprep.subr.mxu0 0.0
        %4220 = vmatpush1.msra.mxu0 %v4124
        %4221 = vmatprep.subr.mxu0 0.0
        %4222 = vmatpush1.msra.mxu0 %v4126
        %4223 = vmatprep.subr.mxu0 0.0
        %4224 = vmatpush1.msra.mxu0 %v4128
        %4225 = vmatprep.subr.mxu0 0.0
        %4226 = vmatpush1.msra.mxu0 %v4130
        %4227 = vmatprep.subr.mxu0 0.0
        %4228 = vmatpush1.msra.mxu0 %v4132
        %4229 = vmatprep.subr.mxu0 0.0
        %4230 = vmatpush1.msra.mxu0 %v4134
        %4231 = vmatprep.subr.mxu0 0.0
        %4232 = vmatpush1.msra.mxu0 %v4136
        %4233 = vmatprep.subr.mxu0 0.0
        %4234 = vmatpush1.msra.mxu0 %v4138
        %4235 = vmatprep.subr.mxu0 0.0
        %4236 = vmatpush1.msra.mxu0 %v4140
        %4237 = vmatprep.subr.mxu0 0.0
        %4238 = vmatpush1.msra.mxu0 %v4142
        %4239 = vmatprep.subr.mxu0 0.0
        %4240 = vmatpush1.msra.mxu0 %v4144
        %4241 = vmatprep.subr.mxu0 0.0
        %4242 = vmatpush1.msra.mxu0 %v4146
        %4243 = vmatprep.subr.mxu0 0.0
        %4244 = vmatpush1.msra.mxu0 %v4148
        %4245 = vmatprep.subr.mxu0 0.0
        %4246 = vmatpush1.msra.mxu0 %v4150
        %4247 = vmatprep.subr.mxu0 0.0
        %4248 = vmatpush1.msra.mxu0 %v4152
        %4249 = vmatprep.subr.mxu0 0.0
        %4250 = vmatpush1.msra.mxu0 %v4154
        %4251 = vmatprep.subr.mxu0 0.0
        %4252 = vmatpush1.msra.mxu0 %v4156
        %4253 = vmatprep.subr.mxu0 0.0
        %4254 = vmatpush1.msra.mxu0 %v4158
        %4255 = vmatprep.mubr.f32.mxu0 %v4094
        %4256 = vmatmul.mubr.f32.gmra.mrb[0].mxu0 %v4093
        %v4257 = vpop.f32.mrb[0].mxu0
        %v4258 = vadd.f32 0.0, %v4257
        %v4259 = vpop.f32.mrb[0].mxu0
        %4260 = vdwg.mxu0
        %v4261 = vld [vmem:[%s14 + $0x60] sm:$0xff]
        %v4262 = vld [vmem:[%s14 + $0x68] sm:$0xff]
        %v4263 = vld [vmem:[%s14 + $0x70] sm:$0xff]
        %v4264 = vld [vmem:[%s14 + $0x78] sm:$0xff]
        %v4266 = vsel %vm1130, %v4258, 0
        %4268 = vmatprep.subr.mxu0 0.0
        %4269 = vmatpush1.msra.mxu0 %v4261
        %4270 = vmatprep.subr.mxu0 0.0
        %4271 = vmatpush1.msra.mxu0 %v4262
        %4272 = vmatprep.subr.mxu0 0.0
        %4273 = vmatpush1.msra.mxu0 %v4263
        %4274 = vmatprep.subr.mxu0 0.0
        %4275 = vmatpush1.msra.mxu0 %v4264
        %4276 = vmatprep.subr.mxu0 0.0
        %4277 = vmatpush1.msra.mxu0 0.0
        %4278 = vmatprep.subr.mxu0 0.0
        %4279 = vmatpush1.msra.mxu0 0.0
        %4280 = vmatprep.subr.mxu0 0.0
        %4281 = vmatpush1.msra.mxu0 0.0
        %4282 = vmatprep.subr.mxu0 0.0
        %4283 = vmatpush1.msra.mxu0 0.0
        %4284 = vmatprep.subr.mxu0 0.0
        %4285 = vmatpush1.msra.mxu0 0.0
        %4286 = vmatprep.subr.mxu0 0.0
        %4287 = vmatpush1.msra.mxu0 0.0
        %4288 = vmatprep.subr.mxu0 0.0
        %4289 = vmatpush1.msra.mxu0 0.0
        %4290 = vmatprep.subr.mxu0 0.0
        %4291 = vmatpush1.msra.mxu0 0.0
        %4292 = vmatprep.subr.mxu0 0.0
        %4293 = vmatpush1.msra.mxu0 0.0
        %4294 = vmatprep.subr.mxu0 0.0
        %4295 = vmatpush1.msra.mxu0 0.0
        %4296 = vmatprep.subr.mxu0 0.0
        %4297 = vmatpush1.msra.mxu0 0.0
        %4298 = vmatprep.subr.mxu0 0.0
        %4299 = vmatpush1.msra.mxu0 0.0
        %4300 = vmatprep.subr.mxu0 0.0
        %4301 = vmatpush1.msra.mxu0 0.0
        %4302 = vmatprep.subr.mxu0 0.0
        %4303 = vmatpush1.msra.mxu0 0.0
        %4304 = vmatprep.subr.mxu0 0.0
        %4305 = vmatpush1.msra.mxu0 0.0
        %4306 = vmatprep.subr.mxu0 0.0
        %4307 = vmatpush1.msra.mxu0 0.0
        %4308 = vmatprep.subr.mxu0 0.0
        %4309 = vmatpush1.msra.mxu0 0.0
        %4310 = vmatprep.subr.mxu0 0.0
        %4311 = vmatpush1.msra.mxu0 0.0
        %4312 = vmatprep.subr.mxu0 0.0
        %4313 = vmatpush1.msra.mxu0 0.0
        %4314 = vmatprep.subr.mxu0 0.0
        %4315 = vmatpush1.msra.mxu0 0.0
        %4316 = vmatprep.subr.mxu0 0.0
        %4317 = vmatpush1.msra.mxu0 0.0
        %4318 = vmatprep.subr.mxu0 0.0
        %4319 = vmatpush1.msra.mxu0 0.0
        %4320 = vmatprep.subr.mxu0 0.0
        %4321 = vmatpush1.msra.mxu0 0.0
        %4322 = vmatprep.subr.mxu0 0.0
        %4323 = vmatpush1.msra.mxu0 0.0
        %4324 = vmatprep.subr.mxu0 0.0
        %4325 = vmatpush1.msra.mxu0 0.0
        %4326 = vmatprep.subr.mxu0 0.0
        %4327 = vmatpush1.msra.mxu0 0.0
        %4328 = vmatprep.subr.mxu0 0.0
        %4329 = vmatpush1.msra.mxu0 0.0
        %4330 = vmatprep.subr.mxu0 0.0
        %4331 = vmatpush1.msra.mxu0 0.0
        %4332 = vmatprep.mubr.f32.mxu0 0.0
        %4333 = vmatmul.mubr.f32.gmra.mrb[0].mxu0 %v4266
        %v4334 = vpop.f32.mrb[0].mxu0
        %v4335 = vadd.f32 0.0, %v4334
        %v4336 = vpop.f32.mrb[0].mxu0
        %4337 = vdwg.mxu0
        %v4338 = vadd.f32 %v3872, %v4335
        %v4339 = vadd.f32 %v2142, %v4338
        %v4340 = vld [vmem:[%s15] sm:$0x1]
        %v4342 = vlaneseq
        %v4343 = vshrl.u32 %v4342, 7
        %v4344 = vsub.s32 0, %v4343
        %v4345 = vrot.slane %v4340, %v4344
        %v4347 = vadd.f32 %v4339, %v4345
        %v4348 = vld [vmem:[%s16] sm:$0x1]
        %v4349 = vld [vmem:[%s17] sm:$0x1]
        %4350 = vadd.xlane.f32.xlu0 %v4347
        %v4351 = vpop.xlane.xlu0 %4350
        %v4352 = vmul.f32 %v4351, %v2119
        %v4353 = vsub.f32 %v4347, %v4352
        %v4354 = vmul.f32 %v4353, %v4353
        %4355 = vadd.xlane.f32.xlu0 %v4354
        %v4356 = vpop.xlane.xlu0 %4355
        %v4357 = vmul.f32 %v4356, %v2119
        %v4358 = vadd.f32 %v4357, 1e-05
        %v4359 = vrsqrt.pop %v4358
        %v4360 = vmul.f32 %v4353, %v4359
        %v4362 = vlaneseq
        %v4363 = vshrl.u32 %v4362, 7
        %v4364 = vsub.s32 0, %v4363
        %v4365 = vrot.slane %v4348, %v4364
        %v4367 = vmul.f32 %v4360, %v4365
        %v4369 = vlaneseq
        %v4370 = vshrl.u32 %v4369, 7
        %v4371 = vsub.s32 0, %v4370
        %v4372 = vrot.slane %v4349, %v4371
        %v4374 = vadd.f32 %v4367, %v4372
        %v4375 = vld [vmem:[%s18] sm:$0xff]
        %v4376 = vld [vmem:[%s18 + $0x8] sm:$0xff]
        %v4377 = vld [vmem:[%s18 + $0x10] sm:$0xff]
        %v4378 = vld [vmem:[%s18 + $0x18] sm:$0xff]
        %v4379 = vld [vmem:[%s18 + $0x20] sm:$0xff]
        %v4380 = vld [vmem:[%s18 + $0x28] sm:$0xff]
        %v4381 = vld [vmem:[%s18 + $0x30] sm:$0xff]
        %v4382 = vld [vmem:[%s18 + $0x38] sm:$0xff]
        %v4383 = vld [vmem:[%s18 + $0x40] sm:$0xff]
        %v4384 = vld [vmem:[%s18 + $0x48] sm:$0xff]
        %v4385 = vld [vmem:[%s18 + $0x50] sm:$0xff]
        %v4386 = vld [vmem:[%s18 + $0x58] sm:$0xff]
        %v4387 = vld [vmem:[%s18 + $0x60] sm:$0xff]
        %v4388 = vld [vmem:[%s18 + $0x68] sm:$0xff]
        %v4389 = vld [vmem:[%s18 + $0x70] sm:$0xff]
        %v4390 = vld [vmem:[%s18 + $0x78] sm:$0xff]
        %v4391 = vld [vmem:[%s18 + $0x80] sm:$0xff]
        %v4392 = vld [vmem:[%s18 + $0x88] sm:$0xff]
        %v4393 = vld [vmem:[%s18 + $0x90] sm:$0xff]
        %v4394 = vld [vmem:[%s18 + $0x98] sm:$0xff]
        %v4395 = vld [vmem:[%s18 + $0xa0] sm:$0xff]
        %v4396 = vld [vmem:[%s18 + $0xa8] sm:$0xff]
        %v4397 = vld [vmem:[%s18 + $0xb0] sm:$0xff]
        %v4398 = vld [vmem:[%s18 + $0xb8] sm:$0xff]
        %v4399 = vld [vmem:[%s18 + $0xc0] sm:$0xff]
        %v4400 = vld [vmem:[%s18 + $0xc8] sm:$0xff]
        %v4401 = vld [vmem:[%s18 + $0xd0] sm:$0xff]
        %v4402 = vld [vmem:[%s18 + $0xd8] sm:$0xff]
        %v4403 = vld [vmem:[%s18 + $0xe0] sm:$0xff]
        %v4404 = vld [vmem:[%s18 + $0xe8] sm:$0xff]
        %v4405 = vld [vmem:[%s18 + $0xf0] sm:$0xff]
        %v4406 = vld [vmem:[%s18 + $0xf8] sm:$0xff]
        %v4407 = vld [vmem:[%s18 + $0x100] sm:$0xff]
        %v4408 = vld [vmem:[%s18 + $0x108] sm:$0xff]
        %v4409 = vld [vmem:[%s18 + $0x110] sm:$0xff]
        %v4410 = vld [vmem:[%s18 + $0x118] sm:$0xff]
        %v4411 = vld [vmem:[%s18 + $0x120] sm:$0xff]
        %v4412 = vld [vmem:[%s18 + $0x128] sm:$0xff]
        %v4413 = vld [vmem:[%s18 + $0x130] sm:$0xff]
        %v4414 = vld [vmem:[%s18 + $0x138] sm:$0xff]
        %v4415 = vld [vmem:[%s18 + $0x140] sm:$0xff]
        %v4416 = vld [vmem:[%s18 + $0x148] sm:$0xff]
        %v4417 = vld [vmem:[%s18 + $0x150] sm:$0xff]
        %v4418 = vld [vmem:[%s18 + $0x158] sm:$0xff]
        %v4419 = vld [vmem:[%s18 + $0x160] sm:$0xff]
        %v4420 = vld [vmem:[%s18 + $0x168] sm:$0xff]
        %v4421 = vld [vmem:[%s18 + $0x170] sm:$0xff]
        %v4422 = vld [vmem:[%s18 + $0x178] sm:$0xff]
        %v4423 = vld [vmem:[%s18 + $0x180] sm:$0xff]
        %v4424 = vld [vmem:[%s18 + $0x188] sm:$0xff]
        %v4425 = vld [vmem:[%s18 + $0x190] sm:$0xff]
        %v4426 = vld [vmem:[%s18 + $0x198] sm:$0xff]
        %v4427 = vld [vmem:[%s18 + $0x1a0] sm:$0xff]
        %v4428 = vld [vmem:[%s18 + $0x1a8] sm:$0xff]
        %v4429 = vld [vmem:[%s18 + $0x1b0] sm:$0xff]
        %v4430 = vld [vmem:[%s18 + $0x1b8] sm:$0xff]
        %v4431 = vld [vmem:[%s18 + $0x1c0] sm:$0xff]
        %v4432 = vld [vmem:[%s18 + $0x1c8] sm:$0xff]
        %v4433 = vld [vmem:[%s18 + $0x1d0] sm:$0xff]
        %v4434 = vld [vmem:[%s18 + $0x1d8] sm:$0xff]
        %v4435 = vld [vmem:[%s18 + $0x1e0] sm:$0xff]
        %v4436 = vld [vmem:[%s18 + $0x1e8] sm:$0xff]
        %v4437 = vld [vmem:[%s18 + $0x1f0] sm:$0xff]
        %v4438 = vld [vmem:[%s18 + $0x1f8] sm:$0xff]
        %v4439 = vld [vmem:[%s19] sm:$0xf]
        %v4441 = vlaneseq
        %v4442 = vshrl.u32 %v4441, 7
        %v4443 = vsub.s32 0, %v4442
        %v4444 = vrot.slane %v4439, %v4443
        %v4445 = vlaneseq
        %v4446 = vshrl.u32 %v4445, 7
        %v4447 = vsub.s32 1, %v4446
        %v4448 = vrot.slane %v4439, %v4447
        %v4449 = vlaneseq
        %v4450 = vshrl.u32 %v4449, 7
        %v4451 = vsub.s32 2, %v4450
        %v4452 = vrot.slane %v4439, %v4451
        %v4453 = vlaneseq
        %v4454 = vshrl.u32 %v4453, 7
        %v4455 = vsub.s32 3, %v4454
        %v4456 = vrot.slane %v4439, %v4455
        %4461 = vmatprep.subr.mxu0 %v4376
        %4462 = vmatpush1.msra.mxu0 %v4375
        %4463 = vmatprep.subr.mxu0 %v4380
        %4464 = vmatpush1.msra.mxu0 %v4379
        %4465 = vmatprep.subr.mxu0 %v4384
        %4466 = vmatpush1.msra.mxu0 %v4383
        %4467 = vmatprep.subr.mxu0 %v4388
        %4468 = vmatpush1.msra.mxu0 %v4387
        %4469 = vmatprep.subr.mxu0 %v4392
        %4470 = vmatpush1.msra.mxu0 %v4391
        %4471 = vmatprep.subr.mxu0 %v4396
        %4472 = vmatpush1.msra.mxu0 %v4395
        %4473 = vmatprep.subr.mxu0 %v4400
        %4474 = vmatpush1.msra.mxu0 %v4399
        %4475 = vmatprep.subr.mxu0 %v4404
        %4476 = vmatpush1.msra.mxu0 %v4403
        %4477 = vmatprep.subr.mxu0 %v4408
        %4478 = vmatpush1.msra.mxu0 %v4407
        %4479 = vmatprep.subr.mxu0 %v4412
        %4480 = vmatpush1.msra.mxu0 %v4411
        %4481 = vmatprep.subr.mxu0 %v4416
        %4482 = vmatpush1.msra.mxu0 %v4415
        %4483 = vmatprep.subr.mxu0 %v4420
        %4484 = vmatpush1.msra.mxu0 %v4419
        %4485 = vmatprep.subr.mxu0 %v4424
        %4486 = vmatpush1.msra.mxu0 %v4423
        %4487 = vmatprep.subr.mxu0 %v4428
        %4488 = vmatpush1.msra.mxu0 %v4427
        %4489 = vmatprep.subr.mxu0 %v4432
        %4490 = vmatpush1.msra.mxu0 %v4431
        %4491 = vmatprep.subr.mxu0 %v4436
        %4492 = vmatpush1.msra.mxu0 %v4435
        %4493 = vmatprep.subr.mxu0 0.0
        %4494 = vmatpush1.msra.mxu0 0.0
        %4495 = vmatprep.subr.mxu0 0.0
        %4496 = vmatpush1.msra.mxu0 0.0
        %4497 = vmatprep.subr.mxu0 0.0
        %4498 = vmatpush1.msra.mxu0 0.0
        %4499 = vmatprep.subr.mxu0 0.0
        %4500 = vmatpush1.msra.mxu0 0.0
        %4501 = vmatprep.subr.mxu0 0.0
        %4502 = vmatpush1.msra.mxu0 0.0
        %4503 = vmatprep.subr.mxu0 0.0
        %4504 = vmatpush1.msra.mxu0 0.0
        %4505 = vmatprep.subr.mxu0 0.0
        %4506 = vmatpush1.msra.mxu0 0.0
        %4507 = vmatprep.subr.mxu0 0.0
        %4508 = vmatpush1.msra.mxu0 0.0
        %4509 = vmatprep.subr.mxu0 0.0
        %4510 = vmatpush1.msra.mxu0 0.0
        %4511 = vmatprep.subr.mxu0 0.0
        %4512 = vmatpush1.msra.mxu0 0.0
        %4513 = vmatprep.subr.mxu0 0.0
        %4514 = vmatpush1.msra.mxu0 0.0
        %4515 = vmatprep.subr.mxu0 0.0
        %4516 = vmatpush1.msra.mxu0 0.0
        %4517 = vmatprep.subr.mxu0 0.0
        %4518 = vmatpush1.msra.mxu0 0.0
        %4519 = vmatprep.subr.mxu0 0.0
        %4520 = vmatpush1.msra.mxu0 0.0
        %4521 = vmatprep.subr.mxu0 0.0
        %4522 = vmatpush1.msra.mxu0 0.0
        %4523 = vmatprep.subr.mxu0 0.0
        %4524 = vmatpush1.msra.mxu0 0.0
        %4525 = vmatprep.mubr.f32.mxu0 0.0
        %4526 = vmatmul.mubr.f32.gmra.mrb[0].mxu0 %v4374
        %v4527 = vpop.f32.mrb[0].mxu0
        %v4528 = vadd.f32 %v4444, %v4527
        %v4529 = vpop.f32.mrb[0].mxu0
        %v4530 = vadd.f32 %v4448, %v4529
        %4531 = vdwg.mxu0
        %4532 = vmatprep.subr.mxu0 %v4378
        %4533 = vmatpush1.msra.mxu0 %v4377
        %4534 = vmatprep.subr.mxu0 %v4382
        %4535 = vmatpush1.msra.mxu0 %v4381
        %4536 = vmatprep.subr.mxu0 %v4386
        %4537 = vmatpush1.msra.mxu0 %v4385
        %4538 = vmatprep.subr.mxu0 %v4390
        %4539 = vmatpush1.msra.mxu0 %v4389
        %4540 = vmatprep.subr.mxu0 %v4394
        %4541 = vmatpush1.msra.mxu0 %v4393
        %4542 = vmatprep.subr.mxu0 %v4398
        %4543 = vmatpush1.msra.mxu0 %v4397
        %4544 = vmatprep.subr.mxu0 %v4402
        %4545 = vmatpush1.msra.mxu0 %v4401
        %4546 = vmatprep.subr.mxu0 %v4406
        %4547 = vmatpush1.msra.mxu0 %v4405
        %4548 = vmatprep.subr.mxu0 %v4410
        %4549 = vmatpush1.msra.mxu0 %v4409
        %4550 = vmatprep.subr.mxu0 %v4414
        %4551 = vmatpush1.msra.mxu0 %v4413
        %4552 = vmatprep.subr.mxu0 %v4418
        %4553 = vmatpush1.msra.mxu0 %v4417
        %4554 = vmatprep.subr.mxu0 %v4422
        %4555 = vmatpush1.msra.mxu0 %v4421
        %4556 = vmatprep.subr.mxu0 %v4426
        %4557 = vmatpush1.msra.mxu0 %v4425
        %4558 = vmatprep.subr.mxu0 %v4430
        %4559 = vmatpush1.msra.mxu0 %v4429
        %4560 = vmatprep.subr.mxu0 %v4434
        %4561 = vmatpush1.msra.mxu0 %v4433
        %4562 = vmatprep.subr.mxu0 %v4438
        %4563 = vmatpush1.msra.mxu0 %v4437
        %4564 = vmatprep.subr.mxu0 0.0
        %4565 = vmatpush1.msra.mxu0 0.0
        %4566 = vmatprep.subr.mxu0 0.0
        %4567 = vmatpush1.msra.mxu0 0.0
        %4568 = vmatprep.subr.mxu0 0.0
        %4569 = vmatpush1.msra.mxu0 0.0
        %4570 = vmatprep.subr.mxu0 0.0
        %4571 = vmatpush1.msra.mxu0 0.0
        %4572 = vmatprep.subr.mxu0 0.0
        %4573 = vmatpush1.msra.mxu0 0.0
        %4574 = vmatprep.subr.mxu0 0.0
        %4575 = vmatpush1.msra.mxu0 0.0
        %4576 = vmatprep.subr.mxu0 0.0
        %4577 = vmatpush1.msra.mxu0 0.0
        %4578 = vmatprep.subr.mxu0 0.0
        %4579 = vmatpush1.msra.mxu0 0.0
        %4580 = vmatprep.subr.mxu0 0.0
        %4581 = vmatpush1.msra.mxu0 0.0
        %4582 = vmatprep.subr.mxu0 0.0
        %4583 = vmatpush1.msra.mxu0 0.0
        %4584 = vmatprep.subr.mxu0 0.0
        %4585 = vmatpush1.msra.mxu0 0.0
        %4586 = vmatprep.subr.mxu0 0.0
        %4587 = vmatpush1.msra.mxu0 0.0
        %4588 = vmatprep.subr.mxu0 0.0
        %4589 = vmatpush1.msra.mxu0 0.0
        %4590 = vmatprep.subr.mxu0 0.0
        %4591 = vmatpush1.msra.mxu0 0.0
        %4592 = vmatprep.subr.mxu0 0.0
        %4593 = vmatpush1.msra.mxu0 0.0
        %4594 = vmatprep.subr.mxu0 0.0
        %4595 = vmatpush1.msra.mxu0 0.0
        %4596 = vmatprep.mubr.f32.mxu0 0.0
        %4597 = vmatmul.mubr.f32.gmra.mrb[0].mxu0 %v4374
        %v4598 = vpop.f32.mrb[0].mxu0
        %v4599 = vadd.f32 %v4452, %v4598
        %v4600 = vpop.f32.mrb[0].mxu0
        %v4601 = vadd.f32 %v4456, %v4600
        %4602 = vdwg.mxu0
        %v4603 = vmax.f32 %v4528, 0.0
        %v4604 = vmax.f32 %v4530, 0.0
        %v4605 = vmax.f32 %v4599, 0.0
        %v4606 = vmax.f32 %v4601, 0.0
        %v4607 = vld [vmem:[%s20] sm:$0xff]
        %v4608 = vld [vmem:[%s20 + $0x8] sm:$0xff]
        %v4609 = vld [vmem:[%s20 + $0x10] sm:$0xff]
        %v4610 = vld [vmem:[%s20 + $0x18] sm:$0xff]
        %v4611 = vld [vmem:[%s20 + $0x20] sm:$0xff]
        %v4612 = vld [vmem:[%s20 + $0x28] sm:$0xff]
        %v4613 = vld [vmem:[%s20 + $0x30] sm:$0xff]
        %v4614 = vld [vmem:[%s20 + $0x38] sm:$0xff]
        %v4615 = vld [vmem:[%s20 + $0x40] sm:$0xff]
        %v4616 = vld [vmem:[%s20 + $0x48] sm:$0xff]
        %v4617 = vld [vmem:[%s20 + $0x50] sm:$0xff]
        %v4618 = vld [vmem:[%s20 + $0x58] sm:$0xff]
        %v4619 = vld [vmem:[%s20 + $0x60] sm:$0xff]
        %v4620 = vld [vmem:[%s20 + $0x68] sm:$0xff]
        %v4621 = vld [vmem:[%s20 + $0x70] sm:$0xff]
        %v4622 = vld [vmem:[%s20 + $0x78] sm:$0xff]
        %v4623 = vld [vmem:[%s20 + $0x80] sm:$0xff]
        %v4624 = vld [vmem:[%s20 + $0x88] sm:$0xff]
        %v4625 = vld [vmem:[%s20 + $0x90] sm:$0xff]
        %v4626 = vld [vmem:[%s20 + $0x98] sm:$0xff]
        %v4627 = vld [vmem:[%s20 + $0xa0] sm:$0xff]
        %v4628 = vld [vmem:[%s20 + $0xa8] sm:$0xff]
        %v4629 = vld [vmem:[%s20 + $0xb0] sm:$0xff]
        %v4630 = vld [vmem:[%s20 + $0xb8] sm:$0xff]
        %v4631 = vld [vmem:[%s20 + $0xc0] sm:$0xff]
        %v4632 = vld [vmem:[%s20 + $0xc8] sm:$0xff]
        %v4633 = vld [vmem:[%s20 + $0xd0] sm:$0xff]
        %v4634 = vld [vmem:[%s20 + $0xd8] sm:$0xff]
        %v4635 = vld [vmem:[%s20 + $0xe0] sm:$0xff]
        %v4636 = vld [vmem:[%s20 + $0xe8] sm:$0xff]
        %v4637 = vld [vmem:[%s20 + $0xf0] sm:$0xff]
        %v4638 = vld [vmem:[%s20 + $0xf8] sm:$0xff]
        %v4639 = vld [vmem:[%s20 + $0x100] sm:$0xff]
        %v4640 = vld [vmem:[%s20 + $0x108] sm:$0xff]
        %v4641 = vld [vmem:[%s20 + $0x110] sm:$0xff]
        %v4642 = vld [vmem:[%s20 + $0x118] sm:$0xff]
        %v4643 = vld [vmem:[%s20 + $0x120] sm:$0xff]
        %v4644 = vld [vmem:[%s20 + $0x128] sm:$0xff]
        %v4645 = vld [vmem:[%s20 + $0x130] sm:$0xff]
        %v4646 = vld [vmem:[%s20 + $0x138] sm:$0xff]
        %v4647 = vld [vmem:[%s20 + $0x140] sm:$0xff]
        %v4648 = vld [vmem:[%s20 + $0x148] sm:$0xff]
        %v4649 = vld [vmem:[%s20 + $0x150] sm:$0xff]
        %v4650 = vld [vmem:[%s20 + $0x158] sm:$0xff]
        %v4651 = vld [vmem:[%s20 + $0x160] sm:$0xff]
        %v4652 = vld [vmem:[%s20 + $0x168] sm:$0xff]
        %v4653 = vld [vmem:[%s20 + $0x170] sm:$0xff]
        %v4654 = vld [vmem:[%s20 + $0x178] sm:$0xff]
        %v4655 = vld [vmem:[%s20 + $0x180] sm:$0xff]
        %v4656 = vld [vmem:[%s20 + $0x188] sm:$0xff]
        %v4657 = vld [vmem:[%s20 + $0x190] sm:$0xff]
        %v4658 = vld [vmem:[%s20 + $0x198] sm:$0xff]
        %v4659 = vld [vmem:[%s20 + $0x1a0] sm:$0xff]
        %v4660 = vld [vmem:[%s20 + $0x1a8] sm:$0xff]
        %v4661 = vld [vmem:[%s20 + $0x1b0] sm:$0xff]
        %v4662 = vld [vmem:[%s20 + $0x1b8] sm:$0xff]
        %v4663 = vld [vmem:[%s20 + $0x1c0] sm:$0xff]
        %v4664 = vld [vmem:[%s20 + $0x1c8] sm:$0xff]
        %v4665 = vld [vmem:[%s20 + $0x1d0] sm:$0xff]
        %v4666 = vld [vmem:[%s20 + $0x1d8] sm:$0xff]
        %v4667 = vld [vmem:[%s20 + $0x1e0] sm:$0xff]
        %v4668 = vld [vmem:[%s20 + $0x1e8] sm:$0xff]
        %v4669 = vld [vmem:[%s20 + $0x1f0] sm:$0xff]
        %v4670 = vld [vmem:[%s20 + $0x1f8] sm:$0xff]
        %v4671 = vld [vmem:[%s21] sm:$0x1]
        %v4673 = vlaneseq
        %v4674 = vshrl.u32 %v4673, 7
        %v4675 = vsub.s32 0, %v4674
        %v4676 = vrot.slane %v4671, %v4675
        %4678 = vmatprep.subr.mxu0 0.0
        %4679 = vmatpush1.msra.mxu0 %v4607
        %4680 = vmatprep.subr.mxu0 0.0
        %4681 = vmatpush1.msra.mxu0 %v4608
        %4682 = vmatprep.subr.mxu0 0.0
        %4683 = vmatpush1.msra.mxu0 %v4609
        %4684 = vmatprep.subr.mxu0 0.0
        %4685 = vmatpush1.msra.mxu0 %v4610
        %4686 = vmatprep.subr.mxu0 0.0
        %4687 = vmatpush1.msra.mxu0 %v4611
        %4688 = vmatprep.subr.mxu0 0.0
        %4689 = vmatpush1.msra.mxu0 %v4612
        %4690 = vmatprep.subr.mxu0 0.0
        %4691 = vmatpush1.msra.mxu0 %v4613
        %4692 = vmatprep.subr.mxu0 0.0
        %4693 = vmatpush1.msra.mxu0 %v4614
        %4694 = vmatprep.subr.mxu0 0.0
        %4695 = vmatpush1.msra.mxu0 %v4615
        %4696 = vmatprep.subr.mxu0 0.0
        %4697 = vmatpush1.msra.mxu0 %v4616
        %4698 = vmatprep.subr.mxu0 0.0
        %4699 = vmatpush1.msra.mxu0 %v4617
        %4700 = vmatprep.subr.mxu0 0.0
        %4701 = vmatpush1.msra.mxu0 %v4618
        %4702 = vmatprep.subr.mxu0 0.0
        %4703 = vmatpush1.msra.mxu0 %v4619
        %4704 = vmatprep.subr.mxu0 0.0
        %4705 = vmatpush1.msra.mxu0 %v4620
        %4706 = vmatprep.subr.mxu0 0.0
        %4707 = vmatpush1.msra.mxu0 %v4621
        %4708 = vmatprep.subr.mxu0 0.0
        %4709 = vmatpush1.msra.mxu0 %v4622
        %4710 = vmatprep.subr.mxu0 0.0
        %4711 = vmatpush1.msra.mxu0 %v4623
        %4712 = vmatprep.subr.mxu0 0.0
        %4713 = vmatpush1.msra.mxu0 %v4624
        %4714 = vmatprep.subr.mxu0 0.0
        %4715 = vmatpush1.msra.mxu0 %v4625
        %4716 = vmatprep.subr.mxu0 0.0
        %4717 = vmatpush1.msra.mxu0 %v4626
        %4718 = vmatprep.subr.mxu0 0.0
        %4719 = vmatpush1.msra.mxu0 %v4627
        %4720 = vmatprep.subr.mxu0 0.0
        %4721 = vmatpush1.msra.mxu0 %v4628
        %4722 = vmatprep.subr.mxu0 0.0
        %4723 = vmatpush1.msra.mxu0 %v4629
        %4724 = vmatprep.subr.mxu0 0.0
        %4725 = vmatpush1.msra.mxu0 %v4630
        %4726 = vmatprep.subr.mxu0 0.0
        %4727 = vmatpush1.msra.mxu0 %v4631
        %4728 = vmatprep.subr.mxu0 0.0
        %4729 = vmatpush1.msra.mxu0 %v4632
        %4730 = vmatprep.subr.mxu0 0.0
        %4731 = vmatpush1.msra.mxu0 %v4633
        %4732 = vmatprep.subr.mxu0 0.0
        %4733 = vmatpush1.msra.mxu0 %v4634
        %4734 = vmatprep.subr.mxu0 0.0
        %4735 = vmatpush1.msra.mxu0 %v4635
        %4736 = vmatprep.subr.mxu0 0.0
        %4737 = vmatpush1.msra.mxu0 %v4636
        %4738 = vmatprep.subr.mxu0 0.0
        %4739 = vmatpush1.msra.mxu0 %v4637
        %4740 = vmatprep.subr.mxu0 0.0
        %4741 = vmatpush1.msra.mxu0 %v4638
        %4742 = vmatprep.mubr.f32.mxu0 %v4604
        %4743 = vmatmul.mubr.f32.gmra.mrb[0].mxu0 %v4603
        %v4744 = vpop.f32.mrb[0].mxu0
        %v4745 = vadd.f32 %v4676, %v4744
        %v4746 = vpop.f32.mrb[0].mxu0
        %4747 = vdwg.mxu0
        %4748 = vmatprep.subr.mxu0 0.0
        %4749 = vmatpush1.msra.mxu0 %v4639
        %4750 = vmatprep.subr.mxu0 0.0
        %4751 = vmatpush1.msra.mxu0 %v4640
        %4752 = vmatprep.subr.mxu0 0.0
        %4753 = vmatpush1.msra.mxu0 %v4641
        %4754 = vmatprep.subr.mxu0 0.0
        %4755 = vmatpush1.msra.mxu0 %v4642
        %4756 = vmatprep.subr.mxu0 0.0
        %4757 = vmatpush1.msra.mxu0 %v4643
        %4758 = vmatprep.subr.mxu0 0.0
        %4759 = vmatpush1.msra.mxu0 %v4644
        %4760 = vmatprep.subr.mxu0 0.0
        %4761 = vmatpush1.msra.mxu0 %v4645
        %4762 = vmatprep.subr.mxu0 0.0
        %4763 = vmatpush1.msra.mxu0 %v4646
        %4764 = vmatprep.subr.mxu0 0.0
        %4765 = vmatpush1.msra.mxu0 %v4647
        %4766 = vmatprep.subr.mxu0 0.0
        %4767 = vmatpush1.msra.mxu0 %v4648
        %4768 = vmatprep.subr.mxu0 0.0
        %4769 = vmatpush1.msra.mxu0 %v4649
        %4770 = vmatprep.subr.mxu0 0.0
        %4771 = vmatpush1.msra.mxu0 %v4650
        %4772 = vmatprep.subr.mxu0 0.0
        %4773 = vmatpush1.msra.mxu0 %v4651
        %4774 = vmatprep.subr.mxu0 0.0
        %4775 = vmatpush1.msra.mxu0 %v4652
        %4776 = vmatprep.subr.mxu0 0.0
        %4777 = vmatpush1.msra.mxu0 %v4653
        %4778 = vmatprep.subr.mxu0 0.0
        %4779 = vmatpush1.msra.mxu0 %v4654
        %4780 = vmatprep.subr.mxu0 0.0
        %4781 = vmatpush1.msra.mxu0 %v4655
        %4782 = vmatprep.subr.mxu0 0.0
        %4783 = vmatpush1.msra.mxu0 %v4656
        %4784 = vmatprep.subr.mxu0 0.0
        %4785 = vmatpush1.msra.mxu0 %v4657
        %4786 = vmatprep.subr.mxu0 0.0
        %4787 = vmatpush1.msra.mxu0 %v4658
        %4788 = vmatprep.subr.mxu0 0.0
        %4789 = vmatpush1.msra.mxu0 %v4659
        %4790 = vmatprep.subr.mxu0 0.0
        %4791 = vmatpush1.msra.mxu0 %v4660
        %4792 = vmatprep.subr.mxu0 0.0
        %4793 = vmatpush1.msra.mxu0 %v4661
        %4794 = vmatprep.subr.mxu0 0.0
        %4795 = vmatpush1.msra.mxu0 %v4662
        %4796 = vmatprep.subr.mxu0 0.0
        %4797 = vmatpush1.msra.mxu0 %v4663
        %4798 = vmatprep.subr.mxu0 0.0
        %4799 = vmatpush1.msra.mxu0 %v4664
        %4800 = vmatprep.subr.mxu0 0.0
        %4801 = vmatpush1.msra.mxu0 %v4665
        %4802 = vmatprep.subr.mxu0 0.0
        %4803 = vmatpush1.msra.mxu0 %v4666
        %4804 = vmatprep.subr.mxu0 0.0
        %4805 = vmatpush1.msra.mxu0 %v4667
        %4806 = vmatprep.subr.mxu0 0.0
        %4807 = vmatpush1.msra.mxu0 %v4668
        %4808 = vmatprep.subr.mxu0 0.0
        %4809 = vmatpush1.msra.mxu0 %v4669
        %4810 = vmatprep.subr.mxu0 0.0
        %4811 = vmatpush1.msra.mxu0 %v4670
        %4812 = vmatprep.mubr.f32.mxu0 %v4606
        %4813 = vmatmul.mubr.f32.gmra.mrb[0].mxu0 %v4605
        %v4814 = vpop.f32.mrb[0].mxu0
        %v4815 = vadd.f32 %v4745, %v4814
        %v4816 = vpop.f32.mrb[0].mxu0
        %4817 = vdwg.mxu0
        %v4818 = vadd.f32 %v4374, %v4815
        %v4819 = vld [vmem:[%s22] sm:$0x1]
        %v4820 = vld [vmem:[%s23] sm:$0x1]
        %4821 = vadd.xlane.f32.xlu0 %v4818
        %v4822 = vpop.xlane.xlu0 %4821
        %v4823 = vmul.f32 %v4822, %v2119
        %v4824 = vsub.f32 %v4818, %v4823
        %v4825 = vmul.f32 %v4824, %v4824
        %4826 = vadd.xlane.f32.xlu0 %v4825
        %v4827 = vpop.xlane.xlu0 %4826
        %v4828 = vmul.f32 %v4827, %v2119
        %v4829 = vadd.f32 %v4828, 1e-05
        %v4830 = vrsqrt.pop %v4829
        %v4831 = vmul.f32 %v4824, %v4830
        %v4833 = vlaneseq
        %v4834 = vshrl.u32 %v4833, 7
        %v4835 = vsub.s32 0, %v4834
        %v4836 = vrot.slane %v4819, %v4835
        %v4838 = vmul.f32 %v4831, %v4836
        %v4840 = vlaneseq
        %v4841 = vshrl.u32 %v4840, 7
        %v4842 = vsub.s32 0, %v4841
        %v4843 = vrot.slane %v4820, %v4842
        %v4845 = vadd.f32 %v4838, %v4843
        %v4846 = vld [vmem:[%s24] sm:$0xff]
        %v4847 = vld [vmem:[%s24 + $0x8] sm:$0xff]
        %v4848 = vld [vmem:[%s24 + $0x10] sm:$0xff]
        %v4849 = vld [vmem:[%s24 + $0x18] sm:$0xff]
        %v4850 = vld [vmem:[%s24 + $0x20] sm:$0xff]
        %v4851 = vld [vmem:[%s24 + $0x28] sm:$0xff]
        %v4852 = vld [vmem:[%s24 + $0x30] sm:$0xff]
        %v4853 = vld [vmem:[%s24 + $0x38] sm:$0xff]
        %v4854 = vld [vmem:[%s24 + $0x40] sm:$0xff]
        %v4855 = vld [vmem:[%s24 + $0x48] sm:$0xff]
        %v4856 = vld [vmem:[%s24 + $0x50] sm:$0xff]
        %v4857 = vld [vmem:[%s24 + $0x58] sm:$0xff]
        %v4858 = vld [vmem:[%s24 + $0x60] sm:$0xff]
        %v4859 = vld [vmem:[%s24 + $0x68] sm:$0xff]
        %v4860 = vld [vmem:[%s24 + $0x70] sm:$0xff]
        %v4861 = vld [vmem:[%s24 + $0x78] sm:$0xff]
        %v4862 = vld [vmem:[%s25] sm:$0x1]
        %v4864 = vlaneseq
        %v4865 = vshrl.u32 %v4864, 7
        %v4866 = vsub.s32 0, %v4865
        %v4867 = vrot.slane %v4862, %v4866
        %4869 = vmatprep.subr.mxu0 0.0
        %4870 = vmatpush1.msra.mxu0 %v4846
        %4871 = vmatprep.subr.mxu0 0.0
        %4872 = vmatpush1.msra.mxu0 %v4847
        %4873 = vmatprep.subr.mxu0 0.0
        %4874 = vmatpush1.msra.mxu0 %v4848
        %4875 = vmatprep.subr.mxu0 0.0
        %4876 = vmatpush1.msra.mxu0 %v4849
        %4877 = vmatprep.subr.mxu0 0.0
        %4878 = vmatpush1.msra.mxu0 %v4850
        %4879 = vmatprep.subr.mxu0 0.0
        %4880 = vmatpush1.msra.mxu0 %v4851
        %4881 = vmatprep.subr.mxu0 0.0
        %4882 = vmatpush1.msra.mxu0 %v4852
        %4883 = vmatprep.subr.mxu0 0.0
        %4884 = vmatpush1.msra.mxu0 %v4853
        %4885 = vmatprep.subr.mxu0 0.0
        %4886 = vmatpush1.msra.mxu0 %v4854
        %4887 = vmatprep.subr.mxu0 0.0
        %4888 = vmatpush1.msra.mxu0 %v4855
        %4889 = vmatprep.subr.mxu0 0.0
        %4890 = vmatpush1.msra.mxu0 %v4856
        %4891 = vmatprep.subr.mxu0 0.0
        %4892 = vmatpush1.msra.mxu0 %v4857
        %4893 = vmatprep.subr.mxu0 0.0
        %4894 = vmatpush1.msra.mxu0 %v4858
        %4895 = vmatprep.subr.mxu0 0.0
        %4896 = vmatpush1.msra.mxu0 %v4859
        %4897 = vmatprep.subr.mxu0 0.0
        %4898 = vmatpush1.msra.mxu0 %v4860
        %4899 = vmatprep.subr.mxu0 0.0
        %4900 = vmatpush1.msra.mxu0 %v4861
        %4901 = vmatprep.subr.mxu0 0.0
        %4902 = vmatpush1.msra.mxu0 0.0
        %4903 = vmatprep.subr.mxu0 0.0
        %4904 = vmatpush1.msra.mxu0 0.0
        %4905 = vmatprep.subr.mxu0 0.0
        %4906 = vmatpush1.msra.mxu0 0.0
        %4907 = vmatprep.subr.mxu0 0.0
        %4908 = vmatpush1.msra.mxu0 0.0
        %4909 = vmatprep.subr.mxu0 0.0
        %4910 = vmatpush1.msra.mxu0 0.0
        %4911 = vmatprep.subr.mxu0 0.0
        %4912 = vmatpush1.msra.mxu0 0.0
        %4913 = vmatprep.subr.mxu0 0.0
        %4914 = vmatpush1.msra.mxu0 0.0
        %4915 = vmatprep.subr.mxu0 0.0
        %4916 = vmatpush1.msra.mxu0 0.0
        %4917 = vmatprep.subr.mxu0 0.0
        %4918 = vmatpush1.msra.mxu0 0.0
        %4919 = vmatprep.subr.mxu0 0.0
        %4920 = vmatpush1.msra.mxu0 0.0
        %4921 = vmatprep.subr.mxu0 0.0
        %4922 = vmatpush1.msra.mxu0 0.0
        %4923 = vmatprep.subr.mxu0 0.0
        %4924 = vmatpush1.msra.mxu0 0.0
        %4925 = vmatprep.subr.mxu0 0.0
        %4926 = vmatpush1.msra.mxu0 0.0
        %4927 = vmatprep.subr.mxu0 0.0
        %4928 = vmatpush1.msra.mxu0 0.0
        %4929 = vmatprep.subr.mxu0 0.0
        %4930 = vmatpush1.msra.mxu0 0.0
        %4931 = vmatprep.subr.mxu0 0.0
        %4932 = vmatpush1.msra.mxu0 0.0
        %4933 = vmatprep.mubr.f32.mxu0 0.0
        %4934 = vmatmul.mubr.f32.gmra.mrb[0].mxu0 %v4845
        %v4935 = vpop.f32.mrb[0].mxu0
        %v4936 = vadd.f32 %v4867, %v4935
        %v4937 = vpop.f32.mrb[0].mxu0
        %4938 = vdwg.mxu0
        %4939 = vst [vmem:[%s764] sm:$0xff] %v4936
        %s4940 = sand.u32 %s584, 1
        %s4941 = scalar_lea.sflag [#allocation5], %s4940
        %s4942 = sand.u32 %s584, 1
        %s4943 = smul.addr %s4942, 8
        %s4944 = scalar_lea.vmem [#allocation4], %s4943
        // Predicated region
        $region121: #{caption_model_forward.3} parent=119 // pred_check
          %p4945 = pneg %p594
        $region122: #{caption_model_forward.3} parent=119 // pred_check_branch
          %4947 = sbr.rel (%p4945) target = $region124
        $region123: #{caption_model_forward.3} parent=119 // pred_region
          %s4949 = ssub.s32 128, 128
          %4950 = vsyncadd %s4941, %s4949
          %s4951 = smul.addr %s46, 128
          %s4952 = scalar_lea.hbm %s26, %s4951
          %s4954 = sshll.u32 %s4944, 4
          %s4955 = int_to_ptr.vmem [resolvable:$true] %s4954
          %4957 = dma.vmem_to_hbm [thread:$0]  %s4955, 128, %s4952, %s4941
        $region124: #{caption_model_forward.3} parent=119 // pred_fallthru
          _
      $region120: #{caption_model_forward.3} parent=5 // pred_fallthru
        _
      %p4958 = scmp.le.s32.totalorder 2, %s41
      // Predicated region
      $region125: #{caption_model_forward.3} parent=5 // pred_check
        %p4959 = pneg %p4958
      $region126: #{caption_model_forward.3} parent=5 // pred_check_branch
        %4961 = sbr.rel (%p4959) target = $region128
      $region127: #{caption_model_forward.3} parent=5 // pred_region
        %s4962 = ssub.s32 %s41, 2
        // Predicated region
        $region129: #{caption_model_forward.3} parent=127 // pred_check
          %p4963 = pneg %p600
        $region130: #{caption_model_forward.3} parent=127 // pred_check_branch
          %4965 = sbr.rel (%p4963) target = $region132
        $region131: #{caption_model_forward.3} parent=127 // pred_region
          %s4966 = sand.u32 %s585, 1
          %s4967 = scalar_lea.sflag [#allocation5], %s4966
          %s4968 = sand.u32 %s585, 1
          %s4969 = smul.addr %s4968, 8
          %s4970 = scalar_lea.vmem [#allocation4], %s4969
          %4971 = dma.done %s4967, 128
        $region132: #{caption_model_forward.3} parent=127 // pred_fallthru
          _
      $region128: #{caption_model_forward.3} parent=5 // pred_fallthru
        _
    $region6: #{caption_model_forward.3} parent=1 // loop_footer
      %s45 = sadd.s32 1, %s41
    $region7: #{caption_model_forward.3} parent=1 // loop_footer_branch
      %40 = sbr.rel target = $region3
    $region8: #{caption_model_forward.3} parent=1 // loop_exit
      _
    %4972 = vsyncpa [#allocation5], 1
    %s4973 = scalar_lea.sflag [#allocation5], 1
    %4974 = vsyncpa %s4973, 1

</llo_original>
